<compile_context>
chip_gen: v7x
topology: tpu7x:2x2x1
jax: 0.10.0
libtpu: 0.0.40
codegen_flags: <defaults>
</compile_context>

<pallas_src>
import jax
import jax.numpy as jnp
from jax.experimental import pallas as pl
from jax.experimental.pallas import tpu as pltpu

LANES = 128          # TPU lane width; narrow feature dims padded up to this
_NEG = -1e30         # "minus infinity" for padded log-softmax logits
_EPS = 1e-5          # BatchNorm eps


# ----------------------------- fused Pallas kernel ---------------------------

def _disc_kernel(x_ref, w1_ref, st1_ref, w2_ref, st2_ref, w3_ref, b3_ref,
                 o_ref, acc_ref):
    j = pl.program_id(0)

    @pl.when(j == 0)
    def _():
        acc_ref[...] = jnp.zeros_like(acc_ref)

    # fd1 tile: relu((x @ w1[:, tile j]) * s1_j + t1_j); bf16 operands, f32 acc.
    h = jnp.dot(x_ref[...], w1_ref[...], preferred_element_type=jnp.float32)
    h = jnp.maximum(h * st1_ref[0:1, :] + st1_ref[1:2, :], 0.0)

    # partial fd2: acc += h_j @ w2[tile j]   (accumulates over the 2048 axis)
    acc_ref[...] += jnp.dot(h.astype(jnp.bfloat16), w2_ref[...],
                            preferred_element_type=jnp.float32)

    @pl.when(j == pl.num_programs(0) - 1)
    def _():
        # fd2 epilogue: folded BN + ReLU (padded lanes stay exactly 0)
        y2 = jnp.maximum(acc_ref[...] * st2_ref[0:1, :] + st2_ref[1:2, :], 0.0)
        # fd3 + padded log-softmax (padded lanes biased to -1e30)
        y3 = jnp.dot(y2.astype(jnp.bfloat16), w3_ref[...],
                     preferred_element_type=jnp.float32) + b3_ref[...]
        m = jnp.max(y3, axis=-1, keepdims=True)
        lse = jnp.log(jnp.sum(jnp.exp(y3 - m), axis=-1, keepdims=True)) + m
        o_ref[...] = (y3 - lse).astype(o_ref.dtype)


# ------------------------------ Pallas wrapper -------------------------------

def disc_call(x_bf16, w1, st1, w2, st2, w3, b3, *, tn=1024):
    """Fused fd1+BN+ReLU+fd2+BN+ReLU+fd3+LogSoftmax; returns (M, 128) f32."""
    M, K = x_bf16.shape
    _, N = w1.shape
    TN = min(N, tn)                        # 1024 -> 2 reduction steps for N=2048
    grid = (pl.cdiv(N, TN),)

    flops = 2 * M * K * N + 2 * M * N * LANES + 2 * M * LANES * LANES
    bytes_accessed = int(x_bf16.size * 2 + w1.size * 2 + st1.size * 4 +
                         w2.size * 2 + st2.size * 4 + w3.size * 2 +
                         b3.size * 4 + M * LANES * 4)

    return pl.pallas_call(
        _disc_kernel,
        out_shape=jax.ShapeDtypeStruct((M, LANES), jnp.float32),
        grid=grid,
        in_specs=[
            pl.BlockSpec((M, K), lambda j: (0, 0)),        # x: resident
            pl.BlockSpec((K, TN), lambda j: (0, j)),       # w1 tile (streamed)
            pl.BlockSpec((2, TN), lambda j: (0, j)),       # [s1; t1] tile
            pl.BlockSpec((TN, LANES), lambda j: (j, 0)),   # w2 tile (streamed)
            pl.BlockSpec((2, LANES), lambda j: (0, 0)),    # [s2; t2]: resident
            pl.BlockSpec((LANES, LANES), lambda j: (0, 0)),  # w3: resident
            pl.BlockSpec((1, LANES), lambda j: (0, 0)),    # b3 (padded -1e30)
        ],
        out_specs=pl.BlockSpec((M, LANES), lambda j: (0, 0)),
        scratch_shapes=[pltpu.VMEM((M, LANES), jnp.float32)],  # fd2 accumulator
        compiler_params=pltpu.CompilerParams(
            dimension_semantics=("arbitrary",),            # reduction axis
            vmem_limit_bytes=40 << 20),
        cost_estimate=pl.CostEstimate(
            flops=int(flops),
            transcendentals=int(M * LANES),
            bytes_accessed=bytes_accessed),
    )(x_bf16, w1, st1, w2, st2, w3, b3)


# ------------------------- parameter preprocessing ---------------------------

def prepare_params(params):
    """One-time weight prep: transpose, BN fold, bf16 cast, lane padding."""
    w1, b1, g1, be1, rm1, rv1 = params['fd1']
    s1 = g1 / jnp.sqrt(rv1 + _EPS)
    t1 = (b1 - rm1) * s1 + be1

    w2, b2, g2, be2, rm2, rv2 = params['fd2']
    s2 = g2 / jnp.sqrt(rv2 + _EPS)
    t2 = (b2 - rm2) * s2 + be2
    n2, k2 = w2.shape                      # (100, 2048)

    w3, b3 = params['fd3']
    n3 = w3.shape[0]                       # 2

    prep = {
        # fd1: torch (out,in) -> (in,out), bf16 for weight streaming
        'w1': jnp.asarray(w1.T, jnp.bfloat16),                        # (3200,2048)
        'st1': jnp.stack([s1, t1]).astype(jnp.float32),               # (2,2048)
        # fd2: pad output features 100 -> 128 (zero scale/shift => relu -> 0)
        'w2': jnp.zeros((k2, LANES), jnp.bfloat16)
                 .at[:, :n2].set(w2.T.astype(jnp.bfloat16)),          # (2048,128)
        'st2': jnp.zeros((2, LANES), jnp.float32)
                  .at[0, :n2].set(s2).at[1, :n2].set(t2),             # (2,128)
        # fd3: pad (100,2) -> (128,128); padded logits biased to -1e30 so the
        # padded-lane log-softmax equals the 2-class one on the real lanes.
        'w3': jnp.zeros((LANES, LANES), jnp.bfloat16)
                 .at[:n2, :n3].set(w3.T.astype(jnp.bfloat16)),        # (128,128)
        'b3': jnp.full((1, LANES), _NEG, jnp.float32).at[:, :n3].set(b3),
    }
    return prep


# ------------------------------ forward pass ---------------------------------

def discriminator_forward(prep, x, num_classes=2):
    n = x.shape[0]
    h = x.reshape(n, -1).astype(jnp.bfloat16)          # x.view(x.size(0), -1)
    out_p = disc_call(h, prep['w1'], prep['st1'], prep['w2'], prep['st2'],
                      prep['w3'], prep['b3'])                          # (N,128)
    return out_p[:, :num_classes]                                      # (N,2)


# ----------------------------- pure-JAX reference ----------------------------

def reference_forward(params, x):
    n = x.shape[0]
    h = x.reshape(n, -1)
    w1, b1, g1, be1, rm1, rv1 = params['fd1']
    h = jnp.maximum((h @ w1.T + b1 - rm1) / jnp.sqrt(rv1 + _EPS) * g1 + be1, 0.0)
    w2, b2, g2, be2, rm2, rv2 = params['fd2']
    h = jnp.maximum((h @ w2.T + b2 - rm2) / jnp.sqrt(rv2 + _EPS) * g2 + be2, 0.0)
    w3, b3 = params['fd3']
    h = h @ w3.T + b3
    return jax.nn.log_softmax(h, axis=1)


# ---------------------------- parameter init ---------------------------------

def init_params(key):
    keys = iter(jax.random.split(key, 16))

    def lin(out_f, in_f):
        w = jax.random.normal(next(keys), (out_f, in_f), jnp.float32) / jnp.sqrt(in_f)
        b = 0.01 * jax.random.normal(next(keys), (out_f,), jnp.float32)
        return (w, b)

    def bn(nf):
        gamma = 1.0 + 0.01 * jax.random.normal(next(keys), (nf,), jnp.float32)
        beta = 0.01 * jax.random.normal(next(keys), (nf,), jnp.float32)
        rm = jnp.zeros((nf,), jnp.float32)
        rv = jnp.ones((nf,), jnp.float32)
        return (gamma, beta, rm, rv)

    p = {}
    p['fd1'] = lin(2048, 3200) + bn(2048)    # Linear(128*5*5 -> 2048) + BN1d
    p['fd2'] = lin(100, 2048) + bn(100)      # Linear(2048 -> 100) + BN1d
    p['fd3'] = lin(2, 100)                   # Linear(100 -> 2)
    return p


if __name__ == "__main__":
    key = jax.random.PRNGKey(0)
    pkey, xkey = jax.random.split(key)
    params = init_params(pkey)
    prep = prepare_params(params)            # one-time weight prep

    # Discriminator input: feature map of shape (N, 128, 5, 5), flattened inside
    x = jax.random.normal(xkey, (2, 128, 5, 5), jnp.float32)

    fwd = jax.jit(discriminator_forward)
    out = fwd(prep, x)
    jax.block_until_ready(out)

    ref = reference_forward(params, x)

    assert out.shape == (2, 2), out.shape
    assert bool(jnp.all(jnp.isfinite(out)))
    # rows are log-probabilities
    assert bool(jnp.allclose(jnp.sum(jnp.exp(out), axis=1), 1.0, atol=1e-3))
    # bf16 weight streaming with f32 accumulation: small, bounded drift vs f32 ref
    max_err = float(jnp.max(jnp.abs(out - ref)))
    assert max_err < 5e-2, max_err
    print("KERNEL_OK")
</pallas_src>

<mosaic_0001>
module attributes {stable_mosaic.version = 11 : i64} {
  func.func @_disc_kernel(%arg0: i32, %arg1: memref<2x3200xbf16, #tpu.memory_space<vmem>>, %arg2: memref<3200x1024xbf16, #tpu.memory_space<vmem>>, %arg3: memref<2x1024xf32, #tpu.memory_space<vmem>>, %arg4: memref<1024x128xbf16, #tpu.memory_space<vmem>>, %arg5: memref<2x128xf32, #tpu.memory_space<vmem>>, %arg6: memref<128x128xbf16, #tpu.memory_space<vmem>>, %arg7: memref<1x128xf32, #tpu.memory_space<vmem>>, %arg8: memref<2x128xf32, #tpu.memory_space<vmem>>, %arg9: memref<2x128xf32, #tpu.memory_space<vmem>>) attributes {dimension_semantics = [#tpu.dimension_semantics<arbitrary>], iteration_bounds = array<i64: 2>, scalar_prefetch = 0 : i64, scratch_operands = 1 : i64, tpu.core_type = #tpu.core_type<tc>, window_params = [{pipeline_mode = #tpu.pipeline_mode<synchronous>, transform_indices = @transform_0, window_bounds = array<i64: 2, 3200>}, {transform_indices = @transform_1, window_bounds = array<i64: 3200, 1024>}, {transform_indices = @transform_2, window_bounds = array<i64: 2, 1024>}, {transform_indices = @transform_3, window_bounds = array<i64: 1024, 128>}, {pipeline_mode = #tpu.pipeline_mode<synchronous>, transform_indices = @transform_4, window_bounds = array<i64: 2, 128>}, {pipeline_mode = #tpu.pipeline_mode<synchronous>, transform_indices = @transform_5, window_bounds = array<i64: 128, 128>}, {pipeline_mode = #tpu.pipeline_mode<synchronous>, transform_indices = @transform_6, window_bounds = array<i64: 1, 128>}, {pipeline_mode = #tpu.pipeline_mode<synchronous>, transform_indices = @transform_7, window_bounds = array<i64: 2, 128>}]} {
    %c0_i32 = arith.constant 0 : i32
    %0 = arith.cmpi eq, %arg0, %c0_i32 : i32
    %1 = arith.extui %0 : i1 to i32
    %c0_i32_0 = arith.constant 0 : i32
    %2 = arith.cmpi ne, %1, %c0_i32_0 : i32
    scf.if %2 {
      %cst_16 = arith.constant 0.000000e+00 : f32
      %23 = vector.broadcast %cst_16 : f32 to vector<2x128xf32>
      %c0_17 = arith.constant 0 : index
      %c0_18 = arith.constant 0 : index
      %24 = vector.load %arg9[%c0_17, %c0_18] : memref<2x128xf32, #tpu.memory_space<vmem>>, vector<2x128xf32>
      tpu.vector_store %arg9[%c0_17, %c0_18], %23 {strides = array<i32>} : memref<2x128xf32, #tpu.memory_space<vmem>>, vector<2x128xf32>,
    } else {
    }
    %c0 = arith.constant 0 : index
    %c0_1 = arith.constant 0 : index
    %3 = vector.load %arg1[%c0, %c0_1] : memref<2x3200xbf16, #tpu.memory_space<vmem>>, vector<2x3200xbf16>
    %c0_2 = arith.constant 0 : index
    %c0_3 = arith.constant 0 : index
    %4 = vector.load %arg2[%c0_2, %c0_3] : memref<3200x1024xbf16, #tpu.memory_space<vmem>>, vector<3200x1024xbf16>
    %cst = arith.constant dense<0.000000e+00> : vector<2x1024xf32>
    %5 = tpu.matmul %3, %4, %cst {dimension_numbers = #tpu.dot_dimension_numbers<[1], [0], [0], [1], [0, 0, 1, 1], [], []>} : vector<2x3200xbf16>, vector<3200x1024xbf16>, vector<2x1024xf32> -> vector<2x1024xf32>
    %c0_4 = arith.constant 0 : index
    %c0_5 = arith.constant 0 : index
    %6 = vector.load %arg3[%c0_4, %c0_5] : memref<2x1024xf32, #tpu.memory_space<vmem>>, vector<1x1024xf32>
    %7 = vector.broadcast %6 : vector<1x1024xf32> to vector<2x1024xf32>
    %8 = arith.mulf %5, %7 : vector<2x1024xf32>
    %c1 = arith.constant 1 : index
    %c0_6 = arith.constant 0 : index
    %9 = vector.load %arg3[%c1, %c0_6] : memref<2x1024xf32, #tpu.memory_space<vmem>>, vector<1x1024xf32>
    %10 = vector.broadcast %9 : vector<1x1024xf32> to vector<2x1024xf32>
    %11 = arith.addf %8, %10 : vector<2x1024xf32>
    %cst_7 = arith.constant 0.000000e+00 : f32
    %12 = vector.broadcast %cst_7 : f32 to vector<2x1024xf32>
    %13 = arith.maximumf %11, %12 : vector<2x1024xf32>
    %c0_8 = arith.constant 0 : index
    %c0_9 = arith.constant 0 : index
    %14 = vector.load %arg9[%c0_8, %c0_9] : memref<2x128xf32, #tpu.memory_space<vmem>>, vector<2x128xf32>
    %15 = arith.truncf %13 : vector<2x1024xf32> to vector<2x1024xbf16>
    %c0_10 = arith.constant 0 : index
    %c0_11 = arith.constant 0 : index
    %16 = vector.load %arg4[%c0_10, %c0_11] : memref<1024x128xbf16, #tpu.memory_space<vmem>>, vector<1024x128xbf16>
    %cst_12 = arith.constant dense<0.000000e+00> : vector<2x128xf32>
    %17 = tpu.matmul %15, %16, %cst_12 {dimension_numbers = #tpu.dot_dimension_numbers<[1], [0], [0], [1], [0, 0, 1, 1], [], []>} : vector<2x1024xbf16>, vector<1024x128xbf16>, vector<2x128xf32> -> vector<2x128xf32>
    %18 = arith.addf %14, %17 : vector<2x128xf32>
    %c0_13 = arith.constant 0 : index
    %c0_14 = arith.constant 0 : index
    %19 = vector.load %arg9[%c0_13, %c0_14] : memref<2x128xf32, #tpu.memory_space<vmem>>, vector<2x128xf32>
    tpu.vector_store %arg9[%c0_13, %c0_14], %18 {strides = array<i32>} : memref<2x128xf32, #tpu.memory_space<vmem>>, vector<2x128xf32>,
    %c1_i32 = arith.constant 1 : i32
    %20 = arith.cmpi eq, %arg0, %c1_i32 : i32
    %21 = arith.extui %20 : i1 to i32
    %c0_i32_15 = arith.constant 0 : i32
    %22 = arith.cmpi ne, %21, %c0_i32_15 : i32
    scf.if %22 {
      %c0_16 = arith.constant 0 : index
      %c0_17 = arith.constant 0 : index
      %23 = vector.load %arg9[%c0_16, %c0_17] : memref<2x128xf32, #tpu.memory_space<vmem>>, vector<2x128xf32>
      %c0_18 = arith.constant 0 : index
      %c0_19 = arith.constant 0 : index
      %24 = vector.load %arg5[%c0_18, %c0_19] : memref<2x128xf32, #tpu.memory_space<vmem>>, vector<1x128xf32>
      %25 = vector.broadcast %24 : vector<1x128xf32> to vector<2x128xf32>
      %26 = arith.mulf %23, %25 : vector<2x128xf32>
      %c1_20 = arith.constant 1 : index
      %c0_21 = arith.constant 0 : index
      %27 = vector.load %arg5[%c1_20, %c0_21] : memref<2x128xf32, #tpu.memory_space<vmem>>, vector<1x128xf32>
      %28 = vector.broadcast %27 : vector<1x128xf32> to vector<2x128xf32>
      %29 = arith.addf %26, %28 : vector<2x128xf32>
      %cst_22 = arith.constant 0.000000e+00 : f32
      %30 = vector.broadcast %cst_22 : f32 to vector<2x128xf32>
      %31 = arith.maximumf %29, %30 : vector<2x128xf32>
      %32 = arith.truncf %31 : vector<2x128xf32> to vector<2x128xbf16>
      %c0_23 = arith.constant 0 : index
      %c0_24 = arith.constant 0 : index
      %33 = vector.load %arg6[%c0_23, %c0_24] : memref<128x128xbf16, #tpu.memory_space<vmem>>, vector<128x128xbf16>
      %cst_25 = arith.constant dense<0.000000e+00> : vector<2x128xf32>
      %34 = tpu.matmul %32, %33, %cst_25 {dimension_numbers = #tpu.dot_dimension_numbers<[1], [0], [0], [1], [0, 0, 1, 1], [], []>} : vector<2x128xbf16>, vector<128x128xbf16>, vector<2x128xf32> -> vector<2x128xf32>
      %c0_26 = arith.constant 0 : index
      %c0_27 = arith.constant 0 : index
      %35 = vector.load %arg7[%c0_26, %c0_27] : memref<1x128xf32, #tpu.memory_space<vmem>>, vector<1x128xf32>
      %36 = vector.broadcast %35 : vector<1x128xf32> to vector<2x128xf32>
      %37 = arith.addf %34, %36 : vector<2x128xf32>
      %cst_28 = arith.constant dense<0xFF800000> : vector<2xf32>
      %38 = vector.multi_reduction <maximumf>, %37, %cst_28 [1] : vector<2x128xf32> to vector<2xf32>
      %39 = vector.shape_cast %38 : vector<2xf32> to vector<2x1xf32>
      %40 = vector.broadcast %39 : vector<2x1xf32> to vector<2x128xf32>
      %41 = arith.subf %37, %40 : vector<2x128xf32>
      %42 = math.exp %41 : vector<2x128xf32>
      %cst_29 = arith.constant dense<0.000000e+00> : vector<2xf32>
      %43 = vector.multi_reduction <add>, %42, %cst_29 [1] : vector<2x128xf32> to vector<2xf32>
      %44 = vector.shape_cast %43 : vector<2xf32> to vector<2x1xf32>
      %45 = math.log %44 : vector<2x1xf32>
      %46 = arith.addf %45, %39 : vector<2x1xf32>
      %47 = vector.broadcast %46 : vector<2x1xf32> to vector<2x128xf32>
      %48 = arith.subf %37, %47 : vector<2x128xf32>
      %c0_30 = arith.constant 0 : index
      %c0_31 = arith.constant 0 : index
      %49 = vector.load %arg8[%c0_30, %c0_31] : memref<2x128xf32, #tpu.memory_space<vmem>>, vector<2x128xf32>
      tpu.vector_store %arg8[%c0_30, %c0_31], %48 {strides = array<i32>} : memref<2x128xf32, #tpu.memory_space<vmem>>, vector<2x128xf32>,
    } else {
    }
    return
  }
  func.func @transform_0(%arg0: i32) -> (i32, i32) {
    %c0_i32 = arith.constant 0 : i32
    %c0_i32_0 = arith.constant 0 : i32
    %c0_i32_1 = arith.constant 0 : i32
    return %c0_i32, %c0_i32_0 : i32, i32
  }
  func.func @transform_1(%arg0: i32) -> (i32, i32) {
    %c0_i32 = arith.constant 0 : i32
    %c0_i32_0 = arith.constant 0 : i32
    return %c0_i32, %arg0 : i32, i32
  }
  func.func @transform_2(%arg0: i32) -> (i32, i32) {
    %c0_i32 = arith.constant 0 : i32
    %c0_i32_0 = arith.constant 0 : i32
    return %c0_i32, %arg0 : i32, i32
  }
  func.func @transform_3(%arg0: i32) -> (i32, i32) {
    %c0_i32 = arith.constant 0 : i32
    %c0_i32_0 = arith.constant 0 : i32
    return %arg0, %c0_i32 : i32, i32
  }
  func.func @transform_4(%arg0: i32) -> (i32, i32) {
    %c0_i32 = arith.constant 0 : i32
    %c0_i32_0 = arith.constant 0 : i32
    %c0_i32_1 = arith.constant 0 : i32
    return %c0_i32, %c0_i32_0 : i32, i32
  }
  func.func @transform_5(%arg0: i32) -> (i32, i32) {
    %c0_i32 = arith.constant 0 : i32
    %c0_i32_0 = arith.constant 0 : i32
    %c0_i32_1 = arith.constant 0 : i32
    return %c0_i32, %c0_i32_0 : i32, i32
  }
  func.func @transform_6(%arg0: i32) -> (i32, i32) {
    %c0_i32 = arith.constant 0 : i32
    %c0_i32_0 = arith.constant 0 : i32
    %c0_i32_1 = arith.constant 0 : i32
    return %c0_i32, %c0_i32_0 : i32, i32
  }
  func.func @transform_7(%arg0: i32) -> (i32, i32) {
    %c0_i32 = arith.constant 0 : i32
    %c0_i32_0 = arith.constant 0 : i32
    %c0_i32_1 = arith.constant 0 : i32
    return %c0_i32, %c0_i32_0 : i32, i32
  }
}

</mosaic_0001>

<llo_original>
// kernel: discriminator_forward.1
$region0: #{discriminator_forward.1}
  #allocation0 [shape = 'u32[]', space=smem, size = 0x4, offset = 0x4, fixed_abs, tag = 'smem constant byte address 0x4 - core index']
  #allocation1 [shape = 'u32[144,128]{1,0:T(1,128)}', space=vmem, size = 0x12000, scoped, tag = 'internal scratch']
  #allocation2 [shape = 'f32[2,128]{1,0:T(2,128)}', space=vmem, size = 0x400, scoped, tag = 'scratch operand']
  %s0 = inlined_call_operand.vmem [shape: bf16[2,3200], index: 0, kind: input, shape index: {}]
  %s1 = inlined_call_operand.hbm [shape: bf16[3200,2048], index: 1, kind: input, shape index: {}]
  %s2 = inlined_call_operand.hbm [shape: f32[2,2048], index: 2, kind: input, shape index: {}]
  %s3 = inlined_call_operand.hbm [shape: bf16[2048,128], index: 3, kind: input, shape index: {}]
  %s4 = inlined_call_operand.hbm [shape: f32[2,128], index: 4, kind: input, shape index: {}]
  %s5 = inlined_call_operand.hbm [shape: bf16[128,128], index: 5, kind: input, shape index: {}]
  %s6 = inlined_call_operand.hbm [shape: f32[1,128], index: 6, kind: input, shape index: {}]
  %s7 = inlined_call_operand.hbm [shape: f32[2,128], index: 7, kind: output, shape index: {}]
  %s8 = sld [smem:[#allocation0]]
  $region93: #{discriminator_forward.1} parent=0
    _
  %s10 = ssub.s32 1, %s8
  %s11 = scalar_select 0, %s10, %s8
  $region1: #{discriminator_forward.1} parent=0
    #allocation3 [shape = 'u8[13107200]{0}', space=vmem, size = 0xc80000, scoped, tag = 'input window, operand 1']
    #allocation4 [shape = 's32[2]{0}', space=sflag, size = 0x8, scoped, tag = 'scoped memory for discriminator_forward.1']
    #allocation5 [shape = 's32[2]{0}', space=sflag, size = 0x8, scoped, tag = 'scoped memory for discriminator_forward.1']
    #allocation6 [shape = 'u8[16384]{0}', space=vmem, size = 0x4000, scoped, tag = 'input window, operand 2']
    #allocation7 [shape = 's32[2]{0}', space=sflag, size = 0x8, scoped, tag = 'scoped memory for discriminator_forward.1']
    #allocation8 [shape = 'u8[524288]{0}', space=vmem, size = 0x80000, scoped, tag = 'input window, operand 3']
    #allocation9 [shape = 'u8[1024]{0}', space=vmem, size = 0x400, scoped, tag = 'input window, operand 4, single buffered']
    #allocation10 [shape = 's32[1]{0}', space=sflag, size = 0x4, scoped, tag = 'scoped memory for discriminator_forward.1']
    #allocation11 [shape = 'u8[32768]{0}', space=vmem, size = 0x8000, scoped, tag = 'input window, operand 5, single buffered']
    #allocation12 [shape = 'u8[512]{0}', space=vmem, size = 0x400, scoped, tag = 'input window, operand 6, single buffered']
    #allocation13 [shape = 's32[1]{0}', space=sflag, size = 0x4, scoped, tag = 'scoped memory for discriminator_forward.1']
    #allocation14 [shape = 'u8[1024]{0}', space=vmem, size = 0x400, scoped, tag = 'output window, operand 0, single buffered']
    %12 = vsyncpa [#allocation4], 0
    %s13 = scalar_lea.sflag [#allocation4], 1
    %14 = vsyncpa %s13, 0
    %15 = vsyncpa [#allocation7], 0
    %s16 = scalar_lea.sflag [#allocation7], 1
    %17 = vsyncpa %s16, 0
    %18 = vsyncpa [#allocation10], 0
    %19 = vsyncpa [#allocation13], 0
    %20 = vsyncpa [#allocation5], 0
    loop: start=0, step=1, limit=4
    $region2: #{discriminator_forward.1} parent=1 // loop_pre_header
      _
    $region3: #{discriminator_forward.1} parent=1 // loop_header
      %s22 = sphi 0, %s26
      %p23 = scmp.ge.s32.totalorder %s22, 4
      %s30 = sphi 0, %s30
      %s32 = sphi 0, %s30
      %s33 = sphi 0, %s32
      %s47 = sphi 0, %s33
      %s53 = sphi 0, %s55
      %s56 = sphi 0, %s53
      %s57 = sphi 0, %s56
      %s73 = sphi 0, %s57
      %s79 = sphi 0, %s81
      %s82 = sphi 0, %s79
      %s83 = sphi 0, %s82
      %s99 = sphi 0, %s83
      %s105 = sphi 0, %s107
      %s108 = sphi 0, %s105
      %s109 = sphi 0, %s108
      %s125 = sphi 0, %s109
      %s129 = sphi 0, %s129
      %s131 = sphi 0, %s129
      %s132 = sphi 0, %s131
      %s146 = sphi 0, %s132
      %s150 = sphi 0, %s150
      %s152 = sphi 0, %s150
      %s153 = sphi 0, %s152
      %s167 = sphi 0, %s153
      %s171 = sphi 0, %s171
      %s173 = sphi 0, %s171
      %s174 = sphi 0, %s173
      %s188 = sphi 0, %s174
      %s192 = sphi 0, %s192
      %s194 = sphi 0, %s192
      %s195 = sphi 0, %s194
      %s209 = sphi 0, %s195
    $region4: #{discriminator_forward.1} parent=1 // loop_header_branch
      %25 = sbr.rel (%p23) target = $region8
    $region5: #{discriminator_forward.1} parent=1 // loop_body
      %s27 = ssub.s32 %s22, 1
      %s28 = ssub.s32 %s22, 2
      %s29 = sadd.s32 %s22, 1
      %s31 = sadd.s32 %s30, 1
      %p34 = scmp.eq.s32.totalorder %s22, 1
      %p35 = scmp.ne.s32.totalorder %s30, %s32
      %p36 = scmp.eq.s32.totalorder %s22, 0
      %p37 = por %p35, %p36
      %p38 = scmp.ne.s32.totalorder %s30, %s32
      %p39 = scmp.eq.s32.totalorder %s27, 1
      %p40 = por %p38, %p39
      %p41 = scmp.ne.s32.totalorder %s32, %s33
      %p42 = scmp.eq.s32.totalorder %s27, 0
      %p43 = por %p41, %p42
      %p44 = scmp.ne.s32.totalorder %s32, %s33
      %p45 = scmp.eq.s32.totalorder %s28, 1
      %p46 = por %p44, %p45
      %p48 = scmp.ne.s32.totalorder %s33, %s47
      %p49 = scmp.eq.s32.totalorder %s28, 0
      %p50 = por %p48, %p49
      %s51 = ssub.s32 %s22, %s29
      %p52 = scmp.eq.s32.totalorder %s51, 0
      %s54 = sadd.s32 %s53, 1
      %s55 = scalar_select %p52, %s53, %s54
      %p58 = pneg %p52
      %p59 = scmp.eq.s32.totalorder %s22, 1
      %p60 = por %p58, %p59
      %p61 = scmp.ne.s32.totalorder %s53, %s56
      %p62 = scmp.eq.s32.totalorder %s22, 0
      %p63 = por %p61, %p62
      %p64 = scmp.ne.s32.totalorder %s53, %s56
      %p65 = scmp.eq.s32.totalorder %s27, 1
      %p66 = por %p64, %p65
      %p67 = scmp.ne.s32.totalorder %s56, %s57
      %p68 = scmp.eq.s32.totalorder %s27, 0
      %p69 = por %p67, %p68
      %p70 = scmp.ne.s32.totalorder %s56, %s57
      %p71 = scmp.eq.s32.totalorder %s28, 1
      %p72 = por %p70, %p71
      %p74 = scmp.ne.s32.totalorder %s57, %s73
      %p75 = scmp.eq.s32.totalorder %s28, 0
      %p76 = por %p74, %p75
      %s77 = ssub.s32 %s22, %s29
      %p78 = scmp.eq.s32.totalorder %s77, 0
      %s80 = sadd.s32 %s79, 1
      %s81 = scalar_select %p78, %s79, %s80
      %p84 = pneg %p78
      %p85 = scmp.eq.s32.totalorder %s22, 1
      %p86 = por %p84, %p85
      %p87 = scmp.ne.s32.totalorder %s79, %s82
      %p88 = scmp.eq.s32.totalorder %s22, 0
      %p89 = por %p87, %p88
      %p90 = scmp.ne.s32.totalorder %s79, %s82
      %p91 = scmp.eq.s32.totalorder %s27, 1
      %p92 = por %p90, %p91
      %p93 = scmp.ne.s32.totalorder %s82, %s83
      %p94 = scmp.eq.s32.totalorder %s27, 0
      %p95 = por %p93, %p94
      %p96 = scmp.ne.s32.totalorder %s82, %s83
      %p97 = scmp.eq.s32.totalorder %s28, 1
      %p98 = por %p96, %p97
      %p100 = scmp.ne.s32.totalorder %s83, %s99
      %p101 = scmp.eq.s32.totalorder %s28, 0
      %p102 = por %p100, %p101
      %s103 = ssub.s32 %s22, %s29
      %p104 = scmp.eq.s32.totalorder %s103, 0
      %s106 = sadd.s32 %s105, 1
      %s107 = scalar_select %p104, %s105, %s106
      %p110 = pneg %p104
      %p111 = scmp.eq.s32.totalorder %s22, 1
      %p112 = por %p110, %p111
      %p113 = scmp.ne.s32.totalorder %s105, %s108
      %p114 = scmp.eq.s32.totalorder %s22, 0
      %p115 = por %p113, %p114
      %p116 = scmp.ne.s32.totalorder %s105, %s108
      %p117 = scmp.eq.s32.totalorder %s27, 1
      %p118 = por %p116, %p117
      %p119 = scmp.ne.s32.totalorder %s108, %s109
      %p120 = scmp.eq.s32.totalorder %s27, 0
      %p121 = por %p119, %p120
      %p122 = scmp.ne.s32.totalorder %s108, %s109
      %p123 = scmp.eq.s32.totalorder %s28, 1
      %p124 = por %p122, %p123
      %p126 = scmp.ne.s32.totalorder %s109, %s125
      %p127 = scmp.eq.s32.totalorder %s28, 0
      %p128 = por %p126, %p127
      %s130 = sadd.s32 %s129, 1
      %p133 = scmp.eq.s32.totalorder %s22, 1
      %p134 = scmp.ne.s32.totalorder %s129, %s131
      %p135 = scmp.eq.s32.totalorder %s22, 0
      %p136 = por %p134, %p135
      %p137 = scmp.ne.s32.totalorder %s129, %s131
      %p138 = scmp.eq.s32.totalorder %s27, 1
      %p139 = por %p137, %p138
      %p140 = scmp.ne.s32.totalorder %s131, %s132
      %p141 = scmp.eq.s32.totalorder %s27, 0
      %p142 = por %p140, %p141
      %p143 = scmp.ne.s32.totalorder %s131, %s132
      %p144 = scmp.eq.s32.totalorder %s28, 1
      %p145 = por %p143, %p144
      %p147 = scmp.ne.s32.totalorder %s132, %s146
      %p148 = scmp.eq.s32.totalorder %s28, 0
      %p149 = por %p147, %p148
      %s151 = sadd.s32 %s150, 1
      %p154 = scmp.eq.s32.totalorder %s22, 1
      %p155 = scmp.ne.s32.totalorder %s150, %s152
      %p156 = scmp.eq.s32.totalorder %s22, 0
      %p157 = por %p155, %p156
      %p158 = scmp.ne.s32.totalorder %s150, %s152
      %p159 = scmp.eq.s32.totalorder %s27, 1
      %p160 = por %p158, %p159
      %p161 = scmp.ne.s32.totalorder %s152, %s153
      %p162 = scmp.eq.s32.totalorder %s27, 0
      %p163 = por %p161, %p162
      %p164 = scmp.ne.s32.totalorder %s152, %s153
      %p165 = scmp.eq.s32.totalorder %s28, 1
      %p166 = por %p164, %p165
      %p168 = scmp.ne.s32.totalorder %s153, %s167
      %p169 = scmp.eq.s32.totalorder %s28, 0
      %p170 = por %p168, %p169
      %s172 = sadd.s32 %s171, 1
      %p175 = scmp.eq.s32.totalorder %s22, 1
      %p176 = scmp.ne.s32.totalorder %s171, %s173
      %p177 = scmp.eq.s32.totalorder %s22, 0
      %p178 = por %p176, %p177
      %p179 = scmp.ne.s32.totalorder %s171, %s173
      %p180 = scmp.eq.s32.totalorder %s27, 1
      %p181 = por %p179, %p180
      %p182 = scmp.ne.s32.totalorder %s173, %s174
      %p183 = scmp.eq.s32.totalorder %s27, 0
      %p184 = por %p182, %p183
      %p185 = scmp.ne.s32.totalorder %s173, %s174
      %p186 = scmp.eq.s32.totalorder %s28, 1
      %p187 = por %p185, %p186
      %p189 = scmp.ne.s32.totalorder %s174, %s188
      %p190 = scmp.eq.s32.totalorder %s28, 0
      %p191 = por %p189, %p190
      %s193 = sadd.s32 %s192, 1
      %p196 = scmp.eq.s32.totalorder %s22, 1
      %p197 = scmp.ne.s32.totalorder %s192, %s194
      %p198 = scmp.eq.s32.totalorder %s22, 0
      %p199 = por %p197, %p198
      %p200 = scmp.ne.s32.totalorder %s192, %s194
      %p201 = scmp.eq.s32.totalorder %s27, 1
      %p202 = por %p200, %p201
      %p203 = scmp.ne.s32.totalorder %s194, %s195
      %p204 = scmp.eq.s32.totalorder %s27, 0
      %p205 = por %p203, %p204
      %p206 = scmp.ne.s32.totalorder %s194, %s195
      %p207 = scmp.eq.s32.totalorder %s28, 1
      %p208 = por %p206, %p207
      %p210 = scmp.ne.s32.totalorder %s195, %s209
      %p211 = scmp.eq.s32.totalorder %s28, 0
      %p212 = por %p210, %p211
      %p213 = scmp.le.s32.totalorder 1, %s22
      %p214 = scmp.lt.s32.totalorder %s22, 3
      %p215 = pnand %p213, %p214
      %p216 = pneg %p215
      // Predicated region
      $region9: #{discriminator_forward.1} parent=5 // pred_check
        _
      $region10: #{discriminator_forward.1} parent=5 // pred_check_branch
        %218 = sbr.rel (%p215) target = $region12
      $region11: #{discriminator_forward.1} parent=5 // pred_region
        %s219 = ssub.s32 %s22, 1
        // Predicated region
        $region13: #{discriminator_forward.1} parent=11 // pred_check
          %p220 = pneg %p43
        $region14: #{discriminator_forward.1} parent=11 // pred_check_branch
          %222 = sbr.rel (%p220) target = $region16
        $region15: #{discriminator_forward.1} parent=11 // pred_region
          _
        $region16: #{discriminator_forward.1} parent=11 // pred_fallthru
          _
        // Predicated region
        $region17: #{discriminator_forward.1} parent=11 // pred_check
          %p223 = pneg %p142
        $region18: #{discriminator_forward.1} parent=11 // pred_check_branch
          %225 = sbr.rel (%p223) target = $region20
        $region19: #{discriminator_forward.1} parent=11 // pred_region
          %s227 = ssub.s32 32, 32
          %228 = vsyncadd [#allocation10], %s227
          %s230 = sshll.u32 [#allocation9], 4
          %s231 = int_to_ptr.vmem [resolvable:$true] %s230
          %233 = dma.hbm_to_vmem [thread:$0]  %s4, 32, %s231, [#allocation10]
        $region20: #{discriminator_forward.1} parent=11 // pred_fallthru
          _
        // Predicated region
        $region21: #{discriminator_forward.1} parent=11 // pred_check
          %p234 = pneg %p163
        $region22: #{discriminator_forward.1} parent=11 // pred_check_branch
          %236 = sbr.rel (%p234) target = $region24
        $region23: #{discriminator_forward.1} parent=11 // pred_region
          %s238 = ssub.s32 1024, 1024
          %239 = vsyncadd [#allocation10], %s238
          %s240 = sshll.u32 [#allocation11], 4
          %s241 = int_to_ptr.vmem [resolvable:$true] %s240
          %246 = dma.hbm_to_vmem [thread:$0]  %s5, 1024, %s241, [#allocation10], 64, 64, 4
        $region24: #{discriminator_forward.1} parent=11 // pred_fallthru
          _
        // Predicated region
        $region25: #{discriminator_forward.1} parent=11 // pred_check
          %p247 = pneg %p184
        $region26: #{discriminator_forward.1} parent=11 // pred_check_branch
          %249 = sbr.rel (%p247) target = $region28
        $region27: #{discriminator_forward.1} parent=11 // pred_region
          %s251 = ssub.s32 16, 16
          %252 = vsyncadd [#allocation13], %s251
          %s254 = sshll.u32 [#allocation12], 4
          %s255 = int_to_ptr.vmem [resolvable:$true] %s254
          %257 = dma.hbm_to_vmem [thread:$0]  %s6, 16, %s255, [#allocation13]
        $region28: #{discriminator_forward.1} parent=11 // pred_fallthru
          _
      $region12: #{discriminator_forward.1} parent=5 // pred_fallthru
        _
      %p258 = scmp.lt.s32.totalorder %s22, 2
      // Predicated region
      $region29: #{discriminator_forward.1} parent=5 // pred_check
        %p259 = pneg %p258
      $region30: #{discriminator_forward.1} parent=5 // pred_check_branch
        %261 = sbr.rel (%p259) target = $region32
      $region31: #{discriminator_forward.1} parent=5 // pred_region
        // Predicated region
        $region33: #{discriminator_forward.1} parent=31 // pred_check
          %p262 = pneg %p63
        $region34: #{discriminator_forward.1} parent=31 // pred_check_branch
          %264 = sbr.rel (%p262) target = $region36
        $region35: #{discriminator_forward.1} parent=31 // pred_region
          %s265 = sand.u32 %s53, 1
          %s266 = scalar_lea.sflag [#allocation4], %s265
          %s267 = sand.u32 %s53, 1
          %s268 = smul.addr %s267, 12800
          %s269 = scalar_lea.vmem [#allocation3], %s268
          %s270 = smul.u32 8, %s22
          %s272 = ssub.s32 204800, 204800
          %273 = vsyncadd %s266, %s272
          %s274 = smul.addr %s270, 64
          %s275 = scalar_lea.hbm %s1, %s274
          %s276 = sshll.u32 %s269, 4
          %s277 = int_to_ptr.vmem [resolvable:$true] %s276
          %282 = dma.hbm_to_vmem [thread:$0]  %s275, 204800, %s277, %s266, 1024, 512, 32
        $region36: #{discriminator_forward.1} parent=31 // pred_fallthru
          _
        // Predicated region
        $region37: #{discriminator_forward.1} parent=31 // pred_check
          %p283 = pneg %p89
        $region38: #{discriminator_forward.1} parent=31 // pred_check_branch
          %285 = sbr.rel (%p283) target = $region40
        $region39: #{discriminator_forward.1} parent=31 // pred_region
          %s286 = sand.u32 %s22, 1
          %s287 = scalar_lea.sflag [#allocation7], %s286
          %s288 = sand.u32 %s79, 1
          %s289 = smul.addr %s288, 16
          %s290 = scalar_lea.vmem [#allocation6], %s289
          %s291 = smul.u32 8, %s22
          %s293 = ssub.s32 256, 256
          %294 = vsyncadd %s287, %s293
          %s295 = smul.addr %s291, 32
          %s296 = scalar_lea.hbm %s2, %s295
          %s298 = sshll.u32 %s290, 4
          %s299 = int_to_ptr.vmem [resolvable:$true] %s298
          %301 = dma.hbm_to_vmem [thread:$0]  %s296, 256, %s299, %s287
        $region40: #{discriminator_forward.1} parent=31 // pred_fallthru
          _
        // Predicated region
        $region41: #{discriminator_forward.1} parent=31 // pred_check
          %p302 = pneg %p115
        $region42: #{discriminator_forward.1} parent=31 // pred_check_branch
          %304 = sbr.rel (%p302) target = $region44
        $region43: #{discriminator_forward.1} parent=31 // pred_region
          %s305 = sand.u32 %s22, 1
          %s306 = scalar_lea.sflag [#allocation7], %s305
          %s307 = sand.u32 %s105, 1
          %s308 = smul.addr %s307, 512
          %s309 = scalar_lea.vmem [#allocation8], %s308
          %s310 = smul.u32 128, %s22
          %s312 = ssub.s32 8192, 8192
          %313 = vsyncadd %s306, %s312
          %s314 = smul.addr %s310, 64
          %s315 = scalar_lea.hbm %s3, %s314
          %s316 = sshll.u32 %s309, 4
          %s317 = int_to_ptr.vmem [resolvable:$true] %s316
          %322 = dma.hbm_to_vmem [thread:$0]  %s315, 8192, %s317, %s306, 64, 64, 4
        $region44: #{discriminator_forward.1} parent=31 // pred_fallthru
          _
      $region32: #{discriminator_forward.1} parent=5 // pred_fallthru
        _
      %p323 = scmp.le.s32.totalorder 1, %s22
      %p324 = scmp.lt.s32.totalorder %s22, 3
      %p325 = pnand %p323, %p324
      %p326 = pneg %p325
      // Predicated region
      $region45: #{discriminator_forward.1} parent=5 // pred_check
        _
      $region46: #{discriminator_forward.1} parent=5 // pred_check_branch
        %328 = sbr.rel (%p325) target = $region48
      $region47: #{discriminator_forward.1} parent=5 // pred_region
        %s329 = ssub.s32 %s22, 1
        %s330 = sand.u32 %s56, 1
        %s331 = scalar_lea.sflag [#allocation4], %s330
        %s332 = sand.u32 %s56, 1
        %s333 = smul.addr %s332, 12800
        %s334 = scalar_lea.vmem [#allocation3], %s333
        // Predicated region
        $region49: #{discriminator_forward.1} parent=47 // pred_check
          %p335 = pneg %p69
        $region50: #{discriminator_forward.1} parent=47 // pred_check_branch
          %337 = sbr.rel (%p335) target = $region52
        $region51: #{discriminator_forward.1} parent=47 // pred_region
          %338 = dma.done %s331, 204800
        $region52: #{discriminator_forward.1} parent=47 // pred_fallthru
          _
        %s339 = sand.u32 %s27, 1
        %s340 = scalar_lea.sflag [#allocation7], %s339
        %s341 = sand.u32 %s82, 1
        %s342 = smul.addr %s341, 16
        %s343 = scalar_lea.vmem [#allocation6], %s342
        // Predicated region
        $region53: #{discriminator_forward.1} parent=47 // pred_check
          %p344 = pneg %p95
        $region54: #{discriminator_forward.1} parent=47 // pred_check_branch
          %346 = sbr.rel (%p344) target = $region56
        $region55: #{discriminator_forward.1} parent=47 // pred_region
          %347 = dma.done %s340, 256
        $region56: #{discriminator_forward.1} parent=47 // pred_fallthru
          _
        %s348 = sand.u32 %s27, 1
        %s349 = scalar_lea.sflag [#allocation7], %s348
        %s350 = sand.u32 %s108, 1
        %s351 = smul.addr %s350, 512
        %s352 = scalar_lea.vmem [#allocation8], %s351
        // Predicated region
        $region57: #{discriminator_forward.1} parent=47 // pred_check
          %p353 = pneg %p121
        $region58: #{discriminator_forward.1} parent=47 // pred_check_branch
          %355 = sbr.rel (%p353) target = $region60
        $region59: #{discriminator_forward.1} parent=47 // pred_region
          %356 = dma.done %s349, 8192
        $region60: #{discriminator_forward.1} parent=47 // pred_fallthru
          _
        // Predicated region
        $region61: #{discriminator_forward.1} parent=47 // pred_check
          %p357 = pneg %p142
        $region62: #{discriminator_forward.1} parent=47 // pred_check_branch
          %359 = sbr.rel (%p357) target = $region64
        $region63: #{discriminator_forward.1} parent=47 // pred_region
          %360 = dma.done [#allocation10], 32
        $region64: #{discriminator_forward.1} parent=47 // pred_fallthru
          _
        // Predicated region
        $region65: #{discriminator_forward.1} parent=47 // pred_check
          %p361 = pneg %p163
        $region66: #{discriminator_forward.1} parent=47 // pred_check_branch
          %363 = sbr.rel (%p361) target = $region68
        $region67: #{discriminator_forward.1} parent=47 // pred_region
          %364 = dma.done [#allocation10], 1024
        $region68: #{discriminator_forward.1} parent=47 // pred_fallthru
          _
        // Predicated region
        $region69: #{discriminator_forward.1} parent=47 // pred_check
          %p365 = pneg %p184
        $region70: #{discriminator_forward.1} parent=47 // pred_check_branch
          %367 = sbr.rel (%p365) target = $region72
        $region71: #{discriminator_forward.1} parent=47 // pred_region
          %368 = dma.done [#allocation13], 16
        $region72: #{discriminator_forward.1} parent=47 // pred_fallthru
          _
        %p369 = pneg %p43
        %p370 = pneg %p40
        %s371 = sand.u32 %s56, 1
        %s372 = scalar_lea.sflag [#allocation4], %s371
        %s373 = sand.u32 %s56, 1
        %s374 = smul.addr %s373, 12800
        %s375 = scalar_lea.vmem [#allocation3], %s374
        %p376 = pneg %p69
        %p377 = pneg %p66
        %s378 = sand.u32 %s27, 1
        %s379 = scalar_lea.sflag [#allocation7], %s378
        %s380 = sand.u32 %s82, 1
        %s381 = smul.addr %s380, 16
        %s382 = scalar_lea.vmem [#allocation6], %s381
        %p383 = pneg %p95
        %p384 = pneg %p92
        %s385 = sand.u32 %s27, 1
        %s386 = scalar_lea.sflag [#allocation7], %s385
        %s387 = sand.u32 %s108, 1
        %s388 = smul.addr %s387, 512
        %s389 = scalar_lea.vmem [#allocation8], %s388
        %p390 = pneg %p121
        %p391 = pneg %p118
        %p392 = pneg %p142
        %p393 = pneg %p139
        %p394 = pneg %p163
        %p395 = pneg %p160
        %p396 = pneg %p184
        %p397 = pneg %p181
        %p398 = pneg %p205
        %p399 = pneg %p202
        %s400 = smul.u32 8, %s27
        %s401 = smul.u32 8, %s27
        %s402 = smul.u32 128, %s27
        %p404 = scmp.eq.s32.totalorder %s27, 0
        // Predicated region
        $region73: #{discriminator_forward.1} parent=47 // pred_check
          %p405 = pneg %p404
        $region74: #{discriminator_forward.1} parent=47 // pred_check_branch
          %407 = sbr.rel (%p405) target = $region76
        $region75: #{discriminator_forward.1} parent=47 // pred_region
          %408 = vst [vmem:[#allocation2] sm:$0x3] 0.0
        $region76: #{discriminator_forward.1} parent=47 // pred_fallthru
          _
        %v409 = vld [vmem:[%s0] sm:$0xff]
        %v410 = vld [vmem:[%s0 + $0x8] sm:$0xff]
        %v411 = vld [vmem:[%s0 + $0x10] sm:$0xff]
        %v412 = vld [vmem:[%s0 + $0x18] sm:$0x1]
        %v413 = vld [vmem:[%s334] sm:$0xff]
        %v414 = vld [vmem:[%s334 + $0x8] sm:$0xff]
        %v415 = vld [vmem:[%s334 + $0x10] sm:$0xff]
        %v416 = vld [vmem:[%s334 + $0x18] sm:$0xff]
        %v417 = vld [vmem:[%s334 + $0x20] sm:$0xff]
        %v418 = vld [vmem:[%s334 + $0x28] sm:$0xff]
        %v419 = vld [vmem:[%s334 + $0x30] sm:$0xff]
        %v420 = vld [vmem:[%s334 + $0x38] sm:$0xff]
        %v421 = vld [vmem:[%s334 + $0x40] sm:$0xff]
        %v422 = vld [vmem:[%s334 + $0x48] sm:$0xff]
        %v423 = vld [vmem:[%s334 + $0x50] sm:$0xff]
        %v424 = vld [vmem:[%s334 + $0x58] sm:$0xff]
        %v425 = vld [vmem:[%s334 + $0x60] sm:$0xff]
        %v426 = vld [vmem:[%s334 + $0x68] sm:$0xff]
        %v427 = vld [vmem:[%s334 + $0x70] sm:$0xff]
        %v428 = vld [vmem:[%s334 + $0x78] sm:$0xff]
        %v429 = vld [vmem:[%s334 + $0x80] sm:$0xff]
        %v430 = vld [vmem:[%s334 + $0x88] sm:$0xff]
        %v431 = vld [vmem:[%s334 + $0x90] sm:$0xff]
        %v432 = vld [vmem:[%s334 + $0x98] sm:$0xff]
        %v433 = vld [vmem:[%s334 + $0xa0] sm:$0xff]
        %v434 = vld [vmem:[%s334 + $0xa8] sm:$0xff]
        %v435 = vld [vmem:[%s334 + $0xb0] sm:$0xff]
        %v436 = vld [vmem:[%s334 + $0xb8] sm:$0xff]
        %v437 = vld [vmem:[%s334 + $0xc0] sm:$0xff]
        %v438 = vld [vmem:[%s334 + $0xc8] sm:$0xff]
        %v439 = vld [vmem:[%s334 + $0xd0] sm:$0xff]
        %v440 = vld [vmem:[%s334 + $0xd8] sm:$0xff]
        %v441 = vld [vmem:[%s334 + $0xe0] sm:$0xff]
        %v442 = vld [vmem:[%s334 + $0xe8] sm:$0xff]
        %v443 = vld [vmem:[%s334 + $0xf0] sm:$0xff]
        %v444 = vld [vmem:[%s334 + $0xf8] sm:$0xff]
        %v445 = vld [vmem:[%s334 + $0x100] sm:$0xff]
        %v446 = vld [vmem:[%s334 + $0x108] sm:$0xff]
        %v447 = vld [vmem:[%s334 + $0x110] sm:$0xff]
        %v448 = vld [vmem:[%s334 + $0x118] sm:$0xff]
        %v449 = vld [vmem:[%s334 + $0x120] sm:$0xff]
        %v450 = vld [vmem:[%s334 + $0x128] sm:$0xff]
        %v451 = vld [vmem:[%s334 + $0x130] sm:$0xff]
        %v452 = vld [vmem:[%s334 + $0x138] sm:$0xff]
        %v453 = vld [vmem:[%s334 + $0x140] sm:$0xff]
        %v454 = vld [vmem:[%s334 + $0x148] sm:$0xff]
        %v455 = vld [vmem:[%s334 + $0x150] sm:$0xff]
        %v456 = vld [vmem:[%s334 + $0x158] sm:$0xff]
        %v457 = vld [vmem:[%s334 + $0x160] sm:$0xff]
        %v458 = vld [vmem:[%s334 + $0x168] sm:$0xff]
        %v459 = vld [vmem:[%s334 + $0x170] sm:$0xff]
        %v460 = vld [vmem:[%s334 + $0x178] sm:$0xff]
        %v461 = vld [vmem:[%s334 + $0x180] sm:$0xff]
        %v462 = vld [vmem:[%s334 + $0x188] sm:$0xff]
        %v463 = vld [vmem:[%s334 + $0x190] sm:$0xff]
        %v464 = vld [vmem:[%s334 + $0x198] sm:$0xff]
        %v465 = vld [vmem:[%s334 + $0x1a0] sm:$0xff]
        %v466 = vld [vmem:[%s334 + $0x1a8] sm:$0xff]
        %v467 = vld [vmem:[%s334 + $0x1b0] sm:$0xff]
        %v468 = vld [vmem:[%s334 + $0x1b8] sm:$0xff]
        %v469 = vld [vmem:[%s334 + $0x1c0] sm:$0xff]
        %v470 = vld [vmem:[%s334 + $0x1c8] sm:$0xff]
        %v471 = vld [vmem:[%s334 + $0x1d0] sm:$0xff]
        %v472 = vld [vmem:[%s334 + $0x1d8] sm:$0xff]
        %v473 = vld [vmem:[%s334 + $0x1e0] sm:$0xff]
        %v474 = vld [vmem:[%s334 + $0x1e8] sm:$0xff]
        %v475 = vld [vmem:[%s334 + $0x1f0] sm:$0xff]
        %v476 = vld [vmem:[%s334 + $0x1f8] sm:$0xff]
        %v477 = vld [vmem:[%s334 + $0x200] sm:$0xff]
        %v478 = vld [vmem:[%s334 + $0x208] sm:$0xff]
        %v479 = vld [vmem:[%s334 + $0x210] sm:$0xff]
        %v480 = vld [vmem:[%s334 + $0x218] sm:$0xff]
        %v481 = vld [vmem:[%s334 + $0x220] sm:$0xff]
        %v482 = vld [vmem:[%s334 + $0x228] sm:$0xff]
        %v483 = vld [vmem:[%s334 + $0x230] sm:$0xff]
        %v484 = vld [vmem:[%s334 + $0x238] sm:$0xff]
        %v485 = vld [vmem:[%s334 + $0x240] sm:$0xff]
        %v486 = vld [vmem:[%s334 + $0x248] sm:$0xff]
        %v487 = vld [vmem:[%s334 + $0x250] sm:$0xff]
        %v488 = vld [vmem:[%s334 + $0x258] sm:$0xff]
        %v489 = vld [vmem:[%s334 + $0x260] sm:$0xff]
        %v490 = vld [vmem:[%s334 + $0x268] sm:$0xff]
        %v491 = vld [vmem:[%s334 + $0x270] sm:$0xff]
        %v492 = vld [vmem:[%s334 + $0x278] sm:$0xff]
        %v493 = vld [vmem:[%s334 + $0x280] sm:$0xff]
        %v494 = vld [vmem:[%s334 + $0x288] sm:$0xff]
        %v495 = vld [vmem:[%s334 + $0x290] sm:$0xff]
        %v496 = vld [vmem:[%s334 + $0x298] sm:$0xff]
        %v497 = vld [vmem:[%s334 + $0x2a0] sm:$0xff]
        %v498 = vld [vmem:[%s334 + $0x2a8] sm:$0xff]
        %v499 = vld [vmem:[%s334 + $0x2b0] sm:$0xff]
        %v500 = vld [vmem:[%s334 + $0x2b8] sm:$0xff]
        %v501 = vld [vmem:[%s334 + $0x2c0] sm:$0xff]
        %v502 = vld [vmem:[%s334 + $0x2c8] sm:$0xff]
        %v503 = vld [vmem:[%s334 + $0x2d0] sm:$0xff]
        %v504 = vld [vmem:[%s334 + $0x2d8] sm:$0xff]
        %v505 = vld [vmem:[%s334 + $0x2e0] sm:$0xff]
        %v506 = vld [vmem:[%s334 + $0x2e8] sm:$0xff]
        %v507 = vld [vmem:[%s334 + $0x2f0] sm:$0xff]
        %v508 = vld [vmem:[%s334 + $0x2f8] sm:$0xff]
        %v509 = vld [vmem:[%s334 + $0x300] sm:$0xff]
        %v510 = vld [vmem:[%s334 + $0x308] sm:$0xff]
        %v511 = vld [vmem:[%s334 + $0x310] sm:$0xff]
        %v512 = vld [vmem:[%s334 + $0x318] sm:$0xff]
        %v513 = vld [vmem:[%s334 + $0x320] sm:$0xff]
        %v514 = vld [vmem:[%s334 + $0x328] sm:$0xff]
        %v515 = vld [vmem:[%s334 + $0x330] sm:$0xff]
        %v516 = vld [vmem:[%s334 + $0x338] sm:$0xff]
        %v517 = vld [vmem:[%s334 + $0x340] sm:$0xff]
        %v518 = vld [vmem:[%s334 + $0x348] sm:$0xff]
        %v519 = vld [vmem:[%s334 + $0x350] sm:$0xff]
        %v520 = vld [vmem:[%s334 + $0x358] sm:$0xff]
        %v521 = vld [vmem:[%s334 + $0x360] sm:$0xff]
        %v522 = vld [vmem:[%s334 + $0x368] sm:$0xff]
        %v523 = vld [vmem:[%s334 + $0x370] sm:$0xff]
        %v524 = vld [vmem:[%s334 + $0x378] sm:$0xff]
        %v525 = vld [vmem:[%s334 + $0x380] sm:$0xff]
        %v526 = vld [vmem:[%s334 + $0x388] sm:$0xff]
        %v527 = vld [vmem:[%s334 + $0x390] sm:$0xff]
        %v528 = vld [vmem:[%s334 + $0x398] sm:$0xff]
        %v529 = vld [vmem:[%s334 + $0x3a0] sm:$0xff]
        %v530 = vld [vmem:[%s334 + $0x3a8] sm:$0xff]
        %v531 = vld [vmem:[%s334 + $0x3b0] sm:$0xff]
        %v532 = vld [vmem:[%s334 + $0x3b8] sm:$0xff]
        %v533 = vld [vmem:[%s334 + $0x3c0] sm:$0xff]
        %v534 = vld [vmem:[%s334 + $0x3c8] sm:$0xff]
        %v535 = vld [vmem:[%s334 + $0x3d0] sm:$0xff]
        %v536 = vld [vmem:[%s334 + $0x3d8] sm:$0xff]
        %v537 = vld [vmem:[%s334 + $0x3e0] sm:$0xff]
        %v538 = vld [vmem:[%s334 + $0x3e8] sm:$0xff]
        %v539 = vld [vmem:[%s334 + $0x3f0] sm:$0xff]
        %v540 = vld [vmem:[%s334 + $0x3f8] sm:$0xff]
        %v541 = vld [vmem:[%s334 + $0x400] sm:$0xff]
        %v542 = vld [vmem:[%s334 + $0x408] sm:$0xff]
        %v543 = vld [vmem:[%s334 + $0x410] sm:$0xff]
        %v544 = vld [vmem:[%s334 + $0x418] sm:$0xff]
        %v545 = vld [vmem:[%s334 + $0x420] sm:$0xff]
        %v546 = vld [vmem:[%s334 + $0x428] sm:$0xff]
        %v547 = vld [vmem:[%s334 + $0x430] sm:$0xff]
        %v548 = vld [vmem:[%s334 + $0x438] sm:$0xff]
        %v549 = vld [vmem:[%s334 + $0x440] sm:$0xff]
        %v550 = vld [vmem:[%s334 + $0x448] sm:$0xff]
        %v551 = vld [vmem:[%s334 + $0x450] sm:$0xff]
        %v552 = vld [vmem:[%s334 + $0x458] sm:$0xff]
        %v553 = vld [vmem:[%s334 + $0x460] sm:$0xff]
        %v554 = vld [vmem:[%s334 + $0x468] sm:$0xff]
        %v555 = vld [vmem:[%s334 + $0x470] sm:$0xff]
        %v556 = vld [vmem:[%s334 + $0x478] sm:$0xff]
        %v557 = vld [vmem:[%s334 + $0x480] sm:$0xff]
        %v558 = vld [vmem:[%s334 + $0x488] sm:$0xff]
        %v559 = vld [vmem:[%s334 + $0x490] sm:$0xff]
        %v560 = vld [vmem:[%s334 + $0x498] sm:$0xff]
        %v561 = vld [vmem:[%s334 + $0x4a0] sm:$0xff]
        %v562 = vld [vmem:[%s334 + $0x4a8] sm:$0xff]
        %v563 = vld [vmem:[%s334 + $0x4b0] sm:$0xff]
        %v564 = vld [vmem:[%s334 + $0x4b8] sm:$0xff]
        %v565 = vld [vmem:[%s334 + $0x4c0] sm:$0xff]
        %v566 = vld [vmem:[%s334 + $0x4c8] sm:$0xff]
        %v567 = vld [vmem:[%s334 + $0x4d0] sm:$0xff]
        %v568 = vld [vmem:[%s334 + $0x4d8] sm:$0xff]
        %v569 = vld [vmem:[%s334 + $0x4e0] sm:$0xff]
        %v570 = vld [vmem:[%s334 + $0x4e8] sm:$0xff]
        %v571 = vld [vmem:[%s334 + $0x4f0] sm:$0xff]
        %v572 = vld [vmem:[%s334 + $0x4f8] sm:$0xff]
        %v573 = vld [vmem:[%s334 + $0x500] sm:$0xff]
        %v574 = vld [vmem:[%s334 + $0x508] sm:$0xff]
        %v575 = vld [vmem:[%s334 + $0x510] sm:$0xff]
        %v576 = vld [vmem:[%s334 + $0x518] sm:$0xff]
        %v577 = vld [vmem:[%s334 + $0x520] sm:$0xff]
        %v578 = vld [vmem:[%s334 + $0x528] sm:$0xff]
        %v579 = vld [vmem:[%s334 + $0x530] sm:$0xff]
        %v580 = vld [vmem:[%s334 + $0x538] sm:$0xff]
        %v581 = vld [vmem:[%s334 + $0x540] sm:$0xff]
        %v582 = vld [vmem:[%s334 + $0x548] sm:$0xff]
        %v583 = vld [vmem:[%s334 + $0x550] sm:$0xff]
        %v584 = vld [vmem:[%s334 + $0x558] sm:$0xff]
        %v585 = vld [vmem:[%s334 + $0x560] sm:$0xff]
        %v586 = vld [vmem:[%s334 + $0x568] sm:$0xff]
        %v587 = vld [vmem:[%s334 + $0x570] sm:$0xff]
        %v588 = vld [vmem:[%s334 + $0x578] sm:$0xff]
        %v589 = vld [vmem:[%s334 + $0x580] sm:$0xff]
        %v590 = vld [vmem:[%s334 + $0x588] sm:$0xff]
        %v591 = vld [vmem:[%s334 + $0x590] sm:$0xff]
        %v592 = vld [vmem:[%s334 + $0x598] sm:$0xff]
        %v593 = vld [vmem:[%s334 + $0x5a0] sm:$0xff]
        %v594 = vld [vmem:[%s334 + $0x5a8] sm:$0xff]
        %v595 = vld [vmem:[%s334 + $0x5b0] sm:$0xff]
        %v596 = vld [vmem:[%s334 + $0x5b8] sm:$0xff]
        %v597 = vld [vmem:[%s334 + $0x5c0] sm:$0xff]
        %v598 = vld [vmem:[%s334 + $0x5c8] sm:$0xff]
        %v599 = vld [vmem:[%s334 + $0x5d0] sm:$0xff]
        %v600 = vld [vmem:[%s334 + $0x5d8] sm:$0xff]
        %v601 = vld [vmem:[%s334 + $0x5e0] sm:$0xff]
        %v602 = vld [vmem:[%s334 + $0x5e8] sm:$0xff]
        %v603 = vld [vmem:[%s334 + $0x5f0] sm:$0xff]
        %v604 = vld [vmem:[%s334 + $0x5f8] sm:$0xff]
        %v605 = vld [vmem:[%s334 + $0x600] sm:$0xff]
        %v606 = vld [vmem:[%s334 + $0x608] sm:$0xff]
        %v607 = vld [vmem:[%s334 + $0x610] sm:$0xff]
        %v608 = vld [vmem:[%s334 + $0x618] sm:$0xff]
        %v609 = vld [vmem:[%s334 + $0x620] sm:$0xff]
        %v610 = vld [vmem:[%s334 + $0x628] sm:$0xff]
        %v611 = vld [vmem:[%s334 + $0x630] sm:$0xff]
        %v612 = vld [vmem:[%s334 + $0x638] sm:$0xff]
        %v613 = vld [vmem:[%s334 + $0x640] sm:$0xff]
        %v614 = vld [vmem:[%s334 + $0x648] sm:$0xff]
        %v615 = vld [vmem:[%s334 + $0x650] sm:$0xff]
        %v616 = vld [vmem:[%s334 + $0x658] sm:$0xff]
        %v617 = vld [vmem:[%s334 + $0x660] sm:$0xff]
        %v618 = vld [vmem:[%s334 + $0x668] sm:$0xff]
        %v619 = vld [vmem:[%s334 + $0x670] sm:$0xff]
        %v620 = vld [vmem:[%s334 + $0x678] sm:$0xff]
        %v621 = vld [vmem:[%s334 + $0x680] sm:$0xff]
        %v622 = vld [vmem:[%s334 + $0x688] sm:$0xff]
        %v623 = vld [vmem:[%s334 + $0x690] sm:$0xff]
        %v624 = vld [vmem:[%s334 + $0x698] sm:$0xff]
        %v625 = vld [vmem:[%s334 + $0x6a0] sm:$0xff]
        %v626 = vld [vmem:[%s334 + $0x6a8] sm:$0xff]
        %v627 = vld [vmem:[%s334 + $0x6b0] sm:$0xff]
        %v628 = vld [vmem:[%s334 + $0x6b8] sm:$0xff]
        %v629 = vld [vmem:[%s334 + $0x6c0] sm:$0xff]
        %v630 = vld [vmem:[%s334 + $0x6c8] sm:$0xff]
        %v631 = vld [vmem:[%s334 + $0x6d0] sm:$0xff]
        %v632 = vld [vmem:[%s334 + $0x6d8] sm:$0xff]
        %v633 = vld [vmem:[%s334 + $0x6e0] sm:$0xff]
        %v634 = vld [vmem:[%s334 + $0x6e8] sm:$0xff]
        %v635 = vld [vmem:[%s334 + $0x6f0] sm:$0xff]
        %v636 = vld [vmem:[%s334 + $0x6f8] sm:$0xff]
        %v637 = vld [vmem:[%s334 + $0x700] sm:$0xff]
        %v638 = vld [vmem:[%s334 + $0x708] sm:$0xff]
        %v639 = vld [vmem:[%s334 + $0x710] sm:$0xff]
        %v640 = vld [vmem:[%s334 + $0x718] sm:$0xff]
        %v641 = vld [vmem:[%s334 + $0x720] sm:$0xff]
        %v642 = vld [vmem:[%s334 + $0x728] sm:$0xff]
        %v643 = vld [vmem:[%s334 + $0x730] sm:$0xff]
        %v644 = vld [vmem:[%s334 + $0x738] sm:$0xff]
        %v645 = vld [vmem:[%s334 + $0x740] sm:$0xff]
        %v646 = vld [vmem:[%s334 + $0x748] sm:$0xff]
        %v647 = vld [vmem:[%s334 + $0x750] sm:$0xff]
        %v648 = vld [vmem:[%s334 + $0x758] sm:$0xff]
        %v649 = vld [vmem:[%s334 + $0x760] sm:$0xff]
        %v650 = vld [vmem:[%s334 + $0x768] sm:$0xff]
        %v651 = vld [vmem:[%s334 + $0x770] sm:$0xff]
        %v652 = vld [vmem:[%s334 + $0x778] sm:$0xff]
        %v653 = vld [vmem:[%s334 + $0x780] sm:$0xff]
        %v654 = vld [vmem:[%s334 + $0x788] sm:$0xff]
        %v655 = vld [vmem:[%s334 + $0x790] sm:$0xff]
        %v656 = vld [vmem:[%s334 + $0x798] sm:$0xff]
        %v657 = vld [vmem:[%s334 + $0x7a0] sm:$0xff]
        %v658 = vld [vmem:[%s334 + $0x7a8] sm:$0xff]
        %v659 = vld [vmem:[%s334 + $0x7b0] sm:$0xff]
        %v660 = vld [vmem:[%s334 + $0x7b8] sm:$0xff]
        %v661 = vld [vmem:[%s334 + $0x7c0] sm:$0xff]
        %v662 = vld [vmem:[%s334 + $0x7c8] sm:$0xff]
        %v663 = vld [vmem:[%s334 + $0x7d0] sm:$0xff]
        %v664 = vld [vmem:[%s334 + $0x7d8] sm:$0xff]
        %v665 = vld [vmem:[%s334 + $0x7e0] sm:$0xff]
        %v666 = vld [vmem:[%s334 + $0x7e8] sm:$0xff]
        %v667 = vld [vmem:[%s334 + $0x7f0] sm:$0xff]
        %v668 = vld [vmem:[%s334 + $0x7f8] sm:$0xff]
        %v669 = vld [vmem:[%s334 + $0x800] sm:$0xff]
        %v670 = vld [vmem:[%s334 + $0x808] sm:$0xff]
        %v671 = vld [vmem:[%s334 + $0x810] sm:$0xff]
        %v672 = vld [vmem:[%s334 + $0x818] sm:$0xff]
        %v673 = vld [vmem:[%s334 + $0x820] sm:$0xff]
        %v674 = vld [vmem:[%s334 + $0x828] sm:$0xff]
        %v675 = vld [vmem:[%s334 + $0x830] sm:$0xff]
        %v676 = vld [vmem:[%s334 + $0x838] sm:$0xff]
        %v677 = vld [vmem:[%s334 + $0x840] sm:$0xff]
        %v678 = vld [vmem:[%s334 + $0x848] sm:$0xff]
        %v679 = vld [vmem:[%s334 + $0x850] sm:$0xff]
        %v680 = vld [vmem:[%s334 + $0x858] sm:$0xff]
        %v681 = vld [vmem:[%s334 + $0x860] sm:$0xff]
        %v682 = vld [vmem:[%s334 + $0x868] sm:$0xff]
        %v683 = vld [vmem:[%s334 + $0x870] sm:$0xff]
        %v684 = vld [vmem:[%s334 + $0x878] sm:$0xff]
        %v685 = vld [vmem:[%s334 + $0x880] sm:$0xff]
        %v686 = vld [vmem:[%s334 + $0x888] sm:$0xff]
        %v687 = vld [vmem:[%s334 + $0x890] sm:$0xff]
        %v688 = vld [vmem:[%s334 + $0x898] sm:$0xff]
        %v689 = vld [vmem:[%s334 + $0x8a0] sm:$0xff]
        %v690 = vld [vmem:[%s334 + $0x8a8] sm:$0xff]
        %v691 = vld [vmem:[%s334 + $0x8b0] sm:$0xff]
        %v692 = vld [vmem:[%s334 + $0x8b8] sm:$0xff]
        %v693 = vld [vmem:[%s334 + $0x8c0] sm:$0xff]
        %v694 = vld [vmem:[%s334 + $0x8c8] sm:$0xff]
        %v695 = vld [vmem:[%s334 + $0x8d0] sm:$0xff]
        %v696 = vld [vmem:[%s334 + $0x8d8] sm:$0xff]
        %v697 = vld [vmem:[%s334 + $0x8e0] sm:$0xff]
        %v698 = vld [vmem:[%s334 + $0x8e8] sm:$0xff]
        %v699 = vld [vmem:[%s334 + $0x8f0] sm:$0xff]
        %v700 = vld [vmem:[%s334 + $0x8f8] sm:$0xff]
        %v701 = vld [vmem:[%s334 + $0x900] sm:$0xff]
        %v702 = vld [vmem:[%s334 + $0x908] sm:$0xff]
        %v703 = vld [vmem:[%s334 + $0x910] sm:$0xff]
        %v704 = vld [vmem:[%s334 + $0x918] sm:$0xff]
        %v705 = vld [vmem:[%s334 + $0x920] sm:$0xff]
        %v706 = vld [vmem:[%s334 + $0x928] sm:$0xff]
        %v707 = vld [vmem:[%s334 + $0x930] sm:$0xff]
        %v708 = vld [vmem:[%s334 + $0x938] sm:$0xff]
        %v709 = vld [vmem:[%s334 + $0x940] sm:$0xff]
        %v710 = vld [vmem:[%s334 + $0x948] sm:$0xff]
        %v711 = vld [vmem:[%s334 + $0x950] sm:$0xff]
        %v712 = vld [vmem:[%s334 + $0x958] sm:$0xff]
        %v713 = vld [vmem:[%s334 + $0x960] sm:$0xff]
        %v714 = vld [vmem:[%s334 + $0x968] sm:$0xff]
        %v715 = vld [vmem:[%s334 + $0x970] sm:$0xff]
        %v716 = vld [vmem:[%s334 + $0x978] sm:$0xff]
        %v717 = vld [vmem:[%s334 + $0x980] sm:$0xff]
        %v718 = vld [vmem:[%s334 + $0x988] sm:$0xff]
        %v719 = vld [vmem:[%s334 + $0x990] sm:$0xff]
        %v720 = vld [vmem:[%s334 + $0x998] sm:$0xff]
        %v721 = vld [vmem:[%s334 + $0x9a0] sm:$0xff]
        %v722 = vld [vmem:[%s334 + $0x9a8] sm:$0xff]
        %v723 = vld [vmem:[%s334 + $0x9b0] sm:$0xff]
        %v724 = vld [vmem:[%s334 + $0x9b8] sm:$0xff]
        %v725 = vld [vmem:[%s334 + $0x9c0] sm:$0xff]
        %v726 = vld [vmem:[%s334 + $0x9c8] sm:$0xff]
        %v727 = vld [vmem:[%s334 + $0x9d0] sm:$0xff]
        %v728 = vld [vmem:[%s334 + $0x9d8] sm:$0xff]
        %v729 = vld [vmem:[%s334 + $0x9e0] sm:$0xff]
        %v730 = vld [vmem:[%s334 + $0x9e8] sm:$0xff]
        %v731 = vld [vmem:[%s334 + $0x9f0] sm:$0xff]
        %v732 = vld [vmem:[%s334 + $0x9f8] sm:$0xff]
        %v733 = vld [vmem:[%s334 + $0xa00] sm:$0xff]
        %v734 = vld [vmem:[%s334 + $0xa08] sm:$0xff]
        %v735 = vld [vmem:[%s334 + $0xa10] sm:$0xff]
        %v736 = vld [vmem:[%s334 + $0xa18] sm:$0xff]
        %v737 = vld [vmem:[%s334 + $0xa20] sm:$0xff]
        %v738 = vld [vmem:[%s334 + $0xa28] sm:$0xff]
        %v739 = vld [vmem:[%s334 + $0xa30] sm:$0xff]
        %v740 = vld [vmem:[%s334 + $0xa38] sm:$0xff]
        %v741 = vld [vmem:[%s334 + $0xa40] sm:$0xff]
        %v742 = vld [vmem:[%s334 + $0xa48] sm:$0xff]
        %v743 = vld [vmem:[%s334 + $0xa50] sm:$0xff]
        %v744 = vld [vmem:[%s334 + $0xa58] sm:$0xff]
        %v745 = vld [vmem:[%s334 + $0xa60] sm:$0xff]
        %v746 = vld [vmem:[%s334 + $0xa68] sm:$0xff]
        %v747 = vld [vmem:[%s334 + $0xa70] sm:$0xff]
        %v748 = vld [vmem:[%s334 + $0xa78] sm:$0xff]
        %v749 = vld [vmem:[%s334 + $0xa80] sm:$0xff]
        %v750 = vld [vmem:[%s334 + $0xa88] sm:$0xff]
        %v751 = vld [vmem:[%s334 + $0xa90] sm:$0xff]
        %v752 = vld [vmem:[%s334 + $0xa98] sm:$0xff]
        %v753 = vld [vmem:[%s334 + $0xaa0] sm:$0xff]
        %v754 = vld [vmem:[%s334 + $0xaa8] sm:$0xff]
        %v755 = vld [vmem:[%s334 + $0xab0] sm:$0xff]
        %v756 = vld [vmem:[%s334 + $0xab8] sm:$0xff]
        %v757 = vld [vmem:[%s334 + $0xac0] sm:$0xff]
        %v758 = vld [vmem:[%s334 + $0xac8] sm:$0xff]
        %v759 = vld [vmem:[%s334 + $0xad0] sm:$0xff]
        %v760 = vld [vmem:[%s334 + $0xad8] sm:$0xff]
        %v761 = vld [vmem:[%s334 + $0xae0] sm:$0xff]
        %v762 = vld [vmem:[%s334 + $0xae8] sm:$0xff]
        %v763 = vld [vmem:[%s334 + $0xaf0] sm:$0xff]
        %v764 = vld [vmem:[%s334 + $0xaf8] sm:$0xff]
        %v765 = vld [vmem:[%s334 + $0xb00] sm:$0xff]
        %v766 = vld [vmem:[%s334 + $0xb08] sm:$0xff]
        %v767 = vld [vmem:[%s334 + $0xb10] sm:$0xff]
        %v768 = vld [vmem:[%s334 + $0xb18] sm:$0xff]
        %v769 = vld [vmem:[%s334 + $0xb20] sm:$0xff]
        %v770 = vld [vmem:[%s334 + $0xb28] sm:$0xff]
        %v771 = vld [vmem:[%s334 + $0xb30] sm:$0xff]
        %v772 = vld [vmem:[%s334 + $0xb38] sm:$0xff]
        %v773 = vld [vmem:[%s334 + $0xb40] sm:$0xff]
        %v774 = vld [vmem:[%s334 + $0xb48] sm:$0xff]
        %v775 = vld [vmem:[%s334 + $0xb50] sm:$0xff]
        %v776 = vld [vmem:[%s334 + $0xb58] sm:$0xff]
        %v777 = vld [vmem:[%s334 + $0xb60] sm:$0xff]
        %v778 = vld [vmem:[%s334 + $0xb68] sm:$0xff]
        %v779 = vld [vmem:[%s334 + $0xb70] sm:$0xff]
        %v780 = vld [vmem:[%s334 + $0xb78] sm:$0xff]
        %v781 = vld [vmem:[%s334 + $0xb80] sm:$0xff]
        %v782 = vld [vmem:[%s334 + $0xb88] sm:$0xff]
        %v783 = vld [vmem:[%s334 + $0xb90] sm:$0xff]
        %v784 = vld [vmem:[%s334 + $0xb98] sm:$0xff]
        %v785 = vld [vmem:[%s334 + $0xba0] sm:$0xff]
        %v786 = vld [vmem:[%s334 + $0xba8] sm:$0xff]
        %v787 = vld [vmem:[%s334 + $0xbb0] sm:$0xff]
        %v788 = vld [vmem:[%s334 + $0xbb8] sm:$0xff]
        %v789 = vld [vmem:[%s334 + $0xbc0] sm:$0xff]
        %v790 = vld [vmem:[%s334 + $0xbc8] sm:$0xff]
        %v791 = vld [vmem:[%s334 + $0xbd0] sm:$0xff]
        %v792 = vld [vmem:[%s334 + $0xbd8] sm:$0xff]
        %v793 = vld [vmem:[%s334 + $0xbe0] sm:$0xff]
        %v794 = vld [vmem:[%s334 + $0xbe8] sm:$0xff]
        %v795 = vld [vmem:[%s334 + $0xbf0] sm:$0xff]
        %v796 = vld [vmem:[%s334 + $0xbf8] sm:$0xff]
        %v797 = vld [vmem:[%s334 + $0xc00] sm:$0xff]
        %v798 = vld [vmem:[%s334 + $0xc08] sm:$0xff]
        %v799 = vld [vmem:[%s334 + $0xc10] sm:$0xff]
        %v800 = vld [vmem:[%s334 + $0xc18] sm:$0xff]
        %v801 = vld [vmem:[%s334 + $0xc20] sm:$0xff]
        %v802 = vld [vmem:[%s334 + $0xc28] sm:$0xff]
        %v803 = vld [vmem:[%s334 + $0xc30] sm:$0xff]
        %v804 = vld [vmem:[%s334 + $0xc38] sm:$0xff]
        %v805 = vld [vmem:[%s334 + $0xc40] sm:$0xff]
        %v806 = vld [vmem:[%s334 + $0xc48] sm:$0xff]
        %v807 = vld [vmem:[%s334 + $0xc50] sm:$0xff]
        %v808 = vld [vmem:[%s334 + $0xc58] sm:$0xff]
        %v809 = vld [vmem:[%s334 + $0xc60] sm:$0xff]
        %v810 = vld [vmem:[%s334 + $0xc68] sm:$0xff]
        %v811 = vld [vmem:[%s334 + $0xc70] sm:$0xff]
        %v812 = vld [vmem:[%s334 + $0xc78] sm:$0xff]
        %v813 = vld [vmem:[%s334 + $0xc80] sm:$0xff]
        %v814 = vld [vmem:[%s334 + $0xc88] sm:$0xff]
        %v815 = vld [vmem:[%s334 + $0xc90] sm:$0xff]
        %v816 = vld [vmem:[%s334 + $0xc98] sm:$0xff]
        %v817 = vld [vmem:[%s334 + $0xca0] sm:$0xff]
        %v818 = vld [vmem:[%s334 + $0xca8] sm:$0xff]
        %v819 = vld [vmem:[%s334 + $0xcb0] sm:$0xff]
        %v820 = vld [vmem:[%s334 + $0xcb8] sm:$0xff]
        %v821 = vld [vmem:[%s334 + $0xcc0] sm:$0xff]
        %v822 = vld [vmem:[%s334 + $0xcc8] sm:$0xff]
        %v823 = vld [vmem:[%s334 + $0xcd0] sm:$0xff]
        %v824 = vld [vmem:[%s334 + $0xcd8] sm:$0xff]
        %v825 = vld [vmem:[%s334 + $0xce0] sm:$0xff]
        %v826 = vld [vmem:[%s334 + $0xce8] sm:$0xff]
        %v827 = vld [vmem:[%s334 + $0xcf0] sm:$0xff]
        %v828 = vld [vmem:[%s334 + $0xcf8] sm:$0xff]
        %v829 = vld [vmem:[%s334 + $0xd00] sm:$0xff]
        %v830 = vld [vmem:[%s334 + $0xd08] sm:$0xff]
        %v831 = vld [vmem:[%s334 + $0xd10] sm:$0xff]
        %v832 = vld [vmem:[%s334 + $0xd18] sm:$0xff]
        %v833 = vld [vmem:[%s334 + $0xd20] sm:$0xff]
        %v834 = vld [vmem:[%s334 + $0xd28] sm:$0xff]
        %v835 = vld [vmem:[%s334 + $0xd30] sm:$0xff]
        %v836 = vld [vmem:[%s334 + $0xd38] sm:$0xff]
        %v837 = vld [vmem:[%s334 + $0xd40] sm:$0xff]
        %v838 = vld [vmem:[%s334 + $0xd48] sm:$0xff]
        %v839 = vld [vmem:[%s334 + $0xd50] sm:$0xff]
        %v840 = vld [vmem:[%s334 + $0xd58] sm:$0xff]
        %v841 = vld [vmem:[%s334 + $0xd60] sm:$0xff]
        %v842 = vld [vmem:[%s334 + $0xd68] sm:$0xff]
        %v843 = vld [vmem:[%s334 + $0xd70] sm:$0xff]
        %v844 = vld [vmem:[%s334 + $0xd78] sm:$0xff]
        %v845 = vld [vmem:[%s334 + $0xd80] sm:$0xff]
        %v846 = vld [vmem:[%s334 + $0xd88] sm:$0xff]
        %v847 = vld [vmem:[%s334 + $0xd90] sm:$0xff]
        %v848 = vld [vmem:[%s334 + $0xd98] sm:$0xff]
        %v849 = vld [vmem:[%s334 + $0xda0] sm:$0xff]
        %v850 = vld [vmem:[%s334 + $0xda8] sm:$0xff]
        %v851 = vld [vmem:[%s334 + $0xdb0] sm:$0xff]
        %v852 = vld [vmem:[%s334 + $0xdb8] sm:$0xff]
        %v853 = vld [vmem:[%s334 + $0xdc0] sm:$0xff]
        %v854 = vld [vmem:[%s334 + $0xdc8] sm:$0xff]
        %v855 = vld [vmem:[%s334 + $0xdd0] sm:$0xff]
        %v856 = vld [vmem:[%s334 + $0xdd8] sm:$0xff]
        %v857 = vld [vmem:[%s334 + $0xde0] sm:$0xff]
        %v858 = vld [vmem:[%s334 + $0xde8] sm:$0xff]
        %v859 = vld [vmem:[%s334 + $0xdf0] sm:$0xff]
        %v860 = vld [vmem:[%s334 + $0xdf8] sm:$0xff]
        %v861 = vld [vmem:[%s334 + $0xe00] sm:$0xff]
        %v862 = vld [vmem:[%s334 + $0xe08] sm:$0xff]
        %v863 = vld [vmem:[%s334 + $0xe10] sm:$0xff]
        %v864 = vld [vmem:[%s334 + $0xe18] sm:$0xff]
        %v865 = vld [vmem:[%s334 + $0xe20] sm:$0xff]
        %v866 = vld [vmem:[%s334 + $0xe28] sm:$0xff]
        %v867 = vld [vmem:[%s334 + $0xe30] sm:$0xff]
        %v868 = vld [vmem:[%s334 + $0xe38] sm:$0xff]
        %v869 = vld [vmem:[%s334 + $0xe40] sm:$0xff]
        %v870 = vld [vmem:[%s334 + $0xe48] sm:$0xff]
        %v871 = vld [vmem:[%s334 + $0xe50] sm:$0xff]
        %v872 = vld [vmem:[%s334 + $0xe58] sm:$0xff]
        %v873 = vld [vmem:[%s334 + $0xe60] sm:$0xff]
        %v874 = vld [vmem:[%s334 + $0xe68] sm:$0xff]
        %v875 = vld [vmem:[%s334 + $0xe70] sm:$0xff]
        %v876 = vld [vmem:[%s334 + $0xe78] sm:$0xff]
        %v877 = vld [vmem:[%s334 + $0xe80] sm:$0xff]
        %v878 = vld [vmem:[%s334 + $0xe88] sm:$0xff]
        %v879 = vld [vmem:[%s334 + $0xe90] sm:$0xff]
        %v880 = vld [vmem:[%s334 + $0xe98] sm:$0xff]
        %v881 = vld [vmem:[%s334 + $0xea0] sm:$0xff]
        %v882 = vld [vmem:[%s334 + $0xea8] sm:$0xff]
        %v883 = vld [vmem:[%s334 + $0xeb0] sm:$0xff]
        %v884 = vld [vmem:[%s334 + $0xeb8] sm:$0xff]
        %v885 = vld [vmem:[%s334 + $0xec0] sm:$0xff]
        %v886 = vld [vmem:[%s334 + $0xec8] sm:$0xff]
        %v887 = vld [vmem:[%s334 + $0xed0] sm:$0xff]
        %v888 = vld [vmem:[%s334 + $0xed8] sm:$0xff]
        %v889 = vld [vmem:[%s334 + $0xee0] sm:$0xff]
        %v890 = vld [vmem:[%s334 + $0xee8] sm:$0xff]
        %v891 = vld [vmem:[%s334 + $0xef0] sm:$0xff]
        %v892 = vld [vmem:[%s334 + $0xef8] sm:$0xff]
        %v893 = vld [vmem:[%s334 + $0xf00] sm:$0xff]
        %v894 = vld [vmem:[%s334 + $0xf08] sm:$0xff]
        %v895 = vld [vmem:[%s334 + $0xf10] sm:$0xff]
        %v896 = vld [vmem:[%s334 + $0xf18] sm:$0xff]
        %v897 = vld [vmem:[%s334 + $0xf20] sm:$0xff]
        %v898 = vld [vmem:[%s334 + $0xf28] sm:$0xff]
        %v899 = vld [vmem:[%s334 + $0xf30] sm:$0xff]
        %v900 = vld [vmem:[%s334 + $0xf38] sm:$0xff]
        %v901 = vld [vmem:[%s334 + $0xf40] sm:$0xff]
        %v902 = vld [vmem:[%s334 + $0xf48] sm:$0xff]
        %v903 = vld [vmem:[%s334 + $0xf50] sm:$0xff]
        %v904 = vld [vmem:[%s334 + $0xf58] sm:$0xff]
        %v905 = vld [vmem:[%s334 + $0xf60] sm:$0xff]
        %v906 = vld [vmem:[%s334 + $0xf68] sm:$0xff]
        %v907 = vld [vmem:[%s334 + $0xf70] sm:$0xff]
        %v908 = vld [vmem:[%s334 + $0xf78] sm:$0xff]
        %v909 = vld [vmem:[%s334 + $0xf80] sm:$0xff]
        %v910 = vld [vmem:[%s334 + $0xf88] sm:$0xff]
        %v911 = vld [vmem:[%s334 + $0xf90] sm:$0xff]
        %v912 = vld [vmem:[%s334 + $0xf98] sm:$0xff]
        %v913 = vld [vmem:[%s334 + $0xfa0] sm:$0xff]
        %v914 = vld [vmem:[%s334 + $0xfa8] sm:$0xff]
        %v915 = vld [vmem:[%s334 + $0xfb0] sm:$0xff]
        %v916 = vld [vmem:[%s334 + $0xfb8] sm:$0xff]
        %v917 = vld [vmem:[%s334 + $0xfc0] sm:$0xff]
        %v918 = vld [vmem:[%s334 + $0xfc8] sm:$0xff]
        %v919 = vld [vmem:[%s334 + $0xfd0] sm:$0xff]
        %v920 = vld [vmem:[%s334 + $0xfd8] sm:$0xff]
        %v921 = vld [vmem:[%s334 + $0xfe0] sm:$0xff]
        %v922 = vld [vmem:[%s334 + $0xfe8] sm:$0xff]
        %v923 = vld [vmem:[%s334 + $0xff0] sm:$0xff]
        %v924 = vld [vmem:[%s334 + $0xff8] sm:$0xff]
        %v925 = vld [vmem:[%s334 + $0x1000] sm:$0xff]
        %v926 = vld [vmem:[%s334 + $0x1008] sm:$0xff]
        %v927 = vld [vmem:[%s334 + $0x1010] sm:$0xff]
        %v928 = vld [vmem:[%s334 + $0x1018] sm:$0xff]
        %v929 = vld [vmem:[%s334 + $0x1020] sm:$0xff]
        %v930 = vld [vmem:[%s334 + $0x1028] sm:$0xff]
        %v931 = vld [vmem:[%s334 + $0x1030] sm:$0xff]
        %v932 = vld [vmem:[%s334 + $0x1038] sm:$0xff]
        %v933 = vld [vmem:[%s334 + $0x1040] sm:$0xff]
        %v934 = vld [vmem:[%s334 + $0x1048] sm:$0xff]
        %v935 = vld [vmem:[%s334 + $0x1050] sm:$0xff]
        %v936 = vld [vmem:[%s334 + $0x1058] sm:$0xff]
        %v937 = vld [vmem:[%s334 + $0x1060] sm:$0xff]
        %v938 = vld [vmem:[%s334 + $0x1068] sm:$0xff]
        %v939 = vld [vmem:[%s334 + $0x1070] sm:$0xff]
        %v940 = vld [vmem:[%s334 + $0x1078] sm:$0xff]
        %v941 = vld [vmem:[%s334 + $0x1080] sm:$0xff]
        %v942 = vld [vmem:[%s334 + $0x1088] sm:$0xff]
        %v943 = vld [vmem:[%s334 + $0x1090] sm:$0xff]
        %v944 = vld [vmem:[%s334 + $0x1098] sm:$0xff]
        %v945 = vld [vmem:[%s334 + $0x10a0] sm:$0xff]
        %v946 = vld [vmem:[%s334 + $0x10a8] sm:$0xff]
        %v947 = vld [vmem:[%s334 + $0x10b0] sm:$0xff]
        %v948 = vld [vmem:[%s334 + $0x10b8] sm:$0xff]
        %v949 = vld [vmem:[%s334 + $0x10c0] sm:$0xff]
        %v950 = vld [vmem:[%s334 + $0x10c8] sm:$0xff]
        %v951 = vld [vmem:[%s334 + $0x10d0] sm:$0xff]
        %v952 = vld [vmem:[%s334 + $0x10d8] sm:$0xff]
        %v953 = vld [vmem:[%s334 + $0x10e0] sm:$0xff]
        %v954 = vld [vmem:[%s334 + $0x10e8] sm:$0xff]
        %v955 = vld [vmem:[%s334 + $0x10f0] sm:$0xff]
        %v956 = vld [vmem:[%s334 + $0x10f8] sm:$0xff]
        %v957 = vld [vmem:[%s334 + $0x1100] sm:$0xff]
        %v958 = vld [vmem:[%s334 + $0x1108] sm:$0xff]
        %v959 = vld [vmem:[%s334 + $0x1110] sm:$0xff]
        %v960 = vld [vmem:[%s334 + $0x1118] sm:$0xff]
        %v961 = vld [vmem:[%s334 + $0x1120] sm:$0xff]
        %v962 = vld [vmem:[%s334 + $0x1128] sm:$0xff]
        %v963 = vld [vmem:[%s334 + $0x1130] sm:$0xff]
        %v964 = vld [vmem:[%s334 + $0x1138] sm:$0xff]
        %v965 = vld [vmem:[%s334 + $0x1140] sm:$0xff]
        %v966 = vld [vmem:[%s334 + $0x1148] sm:$0xff]
        %v967 = vld [vmem:[%s334 + $0x1150] sm:$0xff]
        %v968 = vld [vmem:[%s334 + $0x1158] sm:$0xff]
        %v969 = vld [vmem:[%s334 + $0x1160] sm:$0xff]
        %v970 = vld [vmem:[%s334 + $0x1168] sm:$0xff]
        %v971 = vld [vmem:[%s334 + $0x1170] sm:$0xff]
        %v972 = vld [vmem:[%s334 + $0x1178] sm:$0xff]
        %v973 = vld [vmem:[%s334 + $0x1180] sm:$0xff]
        %v974 = vld [vmem:[%s334 + $0x1188] sm:$0xff]
        %v975 = vld [vmem:[%s334 + $0x1190] sm:$0xff]
        %v976 = vld [vmem:[%s334 + $0x1198] sm:$0xff]
        %v977 = vld [vmem:[%s334 + $0x11a0] sm:$0xff]
        %v978 = vld [vmem:[%s334 + $0x11a8] sm:$0xff]
        %v979 = vld [vmem:[%s334 + $0x11b0] sm:$0xff]
        %v980 = vld [vmem:[%s334 + $0x11b8] sm:$0xff]
        %v981 = vld [vmem:[%s334 + $0x11c0] sm:$0xff]
        %v982 = vld [vmem:[%s334 + $0x11c8] sm:$0xff]
        %v983 = vld [vmem:[%s334 + $0x11d0] sm:$0xff]
        %v984 = vld [vmem:[%s334 + $0x11d8] sm:$0xff]
        %v985 = vld [vmem:[%s334 + $0x11e0] sm:$0xff]
        %v986 = vld [vmem:[%s334 + $0x11e8] sm:$0xff]
        %v987 = vld [vmem:[%s334 + $0x11f0] sm:$0xff]
        %v988 = vld [vmem:[%s334 + $0x11f8] sm:$0xff]
        %v989 = vld [vmem:[%s334 + $0x1200] sm:$0xff]
        %v990 = vld [vmem:[%s334 + $0x1208] sm:$0xff]
        %v991 = vld [vmem:[%s334 + $0x1210] sm:$0xff]
        %v992 = vld [vmem:[%s334 + $0x1218] sm:$0xff]
        %v993 = vld [vmem:[%s334 + $0x1220] sm:$0xff]
        %v994 = vld [vmem:[%s334 + $0x1228] sm:$0xff]
        %v995 = vld [vmem:[%s334 + $0x1230] sm:$0xff]
        %v996 = vld [vmem:[%s334 + $0x1238] sm:$0xff]
        %v997 = vld [vmem:[%s334 + $0x1240] sm:$0xff]
        %v998 = vld [vmem:[%s334 + $0x1248] sm:$0xff]
        %v999 = vld [vmem:[%s334 + $0x1250] sm:$0xff]
        %v1000 = vld [vmem:[%s334 + $0x1258] sm:$0xff]
        %v1001 = vld [vmem:[%s334 + $0x1260] sm:$0xff]
        %v1002 = vld [vmem:[%s334 + $0x1268] sm:$0xff]
        %v1003 = vld [vmem:[%s334 + $0x1270] sm:$0xff]
        %v1004 = vld [vmem:[%s334 + $0x1278] sm:$0xff]
        %v1005 = vld [vmem:[%s334 + $0x1280] sm:$0xff]
        %v1006 = vld [vmem:[%s334 + $0x1288] sm:$0xff]
        %v1007 = vld [vmem:[%s334 + $0x1290] sm:$0xff]
        %v1008 = vld [vmem:[%s334 + $0x1298] sm:$0xff]
        %v1009 = vld [vmem:[%s334 + $0x12a0] sm:$0xff]
        %v1010 = vld [vmem:[%s334 + $0x12a8] sm:$0xff]
        %v1011 = vld [vmem:[%s334 + $0x12b0] sm:$0xff]
        %v1012 = vld [vmem:[%s334 + $0x12b8] sm:$0xff]
        %v1013 = vld [vmem:[%s334 + $0x12c0] sm:$0xff]
        %v1014 = vld [vmem:[%s334 + $0x12c8] sm:$0xff]
        %v1015 = vld [vmem:[%s334 + $0x12d0] sm:$0xff]
        %v1016 = vld [vmem:[%s334 + $0x12d8] sm:$0xff]
        %v1017 = vld [vmem:[%s334 + $0x12e0] sm:$0xff]
        %v1018 = vld [vmem:[%s334 + $0x12e8] sm:$0xff]
        %v1019 = vld [vmem:[%s334 + $0x12f0] sm:$0xff]
        %v1020 = vld [vmem:[%s334 + $0x12f8] sm:$0xff]
        %v1021 = vld [vmem:[%s334 + $0x1300] sm:$0xff]
        %v1022 = vld [vmem:[%s334 + $0x1308] sm:$0xff]
        %v1023 = vld [vmem:[%s334 + $0x1310] sm:$0xff]
        %v1024 = vld [vmem:[%s334 + $0x1318] sm:$0xff]
        %v1025 = vld [vmem:[%s334 + $0x1320] sm:$0xff]
        %v1026 = vld [vmem:[%s334 + $0x1328] sm:$0xff]
        %v1027 = vld [vmem:[%s334 + $0x1330] sm:$0xff]
        %v1028 = vld [vmem:[%s334 + $0x1338] sm:$0xff]
        %v1029 = vld [vmem:[%s334 + $0x1340] sm:$0xff]
        %v1030 = vld [vmem:[%s334 + $0x1348] sm:$0xff]
        %v1031 = vld [vmem:[%s334 + $0x1350] sm:$0xff]
        %v1032 = vld [vmem:[%s334 + $0x1358] sm:$0xff]
        %v1033 = vld [vmem:[%s334 + $0x1360] sm:$0xff]
        %v1034 = vld [vmem:[%s334 + $0x1368] sm:$0xff]
        %v1035 = vld [vmem:[%s334 + $0x1370] sm:$0xff]
        %v1036 = vld [vmem:[%s334 + $0x1378] sm:$0xff]
        %v1037 = vld [vmem:[%s334 + $0x1380] sm:$0xff]
        %v1038 = vld [vmem:[%s334 + $0x1388] sm:$0xff]
        %v1039 = vld [vmem:[%s334 + $0x1390] sm:$0xff]
        %v1040 = vld [vmem:[%s334 + $0x1398] sm:$0xff]
        %v1041 = vld [vmem:[%s334 + $0x13a0] sm:$0xff]
        %v1042 = vld [vmem:[%s334 + $0x13a8] sm:$0xff]
        %v1043 = vld [vmem:[%s334 + $0x13b0] sm:$0xff]
        %v1044 = vld [vmem:[%s334 + $0x13b8] sm:$0xff]
        %v1045 = vld [vmem:[%s334 + $0x13c0] sm:$0xff]
        %v1046 = vld [vmem:[%s334 + $0x13c8] sm:$0xff]
        %v1047 = vld [vmem:[%s334 + $0x13d0] sm:$0xff]
        %v1048 = vld [vmem:[%s334 + $0x13d8] sm:$0xff]
        %v1049 = vld [vmem:[%s334 + $0x13e0] sm:$0xff]
        %v1050 = vld [vmem:[%s334 + $0x13e8] sm:$0xff]
        %v1051 = vld [vmem:[%s334 + $0x13f0] sm:$0xff]
        %v1052 = vld [vmem:[%s334 + $0x13f8] sm:$0xff]
        %v1053 = vld [vmem:[%s334 + $0x1400] sm:$0xff]
        %v1054 = vld [vmem:[%s334 + $0x1408] sm:$0xff]
        %v1055 = vld [vmem:[%s334 + $0x1410] sm:$0xff]
        %v1056 = vld [vmem:[%s334 + $0x1418] sm:$0xff]
        %v1057 = vld [vmem:[%s334 + $0x1420] sm:$0xff]
        %v1058 = vld [vmem:[%s334 + $0x1428] sm:$0xff]
        %v1059 = vld [vmem:[%s334 + $0x1430] sm:$0xff]
        %v1060 = vld [vmem:[%s334 + $0x1438] sm:$0xff]
        %v1061 = vld [vmem:[%s334 + $0x1440] sm:$0xff]
        %v1062 = vld [vmem:[%s334 + $0x1448] sm:$0xff]
        %v1063 = vld [vmem:[%s334 + $0x1450] sm:$0xff]
        %v1064 = vld [vmem:[%s334 + $0x1458] sm:$0xff]
        %v1065 = vld [vmem:[%s334 + $0x1460] sm:$0xff]
        %v1066 = vld [vmem:[%s334 + $0x1468] sm:$0xff]
        %v1067 = vld [vmem:[%s334 + $0x1470] sm:$0xff]
        %v1068 = vld [vmem:[%s334 + $0x1478] sm:$0xff]
        %v1069 = vld [vmem:[%s334 + $0x1480] sm:$0xff]
        %v1070 = vld [vmem:[%s334 + $0x1488] sm:$0xff]
        %v1071 = vld [vmem:[%s334 + $0x1490] sm:$0xff]
        %v1072 = vld [vmem:[%s334 + $0x1498] sm:$0xff]
        %v1073 = vld [vmem:[%s334 + $0x14a0] sm:$0xff]
        %v1074 = vld [vmem:[%s334 + $0x14a8] sm:$0xff]
        %v1075 = vld [vmem:[%s334 + $0x14b0] sm:$0xff]
        %v1076 = vld [vmem:[%s334 + $0x14b8] sm:$0xff]
        %v1077 = vld [vmem:[%s334 + $0x14c0] sm:$0xff]
        %v1078 = vld [vmem:[%s334 + $0x14c8] sm:$0xff]
        %v1079 = vld [vmem:[%s334 + $0x14d0] sm:$0xff]
        %v1080 = vld [vmem:[%s334 + $0x14d8] sm:$0xff]
        %v1081 = vld [vmem:[%s334 + $0x14e0] sm:$0xff]
        %v1082 = vld [vmem:[%s334 + $0x14e8] sm:$0xff]
        %v1083 = vld [vmem:[%s334 + $0x14f0] sm:$0xff]
        %v1084 = vld [vmem:[%s334 + $0x14f8] sm:$0xff]
        %v1085 = vld [vmem:[%s334 + $0x1500] sm:$0xff]
        %v1086 = vld [vmem:[%s334 + $0x1508] sm:$0xff]
        %v1087 = vld [vmem:[%s334 + $0x1510] sm:$0xff]
        %v1088 = vld [vmem:[%s334 + $0x1518] sm:$0xff]
        %v1089 = vld [vmem:[%s334 + $0x1520] sm:$0xff]
        %v1090 = vld [vmem:[%s334 + $0x1528] sm:$0xff]
        %v1091 = vld [vmem:[%s334 + $0x1530] sm:$0xff]
        %v1092 = vld [vmem:[%s334 + $0x1538] sm:$0xff]
        %v1093 = vld [vmem:[%s334 + $0x1540] sm:$0xff]
        %v1094 = vld [vmem:[%s334 + $0x1548] sm:$0xff]
        %v1095 = vld [vmem:[%s334 + $0x1550] sm:$0xff]
        %v1096 = vld [vmem:[%s334 + $0x1558] sm:$0xff]
        %v1097 = vld [vmem:[%s334 + $0x1560] sm:$0xff]
        %v1098 = vld [vmem:[%s334 + $0x1568] sm:$0xff]
        %v1099 = vld [vmem:[%s334 + $0x1570] sm:$0xff]
        %v1100 = vld [vmem:[%s334 + $0x1578] sm:$0xff]
        %v1101 = vld [vmem:[%s334 + $0x1580] sm:$0xff]
        %v1102 = vld [vmem:[%s334 + $0x1588] sm:$0xff]
        %v1103 = vld [vmem:[%s334 + $0x1590] sm:$0xff]
        %v1104 = vld [vmem:[%s334 + $0x1598] sm:$0xff]
        %v1105 = vld [vmem:[%s334 + $0x15a0] sm:$0xff]
        %v1106 = vld [vmem:[%s334 + $0x15a8] sm:$0xff]
        %v1107 = vld [vmem:[%s334 + $0x15b0] sm:$0xff]
        %v1108 = vld [vmem:[%s334 + $0x15b8] sm:$0xff]
        %v1109 = vld [vmem:[%s334 + $0x15c0] sm:$0xff]
        %v1110 = vld [vmem:[%s334 + $0x15c8] sm:$0xff]
        %v1111 = vld [vmem:[%s334 + $0x15d0] sm:$0xff]
        %v1112 = vld [vmem:[%s334 + $0x15d8] sm:$0xff]
        %v1113 = vld [vmem:[%s334 + $0x15e0] sm:$0xff]
        %v1114 = vld [vmem:[%s334 + $0x15e8] sm:$0xff]
        %v1115 = vld [vmem:[%s334 + $0x15f0] sm:$0xff]
        %v1116 = vld [vmem:[%s334 + $0x15f8] sm:$0xff]
        %v1117 = vld [vmem:[%s334 + $0x1600] sm:$0xff]
        %v1118 = vld [vmem:[%s334 + $0x1608] sm:$0xff]
        %v1119 = vld [vmem:[%s334 + $0x1610] sm:$0xff]
        %v1120 = vld [vmem:[%s334 + $0x1618] sm:$0xff]
        %v1121 = vld [vmem:[%s334 + $0x1620] sm:$0xff]
        %v1122 = vld [vmem:[%s334 + $0x1628] sm:$0xff]
        %v1123 = vld [vmem:[%s334 + $0x1630] sm:$0xff]
        %v1124 = vld [vmem:[%s334 + $0x1638] sm:$0xff]
        %v1125 = vld [vmem:[%s334 + $0x1640] sm:$0xff]
        %v1126 = vld [vmem:[%s334 + $0x1648] sm:$0xff]
        %v1127 = vld [vmem:[%s334 + $0x1650] sm:$0xff]
        %v1128 = vld [vmem:[%s334 + $0x1658] sm:$0xff]
        %v1129 = vld [vmem:[%s334 + $0x1660] sm:$0xff]
        %v1130 = vld [vmem:[%s334 + $0x1668] sm:$0xff]
        %v1131 = vld [vmem:[%s334 + $0x1670] sm:$0xff]
        %v1132 = vld [vmem:[%s334 + $0x1678] sm:$0xff]
        %v1133 = vld [vmem:[%s334 + $0x1680] sm:$0xff]
        %v1134 = vld [vmem:[%s334 + $0x1688] sm:$0xff]
        %v1135 = vld [vmem:[%s334 + $0x1690] sm:$0xff]
        %v1136 = vld [vmem:[%s334 + $0x1698] sm:$0xff]
        %v1137 = vld [vmem:[%s334 + $0x16a0] sm:$0xff]
        %v1138 = vld [vmem:[%s334 + $0x16a8] sm:$0xff]
        %v1139 = vld [vmem:[%s334 + $0x16b0] sm:$0xff]
        %v1140 = vld [vmem:[%s334 + $0x16b8] sm:$0xff]
        %v1141 = vld [vmem:[%s334 + $0x16c0] sm:$0xff]
        %v1142 = vld [vmem:[%s334 + $0x16c8] sm:$0xff]
        %v1143 = vld [vmem:[%s334 + $0x16d0] sm:$0xff]
        %v1144 = vld [vmem:[%s334 + $0x16d8] sm:$0xff]
        %v1145 = vld [vmem:[%s334 + $0x16e0] sm:$0xff]
        %v1146 = vld [vmem:[%s334 + $0x16e8] sm:$0xff]
        %v1147 = vld [vmem:[%s334 + $0x16f0] sm:$0xff]
        %v1148 = vld [vmem:[%s334 + $0x16f8] sm:$0xff]
        %v1149 = vld [vmem:[%s334 + $0x1700] sm:$0xff]
        %v1150 = vld [vmem:[%s334 + $0x1708] sm:$0xff]
        %v1151 = vld [vmem:[%s334 + $0x1710] sm:$0xff]
        %v1152 = vld [vmem:[%s334 + $0x1718] sm:$0xff]
        %v1153 = vld [vmem:[%s334 + $0x1720] sm:$0xff]
        %v1154 = vld [vmem:[%s334 + $0x1728] sm:$0xff]
        %v1155 = vld [vmem:[%s334 + $0x1730] sm:$0xff]
        %v1156 = vld [vmem:[%s334 + $0x1738] sm:$0xff]
        %v1157 = vld [vmem:[%s334 + $0x1740] sm:$0xff]
        %v1158 = vld [vmem:[%s334 + $0x1748] sm:$0xff]
        %v1159 = vld [vmem:[%s334 + $0x1750] sm:$0xff]
        %v1160 = vld [vmem:[%s334 + $0x1758] sm:$0xff]
        %v1161 = vld [vmem:[%s334 + $0x1760] sm:$0xff]
        %v1162 = vld [vmem:[%s334 + $0x1768] sm:$0xff]
        %v1163 = vld [vmem:[%s334 + $0x1770] sm:$0xff]
        %v1164 = vld [vmem:[%s334 + $0x1778] sm:$0xff]
        %v1165 = vld [vmem:[%s334 + $0x1780] sm:$0xff]
        %v1166 = vld [vmem:[%s334 + $0x1788] sm:$0xff]
        %v1167 = vld [vmem:[%s334 + $0x1790] sm:$0xff]
        %v1168 = vld [vmem:[%s334 + $0x1798] sm:$0xff]
        %v1169 = vld [vmem:[%s334 + $0x17a0] sm:$0xff]
        %v1170 = vld [vmem:[%s334 + $0x17a8] sm:$0xff]
        %v1171 = vld [vmem:[%s334 + $0x17b0] sm:$0xff]
        %v1172 = vld [vmem:[%s334 + $0x17b8] sm:$0xff]
        %v1173 = vld [vmem:[%s334 + $0x17c0] sm:$0xff]
        %v1174 = vld [vmem:[%s334 + $0x17c8] sm:$0xff]
        %v1175 = vld [vmem:[%s334 + $0x17d0] sm:$0xff]
        %v1176 = vld [vmem:[%s334 + $0x17d8] sm:$0xff]
        %v1177 = vld [vmem:[%s334 + $0x17e0] sm:$0xff]
        %v1178 = vld [vmem:[%s334 + $0x17e8] sm:$0xff]
        %v1179 = vld [vmem:[%s334 + $0x17f0] sm:$0xff]
        %v1180 = vld [vmem:[%s334 + $0x17f8] sm:$0xff]
        %v1181 = vld [vmem:[%s334 + $0x1800] sm:$0xff]
        %v1182 = vld [vmem:[%s334 + $0x1808] sm:$0xff]
        %v1183 = vld [vmem:[%s334 + $0x1810] sm:$0xff]
        %v1184 = vld [vmem:[%s334 + $0x1818] sm:$0xff]
        %v1185 = vld [vmem:[%s334 + $0x1820] sm:$0xff]
        %v1186 = vld [vmem:[%s334 + $0x1828] sm:$0xff]
        %v1187 = vld [vmem:[%s334 + $0x1830] sm:$0xff]
        %v1188 = vld [vmem:[%s334 + $0x1838] sm:$0xff]
        %v1189 = vld [vmem:[%s334 + $0x1840] sm:$0xff]
        %v1190 = vld [vmem:[%s334 + $0x1848] sm:$0xff]
        %v1191 = vld [vmem:[%s334 + $0x1850] sm:$0xff]
        %v1192 = vld [vmem:[%s334 + $0x1858] sm:$0xff]
        %v1193 = vld [vmem:[%s334 + $0x1860] sm:$0xff]
        %v1194 = vld [vmem:[%s334 + $0x1868] sm:$0xff]
        %v1195 = vld [vmem:[%s334 + $0x1870] sm:$0xff]
        %v1196 = vld [vmem:[%s334 + $0x1878] sm:$0xff]
        %v1197 = vld [vmem:[%s334 + $0x1880] sm:$0xff]
        %v1198 = vld [vmem:[%s334 + $0x1888] sm:$0xff]
        %v1199 = vld [vmem:[%s334 + $0x1890] sm:$0xff]
        %v1200 = vld [vmem:[%s334 + $0x1898] sm:$0xff]
        %v1201 = vld [vmem:[%s334 + $0x18a0] sm:$0xff]
        %v1202 = vld [vmem:[%s334 + $0x18a8] sm:$0xff]
        %v1203 = vld [vmem:[%s334 + $0x18b0] sm:$0xff]
        %v1204 = vld [vmem:[%s334 + $0x18b8] sm:$0xff]
        %v1205 = vld [vmem:[%s334 + $0x18c0] sm:$0xff]
        %v1206 = vld [vmem:[%s334 + $0x18c8] sm:$0xff]
        %v1207 = vld [vmem:[%s334 + $0x18d0] sm:$0xff]
        %v1208 = vld [vmem:[%s334 + $0x18d8] sm:$0xff]
        %v1209 = vld [vmem:[%s334 + $0x18e0] sm:$0xff]
        %v1210 = vld [vmem:[%s334 + $0x18e8] sm:$0xff]
        %v1211 = vld [vmem:[%s334 + $0x18f0] sm:$0xff]
        %v1212 = vld [vmem:[%s334 + $0x18f8] sm:$0xff]
        %v1213 = vld [vmem:[%s334 + $0x1900] sm:$0xff]
        %v1214 = vld [vmem:[%s334 + $0x1908] sm:$0xff]
        %v1215 = vld [vmem:[%s334 + $0x1910] sm:$0xff]
        %v1216 = vld [vmem:[%s334 + $0x1918] sm:$0xff]
        %v1217 = vld [vmem:[%s334 + $0x1920] sm:$0xff]
        %v1218 = vld [vmem:[%s334 + $0x1928] sm:$0xff]
        %v1219 = vld [vmem:[%s334 + $0x1930] sm:$0xff]
        %v1220 = vld [vmem:[%s334 + $0x1938] sm:$0xff]
        %v1221 = vld [vmem:[%s334 + $0x1940] sm:$0xff]
        %v1222 = vld [vmem:[%s334 + $0x1948] sm:$0xff]
        %v1223 = vld [vmem:[%s334 + $0x1950] sm:$0xff]
        %v1224 = vld [vmem:[%s334 + $0x1958] sm:$0xff]
        %v1225 = vld [vmem:[%s334 + $0x1960] sm:$0xff]
        %v1226 = vld [vmem:[%s334 + $0x1968] sm:$0xff]
        %v1227 = vld [vmem:[%s334 + $0x1970] sm:$0xff]
        %v1228 = vld [vmem:[%s334 + $0x1978] sm:$0xff]
        %v1229 = vld [vmem:[%s334 + $0x1980] sm:$0xff]
        %v1230 = vld [vmem:[%s334 + $0x1988] sm:$0xff]
        %v1231 = vld [vmem:[%s334 + $0x1990] sm:$0xff]
        %v1232 = vld [vmem:[%s334 + $0x1998] sm:$0xff]
        %v1233 = vld [vmem:[%s334 + $0x19a0] sm:$0xff]
        %v1234 = vld [vmem:[%s334 + $0x19a8] sm:$0xff]
        %v1235 = vld [vmem:[%s334 + $0x19b0] sm:$0xff]
        %v1236 = vld [vmem:[%s334 + $0x19b8] sm:$0xff]
        %v1237 = vld [vmem:[%s334 + $0x19c0] sm:$0xff]
        %v1238 = vld [vmem:[%s334 + $0x19c8] sm:$0xff]
        %v1239 = vld [vmem:[%s334 + $0x19d0] sm:$0xff]
        %v1240 = vld [vmem:[%s334 + $0x19d8] sm:$0xff]
        %v1241 = vld [vmem:[%s334 + $0x19e0] sm:$0xff]
        %v1242 = vld [vmem:[%s334 + $0x19e8] sm:$0xff]
        %v1243 = vld [vmem:[%s334 + $0x19f0] sm:$0xff]
        %v1244 = vld [vmem:[%s334 + $0x19f8] sm:$0xff]
        %v1245 = vld [vmem:[%s334 + $0x1a00] sm:$0xff]
        %v1246 = vld [vmem:[%s334 + $0x1a08] sm:$0xff]
        %v1247 = vld [vmem:[%s334 + $0x1a10] sm:$0xff]
        %v1248 = vld [vmem:[%s334 + $0x1a18] sm:$0xff]
        %v1249 = vld [vmem:[%s334 + $0x1a20] sm:$0xff]
        %v1250 = vld [vmem:[%s334 + $0x1a28] sm:$0xff]
        %v1251 = vld [vmem:[%s334 + $0x1a30] sm:$0xff]
        %v1252 = vld [vmem:[%s334 + $0x1a38] sm:$0xff]
        %v1253 = vld [vmem:[%s334 + $0x1a40] sm:$0xff]
        %v1254 = vld [vmem:[%s334 + $0x1a48] sm:$0xff]
        %v1255 = vld [vmem:[%s334 + $0x1a50] sm:$0xff]
        %v1256 = vld [vmem:[%s334 + $0x1a58] sm:$0xff]
        %v1257 = vld [vmem:[%s334 + $0x1a60] sm:$0xff]
        %v1258 = vld [vmem:[%s334 + $0x1a68] sm:$0xff]
        %v1259 = vld [vmem:[%s334 + $0x1a70] sm:$0xff]
        %v1260 = vld [vmem:[%s334 + $0x1a78] sm:$0xff]
        %v1261 = vld [vmem:[%s334 + $0x1a80] sm:$0xff]
        %v1262 = vld [vmem:[%s334 + $0x1a88] sm:$0xff]
        %v1263 = vld [vmem:[%s334 + $0x1a90] sm:$0xff]
        %v1264 = vld [vmem:[%s334 + $0x1a98] sm:$0xff]
        %v1265 = vld [vmem:[%s334 + $0x1aa0] sm:$0xff]
        %v1266 = vld [vmem:[%s334 + $0x1aa8] sm:$0xff]
        %v1267 = vld [vmem:[%s334 + $0x1ab0] sm:$0xff]
        %v1268 = vld [vmem:[%s334 + $0x1ab8] sm:$0xff]
        %v1269 = vld [vmem:[%s334 + $0x1ac0] sm:$0xff]
        %v1270 = vld [vmem:[%s334 + $0x1ac8] sm:$0xff]
        %v1271 = vld [vmem:[%s334 + $0x1ad0] sm:$0xff]
        %v1272 = vld [vmem:[%s334 + $0x1ad8] sm:$0xff]
        %v1273 = vld [vmem:[%s334 + $0x1ae0] sm:$0xff]
        %v1274 = vld [vmem:[%s334 + $0x1ae8] sm:$0xff]
        %v1275 = vld [vmem:[%s334 + $0x1af0] sm:$0xff]
        %v1276 = vld [vmem:[%s334 + $0x1af8] sm:$0xff]
        %v1277 = vld [vmem:[%s334 + $0x1b00] sm:$0xff]
        %v1278 = vld [vmem:[%s334 + $0x1b08] sm:$0xff]
        %v1279 = vld [vmem:[%s334 + $0x1b10] sm:$0xff]
        %v1280 = vld [vmem:[%s334 + $0x1b18] sm:$0xff]
        %v1281 = vld [vmem:[%s334 + $0x1b20] sm:$0xff]
        %v1282 = vld [vmem:[%s334 + $0x1b28] sm:$0xff]
        %v1283 = vld [vmem:[%s334 + $0x1b30] sm:$0xff]
        %v1284 = vld [vmem:[%s334 + $0x1b38] sm:$0xff]
        %v1285 = vld [vmem:[%s334 + $0x1b40] sm:$0xff]
        %v1286 = vld [vmem:[%s334 + $0x1b48] sm:$0xff]
        %v1287 = vld [vmem:[%s334 + $0x1b50] sm:$0xff]
        %v1288 = vld [vmem:[%s334 + $0x1b58] sm:$0xff]
        %v1289 = vld [vmem:[%s334 + $0x1b60] sm:$0xff]
        %v1290 = vld [vmem:[%s334 + $0x1b68] sm:$0xff]
        %v1291 = vld [vmem:[%s334 + $0x1b70] sm:$0xff]
        %v1292 = vld [vmem:[%s334 + $0x1b78] sm:$0xff]
        %v1293 = vld [vmem:[%s334 + $0x1b80] sm:$0xff]
        %v1294 = vld [vmem:[%s334 + $0x1b88] sm:$0xff]
        %v1295 = vld [vmem:[%s334 + $0x1b90] sm:$0xff]
        %v1296 = vld [vmem:[%s334 + $0x1b98] sm:$0xff]
        %v1297 = vld [vmem:[%s334 + $0x1ba0] sm:$0xff]
        %v1298 = vld [vmem:[%s334 + $0x1ba8] sm:$0xff]
        %v1299 = vld [vmem:[%s334 + $0x1bb0] sm:$0xff]
        %v1300 = vld [vmem:[%s334 + $0x1bb8] sm:$0xff]
        %v1301 = vld [vmem:[%s334 + $0x1bc0] sm:$0xff]
        %v1302 = vld [vmem:[%s334 + $0x1bc8] sm:$0xff]
        %v1303 = vld [vmem:[%s334 + $0x1bd0] sm:$0xff]
        %v1304 = vld [vmem:[%s334 + $0x1bd8] sm:$0xff]
        %v1305 = vld [vmem:[%s334 + $0x1be0] sm:$0xff]
        %v1306 = vld [vmem:[%s334 + $0x1be8] sm:$0xff]
        %v1307 = vld [vmem:[%s334 + $0x1bf0] sm:$0xff]
        %v1308 = vld [vmem:[%s334 + $0x1bf8] sm:$0xff]
        %v1309 = vld [vmem:[%s334 + $0x1c00] sm:$0xff]
        %v1310 = vld [vmem:[%s334 + $0x1c08] sm:$0xff]
        %v1311 = vld [vmem:[%s334 + $0x1c10] sm:$0xff]
        %v1312 = vld [vmem:[%s334 + $0x1c18] sm:$0xff]
        %v1313 = vld [vmem:[%s334 + $0x1c20] sm:$0xff]
        %v1314 = vld [vmem:[%s334 + $0x1c28] sm:$0xff]
        %v1315 = vld [vmem:[%s334 + $0x1c30] sm:$0xff]
        %v1316 = vld [vmem:[%s334 + $0x1c38] sm:$0xff]
        %v1317 = vld [vmem:[%s334 + $0x1c40] sm:$0xff]
        %v1318 = vld [vmem:[%s334 + $0x1c48] sm:$0xff]
        %v1319 = vld [vmem:[%s334 + $0x1c50] sm:$0xff]
        %v1320 = vld [vmem:[%s334 + $0x1c58] sm:$0xff]
        %v1321 = vld [vmem:[%s334 + $0x1c60] sm:$0xff]
        %v1322 = vld [vmem:[%s334 + $0x1c68] sm:$0xff]
        %v1323 = vld [vmem:[%s334 + $0x1c70] sm:$0xff]
        %v1324 = vld [vmem:[%s334 + $0x1c78] sm:$0xff]
        %v1325 = vld [vmem:[%s334 + $0x1c80] sm:$0xff]
        %v1326 = vld [vmem:[%s334 + $0x1c88] sm:$0xff]
        %v1327 = vld [vmem:[%s334 + $0x1c90] sm:$0xff]
        %v1328 = vld [vmem:[%s334 + $0x1c98] sm:$0xff]
        %v1329 = vld [vmem:[%s334 + $0x1ca0] sm:$0xff]
        %v1330 = vld [vmem:[%s334 + $0x1ca8] sm:$0xff]
        %v1331 = vld [vmem:[%s334 + $0x1cb0] sm:$0xff]
        %v1332 = vld [vmem:[%s334 + $0x1cb8] sm:$0xff]
        %v1333 = vld [vmem:[%s334 + $0x1cc0] sm:$0xff]
        %v1334 = vld [vmem:[%s334 + $0x1cc8] sm:$0xff]
        %v1335 = vld [vmem:[%s334 + $0x1cd0] sm:$0xff]
        %v1336 = vld [vmem:[%s334 + $0x1cd8] sm:$0xff]
        %v1337 = vld [vmem:[%s334 + $0x1ce0] sm:$0xff]
        %v1338 = vld [vmem:[%s334 + $0x1ce8] sm:$0xff]
        %v1339 = vld [vmem:[%s334 + $0x1cf0] sm:$0xff]
        %v1340 = vld [vmem:[%s334 + $0x1cf8] sm:$0xff]
        %v1341 = vld [vmem:[%s334 + $0x1d00] sm:$0xff]
        %v1342 = vld [vmem:[%s334 + $0x1d08] sm:$0xff]
        %v1343 = vld [vmem:[%s334 + $0x1d10] sm:$0xff]
        %v1344 = vld [vmem:[%s334 + $0x1d18] sm:$0xff]
        %v1345 = vld [vmem:[%s334 + $0x1d20] sm:$0xff]
        %v1346 = vld [vmem:[%s334 + $0x1d28] sm:$0xff]
        %v1347 = vld [vmem:[%s334 + $0x1d30] sm:$0xff]
        %v1348 = vld [vmem:[%s334 + $0x1d38] sm:$0xff]
        %v1349 = vld [vmem:[%s334 + $0x1d40] sm:$0xff]
        %v1350 = vld [vmem:[%s334 + $0x1d48] sm:$0xff]
        %v1351 = vld [vmem:[%s334 + $0x1d50] sm:$0xff]
        %v1352 = vld [vmem:[%s334 + $0x1d58] sm:$0xff]
        %v1353 = vld [vmem:[%s334 + $0x1d60] sm:$0xff]
        %v1354 = vld [vmem:[%s334 + $0x1d68] sm:$0xff]
        %v1355 = vld [vmem:[%s334 + $0x1d70] sm:$0xff]
        %v1356 = vld [vmem:[%s334 + $0x1d78] sm:$0xff]
        %v1357 = vld [vmem:[%s334 + $0x1d80] sm:$0xff]
        %v1358 = vld [vmem:[%s334 + $0x1d88] sm:$0xff]
        %v1359 = vld [vmem:[%s334 + $0x1d90] sm:$0xff]
        %v1360 = vld [vmem:[%s334 + $0x1d98] sm:$0xff]
        %v1361 = vld [vmem:[%s334 + $0x1da0] sm:$0xff]
        %v1362 = vld [vmem:[%s334 + $0x1da8] sm:$0xff]
        %v1363 = vld [vmem:[%s334 + $0x1db0] sm:$0xff]
        %v1364 = vld [vmem:[%s334 + $0x1db8] sm:$0xff]
        %v1365 = vld [vmem:[%s334 + $0x1dc0] sm:$0xff]
        %v1366 = vld [vmem:[%s334 + $0x1dc8] sm:$0xff]
        %v1367 = vld [vmem:[%s334 + $0x1dd0] sm:$0xff]
        %v1368 = vld [vmem:[%s334 + $0x1dd8] sm:$0xff]
        %v1369 = vld [vmem:[%s334 + $0x1de0] sm:$0xff]
        %v1370 = vld [vmem:[%s334 + $0x1de8] sm:$0xff]
        %v1371 = vld [vmem:[%s334 + $0x1df0] sm:$0xff]
        %v1372 = vld [vmem:[%s334 + $0x1df8] sm:$0xff]
        %v1373 = vld [vmem:[%s334 + $0x1e00] sm:$0xff]
        %v1374 = vld [vmem:[%s334 + $0x1e08] sm:$0xff]
        %v1375 = vld [vmem:[%s334 + $0x1e10] sm:$0xff]
        %v1376 = vld [vmem:[%s334 + $0x1e18] sm:$0xff]
        %v1377 = vld [vmem:[%s334 + $0x1e20] sm:$0xff]
        %v1378 = vld [vmem:[%s334 + $0x1e28] sm:$0xff]
        %v1379 = vld [vmem:[%s334 + $0x1e30] sm:$0xff]
        %v1380 = vld [vmem:[%s334 + $0x1e38] sm:$0xff]
        %v1381 = vld [vmem:[%s334 + $0x1e40] sm:$0xff]
        %v1382 = vld [vmem:[%s334 + $0x1e48] sm:$0xff]
        %v1383 = vld [vmem:[%s334 + $0x1e50] sm:$0xff]
        %v1384 = vld [vmem:[%s334 + $0x1e58] sm:$0xff]
        %v1385 = vld [vmem:[%s334 + $0x1e60] sm:$0xff]
        %v1386 = vld [vmem:[%s334 + $0x1e68] sm:$0xff]
        %v1387 = vld [vmem:[%s334 + $0x1e70] sm:$0xff]
        %v1388 = vld [vmem:[%s334 + $0x1e78] sm:$0xff]
        %v1389 = vld [vmem:[%s334 + $0x1e80] sm:$0xff]
        %v1390 = vld [vmem:[%s334 + $0x1e88] sm:$0xff]
        %v1391 = vld [vmem:[%s334 + $0x1e90] sm:$0xff]
        %v1392 = vld [vmem:[%s334 + $0x1e98] sm:$0xff]
        %v1393 = vld [vmem:[%s334 + $0x1ea0] sm:$0xff]
        %v1394 = vld [vmem:[%s334 + $0x1ea8] sm:$0xff]
        %v1395 = vld [vmem:[%s334 + $0x1eb0] sm:$0xff]
        %v1396 = vld [vmem:[%s334 + $0x1eb8] sm:$0xff]
        %v1397 = vld [vmem:[%s334 + $0x1ec0] sm:$0xff]
        %v1398 = vld [vmem:[%s334 + $0x1ec8] sm:$0xff]
        %v1399 = vld [vmem:[%s334 + $0x1ed0] sm:$0xff]
        %v1400 = vld [vmem:[%s334 + $0x1ed8] sm:$0xff]
        %v1401 = vld [vmem:[%s334 + $0x1ee0] sm:$0xff]
        %v1402 = vld [vmem:[%s334 + $0x1ee8] sm:$0xff]
        %v1403 = vld [vmem:[%s334 + $0x1ef0] sm:$0xff]
        %v1404 = vld [vmem:[%s334 + $0x1ef8] sm:$0xff]
        %v1405 = vld [vmem:[%s334 + $0x1f00] sm:$0xff]
        %v1406 = vld [vmem:[%s334 + $0x1f08] sm:$0xff]
        %v1407 = vld [vmem:[%s334 + $0x1f10] sm:$0xff]
        %v1408 = vld [vmem:[%s334 + $0x1f18] sm:$0xff]
        %v1409 = vld [vmem:[%s334 + $0x1f20] sm:$0xff]
        %v1410 = vld [vmem:[%s334 + $0x1f28] sm:$0xff]
        %v1411 = vld [vmem:[%s334 + $0x1f30] sm:$0xff]
        %v1412 = vld [vmem:[%s334 + $0x1f38] sm:$0xff]
        %v1413 = vld [vmem:[%s334 + $0x1f40] sm:$0xff]
        %v1414 = vld [vmem:[%s334 + $0x1f48] sm:$0xff]
        %v1415 = vld [vmem:[%s334 + $0x1f50] sm:$0xff]
        %v1416 = vld [vmem:[%s334 + $0x1f58] sm:$0xff]
        %v1417 = vld [vmem:[%s334 + $0x1f60] sm:$0xff]
        %v1418 = vld [vmem:[%s334 + $0x1f68] sm:$0xff]
        %v1419 = vld [vmem:[%s334 + $0x1f70] sm:$0xff]
        %v1420 = vld [vmem:[%s334 + $0x1f78] sm:$0xff]
        %v1421 = vld [vmem:[%s334 + $0x1f80] sm:$0xff]
        %v1422 = vld [vmem:[%s334 + $0x1f88] sm:$0xff]
        %v1423 = vld [vmem:[%s334 + $0x1f90] sm:$0xff]
        %v1424 = vld [vmem:[%s334 + $0x1f98] sm:$0xff]
        %v1425 = vld [vmem:[%s334 + $0x1fa0] sm:$0xff]
        %v1426 = vld [vmem:[%s334 + $0x1fa8] sm:$0xff]
        %v1427 = vld [vmem:[%s334 + $0x1fb0] sm:$0xff]
        %v1428 = vld [vmem:[%s334 + $0x1fb8] sm:$0xff]
        %v1429 = vld [vmem:[%s334 + $0x1fc0] sm:$0xff]
        %v1430 = vld [vmem:[%s334 + $0x1fc8] sm:$0xff]
        %v1431 = vld [vmem:[%s334 + $0x1fd0] sm:$0xff]
        %v1432 = vld [vmem:[%s334 + $0x1fd8] sm:$0xff]
        %v1433 = vld [vmem:[%s334 + $0x1fe0] sm:$0xff]
        %v1434 = vld [vmem:[%s334 + $0x1fe8] sm:$0xff]
        %v1435 = vld [vmem:[%s334 + $0x1ff0] sm:$0xff]
        %v1436 = vld [vmem:[%s334 + $0x1ff8] sm:$0xff]
        %v1437 = vld [vmem:[%s334 + $0x2000] sm:$0xff]
        %v1438 = vld [vmem:[%s334 + $0x2008] sm:$0xff]
        %v1439 = vld [vmem:[%s334 + $0x2010] sm:$0xff]
        %v1440 = vld [vmem:[%s334 + $0x2018] sm:$0xff]
        %v1441 = vld [vmem:[%s334 + $0x2020] sm:$0xff]
        %v1442 = vld [vmem:[%s334 + $0x2028] sm:$0xff]
        %v1443 = vld [vmem:[%s334 + $0x2030] sm:$0xff]
        %v1444 = vld [vmem:[%s334 + $0x2038] sm:$0xff]
        %v1445 = vld [vmem:[%s334 + $0x2040] sm:$0xff]
        %v1446 = vld [vmem:[%s334 + $0x2048] sm:$0xff]
        %v1447 = vld [vmem:[%s334 + $0x2050] sm:$0xff]
        %v1448 = vld [vmem:[%s334 + $0x2058] sm:$0xff]
        %v1449 = vld [vmem:[%s334 + $0x2060] sm:$0xff]
        %v1450 = vld [vmem:[%s334 + $0x2068] sm:$0xff]
        %v1451 = vld [vmem:[%s334 + $0x2070] sm:$0xff]
        %v1452 = vld [vmem:[%s334 + $0x2078] sm:$0xff]
        %v1453 = vld [vmem:[%s334 + $0x2080] sm:$0xff]
        %v1454 = vld [vmem:[%s334 + $0x2088] sm:$0xff]
        %v1455 = vld [vmem:[%s334 + $0x2090] sm:$0xff]
        %v1456 = vld [vmem:[%s334 + $0x2098] sm:$0xff]
        %v1457 = vld [vmem:[%s334 + $0x20a0] sm:$0xff]
        %v1458 = vld [vmem:[%s334 + $0x20a8] sm:$0xff]
        %v1459 = vld [vmem:[%s334 + $0x20b0] sm:$0xff]
        %v1460 = vld [vmem:[%s334 + $0x20b8] sm:$0xff]
        %v1461 = vld [vmem:[%s334 + $0x20c0] sm:$0xff]
        %v1462 = vld [vmem:[%s334 + $0x20c8] sm:$0xff]
        %v1463 = vld [vmem:[%s334 + $0x20d0] sm:$0xff]
        %v1464 = vld [vmem:[%s334 + $0x20d8] sm:$0xff]
        %v1465 = vld [vmem:[%s334 + $0x20e0] sm:$0xff]
        %v1466 = vld [vmem:[%s334 + $0x20e8] sm:$0xff]
        %v1467 = vld [vmem:[%s334 + $0x20f0] sm:$0xff]
        %v1468 = vld [vmem:[%s334 + $0x20f8] sm:$0xff]
        %v1469 = vld [vmem:[%s334 + $0x2100] sm:$0xff]
        %v1470 = vld [vmem:[%s334 + $0x2108] sm:$0xff]
        %v1471 = vld [vmem:[%s334 + $0x2110] sm:$0xff]
        %v1472 = vld [vmem:[%s334 + $0x2118] sm:$0xff]
        %v1473 = vld [vmem:[%s334 + $0x2120] sm:$0xff]
        %v1474 = vld [vmem:[%s334 + $0x2128] sm:$0xff]
        %v1475 = vld [vmem:[%s334 + $0x2130] sm:$0xff]
        %v1476 = vld [vmem:[%s334 + $0x2138] sm:$0xff]
        %v1477 = vld [vmem:[%s334 + $0x2140] sm:$0xff]
        %v1478 = vld [vmem:[%s334 + $0x2148] sm:$0xff]
        %v1479 = vld [vmem:[%s334 + $0x2150] sm:$0xff]
        %v1480 = vld [vmem:[%s334 + $0x2158] sm:$0xff]
        %v1481 = vld [vmem:[%s334 + $0x2160] sm:$0xff]
        %v1482 = vld [vmem:[%s334 + $0x2168] sm:$0xff]
        %v1483 = vld [vmem:[%s334 + $0x2170] sm:$0xff]
        %v1484 = vld [vmem:[%s334 + $0x2178] sm:$0xff]
        %v1485 = vld [vmem:[%s334 + $0x2180] sm:$0xff]
        %v1486 = vld [vmem:[%s334 + $0x2188] sm:$0xff]
        %v1487 = vld [vmem:[%s334 + $0x2190] sm:$0xff]
        %v1488 = vld [vmem:[%s334 + $0x2198] sm:$0xff]
        %v1489 = vld [vmem:[%s334 + $0x21a0] sm:$0xff]
        %v1490 = vld [vmem:[%s334 + $0x21a8] sm:$0xff]
        %v1491 = vld [vmem:[%s334 + $0x21b0] sm:$0xff]
        %v1492 = vld [vmem:[%s334 + $0x21b8] sm:$0xff]
        %v1493 = vld [vmem:[%s334 + $0x21c0] sm:$0xff]
        %v1494 = vld [vmem:[%s334 + $0x21c8] sm:$0xff]
        %v1495 = vld [vmem:[%s334 + $0x21d0] sm:$0xff]
        %v1496 = vld [vmem:[%s334 + $0x21d8] sm:$0xff]
        %v1497 = vld [vmem:[%s334 + $0x21e0] sm:$0xff]
        %v1498 = vld [vmem:[%s334 + $0x21e8] sm:$0xff]
        %v1499 = vld [vmem:[%s334 + $0x21f0] sm:$0xff]
        %v1500 = vld [vmem:[%s334 + $0x21f8] sm:$0xff]
        %v1501 = vld [vmem:[%s334 + $0x2200] sm:$0xff]
        %v1502 = vld [vmem:[%s334 + $0x2208] sm:$0xff]
        %v1503 = vld [vmem:[%s334 + $0x2210] sm:$0xff]
        %v1504 = vld [vmem:[%s334 + $0x2218] sm:$0xff]
        %v1505 = vld [vmem:[%s334 + $0x2220] sm:$0xff]
        %v1506 = vld [vmem:[%s334 + $0x2228] sm:$0xff]
        %v1507 = vld [vmem:[%s334 + $0x2230] sm:$0xff]
        %v1508 = vld [vmem:[%s334 + $0x2238] sm:$0xff]
        %v1509 = vld [vmem:[%s334 + $0x2240] sm:$0xff]
        %v1510 = vld [vmem:[%s334 + $0x2248] sm:$0xff]
        %v1511 = vld [vmem:[%s334 + $0x2250] sm:$0xff]
        %v1512 = vld [vmem:[%s334 + $0x2258] sm:$0xff]
        %v1513 = vld [vmem:[%s334 + $0x2260] sm:$0xff]
        %v1514 = vld [vmem:[%s334 + $0x2268] sm:$0xff]
        %v1515 = vld [vmem:[%s334 + $0x2270] sm:$0xff]
        %v1516 = vld [vmem:[%s334 + $0x2278] sm:$0xff]
        %v1517 = vld [vmem:[%s334 + $0x2280] sm:$0xff]
        %v1518 = vld [vmem:[%s334 + $0x2288] sm:$0xff]
        %v1519 = vld [vmem:[%s334 + $0x2290] sm:$0xff]
        %v1520 = vld [vmem:[%s334 + $0x2298] sm:$0xff]
        %v1521 = vld [vmem:[%s334 + $0x22a0] sm:$0xff]
        %v1522 = vld [vmem:[%s334 + $0x22a8] sm:$0xff]
        %v1523 = vld [vmem:[%s334 + $0x22b0] sm:$0xff]
        %v1524 = vld [vmem:[%s334 + $0x22b8] sm:$0xff]
        %v1525 = vld [vmem:[%s334 + $0x22c0] sm:$0xff]
        %v1526 = vld [vmem:[%s334 + $0x22c8] sm:$0xff]
        %v1527 = vld [vmem:[%s334 + $0x22d0] sm:$0xff]
        %v1528 = vld [vmem:[%s334 + $0x22d8] sm:$0xff]
        %v1529 = vld [vmem:[%s334 + $0x22e0] sm:$0xff]
        %v1530 = vld [vmem:[%s334 + $0x22e8] sm:$0xff]
        %v1531 = vld [vmem:[%s334 + $0x22f0] sm:$0xff]
        %v1532 = vld [vmem:[%s334 + $0x22f8] sm:$0xff]
        %v1533 = vld [vmem:[%s334 + $0x2300] sm:$0xff]
        %v1534 = vld [vmem:[%s334 + $0x2308] sm:$0xff]
        %v1535 = vld [vmem:[%s334 + $0x2310] sm:$0xff]
        %v1536 = vld [vmem:[%s334 + $0x2318] sm:$0xff]
        %v1537 = vld [vmem:[%s334 + $0x2320] sm:$0xff]
        %v1538 = vld [vmem:[%s334 + $0x2328] sm:$0xff]
        %v1539 = vld [vmem:[%s334 + $0x2330] sm:$0xff]
        %v1540 = vld [vmem:[%s334 + $0x2338] sm:$0xff]
        %v1541 = vld [vmem:[%s334 + $0x2340] sm:$0xff]
        %v1542 = vld [vmem:[%s334 + $0x2348] sm:$0xff]
        %v1543 = vld [vmem:[%s334 + $0x2350] sm:$0xff]
        %v1544 = vld [vmem:[%s334 + $0x2358] sm:$0xff]
        %v1545 = vld [vmem:[%s334 + $0x2360] sm:$0xff]
        %v1546 = vld [vmem:[%s334 + $0x2368] sm:$0xff]
        %v1547 = vld [vmem:[%s334 + $0x2370] sm:$0xff]
        %v1548 = vld [vmem:[%s334 + $0x2378] sm:$0xff]
        %v1549 = vld [vmem:[%s334 + $0x2380] sm:$0xff]
        %v1550 = vld [vmem:[%s334 + $0x2388] sm:$0xff]
        %v1551 = vld [vmem:[%s334 + $0x2390] sm:$0xff]
        %v1552 = vld [vmem:[%s334 + $0x2398] sm:$0xff]
        %v1553 = vld [vmem:[%s334 + $0x23a0] sm:$0xff]
        %v1554 = vld [vmem:[%s334 + $0x23a8] sm:$0xff]
        %v1555 = vld [vmem:[%s334 + $0x23b0] sm:$0xff]
        %v1556 = vld [vmem:[%s334 + $0x23b8] sm:$0xff]
        %v1557 = vld [vmem:[%s334 + $0x23c0] sm:$0xff]
        %v1558 = vld [vmem:[%s334 + $0x23c8] sm:$0xff]
        %v1559 = vld [vmem:[%s334 + $0x23d0] sm:$0xff]
        %v1560 = vld [vmem:[%s334 + $0x23d8] sm:$0xff]
        %v1561 = vld [vmem:[%s334 + $0x23e0] sm:$0xff]
        %v1562 = vld [vmem:[%s334 + $0x23e8] sm:$0xff]
        %v1563 = vld [vmem:[%s334 + $0x23f0] sm:$0xff]
        %v1564 = vld [vmem:[%s334 + $0x23f8] sm:$0xff]
        %v1565 = vld [vmem:[%s334 + $0x2400] sm:$0xff]
        %v1566 = vld [vmem:[%s334 + $0x2408] sm:$0xff]
        %v1567 = vld [vmem:[%s334 + $0x2410] sm:$0xff]
        %v1568 = vld [vmem:[%s334 + $0x2418] sm:$0xff]
        %v1569 = vld [vmem:[%s334 + $0x2420] sm:$0xff]
        %v1570 = vld [vmem:[%s334 + $0x2428] sm:$0xff]
        %v1571 = vld [vmem:[%s334 + $0x2430] sm:$0xff]
        %v1572 = vld [vmem:[%s334 + $0x2438] sm:$0xff]
        %v1573 = vld [vmem:[%s334 + $0x2440] sm:$0xff]
        %v1574 = vld [vmem:[%s334 + $0x2448] sm:$0xff]
        %v1575 = vld [vmem:[%s334 + $0x2450] sm:$0xff]
        %v1576 = vld [vmem:[%s334 + $0x2458] sm:$0xff]
        %v1577 = vld [vmem:[%s334 + $0x2460] sm:$0xff]
        %v1578 = vld [vmem:[%s334 + $0x2468] sm:$0xff]
        %v1579 = vld [vmem:[%s334 + $0x2470] sm:$0xff]
        %v1580 = vld [vmem:[%s334 + $0x2478] sm:$0xff]
        %v1581 = vld [vmem:[%s334 + $0x2480] sm:$0xff]
        %v1582 = vld [vmem:[%s334 + $0x2488] sm:$0xff]
        %v1583 = vld [vmem:[%s334 + $0x2490] sm:$0xff]
        %v1584 = vld [vmem:[%s334 + $0x2498] sm:$0xff]
        %v1585 = vld [vmem:[%s334 + $0x24a0] sm:$0xff]
        %v1586 = vld [vmem:[%s334 + $0x24a8] sm:$0xff]
        %v1587 = vld [vmem:[%s334 + $0x24b0] sm:$0xff]
        %v1588 = vld [vmem:[%s334 + $0x24b8] sm:$0xff]
        %v1589 = vld [vmem:[%s334 + $0x24c0] sm:$0xff]
        %v1590 = vld [vmem:[%s334 + $0x24c8] sm:$0xff]
        %v1591 = vld [vmem:[%s334 + $0x24d0] sm:$0xff]
        %v1592 = vld [vmem:[%s334 + $0x24d8] sm:$0xff]
        %v1593 = vld [vmem:[%s334 + $0x24e0] sm:$0xff]
        %v1594 = vld [vmem:[%s334 + $0x24e8] sm:$0xff]
        %v1595 = vld [vmem:[%s334 + $0x24f0] sm:$0xff]
        %v1596 = vld [vmem:[%s334 + $0x24f8] sm:$0xff]
        %v1597 = vld [vmem:[%s334 + $0x2500] sm:$0xff]
        %v1598 = vld [vmem:[%s334 + $0x2508] sm:$0xff]
        %v1599 = vld [vmem:[%s334 + $0x2510] sm:$0xff]
        %v1600 = vld [vmem:[%s334 + $0x2518] sm:$0xff]
        %v1601 = vld [vmem:[%s334 + $0x2520] sm:$0xff]
        %v1602 = vld [vmem:[%s334 + $0x2528] sm:$0xff]
        %v1603 = vld [vmem:[%s334 + $0x2530] sm:$0xff]
        %v1604 = vld [vmem:[%s334 + $0x2538] sm:$0xff]
        %v1605 = vld [vmem:[%s334 + $0x2540] sm:$0xff]
        %v1606 = vld [vmem:[%s334 + $0x2548] sm:$0xff]
        %v1607 = vld [vmem:[%s334 + $0x2550] sm:$0xff]
        %v1608 = vld [vmem:[%s334 + $0x2558] sm:$0xff]
        %v1609 = vld [vmem:[%s334 + $0x2560] sm:$0xff]
        %v1610 = vld [vmem:[%s334 + $0x2568] sm:$0xff]
        %v1611 = vld [vmem:[%s334 + $0x2570] sm:$0xff]
        %v1612 = vld [vmem:[%s334 + $0x2578] sm:$0xff]
        %v1613 = vld [vmem:[%s334 + $0x2580] sm:$0xff]
        %v1614 = vld [vmem:[%s334 + $0x2588] sm:$0xff]
        %v1615 = vld [vmem:[%s334 + $0x2590] sm:$0xff]
        %v1616 = vld [vmem:[%s334 + $0x2598] sm:$0xff]
        %v1617 = vld [vmem:[%s334 + $0x25a0] sm:$0xff]
        %v1618 = vld [vmem:[%s334 + $0x25a8] sm:$0xff]
        %v1619 = vld [vmem:[%s334 + $0x25b0] sm:$0xff]
        %v1620 = vld [vmem:[%s334 + $0x25b8] sm:$0xff]
        %v1621 = vld [vmem:[%s334 + $0x25c0] sm:$0xff]
        %v1622 = vld [vmem:[%s334 + $0x25c8] sm:$0xff]
        %v1623 = vld [vmem:[%s334 + $0x25d0] sm:$0xff]
        %v1624 = vld [vmem:[%s334 + $0x25d8] sm:$0xff]
        %v1625 = vld [vmem:[%s334 + $0x25e0] sm:$0xff]
        %v1626 = vld [vmem:[%s334 + $0x25e8] sm:$0xff]
        %v1627 = vld [vmem:[%s334 + $0x25f0] sm:$0xff]
        %v1628 = vld [vmem:[%s334 + $0x25f8] sm:$0xff]
        %v1629 = vld [vmem:[%s334 + $0x2600] sm:$0xff]
        %v1630 = vld [vmem:[%s334 + $0x2608] sm:$0xff]
        %v1631 = vld [vmem:[%s334 + $0x2610] sm:$0xff]
        %v1632 = vld [vmem:[%s334 + $0x2618] sm:$0xff]
        %v1633 = vld [vmem:[%s334 + $0x2620] sm:$0xff]
        %v1634 = vld [vmem:[%s334 + $0x2628] sm:$0xff]
        %v1635 = vld [vmem:[%s334 + $0x2630] sm:$0xff]
        %v1636 = vld [vmem:[%s334 + $0x2638] sm:$0xff]
        %v1637 = vld [vmem:[%s334 + $0x2640] sm:$0xff]
        %v1638 = vld [vmem:[%s334 + $0x2648] sm:$0xff]
        %v1639 = vld [vmem:[%s334 + $0x2650] sm:$0xff]
        %v1640 = vld [vmem:[%s334 + $0x2658] sm:$0xff]
        %v1641 = vld [vmem:[%s334 + $0x2660] sm:$0xff]
        %v1642 = vld [vmem:[%s334 + $0x2668] sm:$0xff]
        %v1643 = vld [vmem:[%s334 + $0x2670] sm:$0xff]
        %v1644 = vld [vmem:[%s334 + $0x2678] sm:$0xff]
        %v1645 = vld [vmem:[%s334 + $0x2680] sm:$0xff]
        %v1646 = vld [vmem:[%s334 + $0x2688] sm:$0xff]
        %v1647 = vld [vmem:[%s334 + $0x2690] sm:$0xff]
        %v1648 = vld [vmem:[%s334 + $0x2698] sm:$0xff]
        %v1649 = vld [vmem:[%s334 + $0x26a0] sm:$0xff]
        %v1650 = vld [vmem:[%s334 + $0x26a8] sm:$0xff]
        %v1651 = vld [vmem:[%s334 + $0x26b0] sm:$0xff]
        %v1652 = vld [vmem:[%s334 + $0x26b8] sm:$0xff]
        %v1653 = vld [vmem:[%s334 + $0x26c0] sm:$0xff]
        %v1654 = vld [vmem:[%s334 + $0x26c8] sm:$0xff]
        %v1655 = vld [vmem:[%s334 + $0x26d0] sm:$0xff]
        %v1656 = vld [vmem:[%s334 + $0x26d8] sm:$0xff]
        %v1657 = vld [vmem:[%s334 + $0x26e0] sm:$0xff]
        %v1658 = vld [vmem:[%s334 + $0x26e8] sm:$0xff]
        %v1659 = vld [vmem:[%s334 + $0x26f0] sm:$0xff]
        %v1660 = vld [vmem:[%s334 + $0x26f8] sm:$0xff]
        %v1661 = vld [vmem:[%s334 + $0x2700] sm:$0xff]
        %v1662 = vld [vmem:[%s334 + $0x2708] sm:$0xff]
        %v1663 = vld [vmem:[%s334 + $0x2710] sm:$0xff]
        %v1664 = vld [vmem:[%s334 + $0x2718] sm:$0xff]
        %v1665 = vld [vmem:[%s334 + $0x2720] sm:$0xff]
        %v1666 = vld [vmem:[%s334 + $0x2728] sm:$0xff]
        %v1667 = vld [vmem:[%s334 + $0x2730] sm:$0xff]
        %v1668 = vld [vmem:[%s334 + $0x2738] sm:$0xff]
        %v1669 = vld [vmem:[%s334 + $0x2740] sm:$0xff]
        %v1670 = vld [vmem:[%s334 + $0x2748] sm:$0xff]
        %v1671 = vld [vmem:[%s334 + $0x2750] sm:$0xff]
        %v1672 = vld [vmem:[%s334 + $0x2758] sm:$0xff]
        %v1673 = vld [vmem:[%s334 + $0x2760] sm:$0xff]
        %v1674 = vld [vmem:[%s334 + $0x2768] sm:$0xff]
        %v1675 = vld [vmem:[%s334 + $0x2770] sm:$0xff]
        %v1676 = vld [vmem:[%s334 + $0x2778] sm:$0xff]
        %v1677 = vld [vmem:[%s334 + $0x2780] sm:$0xff]
        %v1678 = vld [vmem:[%s334 + $0x2788] sm:$0xff]
        %v1679 = vld [vmem:[%s334 + $0x2790] sm:$0xff]
        %v1680 = vld [vmem:[%s334 + $0x2798] sm:$0xff]
        %v1681 = vld [vmem:[%s334 + $0x27a0] sm:$0xff]
        %v1682 = vld [vmem:[%s334 + $0x27a8] sm:$0xff]
        %v1683 = vld [vmem:[%s334 + $0x27b0] sm:$0xff]
        %v1684 = vld [vmem:[%s334 + $0x27b8] sm:$0xff]
        %v1685 = vld [vmem:[%s334 + $0x27c0] sm:$0xff]
        %v1686 = vld [vmem:[%s334 + $0x27c8] sm:$0xff]
        %v1687 = vld [vmem:[%s334 + $0x27d0] sm:$0xff]
        %v1688 = vld [vmem:[%s334 + $0x27d8] sm:$0xff]
        %v1689 = vld [vmem:[%s334 + $0x27e0] sm:$0xff]
        %v1690 = vld [vmem:[%s334 + $0x27e8] sm:$0xff]
        %v1691 = vld [vmem:[%s334 + $0x27f0] sm:$0xff]
        %v1692 = vld [vmem:[%s334 + $0x27f8] sm:$0xff]
        %v1693 = vld [vmem:[%s334 + $0x2800] sm:$0xff]
        %v1694 = vld [vmem:[%s334 + $0x2808] sm:$0xff]
        %v1695 = vld [vmem:[%s334 + $0x2810] sm:$0xff]
        %v1696 = vld [vmem:[%s334 + $0x2818] sm:$0xff]
        %v1697 = vld [vmem:[%s334 + $0x2820] sm:$0xff]
        %v1698 = vld [vmem:[%s334 + $0x2828] sm:$0xff]
        %v1699 = vld [vmem:[%s334 + $0x2830] sm:$0xff]
        %v1700 = vld [vmem:[%s334 + $0x2838] sm:$0xff]
        %v1701 = vld [vmem:[%s334 + $0x2840] sm:$0xff]
        %v1702 = vld [vmem:[%s334 + $0x2848] sm:$0xff]
        %v1703 = vld [vmem:[%s334 + $0x2850] sm:$0xff]
        %v1704 = vld [vmem:[%s334 + $0x2858] sm:$0xff]
        %v1705 = vld [vmem:[%s334 + $0x2860] sm:$0xff]
        %v1706 = vld [vmem:[%s334 + $0x2868] sm:$0xff]
        %v1707 = vld [vmem:[%s334 + $0x2870] sm:$0xff]
        %v1708 = vld [vmem:[%s334 + $0x2878] sm:$0xff]
        %v1709 = vld [vmem:[%s334 + $0x2880] sm:$0xff]
        %v1710 = vld [vmem:[%s334 + $0x2888] sm:$0xff]
        %v1711 = vld [vmem:[%s334 + $0x2890] sm:$0xff]
        %v1712 = vld [vmem:[%s334 + $0x2898] sm:$0xff]
        %v1713 = vld [vmem:[%s334 + $0x28a0] sm:$0xff]
        %v1714 = vld [vmem:[%s334 + $0x28a8] sm:$0xff]
        %v1715 = vld [vmem:[%s334 + $0x28b0] sm:$0xff]
        %v1716 = vld [vmem:[%s334 + $0x28b8] sm:$0xff]
        %v1717 = vld [vmem:[%s334 + $0x28c0] sm:$0xff]
        %v1718 = vld [vmem:[%s334 + $0x28c8] sm:$0xff]
        %v1719 = vld [vmem:[%s334 + $0x28d0] sm:$0xff]
        %v1720 = vld [vmem:[%s334 + $0x28d8] sm:$0xff]
        %v1721 = vld [vmem:[%s334 + $0x28e0] sm:$0xff]
        %v1722 = vld [vmem:[%s334 + $0x28e8] sm:$0xff]
        %v1723 = vld [vmem:[%s334 + $0x28f0] sm:$0xff]
        %v1724 = vld [vmem:[%s334 + $0x28f8] sm:$0xff]
        %v1725 = vld [vmem:[%s334 + $0x2900] sm:$0xff]
        %v1726 = vld [vmem:[%s334 + $0x2908] sm:$0xff]
        %v1727 = vld [vmem:[%s334 + $0x2910] sm:$0xff]
        %v1728 = vld [vmem:[%s334 + $0x2918] sm:$0xff]
        %v1729 = vld [vmem:[%s334 + $0x2920] sm:$0xff]
        %v1730 = vld [vmem:[%s334 + $0x2928] sm:$0xff]
        %v1731 = vld [vmem:[%s334 + $0x2930] sm:$0xff]
        %v1732 = vld [vmem:[%s334 + $0x2938] sm:$0xff]
        %v1733 = vld [vmem:[%s334 + $0x2940] sm:$0xff]
        %v1734 = vld [vmem:[%s334 + $0x2948] sm:$0xff]
        %v1735 = vld [vmem:[%s334 + $0x2950] sm:$0xff]
        %v1736 = vld [vmem:[%s334 + $0x2958] sm:$0xff]
        %v1737 = vld [vmem:[%s334 + $0x2960] sm:$0xff]
        %v1738 = vld [vmem:[%s334 + $0x2968] sm:$0xff]
        %v1739 = vld [vmem:[%s334 + $0x2970] sm:$0xff]
        %v1740 = vld [vmem:[%s334 + $0x2978] sm:$0xff]
        %v1741 = vld [vmem:[%s334 + $0x2980] sm:$0xff]
        %v1742 = vld [vmem:[%s334 + $0x2988] sm:$0xff]
        %v1743 = vld [vmem:[%s334 + $0x2990] sm:$0xff]
        %v1744 = vld [vmem:[%s334 + $0x2998] sm:$0xff]
        %v1745 = vld [vmem:[%s334 + $0x29a0] sm:$0xff]
        %v1746 = vld [vmem:[%s334 + $0x29a8] sm:$0xff]
        %v1747 = vld [vmem:[%s334 + $0x29b0] sm:$0xff]
        %v1748 = vld [vmem:[%s334 + $0x29b8] sm:$0xff]
        %v1749 = vld [vmem:[%s334 + $0x29c0] sm:$0xff]
        %v1750 = vld [vmem:[%s334 + $0x29c8] sm:$0xff]
        %v1751 = vld [vmem:[%s334 + $0x29d0] sm:$0xff]
        %v1752 = vld [vmem:[%s334 + $0x29d8] sm:$0xff]
        %v1753 = vld [vmem:[%s334 + $0x29e0] sm:$0xff]
        %v1754 = vld [vmem:[%s334 + $0x29e8] sm:$0xff]
        %v1755 = vld [vmem:[%s334 + $0x29f0] sm:$0xff]
        %v1756 = vld [vmem:[%s334 + $0x29f8] sm:$0xff]
        %v1757 = vld [vmem:[%s334 + $0x2a00] sm:$0xff]
        %v1758 = vld [vmem:[%s334 + $0x2a08] sm:$0xff]
        %v1759 = vld [vmem:[%s334 + $0x2a10] sm:$0xff]
        %v1760 = vld [vmem:[%s334 + $0x2a18] sm:$0xff]
        %v1761 = vld [vmem:[%s334 + $0x2a20] sm:$0xff]
        %v1762 = vld [vmem:[%s334 + $0x2a28] sm:$0xff]
        %v1763 = vld [vmem:[%s334 + $0x2a30] sm:$0xff]
        %v1764 = vld [vmem:[%s334 + $0x2a38] sm:$0xff]
        %v1765 = vld [vmem:[%s334 + $0x2a40] sm:$0xff]
        %v1766 = vld [vmem:[%s334 + $0x2a48] sm:$0xff]
        %v1767 = vld [vmem:[%s334 + $0x2a50] sm:$0xff]
        %v1768 = vld [vmem:[%s334 + $0x2a58] sm:$0xff]
        %v1769 = vld [vmem:[%s334 + $0x2a60] sm:$0xff]
        %v1770 = vld [vmem:[%s334 + $0x2a68] sm:$0xff]
        %v1771 = vld [vmem:[%s334 + $0x2a70] sm:$0xff]
        %v1772 = vld [vmem:[%s334 + $0x2a78] sm:$0xff]
        %v1773 = vld [vmem:[%s334 + $0x2a80] sm:$0xff]
        %v1774 = vld [vmem:[%s334 + $0x2a88] sm:$0xff]
        %v1775 = vld [vmem:[%s334 + $0x2a90] sm:$0xff]
        %v1776 = vld [vmem:[%s334 + $0x2a98] sm:$0xff]
        %v1777 = vld [vmem:[%s334 + $0x2aa0] sm:$0xff]
        %v1778 = vld [vmem:[%s334 + $0x2aa8] sm:$0xff]
        %v1779 = vld [vmem:[%s334 + $0x2ab0] sm:$0xff]
        %v1780 = vld [vmem:[%s334 + $0x2ab8] sm:$0xff]
        %v1781 = vld [vmem:[%s334 + $0x2ac0] sm:$0xff]
        %v1782 = vld [vmem:[%s334 + $0x2ac8] sm:$0xff]
        %v1783 = vld [vmem:[%s334 + $0x2ad0] sm:$0xff]
        %v1784 = vld [vmem:[%s334 + $0x2ad8] sm:$0xff]
        %v1785 = vld [vmem:[%s334 + $0x2ae0] sm:$0xff]
        %v1786 = vld [vmem:[%s334 + $0x2ae8] sm:$0xff]
        %v1787 = vld [vmem:[%s334 + $0x2af0] sm:$0xff]
        %v1788 = vld [vmem:[%s334 + $0x2af8] sm:$0xff]
        %v1789 = vld [vmem:[%s334 + $0x2b00] sm:$0xff]
        %v1790 = vld [vmem:[%s334 + $0x2b08] sm:$0xff]
        %v1791 = vld [vmem:[%s334 + $0x2b10] sm:$0xff]
        %v1792 = vld [vmem:[%s334 + $0x2b18] sm:$0xff]
        %v1793 = vld [vmem:[%s334 + $0x2b20] sm:$0xff]
        %v1794 = vld [vmem:[%s334 + $0x2b28] sm:$0xff]
        %v1795 = vld [vmem:[%s334 + $0x2b30] sm:$0xff]
        %v1796 = vld [vmem:[%s334 + $0x2b38] sm:$0xff]
        %v1797 = vld [vmem:[%s334 + $0x2b40] sm:$0xff]
        %v1798 = vld [vmem:[%s334 + $0x2b48] sm:$0xff]
        %v1799 = vld [vmem:[%s334 + $0x2b50] sm:$0xff]
        %v1800 = vld [vmem:[%s334 + $0x2b58] sm:$0xff]
        %v1801 = vld [vmem:[%s334 + $0x2b60] sm:$0xff]
        %v1802 = vld [vmem:[%s334 + $0x2b68] sm:$0xff]
        %v1803 = vld [vmem:[%s334 + $0x2b70] sm:$0xff]
        %v1804 = vld [vmem:[%s334 + $0x2b78] sm:$0xff]
        %v1805 = vld [vmem:[%s334 + $0x2b80] sm:$0xff]
        %v1806 = vld [vmem:[%s334 + $0x2b88] sm:$0xff]
        %v1807 = vld [vmem:[%s334 + $0x2b90] sm:$0xff]
        %v1808 = vld [vmem:[%s334 + $0x2b98] sm:$0xff]
        %v1809 = vld [vmem:[%s334 + $0x2ba0] sm:$0xff]
        %v1810 = vld [vmem:[%s334 + $0x2ba8] sm:$0xff]
        %v1811 = vld [vmem:[%s334 + $0x2bb0] sm:$0xff]
        %v1812 = vld [vmem:[%s334 + $0x2bb8] sm:$0xff]
        %v1813 = vld [vmem:[%s334 + $0x2bc0] sm:$0xff]
        %v1814 = vld [vmem:[%s334 + $0x2bc8] sm:$0xff]
        %v1815 = vld [vmem:[%s334 + $0x2bd0] sm:$0xff]
        %v1816 = vld [vmem:[%s334 + $0x2bd8] sm:$0xff]
        %v1817 = vld [vmem:[%s334 + $0x2be0] sm:$0xff]
        %v1818 = vld [vmem:[%s334 + $0x2be8] sm:$0xff]
        %v1819 = vld [vmem:[%s334 + $0x2bf0] sm:$0xff]
        %v1820 = vld [vmem:[%s334 + $0x2bf8] sm:$0xff]
        %v1821 = vld [vmem:[%s334 + $0x2c00] sm:$0xff]
        %v1822 = vld [vmem:[%s334 + $0x2c08] sm:$0xff]
        %v1823 = vld [vmem:[%s334 + $0x2c10] sm:$0xff]
        %v1824 = vld [vmem:[%s334 + $0x2c18] sm:$0xff]
        %v1825 = vld [vmem:[%s334 + $0x2c20] sm:$0xff]
        %v1826 = vld [vmem:[%s334 + $0x2c28] sm:$0xff]
        %v1827 = vld [vmem:[%s334 + $0x2c30] sm:$0xff]
        %v1828 = vld [vmem:[%s334 + $0x2c38] sm:$0xff]
        %v1829 = vld [vmem:[%s334 + $0x2c40] sm:$0xff]
        %v1830 = vld [vmem:[%s334 + $0x2c48] sm:$0xff]
        %v1831 = vld [vmem:[%s334 + $0x2c50] sm:$0xff]
        %v1832 = vld [vmem:[%s334 + $0x2c58] sm:$0xff]
        %v1833 = vld [vmem:[%s334 + $0x2c60] sm:$0xff]
        %v1834 = vld [vmem:[%s334 + $0x2c68] sm:$0xff]
        %v1835 = vld [vmem:[%s334 + $0x2c70] sm:$0xff]
        %v1836 = vld [vmem:[%s334 + $0x2c78] sm:$0xff]
        %v1837 = vld [vmem:[%s334 + $0x2c80] sm:$0xff]
        %v1838 = vld [vmem:[%s334 + $0x2c88] sm:$0xff]
        %v1839 = vld [vmem:[%s334 + $0x2c90] sm:$0xff]
        %v1840 = vld [vmem:[%s334 + $0x2c98] sm:$0xff]
        %v1841 = vld [vmem:[%s334 + $0x2ca0] sm:$0xff]
        %v1842 = vld [vmem:[%s334 + $0x2ca8] sm:$0xff]
        %v1843 = vld [vmem:[%s334 + $0x2cb0] sm:$0xff]
        %v1844 = vld [vmem:[%s334 + $0x2cb8] sm:$0xff]
        %v1845 = vld [vmem:[%s334 + $0x2cc0] sm:$0xff]
        %v1846 = vld [vmem:[%s334 + $0x2cc8] sm:$0xff]
        %v1847 = vld [vmem:[%s334 + $0x2cd0] sm:$0xff]
        %v1848 = vld [vmem:[%s334 + $0x2cd8] sm:$0xff]
        %v1849 = vld [vmem:[%s334 + $0x2ce0] sm:$0xff]
        %v1850 = vld [vmem:[%s334 + $0x2ce8] sm:$0xff]
        %v1851 = vld [vmem:[%s334 + $0x2cf0] sm:$0xff]
        %v1852 = vld [vmem:[%s334 + $0x2cf8] sm:$0xff]
        %v1853 = vld [vmem:[%s334 + $0x2d00] sm:$0xff]
        %v1854 = vld [vmem:[%s334 + $0x2d08] sm:$0xff]
        %v1855 = vld [vmem:[%s334 + $0x2d10] sm:$0xff]
        %v1856 = vld [vmem:[%s334 + $0x2d18] sm:$0xff]
        %v1857 = vld [vmem:[%s334 + $0x2d20] sm:$0xff]
        %v1858 = vld [vmem:[%s334 + $0x2d28] sm:$0xff]
        %v1859 = vld [vmem:[%s334 + $0x2d30] sm:$0xff]
        %v1860 = vld [vmem:[%s334 + $0x2d38] sm:$0xff]
        %v1861 = vld [vmem:[%s334 + $0x2d40] sm:$0xff]
        %v1862 = vld [vmem:[%s334 + $0x2d48] sm:$0xff]
        %v1863 = vld [vmem:[%s334 + $0x2d50] sm:$0xff]
        %v1864 = vld [vmem:[%s334 + $0x2d58] sm:$0xff]
        %v1865 = vld [vmem:[%s334 + $0x2d60] sm:$0xff]
        %v1866 = vld [vmem:[%s334 + $0x2d68] sm:$0xff]
        %v1867 = vld [vmem:[%s334 + $0x2d70] sm:$0xff]
        %v1868 = vld [vmem:[%s334 + $0x2d78] sm:$0xff]
        %v1869 = vld [vmem:[%s334 + $0x2d80] sm:$0xff]
        %v1870 = vld [vmem:[%s334 + $0x2d88] sm:$0xff]
        %v1871 = vld [vmem:[%s334 + $0x2d90] sm:$0xff]
        %v1872 = vld [vmem:[%s334 + $0x2d98] sm:$0xff]
        %v1873 = vld [vmem:[%s334 + $0x2da0] sm:$0xff]
        %v1874 = vld [vmem:[%s334 + $0x2da8] sm:$0xff]
        %v1875 = vld [vmem:[%s334 + $0x2db0] sm:$0xff]
        %v1876 = vld [vmem:[%s334 + $0x2db8] sm:$0xff]
        %v1877 = vld [vmem:[%s334 + $0x2dc0] sm:$0xff]
        %v1878 = vld [vmem:[%s334 + $0x2dc8] sm:$0xff]
        %v1879 = vld [vmem:[%s334 + $0x2dd0] sm:$0xff]
        %v1880 = vld [vmem:[%s334 + $0x2dd8] sm:$0xff]
        %v1881 = vld [vmem:[%s334 + $0x2de0] sm:$0xff]
        %v1882 = vld [vmem:[%s334 + $0x2de8] sm:$0xff]
        %v1883 = vld [vmem:[%s334 + $0x2df0] sm:$0xff]
        %v1884 = vld [vmem:[%s334 + $0x2df8] sm:$0xff]
        %v1885 = vld [vmem:[%s334 + $0x2e00] sm:$0xff]
        %v1886 = vld [vmem:[%s334 + $0x2e08] sm:$0xff]
        %v1887 = vld [vmem:[%s334 + $0x2e10] sm:$0xff]
        %v1888 = vld [vmem:[%s334 + $0x2e18] sm:$0xff]
        %v1889 = vld [vmem:[%s334 + $0x2e20] sm:$0xff]
        %v1890 = vld [vmem:[%s334 + $0x2e28] sm:$0xff]
        %v1891 = vld [vmem:[%s334 + $0x2e30] sm:$0xff]
        %v1892 = vld [vmem:[%s334 + $0x2e38] sm:$0xff]
        %v1893 = vld [vmem:[%s334 + $0x2e40] sm:$0xff]
        %v1894 = vld [vmem:[%s334 + $0x2e48] sm:$0xff]
        %v1895 = vld [vmem:[%s334 + $0x2e50] sm:$0xff]
        %v1896 = vld [vmem:[%s334 + $0x2e58] sm:$0xff]
        %v1897 = vld [vmem:[%s334 + $0x2e60] sm:$0xff]
        %v1898 = vld [vmem:[%s334 + $0x2e68] sm:$0xff]
        %v1899 = vld [vmem:[%s334 + $0x2e70] sm:$0xff]
        %v1900 = vld [vmem:[%s334 + $0x2e78] sm:$0xff]
        %v1901 = vld [vmem:[%s334 + $0x2e80] sm:$0xff]
        %v1902 = vld [vmem:[%s334 + $0x2e88] sm:$0xff]
        %v1903 = vld [vmem:[%s334 + $0x2e90] sm:$0xff]
        %v1904 = vld [vmem:[%s334 + $0x2e98] sm:$0xff]
        %v1905 = vld [vmem:[%s334 + $0x2ea0] sm:$0xff]
        %v1906 = vld [vmem:[%s334 + $0x2ea8] sm:$0xff]
        %v1907 = vld [vmem:[%s334 + $0x2eb0] sm:$0xff]
        %v1908 = vld [vmem:[%s334 + $0x2eb8] sm:$0xff]
        %v1909 = vld [vmem:[%s334 + $0x2ec0] sm:$0xff]
        %v1910 = vld [vmem:[%s334 + $0x2ec8] sm:$0xff]
        %v1911 = vld [vmem:[%s334 + $0x2ed0] sm:$0xff]
        %v1912 = vld [vmem:[%s334 + $0x2ed8] sm:$0xff]
        %v1913 = vld [vmem:[%s334 + $0x2ee0] sm:$0xff]
        %v1914 = vld [vmem:[%s334 + $0x2ee8] sm:$0xff]
        %v1915 = vld [vmem:[%s334 + $0x2ef0] sm:$0xff]
        %v1916 = vld [vmem:[%s334 + $0x2ef8] sm:$0xff]
        %v1917 = vld [vmem:[%s334 + $0x2f00] sm:$0xff]
        %v1918 = vld [vmem:[%s334 + $0x2f08] sm:$0xff]
        %v1919 = vld [vmem:[%s334 + $0x2f10] sm:$0xff]
        %v1920 = vld [vmem:[%s334 + $0x2f18] sm:$0xff]
        %v1921 = vld [vmem:[%s334 + $0x2f20] sm:$0xff]
        %v1922 = vld [vmem:[%s334 + $0x2f28] sm:$0xff]
        %v1923 = vld [vmem:[%s334 + $0x2f30] sm:$0xff]
        %v1924 = vld [vmem:[%s334 + $0x2f38] sm:$0xff]
        %v1925 = vld [vmem:[%s334 + $0x2f40] sm:$0xff]
        %v1926 = vld [vmem:[%s334 + $0x2f48] sm:$0xff]
        %v1927 = vld [vmem:[%s334 + $0x2f50] sm:$0xff]
        %v1928 = vld [vmem:[%s334 + $0x2f58] sm:$0xff]
        %v1929 = vld [vmem:[%s334 + $0x2f60] sm:$0xff]
        %v1930 = vld [vmem:[%s334 + $0x2f68] sm:$0xff]
        %v1931 = vld [vmem:[%s334 + $0x2f70] sm:$0xff]
        %v1932 = vld [vmem:[%s334 + $0x2f78] sm:$0xff]
        %v1933 = vld [vmem:[%s334 + $0x2f80] sm:$0xff]
        %v1934 = vld [vmem:[%s334 + $0x2f88] sm:$0xff]
        %v1935 = vld [vmem:[%s334 + $0x2f90] sm:$0xff]
        %v1936 = vld [vmem:[%s334 + $0x2f98] sm:$0xff]
        %v1937 = vld [vmem:[%s334 + $0x2fa0] sm:$0xff]
        %v1938 = vld [vmem:[%s334 + $0x2fa8] sm:$0xff]
        %v1939 = vld [vmem:[%s334 + $0x2fb0] sm:$0xff]
        %v1940 = vld [vmem:[%s334 + $0x2fb8] sm:$0xff]
        %v1941 = vld [vmem:[%s334 + $0x2fc0] sm:$0xff]
        %v1942 = vld [vmem:[%s334 + $0x2fc8] sm:$0xff]
        %v1943 = vld [vmem:[%s334 + $0x2fd0] sm:$0xff]
        %v1944 = vld [vmem:[%s334 + $0x2fd8] sm:$0xff]
        %v1945 = vld [vmem:[%s334 + $0x2fe0] sm:$0xff]
        %v1946 = vld [vmem:[%s334 + $0x2fe8] sm:$0xff]
        %v1947 = vld [vmem:[%s334 + $0x2ff0] sm:$0xff]
        %v1948 = vld [vmem:[%s334 + $0x2ff8] sm:$0xff]
        %v1949 = vld [vmem:[%s334 + $0x3000] sm:$0xff]
        %v1950 = vld [vmem:[%s334 + $0x3008] sm:$0xff]
        %v1951 = vld [vmem:[%s334 + $0x3010] sm:$0xff]
        %v1952 = vld [vmem:[%s334 + $0x3018] sm:$0xff]
        %v1953 = vld [vmem:[%s334 + $0x3020] sm:$0xff]
        %v1954 = vld [vmem:[%s334 + $0x3028] sm:$0xff]
        %v1955 = vld [vmem:[%s334 + $0x3030] sm:$0xff]
        %v1956 = vld [vmem:[%s334 + $0x3038] sm:$0xff]
        %v1957 = vld [vmem:[%s334 + $0x3040] sm:$0xff]
        %v1958 = vld [vmem:[%s334 + $0x3048] sm:$0xff]
        %v1959 = vld [vmem:[%s334 + $0x3050] sm:$0xff]
        %v1960 = vld [vmem:[%s334 + $0x3058] sm:$0xff]
        %v1961 = vld [vmem:[%s334 + $0x3060] sm:$0xff]
        %v1962 = vld [vmem:[%s334 + $0x3068] sm:$0xff]
        %v1963 = vld [vmem:[%s334 + $0x3070] sm:$0xff]
        %v1964 = vld [vmem:[%s334 + $0x3078] sm:$0xff]
        %v1965 = vld [vmem:[%s334 + $0x3080] sm:$0xff]
        %v1966 = vld [vmem:[%s334 + $0x3088] sm:$0xff]
        %v1967 = vld [vmem:[%s334 + $0x3090] sm:$0xff]
        %v1968 = vld [vmem:[%s334 + $0x3098] sm:$0xff]
        %v1969 = vld [vmem:[%s334 + $0x30a0] sm:$0xff]
        %v1970 = vld [vmem:[%s334 + $0x30a8] sm:$0xff]
        %v1971 = vld [vmem:[%s334 + $0x30b0] sm:$0xff]
        %v1972 = vld [vmem:[%s334 + $0x30b8] sm:$0xff]
        %v1973 = vld [vmem:[%s334 + $0x30c0] sm:$0xff]
        %v1974 = vld [vmem:[%s334 + $0x30c8] sm:$0xff]
        %v1975 = vld [vmem:[%s334 + $0x30d0] sm:$0xff]
        %v1976 = vld [vmem:[%s334 + $0x30d8] sm:$0xff]
        %v1977 = vld [vmem:[%s334 + $0x30e0] sm:$0xff]
        %v1978 = vld [vmem:[%s334 + $0x30e8] sm:$0xff]
        %v1979 = vld [vmem:[%s334 + $0x30f0] sm:$0xff]
        %v1980 = vld [vmem:[%s334 + $0x30f8] sm:$0xff]
        %v1981 = vld [vmem:[%s334 + $0x3100] sm:$0xff]
        %v1982 = vld [vmem:[%s334 + $0x3108] sm:$0xff]
        %v1983 = vld [vmem:[%s334 + $0x3110] sm:$0xff]
        %v1984 = vld [vmem:[%s334 + $0x3118] sm:$0xff]
        %v1985 = vld [vmem:[%s334 + $0x3120] sm:$0xff]
        %v1986 = vld [vmem:[%s334 + $0x3128] sm:$0xff]
        %v1987 = vld [vmem:[%s334 + $0x3130] sm:$0xff]
        %v1988 = vld [vmem:[%s334 + $0x3138] sm:$0xff]
        %v1989 = vld [vmem:[%s334 + $0x3140] sm:$0xff]
        %v1990 = vld [vmem:[%s334 + $0x3148] sm:$0xff]
        %v1991 = vld [vmem:[%s334 + $0x3150] sm:$0xff]
        %v1992 = vld [vmem:[%s334 + $0x3158] sm:$0xff]
        %v1993 = vld [vmem:[%s334 + $0x3160] sm:$0xff]
        %v1994 = vld [vmem:[%s334 + $0x3168] sm:$0xff]
        %v1995 = vld [vmem:[%s334 + $0x3170] sm:$0xff]
        %v1996 = vld [vmem:[%s334 + $0x3178] sm:$0xff]
        %v1997 = vld [vmem:[%s334 + $0x3180] sm:$0xff]
        %v1998 = vld [vmem:[%s334 + $0x3188] sm:$0xff]
        %v1999 = vld [vmem:[%s334 + $0x3190] sm:$0xff]
        %v2000 = vld [vmem:[%s334 + $0x3198] sm:$0xff]
        %v2001 = vld [vmem:[%s334 + $0x31a0] sm:$0xff]
        %v2002 = vld [vmem:[%s334 + $0x31a8] sm:$0xff]
        %v2003 = vld [vmem:[%s334 + $0x31b0] sm:$0xff]
        %v2004 = vld [vmem:[%s334 + $0x31b8] sm:$0xff]
        %v2005 = vld [vmem:[%s334 + $0x31c0] sm:$0xff]
        %v2006 = vld [vmem:[%s334 + $0x31c8] sm:$0xff]
        %v2007 = vld [vmem:[%s334 + $0x31d0] sm:$0xff]
        %v2008 = vld [vmem:[%s334 + $0x31d8] sm:$0xff]
        %v2009 = vld [vmem:[%s334 + $0x31e0] sm:$0xff]
        %v2010 = vld [vmem:[%s334 + $0x31e8] sm:$0xff]
        %v2011 = vld [vmem:[%s334 + $0x31f0] sm:$0xff]
        %v2012 = vld [vmem:[%s334 + $0x31f8] sm:$0xff]
        %v2017 = vcombine.high %v409, %v409
        %v2019 = vunpack.c.l.s4 1966171168
        %v2020 = vunpack.c.0.s8 %v2019
        %v2021 = vlaneseq
        %v2022 = vshrl.u32 %v2021, 7
        %v2023 = vsub.s32 %v2020, %v2022
        %v2024 = vrot.slane %v409, %v2023
        %v2026 = vunpack.c.l.s4 1966171168
        %v2027 = vunpack.c.0.s8 %v2026
        %v2028 = vlaneseq
        %v2029 = vshrl.u32 %v2028, 7
        %v2030 = vsub.s32 %v2027, %v2029
        %v2031 = vrot.slane %v2017, %v2030
        %v2032 = vcombine.high %v2024, %v2024
        %v2033 = vcombine.high %v2031, %v2031
        %v2035 = vunpack.c.l.s4 1966171168
        %v2036 = vunpack.c.0.s8 %v2035
        %v2037 = vlaneseq
        %v2038 = vshrl.u32 %v2037, 7
        %v2039 = vsub.s32 %v2036, %v2038
        %v2040 = vrot.slane %v2024, %v2039
        %v2042 = vunpack.c.l.s4 1966171168
        %v2043 = vunpack.c.0.s8 %v2042
        %v2044 = vlaneseq
        %v2045 = vshrl.u32 %v2044, 7
        %v2046 = vsub.s32 %v2043, %v2045
        %v2047 = vrot.slane %v2031, %v2046
        %v2049 = vunpack.c.l.s4 1966171168
        %v2050 = vunpack.c.0.s8 %v2049
        %v2051 = vlaneseq
        %v2052 = vshrl.u32 %v2051, 7
        %v2053 = vsub.s32 %v2050, %v2052
        %v2054 = vrot.slane %v2032, %v2053
        %v2056 = vunpack.c.l.s4 1966171168
        %v2057 = vunpack.c.0.s8 %v2056
        %v2058 = vlaneseq
        %v2059 = vshrl.u32 %v2058, 7
        %v2060 = vsub.s32 %v2057, %v2059
        %v2061 = vrot.slane %v2033, %v2060
        %v2062 = vcombine.high %v2040, %v2040
        %v2063 = vcombine.high %v2047, %v2047
        %v2064 = vcombine.high %v2054, %v2054
        %v2065 = vcombine.high %v2061, %v2061
        %v2066 = vcombine.high %v410, %v410
        %v2068 = vunpack.c.l.s4 1966171168
        %v2069 = vunpack.c.0.s8 %v2068
        %v2070 = vlaneseq
        %v2071 = vshrl.u32 %v2070, 7
        %v2072 = vsub.s32 %v2069, %v2071
        %v2073 = vrot.slane %v410, %v2072
        %v2075 = vunpack.c.l.s4 1966171168
        %v2076 = vunpack.c.0.s8 %v2075
        %v2077 = vlaneseq
        %v2078 = vshrl.u32 %v2077, 7
        %v2079 = vsub.s32 %v2076, %v2078
        %v2080 = vrot.slane %v2066, %v2079
        %v2081 = vcombine.high %v2073, %v2073
        %v2082 = vcombine.high %v2080, %v2080
        %v2084 = vunpack.c.l.s4 1966171168
        %v2085 = vunpack.c.0.s8 %v2084
        %v2086 = vlaneseq
        %v2087 = vshrl.u32 %v2086, 7
        %v2088 = vsub.s32 %v2085, %v2087
        %v2089 = vrot.slane %v2073, %v2088
        %v2091 = vunpack.c.l.s4 1966171168
        %v2092 = vunpack.c.0.s8 %v2091
        %v2093 = vlaneseq
        %v2094 = vshrl.u32 %v2093, 7
        %v2095 = vsub.s32 %v2092, %v2094
        %v2096 = vrot.slane %v2080, %v2095
        %v2098 = vunpack.c.l.s4 1966171168
        %v2099 = vunpack.c.0.s8 %v2098
        %v2100 = vlaneseq
        %v2101 = vshrl.u32 %v2100, 7
        %v2102 = vsub.s32 %v2099, %v2101
        %v2103 = vrot.slane %v2081, %v2102
        %v2105 = vunpack.c.l.s4 1966171168
        %v2106 = vunpack.c.0.s8 %v2105
        %v2107 = vlaneseq
        %v2108 = vshrl.u32 %v2107, 7
        %v2109 = vsub.s32 %v2106, %v2108
        %v2110 = vrot.slane %v2082, %v2109
        %v2111 = vcombine.high %v2089, %v2089
        %v2112 = vcombine.high %v2096, %v2096
        %v2113 = vcombine.high %v2103, %v2103
        %v2114 = vcombine.high %v2110, %v2110
        %v2115 = vcombine.high %v411, %v411
        %v2117 = vunpack.c.l.s4 1966171168
        %v2118 = vunpack.c.0.s8 %v2117
        %v2119 = vlaneseq
        %v2120 = vshrl.u32 %v2119, 7
        %v2121 = vsub.s32 %v2118, %v2120
        %v2122 = vrot.slane %v411, %v2121
        %v2124 = vunpack.c.l.s4 1966171168
        %v2125 = vunpack.c.0.s8 %v2124
        %v2126 = vlaneseq
        %v2127 = vshrl.u32 %v2126, 7
        %v2128 = vsub.s32 %v2125, %v2127
        %v2129 = vrot.slane %v2115, %v2128
        %v2130 = vcombine.high %v2122, %v2122
        %v2131 = vcombine.high %v2129, %v2129
        %v2133 = vunpack.c.l.s4 1966171168
        %v2134 = vunpack.c.0.s8 %v2133
        %v2135 = vlaneseq
        %v2136 = vshrl.u32 %v2135, 7
        %v2137 = vsub.s32 %v2134, %v2136
        %v2138 = vrot.slane %v2122, %v2137
        %v2140 = vunpack.c.l.s4 1966171168
        %v2141 = vunpack.c.0.s8 %v2140
        %v2142 = vlaneseq
        %v2143 = vshrl.u32 %v2142, 7
        %v2144 = vsub.s32 %v2141, %v2143
        %v2145 = vrot.slane %v2129, %v2144
        %v2147 = vunpack.c.l.s4 1966171168
        %v2148 = vunpack.c.0.s8 %v2147
        %v2149 = vlaneseq
        %v2150 = vshrl.u32 %v2149, 7
        %v2151 = vsub.s32 %v2148, %v2150
        %v2152 = vrot.slane %v2130, %v2151
        %v2154 = vunpack.c.l.s4 1966171168
        %v2155 = vunpack.c.0.s8 %v2154
        %v2156 = vlaneseq
        %v2157 = vshrl.u32 %v2156, 7
        %v2158 = vsub.s32 %v2155, %v2157
        %v2159 = vrot.slane %v2131, %v2158
        %v2160 = vcombine.high %v2138, %v2138
        %v2161 = vcombine.high %v2145, %v2145
        %v2162 = vcombine.high %v2152, %v2152
        %v2163 = vcombine.high %v2159, %v2159
        %v2165 = vunpack.c.l.s4 1966171168
        %v2166 = vunpack.c.0.s8 %v2165
        %v2167 = vlaneseq
        %v2168 = vshrl.u32 %v2167, 7
        %v2169 = vsub.s32 %v2166, %v2168
        %v2170 = vrot.slane %v412, %v2169
        %v2172 = vunpack.c.l.s4 1966171168
        %v2173 = vunpack.c.0.s8 %v2172
        %v2174 = vlaneseq
        %v2175 = vshrl.u32 %v2174, 7
        %v2176 = vsub.s32 %v2173, %v2175
        %v2177 = vrot.slane %v2170, %v2176
        %v3803 = vunpack.c.l.b16 %v413
        %v3804 = vunpack.c.h.b16 %v413
        %v3805 = vunpack.c.l.b16 %v414
        %v3806 = vunpack.c.h.b16 %v414
        %v3807 = vunpack.c.l.b16 %v415
        %v3808 = vunpack.c.h.b16 %v415
        %v3809 = vunpack.c.l.b16 %v416
        %v3810 = vunpack.c.h.b16 %v416
        %v3811 = vunpack.c.l.b16 %v417
        %v3812 = vunpack.c.h.b16 %v417
        %v3813 = vunpack.c.l.b16 %v418
        %v3814 = vunpack.c.h.b16 %v418
        %v3815 = vunpack.c.l.b16 %v419
        %v3816 = vunpack.c.h.b16 %v419
        %v3817 = vunpack.c.l.b16 %v420
        %v3818 = vunpack.c.h.b16 %v420
        %v3819 = vunpack.c.l.b16 %v421
        %v3820 = vunpack.c.h.b16 %v421
        %v3821 = vunpack.c.l.b16 %v422
        %v3822 = vunpack.c.h.b16 %v422
        %v3823 = vunpack.c.l.b16 %v423
        %v3824 = vunpack.c.h.b16 %v423
        %v3825 = vunpack.c.l.b16 %v424
        %v3826 = vunpack.c.h.b16 %v424
        %v3827 = vunpack.c.l.b16 %v425
        %v3828 = vunpack.c.h.b16 %v425
        %v3829 = vunpack.c.l.b16 %v426
        %v3830 = vunpack.c.h.b16 %v426
        %v3831 = vunpack.c.l.b16 %v427
        %v3832 = vunpack.c.h.b16 %v427
        %v3833 = vunpack.c.l.b16 %v428
        %v3834 = vunpack.c.h.b16 %v428
        %v3835 = vunpack.c.l.b16 %v429
        %v3836 = vunpack.c.h.b16 %v429
        %v3837 = vunpack.c.l.b16 %v430
        %v3838 = vunpack.c.h.b16 %v430
        %v3839 = vunpack.c.l.b16 %v431
        %v3840 = vunpack.c.h.b16 %v431
        %v3841 = vunpack.c.l.b16 %v432
        %v3842 = vunpack.c.h.b16 %v432
        %v3843 = vunpack.c.l.b16 %v433
        %v3844 = vunpack.c.h.b16 %v433
        %v3845 = vunpack.c.l.b16 %v434
        %v3846 = vunpack.c.h.b16 %v434
        %v3847 = vunpack.c.l.b16 %v435
        %v3848 = vunpack.c.h.b16 %v435
        %v3849 = vunpack.c.l.b16 %v436
        %v3850 = vunpack.c.h.b16 %v436
        %v3851 = vunpack.c.l.b16 %v437
        %v3852 = vunpack.c.h.b16 %v437
        %v3853 = vunpack.c.l.b16 %v438
        %v3854 = vunpack.c.h.b16 %v438
        %v3855 = vunpack.c.l.b16 %v439
        %v3856 = vunpack.c.h.b16 %v439
        %v3857 = vunpack.c.l.b16 %v440
        %v3858 = vunpack.c.h.b16 %v440
        %v3859 = vunpack.c.l.b16 %v441
        %v3860 = vunpack.c.h.b16 %v441
        %v3861 = vunpack.c.l.b16 %v442
        %v3862 = vunpack.c.h.b16 %v442
        %v3863 = vunpack.c.l.b16 %v443
        %v3864 = vunpack.c.h.b16 %v443
        %v3865 = vunpack.c.l.b16 %v444
        %v3866 = vunpack.c.h.b16 %v444
        %v3867 = vunpack.c.l.b16 %v445
        %v3868 = vunpack.c.h.b16 %v445
        %v3869 = vunpack.c.l.b16 %v446
        %v3870 = vunpack.c.h.b16 %v446
        %v3871 = vunpack.c.l.b16 %v447
        %v3872 = vunpack.c.h.b16 %v447
        %v3873 = vunpack.c.l.b16 %v448
        %v3874 = vunpack.c.h.b16 %v448
        %v3875 = vunpack.c.l.b16 %v449
        %v3876 = vunpack.c.h.b16 %v449
        %v3877 = vunpack.c.l.b16 %v450
        %v3878 = vunpack.c.h.b16 %v450
        %v3879 = vunpack.c.l.b16 %v451
        %v3880 = vunpack.c.h.b16 %v451
        %v3881 = vunpack.c.l.b16 %v452
        %v3882 = vunpack.c.h.b16 %v452
        %v3883 = vunpack.c.l.b16 %v453
        %v3884 = vunpack.c.h.b16 %v453
        %v3885 = vunpack.c.l.b16 %v454
        %v3886 = vunpack.c.h.b16 %v454
        %v3887 = vunpack.c.l.b16 %v455
        %v3888 = vunpack.c.h.b16 %v455
        %v3889 = vunpack.c.l.b16 %v456
        %v3890 = vunpack.c.h.b16 %v456
        %v3891 = vunpack.c.l.b16 %v457
        %v3892 = vunpack.c.h.b16 %v457
        %v3893 = vunpack.c.l.b16 %v458
        %v3894 = vunpack.c.h.b16 %v458
        %v3895 = vunpack.c.l.b16 %v459
        %v3896 = vunpack.c.h.b16 %v459
        %v3897 = vunpack.c.l.b16 %v460
        %v3898 = vunpack.c.h.b16 %v460
        %v3899 = vunpack.c.l.b16 %v461
        %v3900 = vunpack.c.h.b16 %v461
        %v3901 = vunpack.c.l.b16 %v462
        %v3902 = vunpack.c.h.b16 %v462
        %v3903 = vunpack.c.l.b16 %v463
        %v3904 = vunpack.c.h.b16 %v463
        %v3905 = vunpack.c.l.b16 %v464
        %v3906 = vunpack.c.h.b16 %v464
        %v3907 = vunpack.c.l.b16 %v465
        %v3908 = vunpack.c.h.b16 %v465
        %v3909 = vunpack.c.l.b16 %v466
        %v3910 = vunpack.c.h.b16 %v466
        %v3911 = vunpack.c.l.b16 %v467
        %v3912 = vunpack.c.h.b16 %v467
        %v3913 = vunpack.c.l.b16 %v468
        %v3914 = vunpack.c.h.b16 %v468
        %v3915 = vunpack.c.l.b16 %v469
        %v3916 = vunpack.c.h.b16 %v469
        %v3917 = vunpack.c.l.b16 %v470
        %v3918 = vunpack.c.h.b16 %v470
        %v3919 = vunpack.c.l.b16 %v471
        %v3920 = vunpack.c.h.b16 %v471
        %v3921 = vunpack.c.l.b16 %v472
        %v3922 = vunpack.c.h.b16 %v472
        %v3923 = vunpack.c.l.b16 %v473
        %v3924 = vunpack.c.h.b16 %v473
        %v3925 = vunpack.c.l.b16 %v474
        %v3926 = vunpack.c.h.b16 %v474
        %v3927 = vunpack.c.l.b16 %v475
        %v3928 = vunpack.c.h.b16 %v475
        %v3929 = vunpack.c.l.b16 %v476
        %v3930 = vunpack.c.h.b16 %v476
        %v3931 = vunpack.c.l.b16 %v477
        %v3932 = vunpack.c.h.b16 %v477
        %v3933 = vunpack.c.l.b16 %v478
        %v3934 = vunpack.c.h.b16 %v478
        %v3935 = vunpack.c.l.b16 %v479
        %v3936 = vunpack.c.h.b16 %v479
        %v3937 = vunpack.c.l.b16 %v480
        %v3938 = vunpack.c.h.b16 %v480
        %v3939 = vunpack.c.l.b16 %v481
        %v3940 = vunpack.c.h.b16 %v481
        %v3941 = vunpack.c.l.b16 %v482
        %v3942 = vunpack.c.h.b16 %v482
        %v3943 = vunpack.c.l.b16 %v483
        %v3944 = vunpack.c.h.b16 %v483
        %v3945 = vunpack.c.l.b16 %v484
        %v3946 = vunpack.c.h.b16 %v484
        %v3947 = vunpack.c.l.b16 %v485
        %v3948 = vunpack.c.h.b16 %v485
        %v3949 = vunpack.c.l.b16 %v486
        %v3950 = vunpack.c.h.b16 %v486
        %v3951 = vunpack.c.l.b16 %v487
        %v3952 = vunpack.c.h.b16 %v487
        %v3953 = vunpack.c.l.b16 %v488
        %v3954 = vunpack.c.h.b16 %v488
        %v3955 = vunpack.c.l.b16 %v489
        %v3956 = vunpack.c.h.b16 %v489
        %v3957 = vunpack.c.l.b16 %v490
        %v3958 = vunpack.c.h.b16 %v490
        %v3959 = vunpack.c.l.b16 %v491
        %v3960 = vunpack.c.h.b16 %v491
        %v3961 = vunpack.c.l.b16 %v492
        %v3962 = vunpack.c.h.b16 %v492
        %v3963 = vunpack.c.l.b16 %v493
        %v3964 = vunpack.c.h.b16 %v493
        %v3965 = vunpack.c.l.b16 %v494
        %v3966 = vunpack.c.h.b16 %v494
        %v3967 = vunpack.c.l.b16 %v495
        %v3968 = vunpack.c.h.b16 %v495
        %v3969 = vunpack.c.l.b16 %v496
        %v3970 = vunpack.c.h.b16 %v496
        %v3971 = vunpack.c.l.b16 %v497
        %v3972 = vunpack.c.h.b16 %v497
        %v3973 = vunpack.c.l.b16 %v498
        %v3974 = vunpack.c.h.b16 %v498
        %v3975 = vunpack.c.l.b16 %v499
        %v3976 = vunpack.c.h.b16 %v499
        %v3977 = vunpack.c.l.b16 %v500
        %v3978 = vunpack.c.h.b16 %v500
        %v3979 = vunpack.c.l.b16 %v501
        %v3980 = vunpack.c.h.b16 %v501
        %v3981 = vunpack.c.l.b16 %v502
        %v3982 = vunpack.c.h.b16 %v502
        %v3983 = vunpack.c.l.b16 %v503
        %v3984 = vunpack.c.h.b16 %v503
        %v3985 = vunpack.c.l.b16 %v504
        %v3986 = vunpack.c.h.b16 %v504
        %v3987 = vunpack.c.l.b16 %v505
        %v3988 = vunpack.c.h.b16 %v505
        %v3989 = vunpack.c.l.b16 %v506
        %v3990 = vunpack.c.h.b16 %v506
        %v3991 = vunpack.c.l.b16 %v507
        %v3992 = vunpack.c.h.b16 %v507
        %v3993 = vunpack.c.l.b16 %v508
        %v3994 = vunpack.c.h.b16 %v508
        %v3995 = vunpack.c.l.b16 %v509
        %v3996 = vunpack.c.h.b16 %v509
        %v3997 = vunpack.c.l.b16 %v510
        %v3998 = vunpack.c.h.b16 %v510
        %v3999 = vunpack.c.l.b16 %v511
        %v4000 = vunpack.c.h.b16 %v511
        %v4001 = vunpack.c.l.b16 %v512
        %v4002 = vunpack.c.h.b16 %v512
        %v4003 = vunpack.c.l.b16 %v513
        %v4004 = vunpack.c.h.b16 %v513
        %v4005 = vunpack.c.l.b16 %v514
        %v4006 = vunpack.c.h.b16 %v514
        %v4007 = vunpack.c.l.b16 %v515
        %v4008 = vunpack.c.h.b16 %v515
        %v4009 = vunpack.c.l.b16 %v516
        %v4010 = vunpack.c.h.b16 %v516
        %v4011 = vunpack.c.l.b16 %v517
        %v4012 = vunpack.c.h.b16 %v517
        %v4013 = vunpack.c.l.b16 %v518
        %v4014 = vunpack.c.h.b16 %v518
        %v4015 = vunpack.c.l.b16 %v519
        %v4016 = vunpack.c.h.b16 %v519
        %v4017 = vunpack.c.l.b16 %v520
        %v4018 = vunpack.c.h.b16 %v520
        %v4019 = vunpack.c.l.b16 %v521
        %v4020 = vunpack.c.h.b16 %v521
        %v4021 = vunpack.c.l.b16 %v522
        %v4022 = vunpack.c.h.b16 %v522
        %v4023 = vunpack.c.l.b16 %v523
        %v4024 = vunpack.c.h.b16 %v523
        %v4025 = vunpack.c.l.b16 %v524
        %v4026 = vunpack.c.h.b16 %v524
        %v4027 = vunpack.c.l.b16 %v525
        %v4028 = vunpack.c.h.b16 %v525
        %v4029 = vunpack.c.l.b16 %v526
        %v4030 = vunpack.c.h.b16 %v526
        %v4031 = vunpack.c.l.b16 %v527
        %v4032 = vunpack.c.h.b16 %v527
        %v4033 = vunpack.c.l.b16 %v528
        %v4034 = vunpack.c.h.b16 %v528
        %v4035 = vunpack.c.l.b16 %v529
        %v4036 = vunpack.c.h.b16 %v529
        %v4037 = vunpack.c.l.b16 %v530
        %v4038 = vunpack.c.h.b16 %v530
        %v4039 = vunpack.c.l.b16 %v531
        %v4040 = vunpack.c.h.b16 %v531
        %v4041 = vunpack.c.l.b16 %v532
        %v4042 = vunpack.c.h.b16 %v532
        %v4043 = vunpack.c.l.b16 %v533
        %v4044 = vunpack.c.h.b16 %v533
        %v4045 = vunpack.c.l.b16 %v534
        %v4046 = vunpack.c.h.b16 %v534
        %v4047 = vunpack.c.l.b16 %v535
        %v4048 = vunpack.c.h.b16 %v535
        %v4049 = vunpack.c.l.b16 %v536
        %v4050 = vunpack.c.h.b16 %v536
        %v4051 = vunpack.c.l.b16 %v537
        %v4052 = vunpack.c.h.b16 %v537
        %v4053 = vunpack.c.l.b16 %v538
        %v4054 = vunpack.c.h.b16 %v538
        %v4055 = vunpack.c.l.b16 %v539
        %v4056 = vunpack.c.h.b16 %v539
        %v4057 = vunpack.c.l.b16 %v540
        %v4058 = vunpack.c.h.b16 %v540
        %v4059 = vunpack.c.l.b16 %v541
        %v4060 = vunpack.c.h.b16 %v541
        %v4061 = vunpack.c.l.b16 %v542
        %v4062 = vunpack.c.h.b16 %v542
        %v4063 = vunpack.c.l.b16 %v543
        %v4064 = vunpack.c.h.b16 %v543
        %v4065 = vunpack.c.l.b16 %v544
        %v4066 = vunpack.c.h.b16 %v544
        %v4067 = vunpack.c.l.b16 %v545
        %v4068 = vunpack.c.h.b16 %v545
        %v4069 = vunpack.c.l.b16 %v546
        %v4070 = vunpack.c.h.b16 %v546
        %v4071 = vunpack.c.l.b16 %v547
        %v4072 = vunpack.c.h.b16 %v547
        %v4073 = vunpack.c.l.b16 %v548
        %v4074 = vunpack.c.h.b16 %v548
        %v4075 = vunpack.c.l.b16 %v549
        %v4076 = vunpack.c.h.b16 %v549
        %v4077 = vunpack.c.l.b16 %v550
        %v4078 = vunpack.c.h.b16 %v550
        %v4079 = vunpack.c.l.b16 %v551
        %v4080 = vunpack.c.h.b16 %v551
        %v4081 = vunpack.c.l.b16 %v552
        %v4082 = vunpack.c.h.b16 %v552
        %v4083 = vunpack.c.l.b16 %v553
        %v4084 = vunpack.c.h.b16 %v553
        %v4085 = vunpack.c.l.b16 %v554
        %v4086 = vunpack.c.h.b16 %v554
        %v4087 = vunpack.c.l.b16 %v555
        %v4088 = vunpack.c.h.b16 %v555
        %v4089 = vunpack.c.l.b16 %v556
        %v4090 = vunpack.c.h.b16 %v556
        %v4091 = vunpack.c.l.b16 %v557
        %v4092 = vunpack.c.h.b16 %v557
        %v4093 = vunpack.c.l.b16 %v558
        %v4094 = vunpack.c.h.b16 %v558
        %v4095 = vunpack.c.l.b16 %v559
        %v4096 = vunpack.c.h.b16 %v559
        %v4097 = vunpack.c.l.b16 %v560
        %v4098 = vunpack.c.h.b16 %v560
        %v4099 = vunpack.c.l.b16 %v561
        %v4100 = vunpack.c.h.b16 %v561
        %v4101 = vunpack.c.l.b16 %v562
        %v4102 = vunpack.c.h.b16 %v562
        %v4103 = vunpack.c.l.b16 %v563
        %v4104 = vunpack.c.h.b16 %v563
        %v4105 = vunpack.c.l.b16 %v564
        %v4106 = vunpack.c.h.b16 %v564
        %v4107 = vunpack.c.l.b16 %v565
        %v4108 = vunpack.c.h.b16 %v565
        %v4109 = vunpack.c.l.b16 %v566
        %v4110 = vunpack.c.h.b16 %v566
        %v4111 = vunpack.c.l.b16 %v567
        %v4112 = vunpack.c.h.b16 %v567
        %v4113 = vunpack.c.l.b16 %v568
        %v4114 = vunpack.c.h.b16 %v568
        %v4115 = vunpack.c.l.b16 %v569
        %v4116 = vunpack.c.h.b16 %v569
        %v4117 = vunpack.c.l.b16 %v570
        %v4118 = vunpack.c.h.b16 %v570
        %v4119 = vunpack.c.l.b16 %v571
        %v4120 = vunpack.c.h.b16 %v571
        %v4121 = vunpack.c.l.b16 %v572
        %v4122 = vunpack.c.h.b16 %v572
        %v4123 = vunpack.c.l.b16 %v573
        %v4124 = vunpack.c.h.b16 %v573
        %v4125 = vunpack.c.l.b16 %v574
        %v4126 = vunpack.c.h.b16 %v574
        %v4127 = vunpack.c.l.b16 %v575
        %v4128 = vunpack.c.h.b16 %v575
        %v4129 = vunpack.c.l.b16 %v576
        %v4130 = vunpack.c.h.b16 %v576
        %v4131 = vunpack.c.l.b16 %v577
        %v4132 = vunpack.c.h.b16 %v577
        %v4133 = vunpack.c.l.b16 %v578
        %v4134 = vunpack.c.h.b16 %v578
        %v4135 = vunpack.c.l.b16 %v579
        %v4136 = vunpack.c.h.b16 %v579
        %v4137 = vunpack.c.l.b16 %v580
        %v4138 = vunpack.c.h.b16 %v580
        %v4139 = vunpack.c.l.b16 %v581
        %v4140 = vunpack.c.h.b16 %v581
        %v4141 = vunpack.c.l.b16 %v582
        %v4142 = vunpack.c.h.b16 %v582
        %v4143 = vunpack.c.l.b16 %v583
        %v4144 = vunpack.c.h.b16 %v583
        %v4145 = vunpack.c.l.b16 %v584
        %v4146 = vunpack.c.h.b16 %v584
        %v4147 = vunpack.c.l.b16 %v585
        %v4148 = vunpack.c.h.b16 %v585
        %v4149 = vunpack.c.l.b16 %v586
        %v4150 = vunpack.c.h.b16 %v586
        %v4151 = vunpack.c.l.b16 %v587
        %v4152 = vunpack.c.h.b16 %v587
        %v4153 = vunpack.c.l.b16 %v588
        %v4154 = vunpack.c.h.b16 %v588
        %v4155 = vunpack.c.l.b16 %v589
        %v4156 = vunpack.c.h.b16 %v589
        %v4157 = vunpack.c.l.b16 %v590
        %v4158 = vunpack.c.h.b16 %v590
        %v4159 = vunpack.c.l.b16 %v591
        %v4160 = vunpack.c.h.b16 %v591
        %v4161 = vunpack.c.l.b16 %v592
        %v4162 = vunpack.c.h.b16 %v592
        %v4163 = vunpack.c.l.b16 %v593
        %v4164 = vunpack.c.h.b16 %v593
        %v4165 = vunpack.c.l.b16 %v594
        %v4166 = vunpack.c.h.b16 %v594
        %v4167 = vunpack.c.l.b16 %v595
        %v4168 = vunpack.c.h.b16 %v595
        %v4169 = vunpack.c.l.b16 %v596
        %v4170 = vunpack.c.h.b16 %v596
        %v4171 = vunpack.c.l.b16 %v597
        %v4172 = vunpack.c.h.b16 %v597
        %v4173 = vunpack.c.l.b16 %v598
        %v4174 = vunpack.c.h.b16 %v598
        %v4175 = vunpack.c.l.b16 %v599
        %v4176 = vunpack.c.h.b16 %v599
        %v4177 = vunpack.c.l.b16 %v600
        %v4178 = vunpack.c.h.b16 %v600
        %v4179 = vunpack.c.l.b16 %v601
        %v4180 = vunpack.c.h.b16 %v601
        %v4181 = vunpack.c.l.b16 %v602
        %v4182 = vunpack.c.h.b16 %v602
        %v4183 = vunpack.c.l.b16 %v603
        %v4184 = vunpack.c.h.b16 %v603
        %v4185 = vunpack.c.l.b16 %v604
        %v4186 = vunpack.c.h.b16 %v604
        %v4187 = vunpack.c.l.b16 %v605
        %v4188 = vunpack.c.h.b16 %v605
        %v4189 = vunpack.c.l.b16 %v606
        %v4190 = vunpack.c.h.b16 %v606
        %v4191 = vunpack.c.l.b16 %v607
        %v4192 = vunpack.c.h.b16 %v607
        %v4193 = vunpack.c.l.b16 %v608
        %v4194 = vunpack.c.h.b16 %v608
        %v4195 = vunpack.c.l.b16 %v609
        %v4196 = vunpack.c.h.b16 %v609
        %v4197 = vunpack.c.l.b16 %v610
        %v4198 = vunpack.c.h.b16 %v610
        %v4199 = vunpack.c.l.b16 %v611
        %v4200 = vunpack.c.h.b16 %v611
        %v4201 = vunpack.c.l.b16 %v612
        %v4202 = vunpack.c.h.b16 %v612
        %v4203 = vunpack.c.l.b16 %v613
        %v4204 = vunpack.c.h.b16 %v613
        %v4205 = vunpack.c.l.b16 %v614
        %v4206 = vunpack.c.h.b16 %v614
        %v4207 = vunpack.c.l.b16 %v615
        %v4208 = vunpack.c.h.b16 %v615
        %v4209 = vunpack.c.l.b16 %v616
        %v4210 = vunpack.c.h.b16 %v616
        %v4211 = vunpack.c.l.b16 %v617
        %v4212 = vunpack.c.h.b16 %v617
        %v4213 = vunpack.c.l.b16 %v618
        %v4214 = vunpack.c.h.b16 %v618
        %v4215 = vunpack.c.l.b16 %v619
        %v4216 = vunpack.c.h.b16 %v619
        %v4217 = vunpack.c.l.b16 %v620
        %v4218 = vunpack.c.h.b16 %v620
        %v4219 = vunpack.c.l.b16 %v621
        %v4220 = vunpack.c.h.b16 %v621
        %v4221 = vunpack.c.l.b16 %v622
        %v4222 = vunpack.c.h.b16 %v622
        %v4223 = vunpack.c.l.b16 %v623
        %v4224 = vunpack.c.h.b16 %v623
        %v4225 = vunpack.c.l.b16 %v624
        %v4226 = vunpack.c.h.b16 %v624
        %v4227 = vunpack.c.l.b16 %v625
        %v4228 = vunpack.c.h.b16 %v625
        %v4229 = vunpack.c.l.b16 %v626
        %v4230 = vunpack.c.h.b16 %v626
        %v4231 = vunpack.c.l.b16 %v627
        %v4232 = vunpack.c.h.b16 %v627
        %v4233 = vunpack.c.l.b16 %v628
        %v4234 = vunpack.c.h.b16 %v628
        %v4235 = vunpack.c.l.b16 %v629
        %v4236 = vunpack.c.h.b16 %v629
        %v4237 = vunpack.c.l.b16 %v630
        %v4238 = vunpack.c.h.b16 %v630
        %v4239 = vunpack.c.l.b16 %v631
        %v4240 = vunpack.c.h.b16 %v631
        %v4241 = vunpack.c.l.b16 %v632
        %v4242 = vunpack.c.h.b16 %v632
        %v4243 = vunpack.c.l.b16 %v633
        %v4244 = vunpack.c.h.b16 %v633
        %v4245 = vunpack.c.l.b16 %v634
        %v4246 = vunpack.c.h.b16 %v634
        %v4247 = vunpack.c.l.b16 %v635
        %v4248 = vunpack.c.h.b16 %v635
        %v4249 = vunpack.c.l.b16 %v636
        %v4250 = vunpack.c.h.b16 %v636
        %v4251 = vunpack.c.l.b16 %v637
        %v4252 = vunpack.c.h.b16 %v637
        %v4253 = vunpack.c.l.b16 %v638
        %v4254 = vunpack.c.h.b16 %v638
        %v4255 = vunpack.c.l.b16 %v639
        %v4256 = vunpack.c.h.b16 %v639
        %v4257 = vunpack.c.l.b16 %v640
        %v4258 = vunpack.c.h.b16 %v640
        %v4259 = vunpack.c.l.b16 %v641
        %v4260 = vunpack.c.h.b16 %v641
        %v4261 = vunpack.c.l.b16 %v642
        %v4262 = vunpack.c.h.b16 %v642
        %v4263 = vunpack.c.l.b16 %v643
        %v4264 = vunpack.c.h.b16 %v643
        %v4265 = vunpack.c.l.b16 %v644
        %v4266 = vunpack.c.h.b16 %v644
        %v4267 = vunpack.c.l.b16 %v645
        %v4268 = vunpack.c.h.b16 %v645
        %v4269 = vunpack.c.l.b16 %v646
        %v4270 = vunpack.c.h.b16 %v646
        %v4271 = vunpack.c.l.b16 %v647
        %v4272 = vunpack.c.h.b16 %v647
        %v4273 = vunpack.c.l.b16 %v648
        %v4274 = vunpack.c.h.b16 %v648
        %v4275 = vunpack.c.l.b16 %v649
        %v4276 = vunpack.c.h.b16 %v649
        %v4277 = vunpack.c.l.b16 %v650
        %v4278 = vunpack.c.h.b16 %v650
        %v4279 = vunpack.c.l.b16 %v651
        %v4280 = vunpack.c.h.b16 %v651
        %v4281 = vunpack.c.l.b16 %v652
        %v4282 = vunpack.c.h.b16 %v652
        %v4283 = vunpack.c.l.b16 %v653
        %v4284 = vunpack.c.h.b16 %v653
        %v4285 = vunpack.c.l.b16 %v654
        %v4286 = vunpack.c.h.b16 %v654
        %v4287 = vunpack.c.l.b16 %v655
        %v4288 = vunpack.c.h.b16 %v655
        %v4289 = vunpack.c.l.b16 %v656
        %v4290 = vunpack.c.h.b16 %v656
        %v4291 = vunpack.c.l.b16 %v657
        %v4292 = vunpack.c.h.b16 %v657
        %v4293 = vunpack.c.l.b16 %v658
        %v4294 = vunpack.c.h.b16 %v658
        %v4295 = vunpack.c.l.b16 %v659
        %v4296 = vunpack.c.h.b16 %v659
        %v4297 = vunpack.c.l.b16 %v660
        %v4298 = vunpack.c.h.b16 %v660
        %v4299 = vunpack.c.l.b16 %v661
        %v4300 = vunpack.c.h.b16 %v661
        %v4301 = vunpack.c.l.b16 %v662
        %v4302 = vunpack.c.h.b16 %v662
        %v4303 = vunpack.c.l.b16 %v663
        %v4304 = vunpack.c.h.b16 %v663
        %v4305 = vunpack.c.l.b16 %v664
        %v4306 = vunpack.c.h.b16 %v664
        %v4307 = vunpack.c.l.b16 %v665
        %v4308 = vunpack.c.h.b16 %v665
        %v4309 = vunpack.c.l.b16 %v666
        %v4310 = vunpack.c.h.b16 %v666
        %v4311 = vunpack.c.l.b16 %v667
        %v4312 = vunpack.c.h.b16 %v667
        %v4313 = vunpack.c.l.b16 %v668
        %v4314 = vunpack.c.h.b16 %v668
        %v4315 = vunpack.c.l.b16 %v669
        %v4316 = vunpack.c.h.b16 %v669
        %v4317 = vunpack.c.l.b16 %v670
        %v4318 = vunpack.c.h.b16 %v670
        %v4319 = vunpack.c.l.b16 %v671
        %v4320 = vunpack.c.h.b16 %v671
        %v4321 = vunpack.c.l.b16 %v672
        %v4322 = vunpack.c.h.b16 %v672
        %v4323 = vunpack.c.l.b16 %v673
        %v4324 = vunpack.c.h.b16 %v673
        %v4325 = vunpack.c.l.b16 %v674
        %v4326 = vunpack.c.h.b16 %v674
        %v4327 = vunpack.c.l.b16 %v675
        %v4328 = vunpack.c.h.b16 %v675
        %v4329 = vunpack.c.l.b16 %v676
        %v4330 = vunpack.c.h.b16 %v676
        %v4331 = vunpack.c.l.b16 %v677
        %v4332 = vunpack.c.h.b16 %v677
        %v4333 = vunpack.c.l.b16 %v678
        %v4334 = vunpack.c.h.b16 %v678
        %v4335 = vunpack.c.l.b16 %v679
        %v4336 = vunpack.c.h.b16 %v679
        %v4337 = vunpack.c.l.b16 %v680
        %v4338 = vunpack.c.h.b16 %v680
        %v4339 = vunpack.c.l.b16 %v681
        %v4340 = vunpack.c.h.b16 %v681
        %v4341 = vunpack.c.l.b16 %v682
        %v4342 = vunpack.c.h.b16 %v682
        %v4343 = vunpack.c.l.b16 %v683
        %v4344 = vunpack.c.h.b16 %v683
        %v4345 = vunpack.c.l.b16 %v684
        %v4346 = vunpack.c.h.b16 %v684
        %v4347 = vunpack.c.l.b16 %v685
        %v4348 = vunpack.c.h.b16 %v685
        %v4349 = vunpack.c.l.b16 %v686
        %v4350 = vunpack.c.h.b16 %v686
        %v4351 = vunpack.c.l.b16 %v687
        %v4352 = vunpack.c.h.b16 %v687
        %v4353 = vunpack.c.l.b16 %v688
        %v4354 = vunpack.c.h.b16 %v688
        %v4355 = vunpack.c.l.b16 %v689
        %v4356 = vunpack.c.h.b16 %v689
        %v4357 = vunpack.c.l.b16 %v690
        %v4358 = vunpack.c.h.b16 %v690
        %v4359 = vunpack.c.l.b16 %v691
        %v4360 = vunpack.c.h.b16 %v691
        %v4361 = vunpack.c.l.b16 %v692
        %v4362 = vunpack.c.h.b16 %v692
        %v4363 = vunpack.c.l.b16 %v693
        %v4364 = vunpack.c.h.b16 %v693
        %v4365 = vunpack.c.l.b16 %v694
        %v4366 = vunpack.c.h.b16 %v694
        %v4367 = vunpack.c.l.b16 %v695
        %v4368 = vunpack.c.h.b16 %v695
        %v4369 = vunpack.c.l.b16 %v696
        %v4370 = vunpack.c.h.b16 %v696
        %v4371 = vunpack.c.l.b16 %v697
        %v4372 = vunpack.c.h.b16 %v697
        %v4373 = vunpack.c.l.b16 %v698
        %v4374 = vunpack.c.h.b16 %v698
        %v4375 = vunpack.c.l.b16 %v699
        %v4376 = vunpack.c.h.b16 %v699
        %v4377 = vunpack.c.l.b16 %v700
        %v4378 = vunpack.c.h.b16 %v700
        %v4379 = vunpack.c.l.b16 %v701
        %v4380 = vunpack.c.h.b16 %v701
        %v4381 = vunpack.c.l.b16 %v702
        %v4382 = vunpack.c.h.b16 %v702
        %v4383 = vunpack.c.l.b16 %v703
        %v4384 = vunpack.c.h.b16 %v703
        %v4385 = vunpack.c.l.b16 %v704
        %v4386 = vunpack.c.h.b16 %v704
        %v4387 = vunpack.c.l.b16 %v705
        %v4388 = vunpack.c.h.b16 %v705
        %v4389 = vunpack.c.l.b16 %v706
        %v4390 = vunpack.c.h.b16 %v706
        %v4391 = vunpack.c.l.b16 %v707
        %v4392 = vunpack.c.h.b16 %v707
        %v4393 = vunpack.c.l.b16 %v708
        %v4394 = vunpack.c.h.b16 %v708
        %v4395 = vunpack.c.l.b16 %v709
        %v4396 = vunpack.c.h.b16 %v709
        %v4397 = vunpack.c.l.b16 %v710
        %v4398 = vunpack.c.h.b16 %v710
        %v4399 = vunpack.c.l.b16 %v711
        %v4400 = vunpack.c.h.b16 %v711
        %v4401 = vunpack.c.l.b16 %v712
        %v4402 = vunpack.c.h.b16 %v712
        %v4403 = vunpack.c.l.b16 %v713
        %v4404 = vunpack.c.h.b16 %v713
        %v4405 = vunpack.c.l.b16 %v714
        %v4406 = vunpack.c.h.b16 %v714
        %v4407 = vunpack.c.l.b16 %v715
        %v4408 = vunpack.c.h.b16 %v715
        %v4409 = vunpack.c.l.b16 %v716
        %v4410 = vunpack.c.h.b16 %v716
        %v4411 = vunpack.c.l.b16 %v717
        %v4412 = vunpack.c.h.b16 %v717
        %v4413 = vunpack.c.l.b16 %v718
        %v4414 = vunpack.c.h.b16 %v718
        %v4415 = vunpack.c.l.b16 %v719
        %v4416 = vunpack.c.h.b16 %v719
        %v4417 = vunpack.c.l.b16 %v720
        %v4418 = vunpack.c.h.b16 %v720
        %v4419 = vunpack.c.l.b16 %v721
        %v4420 = vunpack.c.h.b16 %v721
        %v4421 = vunpack.c.l.b16 %v722
        %v4422 = vunpack.c.h.b16 %v722
        %v4423 = vunpack.c.l.b16 %v723
        %v4424 = vunpack.c.h.b16 %v723
        %v4425 = vunpack.c.l.b16 %v724
        %v4426 = vunpack.c.h.b16 %v724
        %v4427 = vunpack.c.l.b16 %v725
        %v4428 = vunpack.c.h.b16 %v725
        %v4429 = vunpack.c.l.b16 %v726
        %v4430 = vunpack.c.h.b16 %v726
        %v4431 = vunpack.c.l.b16 %v727
        %v4432 = vunpack.c.h.b16 %v727
        %v4433 = vunpack.c.l.b16 %v728
        %v4434 = vunpack.c.h.b16 %v728
        %v4435 = vunpack.c.l.b16 %v729
        %v4436 = vunpack.c.h.b16 %v729
        %v4437 = vunpack.c.l.b16 %v730
        %v4438 = vunpack.c.h.b16 %v730
        %v4439 = vunpack.c.l.b16 %v731
        %v4440 = vunpack.c.h.b16 %v731
        %v4441 = vunpack.c.l.b16 %v732
        %v4442 = vunpack.c.h.b16 %v732
        %v4443 = vunpack.c.l.b16 %v733
        %v4444 = vunpack.c.h.b16 %v733
        %v4445 = vunpack.c.l.b16 %v734
        %v4446 = vunpack.c.h.b16 %v734
        %v4447 = vunpack.c.l.b16 %v735
        %v4448 = vunpack.c.h.b16 %v735
        %v4449 = vunpack.c.l.b16 %v736
        %v4450 = vunpack.c.h.b16 %v736
        %v4451 = vunpack.c.l.b16 %v737
        %v4452 = vunpack.c.h.b16 %v737
        %v4453 = vunpack.c.l.b16 %v738
        %v4454 = vunpack.c.h.b16 %v738
        %v4455 = vunpack.c.l.b16 %v739
        %v4456 = vunpack.c.h.b16 %v739
        %v4457 = vunpack.c.l.b16 %v740
        %v4458 = vunpack.c.h.b16 %v740
        %v4459 = vunpack.c.l.b16 %v741
        %v4460 = vunpack.c.h.b16 %v741
        %v4461 = vunpack.c.l.b16 %v742
        %v4462 = vunpack.c.h.b16 %v742
        %v4463 = vunpack.c.l.b16 %v743
        %v4464 = vunpack.c.h.b16 %v743
        %v4465 = vunpack.c.l.b16 %v744
        %v4466 = vunpack.c.h.b16 %v744
        %v4467 = vunpack.c.l.b16 %v745
        %v4468 = vunpack.c.h.b16 %v745
        %v4469 = vunpack.c.l.b16 %v746
        %v4470 = vunpack.c.h.b16 %v746
        %v4471 = vunpack.c.l.b16 %v747
        %v4472 = vunpack.c.h.b16 %v747
        %v4473 = vunpack.c.l.b16 %v748
        %v4474 = vunpack.c.h.b16 %v748
        %v4475 = vunpack.c.l.b16 %v749
        %v4476 = vunpack.c.h.b16 %v749
        %v4477 = vunpack.c.l.b16 %v750
        %v4478 = vunpack.c.h.b16 %v750
        %v4479 = vunpack.c.l.b16 %v751
        %v4480 = vunpack.c.h.b16 %v751
        %v4481 = vunpack.c.l.b16 %v752
        %v4482 = vunpack.c.h.b16 %v752
        %v4483 = vunpack.c.l.b16 %v753
        %v4484 = vunpack.c.h.b16 %v753
        %v4485 = vunpack.c.l.b16 %v754
        %v4486 = vunpack.c.h.b16 %v754
        %v4487 = vunpack.c.l.b16 %v755
        %v4488 = vunpack.c.h.b16 %v755
        %v4489 = vunpack.c.l.b16 %v756
        %v4490 = vunpack.c.h.b16 %v756
        %v4491 = vunpack.c.l.b16 %v757
        %v4492 = vunpack.c.h.b16 %v757
        %v4493 = vunpack.c.l.b16 %v758
        %v4494 = vunpack.c.h.b16 %v758
        %v4495 = vunpack.c.l.b16 %v759
        %v4496 = vunpack.c.h.b16 %v759
        %v4497 = vunpack.c.l.b16 %v760
        %v4498 = vunpack.c.h.b16 %v760
        %v4499 = vunpack.c.l.b16 %v761
        %v4500 = vunpack.c.h.b16 %v761
        %v4501 = vunpack.c.l.b16 %v762
        %v4502 = vunpack.c.h.b16 %v762
        %v4503 = vunpack.c.l.b16 %v763
        %v4504 = vunpack.c.h.b16 %v763
        %v4505 = vunpack.c.l.b16 %v764
        %v4506 = vunpack.c.h.b16 %v764
        %v4507 = vunpack.c.l.b16 %v765
        %v4508 = vunpack.c.h.b16 %v765
        %v4509 = vunpack.c.l.b16 %v766
        %v4510 = vunpack.c.h.b16 %v766
        %v4511 = vunpack.c.l.b16 %v767
        %v4512 = vunpack.c.h.b16 %v767
        %v4513 = vunpack.c.l.b16 %v768
        %v4514 = vunpack.c.h.b16 %v768
        %v4515 = vunpack.c.l.b16 %v769
        %v4516 = vunpack.c.h.b16 %v769
        %v4517 = vunpack.c.l.b16 %v770
        %v4518 = vunpack.c.h.b16 %v770
        %v4519 = vunpack.c.l.b16 %v771
        %v4520 = vunpack.c.h.b16 %v771
        %v4521 = vunpack.c.l.b16 %v772
        %v4522 = vunpack.c.h.b16 %v772
        %v4523 = vunpack.c.l.b16 %v773
        %v4524 = vunpack.c.h.b16 %v773
        %v4525 = vunpack.c.l.b16 %v774
        %v4526 = vunpack.c.h.b16 %v774
        %v4527 = vunpack.c.l.b16 %v775
        %v4528 = vunpack.c.h.b16 %v775
        %v4529 = vunpack.c.l.b16 %v776
        %v4530 = vunpack.c.h.b16 %v776
        %v4531 = vunpack.c.l.b16 %v777
        %v4532 = vunpack.c.h.b16 %v777
        %v4533 = vunpack.c.l.b16 %v778
        %v4534 = vunpack.c.h.b16 %v778
        %v4535 = vunpack.c.l.b16 %v779
        %v4536 = vunpack.c.h.b16 %v779
        %v4537 = vunpack.c.l.b16 %v780
        %v4538 = vunpack.c.h.b16 %v780
        %v4539 = vunpack.c.l.b16 %v781
        %v4540 = vunpack.c.h.b16 %v781
        %v4541 = vunpack.c.l.b16 %v782
        %v4542 = vunpack.c.h.b16 %v782
        %v4543 = vunpack.c.l.b16 %v783
        %v4544 = vunpack.c.h.b16 %v783
        %v4545 = vunpack.c.l.b16 %v784
        %v4546 = vunpack.c.h.b16 %v784
        %v4547 = vunpack.c.l.b16 %v785
        %v4548 = vunpack.c.h.b16 %v785
        %v4549 = vunpack.c.l.b16 %v786
        %v4550 = vunpack.c.h.b16 %v786
        %v4551 = vunpack.c.l.b16 %v787
        %v4552 = vunpack.c.h.b16 %v787
        %v4553 = vunpack.c.l.b16 %v788
        %v4554 = vunpack.c.h.b16 %v788
        %v4555 = vunpack.c.l.b16 %v789
        %v4556 = vunpack.c.h.b16 %v789
        %v4557 = vunpack.c.l.b16 %v790
        %v4558 = vunpack.c.h.b16 %v790
        %v4559 = vunpack.c.l.b16 %v791
        %v4560 = vunpack.c.h.b16 %v791
        %v4561 = vunpack.c.l.b16 %v792
        %v4562 = vunpack.c.h.b16 %v792
        %v4563 = vunpack.c.l.b16 %v793
        %v4564 = vunpack.c.h.b16 %v793
        %v4565 = vunpack.c.l.b16 %v794
        %v4566 = vunpack.c.h.b16 %v794
        %v4567 = vunpack.c.l.b16 %v795
        %v4568 = vunpack.c.h.b16 %v795
        %v4569 = vunpack.c.l.b16 %v796
        %v4570 = vunpack.c.h.b16 %v796
        %v4571 = vunpack.c.l.b16 %v797
        %v4572 = vunpack.c.h.b16 %v797
        %v4573 = vunpack.c.l.b16 %v798
        %v4574 = vunpack.c.h.b16 %v798
        %v4575 = vunpack.c.l.b16 %v799
        %v4576 = vunpack.c.h.b16 %v799
        %v4577 = vunpack.c.l.b16 %v800
        %v4578 = vunpack.c.h.b16 %v800
        %v4579 = vunpack.c.l.b16 %v801
        %v4580 = vunpack.c.h.b16 %v801
        %v4581 = vunpack.c.l.b16 %v802
        %v4582 = vunpack.c.h.b16 %v802
        %v4583 = vunpack.c.l.b16 %v803
        %v4584 = vunpack.c.h.b16 %v803
        %v4585 = vunpack.c.l.b16 %v804
        %v4586 = vunpack.c.h.b16 %v804
        %v4587 = vunpack.c.l.b16 %v805
        %v4588 = vunpack.c.h.b16 %v805
        %v4589 = vunpack.c.l.b16 %v806
        %v4590 = vunpack.c.h.b16 %v806
        %v4591 = vunpack.c.l.b16 %v807
        %v4592 = vunpack.c.h.b16 %v807
        %v4593 = vunpack.c.l.b16 %v808
        %v4594 = vunpack.c.h.b16 %v808
        %v4595 = vunpack.c.l.b16 %v809
        %v4596 = vunpack.c.h.b16 %v809
        %v4597 = vunpack.c.l.b16 %v810
        %v4598 = vunpack.c.h.b16 %v810
        %v4599 = vunpack.c.l.b16 %v811
        %v4600 = vunpack.c.h.b16 %v811
        %v4601 = vunpack.c.l.b16 %v812
        %v4602 = vunpack.c.h.b16 %v812
        %v4603 = vunpack.c.l.b16 %v813
        %v4604 = vunpack.c.h.b16 %v813
        %v4605 = vunpack.c.l.b16 %v814
        %v4606 = vunpack.c.h.b16 %v814
        %v4607 = vunpack.c.l.b16 %v815
        %v4608 = vunpack.c.h.b16 %v815
        %v4609 = vunpack.c.l.b16 %v816
        %v4610 = vunpack.c.h.b16 %v816
        %v4611 = vunpack.c.l.b16 %v817
        %v4612 = vunpack.c.h.b16 %v817
        %v4613 = vunpack.c.l.b16 %v818
        %v4614 = vunpack.c.h.b16 %v818
        %v4615 = vunpack.c.l.b16 %v819
        %v4616 = vunpack.c.h.b16 %v819
        %v4617 = vunpack.c.l.b16 %v820
        %v4618 = vunpack.c.h.b16 %v820
        %v4619 = vunpack.c.l.b16 %v821
        %v4620 = vunpack.c.h.b16 %v821
        %v4621 = vunpack.c.l.b16 %v822
        %v4622 = vunpack.c.h.b16 %v822
        %v4623 = vunpack.c.l.b16 %v823
        %v4624 = vunpack.c.h.b16 %v823
        %v4625 = vunpack.c.l.b16 %v824
        %v4626 = vunpack.c.h.b16 %v824
        %v4627 = vunpack.c.l.b16 %v825
        %v4628 = vunpack.c.h.b16 %v825
        %v4629 = vunpack.c.l.b16 %v826
        %v4630 = vunpack.c.h.b16 %v826
        %v4631 = vunpack.c.l.b16 %v827
        %v4632 = vunpack.c.h.b16 %v827
        %v4633 = vunpack.c.l.b16 %v828
        %v4634 = vunpack.c.h.b16 %v828
        %v4635 = vunpack.c.l.b16 %v829
        %v4636 = vunpack.c.h.b16 %v829
        %v4637 = vunpack.c.l.b16 %v830
        %v4638 = vunpack.c.h.b16 %v830
        %v4639 = vunpack.c.l.b16 %v831
        %v4640 = vunpack.c.h.b16 %v831
        %v4641 = vunpack.c.l.b16 %v832
        %v4642 = vunpack.c.h.b16 %v832
        %v4643 = vunpack.c.l.b16 %v833
        %v4644 = vunpack.c.h.b16 %v833
        %v4645 = vunpack.c.l.b16 %v834
        %v4646 = vunpack.c.h.b16 %v834
        %v4647 = vunpack.c.l.b16 %v835
        %v4648 = vunpack.c.h.b16 %v835
        %v4649 = vunpack.c.l.b16 %v836
        %v4650 = vunpack.c.h.b16 %v836
        %v4651 = vunpack.c.l.b16 %v837
        %v4652 = vunpack.c.h.b16 %v837
        %v4653 = vunpack.c.l.b16 %v838
        %v4654 = vunpack.c.h.b16 %v838
        %v4655 = vunpack.c.l.b16 %v839
        %v4656 = vunpack.c.h.b16 %v839
        %v4657 = vunpack.c.l.b16 %v840
        %v4658 = vunpack.c.h.b16 %v840
        %v4659 = vunpack.c.l.b16 %v841
        %v4660 = vunpack.c.h.b16 %v841
        %v4661 = vunpack.c.l.b16 %v842
        %v4662 = vunpack.c.h.b16 %v842
        %v4663 = vunpack.c.l.b16 %v843
        %v4664 = vunpack.c.h.b16 %v843
        %v4665 = vunpack.c.l.b16 %v844
        %v4666 = vunpack.c.h.b16 %v844
        %v4667 = vunpack.c.l.b16 %v845
        %v4668 = vunpack.c.h.b16 %v845
        %v4669 = vunpack.c.l.b16 %v846
        %v4670 = vunpack.c.h.b16 %v846
        %v4671 = vunpack.c.l.b16 %v847
        %v4672 = vunpack.c.h.b16 %v847
        %v4673 = vunpack.c.l.b16 %v848
        %v4674 = vunpack.c.h.b16 %v848
        %v4675 = vunpack.c.l.b16 %v849
        %v4676 = vunpack.c.h.b16 %v849
        %v4677 = vunpack.c.l.b16 %v850
        %v4678 = vunpack.c.h.b16 %v850
        %v4679 = vunpack.c.l.b16 %v851
        %v4680 = vunpack.c.h.b16 %v851
        %v4681 = vunpack.c.l.b16 %v852
        %v4682 = vunpack.c.h.b16 %v852
        %v4683 = vunpack.c.l.b16 %v853
        %v4684 = vunpack.c.h.b16 %v853
        %v4685 = vunpack.c.l.b16 %v854
        %v4686 = vunpack.c.h.b16 %v854
        %v4687 = vunpack.c.l.b16 %v855
        %v4688 = vunpack.c.h.b16 %v855
        %v4689 = vunpack.c.l.b16 %v856
        %v4690 = vunpack.c.h.b16 %v856
        %v4691 = vunpack.c.l.b16 %v857
        %v4692 = vunpack.c.h.b16 %v857
        %v4693 = vunpack.c.l.b16 %v858
        %v4694 = vunpack.c.h.b16 %v858
        %v4695 = vunpack.c.l.b16 %v859
        %v4696 = vunpack.c.h.b16 %v859
        %v4697 = vunpack.c.l.b16 %v860
        %v4698 = vunpack.c.h.b16 %v860
        %v4699 = vunpack.c.l.b16 %v861
        %v4700 = vunpack.c.h.b16 %v861
        %v4701 = vunpack.c.l.b16 %v862
        %v4702 = vunpack.c.h.b16 %v862
        %v4703 = vunpack.c.l.b16 %v863
        %v4704 = vunpack.c.h.b16 %v863
        %v4705 = vunpack.c.l.b16 %v864
        %v4706 = vunpack.c.h.b16 %v864
        %v4707 = vunpack.c.l.b16 %v865
        %v4708 = vunpack.c.h.b16 %v865
        %v4709 = vunpack.c.l.b16 %v866
        %v4710 = vunpack.c.h.b16 %v866
        %v4711 = vunpack.c.l.b16 %v867
        %v4712 = vunpack.c.h.b16 %v867
        %v4713 = vunpack.c.l.b16 %v868
        %v4714 = vunpack.c.h.b16 %v868
        %v4715 = vunpack.c.l.b16 %v869
        %v4716 = vunpack.c.h.b16 %v869
        %v4717 = vunpack.c.l.b16 %v870
        %v4718 = vunpack.c.h.b16 %v870
        %v4719 = vunpack.c.l.b16 %v871
        %v4720 = vunpack.c.h.b16 %v871
        %v4721 = vunpack.c.l.b16 %v872
        %v4722 = vunpack.c.h.b16 %v872
        %v4723 = vunpack.c.l.b16 %v873
        %v4724 = vunpack.c.h.b16 %v873
        %v4725 = vunpack.c.l.b16 %v874
        %v4726 = vunpack.c.h.b16 %v874
        %v4727 = vunpack.c.l.b16 %v875
        %v4728 = vunpack.c.h.b16 %v875
        %v4729 = vunpack.c.l.b16 %v876
        %v4730 = vunpack.c.h.b16 %v876
        %v4731 = vunpack.c.l.b16 %v877
        %v4732 = vunpack.c.h.b16 %v877
        %v4733 = vunpack.c.l.b16 %v878
        %v4734 = vunpack.c.h.b16 %v878
        %v4735 = vunpack.c.l.b16 %v879
        %v4736 = vunpack.c.h.b16 %v879
        %v4737 = vunpack.c.l.b16 %v880
        %v4738 = vunpack.c.h.b16 %v880
        %v4739 = vunpack.c.l.b16 %v881
        %v4740 = vunpack.c.h.b16 %v881
        %v4741 = vunpack.c.l.b16 %v882
        %v4742 = vunpack.c.h.b16 %v882
        %v4743 = vunpack.c.l.b16 %v883
        %v4744 = vunpack.c.h.b16 %v883
        %v4745 = vunpack.c.l.b16 %v884
        %v4746 = vunpack.c.h.b16 %v884
        %v4747 = vunpack.c.l.b16 %v885
        %v4748 = vunpack.c.h.b16 %v885
        %v4749 = vunpack.c.l.b16 %v886
        %v4750 = vunpack.c.h.b16 %v886
        %v4751 = vunpack.c.l.b16 %v887
        %v4752 = vunpack.c.h.b16 %v887
        %v4753 = vunpack.c.l.b16 %v888
        %v4754 = vunpack.c.h.b16 %v888
        %v4755 = vunpack.c.l.b16 %v889
        %v4756 = vunpack.c.h.b16 %v889
        %v4757 = vunpack.c.l.b16 %v890
        %v4758 = vunpack.c.h.b16 %v890
        %v4759 = vunpack.c.l.b16 %v891
        %v4760 = vunpack.c.h.b16 %v891
        %v4761 = vunpack.c.l.b16 %v892
        %v4762 = vunpack.c.h.b16 %v892
        %v4763 = vunpack.c.l.b16 %v893
        %v4764 = vunpack.c.h.b16 %v893
        %v4765 = vunpack.c.l.b16 %v894
        %v4766 = vunpack.c.h.b16 %v894
        %v4767 = vunpack.c.l.b16 %v895
        %v4768 = vunpack.c.h.b16 %v895
        %v4769 = vunpack.c.l.b16 %v896
        %v4770 = vunpack.c.h.b16 %v896
        %v4771 = vunpack.c.l.b16 %v897
        %v4772 = vunpack.c.h.b16 %v897
        %v4773 = vunpack.c.l.b16 %v898
        %v4774 = vunpack.c.h.b16 %v898
        %v4775 = vunpack.c.l.b16 %v899
        %v4776 = vunpack.c.h.b16 %v899
        %v4777 = vunpack.c.l.b16 %v900
        %v4778 = vunpack.c.h.b16 %v900
        %v4779 = vunpack.c.l.b16 %v901
        %v4780 = vunpack.c.h.b16 %v901
        %v4781 = vunpack.c.l.b16 %v902
        %v4782 = vunpack.c.h.b16 %v902
        %v4783 = vunpack.c.l.b16 %v903
        %v4784 = vunpack.c.h.b16 %v903
        %v4785 = vunpack.c.l.b16 %v904
        %v4786 = vunpack.c.h.b16 %v904
        %v4787 = vunpack.c.l.b16 %v905
        %v4788 = vunpack.c.h.b16 %v905
        %v4789 = vunpack.c.l.b16 %v906
        %v4790 = vunpack.c.h.b16 %v906
        %v4791 = vunpack.c.l.b16 %v907
        %v4792 = vunpack.c.h.b16 %v907
        %v4793 = vunpack.c.l.b16 %v908
        %v4794 = vunpack.c.h.b16 %v908
        %v4795 = vunpack.c.l.b16 %v909
        %v4796 = vunpack.c.h.b16 %v909
        %v4797 = vunpack.c.l.b16 %v910
        %v4798 = vunpack.c.h.b16 %v910
        %v4799 = vunpack.c.l.b16 %v911
        %v4800 = vunpack.c.h.b16 %v911
        %v4801 = vunpack.c.l.b16 %v912
        %v4802 = vunpack.c.h.b16 %v912
        %v4803 = vunpack.c.l.b16 %v913
        %v4804 = vunpack.c.h.b16 %v913
        %v4805 = vunpack.c.l.b16 %v914
        %v4806 = vunpack.c.h.b16 %v914
        %v4807 = vunpack.c.l.b16 %v915
        %v4808 = vunpack.c.h.b16 %v915
        %v4809 = vunpack.c.l.b16 %v916
        %v4810 = vunpack.c.h.b16 %v916
        %v4811 = vunpack.c.l.b16 %v917
        %v4812 = vunpack.c.h.b16 %v917
        %v4813 = vunpack.c.l.b16 %v918
        %v4814 = vunpack.c.h.b16 %v918
        %v4815 = vunpack.c.l.b16 %v919
        %v4816 = vunpack.c.h.b16 %v919
        %v4817 = vunpack.c.l.b16 %v920
        %v4818 = vunpack.c.h.b16 %v920
        %v4819 = vunpack.c.l.b16 %v921
        %v4820 = vunpack.c.h.b16 %v921
        %v4821 = vunpack.c.l.b16 %v922
        %v4822 = vunpack.c.h.b16 %v922
        %v4823 = vunpack.c.l.b16 %v923
        %v4824 = vunpack.c.h.b16 %v923
        %v4825 = vunpack.c.l.b16 %v924
        %v4826 = vunpack.c.h.b16 %v924
        %v4827 = vunpack.c.l.b16 %v925
        %v4828 = vunpack.c.h.b16 %v925
        %v4829 = vunpack.c.l.b16 %v926
        %v4830 = vunpack.c.h.b16 %v926
        %v4831 = vunpack.c.l.b16 %v927
        %v4832 = vunpack.c.h.b16 %v927
        %v4833 = vunpack.c.l.b16 %v928
        %v4834 = vunpack.c.h.b16 %v928
        %v4835 = vunpack.c.l.b16 %v929
        %v4836 = vunpack.c.h.b16 %v929
        %v4837 = vunpack.c.l.b16 %v930
        %v4838 = vunpack.c.h.b16 %v930
        %v4839 = vunpack.c.l.b16 %v931
        %v4840 = vunpack.c.h.b16 %v931
        %v4841 = vunpack.c.l.b16 %v932
        %v4842 = vunpack.c.h.b16 %v932
        %v4843 = vunpack.c.l.b16 %v933
        %v4844 = vunpack.c.h.b16 %v933
        %v4845 = vunpack.c.l.b16 %v934
        %v4846 = vunpack.c.h.b16 %v934
        %v4847 = vunpack.c.l.b16 %v935
        %v4848 = vunpack.c.h.b16 %v935
        %v4849 = vunpack.c.l.b16 %v936
        %v4850 = vunpack.c.h.b16 %v936
        %v4851 = vunpack.c.l.b16 %v937
        %v4852 = vunpack.c.h.b16 %v937
        %v4853 = vunpack.c.l.b16 %v938
        %v4854 = vunpack.c.h.b16 %v938
        %v4855 = vunpack.c.l.b16 %v939
        %v4856 = vunpack.c.h.b16 %v939
        %v4857 = vunpack.c.l.b16 %v940
        %v4858 = vunpack.c.h.b16 %v940
        %v4859 = vunpack.c.l.b16 %v941
        %v4860 = vunpack.c.h.b16 %v941
        %v4861 = vunpack.c.l.b16 %v942
        %v4862 = vunpack.c.h.b16 %v942
        %v4863 = vunpack.c.l.b16 %v943
        %v4864 = vunpack.c.h.b16 %v943
        %v4865 = vunpack.c.l.b16 %v944
        %v4866 = vunpack.c.h.b16 %v944
        %v4867 = vunpack.c.l.b16 %v945
        %v4868 = vunpack.c.h.b16 %v945
        %v4869 = vunpack.c.l.b16 %v946
        %v4870 = vunpack.c.h.b16 %v946
        %v4871 = vunpack.c.l.b16 %v947
        %v4872 = vunpack.c.h.b16 %v947
        %v4873 = vunpack.c.l.b16 %v948
        %v4874 = vunpack.c.h.b16 %v948
        %v4875 = vunpack.c.l.b16 %v949
        %v4876 = vunpack.c.h.b16 %v949
        %v4877 = vunpack.c.l.b16 %v950
        %v4878 = vunpack.c.h.b16 %v950
        %v4879 = vunpack.c.l.b16 %v951
        %v4880 = vunpack.c.h.b16 %v951
        %v4881 = vunpack.c.l.b16 %v952
        %v4882 = vunpack.c.h.b16 %v952
        %v4883 = vunpack.c.l.b16 %v953
        %v4884 = vunpack.c.h.b16 %v953
        %v4885 = vunpack.c.l.b16 %v954
        %v4886 = vunpack.c.h.b16 %v954
        %v4887 = vunpack.c.l.b16 %v955
        %v4888 = vunpack.c.h.b16 %v955
        %v4889 = vunpack.c.l.b16 %v956
        %v4890 = vunpack.c.h.b16 %v956
        %v4891 = vunpack.c.l.b16 %v957
        %v4892 = vunpack.c.h.b16 %v957
        %v4893 = vunpack.c.l.b16 %v958
        %v4894 = vunpack.c.h.b16 %v958
        %v4895 = vunpack.c.l.b16 %v959
        %v4896 = vunpack.c.h.b16 %v959
        %v4897 = vunpack.c.l.b16 %v960
        %v4898 = vunpack.c.h.b16 %v960
        %v4899 = vunpack.c.l.b16 %v961
        %v4900 = vunpack.c.h.b16 %v961
        %v4901 = vunpack.c.l.b16 %v962
        %v4902 = vunpack.c.h.b16 %v962
        %v4903 = vunpack.c.l.b16 %v963
        %v4904 = vunpack.c.h.b16 %v963
        %v4905 = vunpack.c.l.b16 %v964
        %v4906 = vunpack.c.h.b16 %v964
        %v4907 = vunpack.c.l.b16 %v965
        %v4908 = vunpack.c.h.b16 %v965
        %v4909 = vunpack.c.l.b16 %v966
        %v4910 = vunpack.c.h.b16 %v966
        %v4911 = vunpack.c.l.b16 %v967
        %v4912 = vunpack.c.h.b16 %v967
        %v4913 = vunpack.c.l.b16 %v968
        %v4914 = vunpack.c.h.b16 %v968
        %v4915 = vunpack.c.l.b16 %v969
        %v4916 = vunpack.c.h.b16 %v969
        %v4917 = vunpack.c.l.b16 %v970
        %v4918 = vunpack.c.h.b16 %v970
        %v4919 = vunpack.c.l.b16 %v971
        %v4920 = vunpack.c.h.b16 %v971
        %v4921 = vunpack.c.l.b16 %v972
        %v4922 = vunpack.c.h.b16 %v972
        %v4923 = vunpack.c.l.b16 %v973
        %v4924 = vunpack.c.h.b16 %v973
        %v4925 = vunpack.c.l.b16 %v974
        %v4926 = vunpack.c.h.b16 %v974
        %v4927 = vunpack.c.l.b16 %v975
        %v4928 = vunpack.c.h.b16 %v975
        %v4929 = vunpack.c.l.b16 %v976
        %v4930 = vunpack.c.h.b16 %v976
        %v4931 = vunpack.c.l.b16 %v977
        %v4932 = vunpack.c.h.b16 %v977
        %v4933 = vunpack.c.l.b16 %v978
        %v4934 = vunpack.c.h.b16 %v978
        %v4935 = vunpack.c.l.b16 %v979
        %v4936 = vunpack.c.h.b16 %v979
        %v4937 = vunpack.c.l.b16 %v980
        %v4938 = vunpack.c.h.b16 %v980
        %v4939 = vunpack.c.l.b16 %v981
        %v4940 = vunpack.c.h.b16 %v981
        %v4941 = vunpack.c.l.b16 %v982
        %v4942 = vunpack.c.h.b16 %v982
        %v4943 = vunpack.c.l.b16 %v983
        %v4944 = vunpack.c.h.b16 %v983
        %v4945 = vunpack.c.l.b16 %v984
        %v4946 = vunpack.c.h.b16 %v984
        %v4947 = vunpack.c.l.b16 %v985
        %v4948 = vunpack.c.h.b16 %v985
        %v4949 = vunpack.c.l.b16 %v986
        %v4950 = vunpack.c.h.b16 %v986
        %v4951 = vunpack.c.l.b16 %v987
        %v4952 = vunpack.c.h.b16 %v987
        %v4953 = vunpack.c.l.b16 %v988
        %v4954 = vunpack.c.h.b16 %v988
        %v4955 = vunpack.c.l.b16 %v989
        %v4956 = vunpack.c.h.b16 %v989
        %v4957 = vunpack.c.l.b16 %v990
        %v4958 = vunpack.c.h.b16 %v990
        %v4959 = vunpack.c.l.b16 %v991
        %v4960 = vunpack.c.h.b16 %v991
        %v4961 = vunpack.c.l.b16 %v992
        %v4962 = vunpack.c.h.b16 %v992
        %v4963 = vunpack.c.l.b16 %v993
        %v4964 = vunpack.c.h.b16 %v993
        %v4965 = vunpack.c.l.b16 %v994
        %v4966 = vunpack.c.h.b16 %v994
        %v4967 = vunpack.c.l.b16 %v995
        %v4968 = vunpack.c.h.b16 %v995
        %v4969 = vunpack.c.l.b16 %v996
        %v4970 = vunpack.c.h.b16 %v996
        %v4971 = vunpack.c.l.b16 %v997
        %v4972 = vunpack.c.h.b16 %v997
        %v4973 = vunpack.c.l.b16 %v998
        %v4974 = vunpack.c.h.b16 %v998
        %v4975 = vunpack.c.l.b16 %v999
        %v4976 = vunpack.c.h.b16 %v999
        %v4977 = vunpack.c.l.b16 %v1000
        %v4978 = vunpack.c.h.b16 %v1000
        %v4979 = vunpack.c.l.b16 %v1001
        %v4980 = vunpack.c.h.b16 %v1001
        %v4981 = vunpack.c.l.b16 %v1002
        %v4982 = vunpack.c.h.b16 %v1002
        %v4983 = vunpack.c.l.b16 %v1003
        %v4984 = vunpack.c.h.b16 %v1003
        %v4985 = vunpack.c.l.b16 %v1004
        %v4986 = vunpack.c.h.b16 %v1004
        %v4987 = vunpack.c.l.b16 %v1005
        %v4988 = vunpack.c.h.b16 %v1005
        %v4989 = vunpack.c.l.b16 %v1006
        %v4990 = vunpack.c.h.b16 %v1006
        %v4991 = vunpack.c.l.b16 %v1007
        %v4992 = vunpack.c.h.b16 %v1007
        %v4993 = vunpack.c.l.b16 %v1008
        %v4994 = vunpack.c.h.b16 %v1008
        %v4995 = vunpack.c.l.b16 %v1009
        %v4996 = vunpack.c.h.b16 %v1009
        %v4997 = vunpack.c.l.b16 %v1010
        %v4998 = vunpack.c.h.b16 %v1010
        %v4999 = vunpack.c.l.b16 %v1011
        %v5000 = vunpack.c.h.b16 %v1011
        %v5001 = vunpack.c.l.b16 %v1012
        %v5002 = vunpack.c.h.b16 %v1012
        %v5003 = vunpack.c.l.b16 %v1013
        %v5004 = vunpack.c.h.b16 %v1013
        %v5005 = vunpack.c.l.b16 %v1014
        %v5006 = vunpack.c.h.b16 %v1014
        %v5007 = vunpack.c.l.b16 %v1015
        %v5008 = vunpack.c.h.b16 %v1015
        %v5009 = vunpack.c.l.b16 %v1016
        %v5010 = vunpack.c.h.b16 %v1016
        %v5011 = vunpack.c.l.b16 %v1017
        %v5012 = vunpack.c.h.b16 %v1017
        %v5013 = vunpack.c.l.b16 %v1018
        %v5014 = vunpack.c.h.b16 %v1018
        %v5015 = vunpack.c.l.b16 %v1019
        %v5016 = vunpack.c.h.b16 %v1019
        %v5017 = vunpack.c.l.b16 %v1020
        %v5018 = vunpack.c.h.b16 %v1020
        %v5019 = vunpack.c.l.b16 %v1021
        %v5020 = vunpack.c.h.b16 %v1021
        %v5021 = vunpack.c.l.b16 %v1022
        %v5022 = vunpack.c.h.b16 %v1022
        %v5023 = vunpack.c.l.b16 %v1023
        %v5024 = vunpack.c.h.b16 %v1023
        %v5025 = vunpack.c.l.b16 %v1024
        %v5026 = vunpack.c.h.b16 %v1024
        %v5027 = vunpack.c.l.b16 %v1025
        %v5028 = vunpack.c.h.b16 %v1025
        %v5029 = vunpack.c.l.b16 %v1026
        %v5030 = vunpack.c.h.b16 %v1026
        %v5031 = vunpack.c.l.b16 %v1027
        %v5032 = vunpack.c.h.b16 %v1027
        %v5033 = vunpack.c.l.b16 %v1028
        %v5034 = vunpack.c.h.b16 %v1028
        %v5035 = vunpack.c.l.b16 %v1029
        %v5036 = vunpack.c.h.b16 %v1029
        %v5037 = vunpack.c.l.b16 %v1030
        %v5038 = vunpack.c.h.b16 %v1030
        %v5039 = vunpack.c.l.b16 %v1031
        %v5040 = vunpack.c.h.b16 %v1031
        %v5041 = vunpack.c.l.b16 %v1032
        %v5042 = vunpack.c.h.b16 %v1032
        %v5043 = vunpack.c.l.b16 %v1033
        %v5044 = vunpack.c.h.b16 %v1033
        %v5045 = vunpack.c.l.b16 %v1034
        %v5046 = vunpack.c.h.b16 %v1034
        %v5047 = vunpack.c.l.b16 %v1035
        %v5048 = vunpack.c.h.b16 %v1035
        %v5049 = vunpack.c.l.b16 %v1036
        %v5050 = vunpack.c.h.b16 %v1036
        %v5051 = vunpack.c.l.b16 %v1037
        %v5052 = vunpack.c.h.b16 %v1037
        %v5053 = vunpack.c.l.b16 %v1038
        %v5054 = vunpack.c.h.b16 %v1038
        %v5055 = vunpack.c.l.b16 %v1039
        %v5056 = vunpack.c.h.b16 %v1039
        %v5057 = vunpack.c.l.b16 %v1040
        %v5058 = vunpack.c.h.b16 %v1040
        %v5059 = vunpack.c.l.b16 %v1041
        %v5060 = vunpack.c.h.b16 %v1041
        %v5061 = vunpack.c.l.b16 %v1042
        %v5062 = vunpack.c.h.b16 %v1042
        %v5063 = vunpack.c.l.b16 %v1043
        %v5064 = vunpack.c.h.b16 %v1043
        %v5065 = vunpack.c.l.b16 %v1044
        %v5066 = vunpack.c.h.b16 %v1044
        %v5067 = vunpack.c.l.b16 %v1045
        %v5068 = vunpack.c.h.b16 %v1045
        %v5069 = vunpack.c.l.b16 %v1046
        %v5070 = vunpack.c.h.b16 %v1046
        %v5071 = vunpack.c.l.b16 %v1047
        %v5072 = vunpack.c.h.b16 %v1047
        %v5073 = vunpack.c.l.b16 %v1048
        %v5074 = vunpack.c.h.b16 %v1048
        %v5075 = vunpack.c.l.b16 %v1049
        %v5076 = vunpack.c.h.b16 %v1049
        %v5077 = vunpack.c.l.b16 %v1050
        %v5078 = vunpack.c.h.b16 %v1050
        %v5079 = vunpack.c.l.b16 %v1051
        %v5080 = vunpack.c.h.b16 %v1051
        %v5081 = vunpack.c.l.b16 %v1052
        %v5082 = vunpack.c.h.b16 %v1052
        %v5083 = vunpack.c.l.b16 %v1053
        %v5084 = vunpack.c.h.b16 %v1053
        %v5085 = vunpack.c.l.b16 %v1054
        %v5086 = vunpack.c.h.b16 %v1054
        %v5087 = vunpack.c.l.b16 %v1055
        %v5088 = vunpack.c.h.b16 %v1055
        %v5089 = vunpack.c.l.b16 %v1056
        %v5090 = vunpack.c.h.b16 %v1056
        %v5091 = vunpack.c.l.b16 %v1057
        %v5092 = vunpack.c.h.b16 %v1057
        %v5093 = vunpack.c.l.b16 %v1058
        %v5094 = vunpack.c.h.b16 %v1058
        %v5095 = vunpack.c.l.b16 %v1059
        %v5096 = vunpack.c.h.b16 %v1059
        %v5097 = vunpack.c.l.b16 %v1060
        %v5098 = vunpack.c.h.b16 %v1060
        %v5099 = vunpack.c.l.b16 %v1061
        %v5100 = vunpack.c.h.b16 %v1061
        %v5101 = vunpack.c.l.b16 %v1062
        %v5102 = vunpack.c.h.b16 %v1062
        %v5103 = vunpack.c.l.b16 %v1063
        %v5104 = vunpack.c.h.b16 %v1063
        %v5105 = vunpack.c.l.b16 %v1064
        %v5106 = vunpack.c.h.b16 %v1064
        %v5107 = vunpack.c.l.b16 %v1065
        %v5108 = vunpack.c.h.b16 %v1065
        %v5109 = vunpack.c.l.b16 %v1066
        %v5110 = vunpack.c.h.b16 %v1066
        %v5111 = vunpack.c.l.b16 %v1067
        %v5112 = vunpack.c.h.b16 %v1067
        %v5113 = vunpack.c.l.b16 %v1068
        %v5114 = vunpack.c.h.b16 %v1068
        %v5115 = vunpack.c.l.b16 %v1069
        %v5116 = vunpack.c.h.b16 %v1069
        %v5117 = vunpack.c.l.b16 %v1070
        %v5118 = vunpack.c.h.b16 %v1070
        %v5119 = vunpack.c.l.b16 %v1071
        %v5120 = vunpack.c.h.b16 %v1071
        %v5121 = vunpack.c.l.b16 %v1072
        %v5122 = vunpack.c.h.b16 %v1072
        %v5123 = vunpack.c.l.b16 %v1073
        %v5124 = vunpack.c.h.b16 %v1073
        %v5125 = vunpack.c.l.b16 %v1074
        %v5126 = vunpack.c.h.b16 %v1074
        %v5127 = vunpack.c.l.b16 %v1075
        %v5128 = vunpack.c.h.b16 %v1075
        %v5129 = vunpack.c.l.b16 %v1076
        %v5130 = vunpack.c.h.b16 %v1076
        %v5131 = vunpack.c.l.b16 %v1077
        %v5132 = vunpack.c.h.b16 %v1077
        %v5133 = vunpack.c.l.b16 %v1078
        %v5134 = vunpack.c.h.b16 %v1078
        %v5135 = vunpack.c.l.b16 %v1079
        %v5136 = vunpack.c.h.b16 %v1079
        %v5137 = vunpack.c.l.b16 %v1080
        %v5138 = vunpack.c.h.b16 %v1080
        %v5139 = vunpack.c.l.b16 %v1081
        %v5140 = vunpack.c.h.b16 %v1081
        %v5141 = vunpack.c.l.b16 %v1082
        %v5142 = vunpack.c.h.b16 %v1082
        %v5143 = vunpack.c.l.b16 %v1083
        %v5144 = vunpack.c.h.b16 %v1083
        %v5145 = vunpack.c.l.b16 %v1084
        %v5146 = vunpack.c.h.b16 %v1084
        %v5147 = vunpack.c.l.b16 %v1085
        %v5148 = vunpack.c.h.b16 %v1085
        %v5149 = vunpack.c.l.b16 %v1086
        %v5150 = vunpack.c.h.b16 %v1086
        %v5151 = vunpack.c.l.b16 %v1087
        %v5152 = vunpack.c.h.b16 %v1087
        %v5153 = vunpack.c.l.b16 %v1088
        %v5154 = vunpack.c.h.b16 %v1088
        %v5155 = vunpack.c.l.b16 %v1089
        %v5156 = vunpack.c.h.b16 %v1089
        %v5157 = vunpack.c.l.b16 %v1090
        %v5158 = vunpack.c.h.b16 %v1090
        %v5159 = vunpack.c.l.b16 %v1091
        %v5160 = vunpack.c.h.b16 %v1091
        %v5161 = vunpack.c.l.b16 %v1092
        %v5162 = vunpack.c.h.b16 %v1092
        %v5163 = vunpack.c.l.b16 %v1093
        %v5164 = vunpack.c.h.b16 %v1093
        %v5165 = vunpack.c.l.b16 %v1094
        %v5166 = vunpack.c.h.b16 %v1094
        %v5167 = vunpack.c.l.b16 %v1095
        %v5168 = vunpack.c.h.b16 %v1095
        %v5169 = vunpack.c.l.b16 %v1096
        %v5170 = vunpack.c.h.b16 %v1096
        %v5171 = vunpack.c.l.b16 %v1097
        %v5172 = vunpack.c.h.b16 %v1097
        %v5173 = vunpack.c.l.b16 %v1098
        %v5174 = vunpack.c.h.b16 %v1098
        %v5175 = vunpack.c.l.b16 %v1099
        %v5176 = vunpack.c.h.b16 %v1099
        %v5177 = vunpack.c.l.b16 %v1100
        %v5178 = vunpack.c.h.b16 %v1100
        %v5179 = vunpack.c.l.b16 %v1101
        %v5180 = vunpack.c.h.b16 %v1101
        %v5181 = vunpack.c.l.b16 %v1102
        %v5182 = vunpack.c.h.b16 %v1102
        %v5183 = vunpack.c.l.b16 %v1103
        %v5184 = vunpack.c.h.b16 %v1103
        %v5185 = vunpack.c.l.b16 %v1104
        %v5186 = vunpack.c.h.b16 %v1104
        %v5187 = vunpack.c.l.b16 %v1105
        %v5188 = vunpack.c.h.b16 %v1105
        %v5189 = vunpack.c.l.b16 %v1106
        %v5190 = vunpack.c.h.b16 %v1106
        %v5191 = vunpack.c.l.b16 %v1107
        %v5192 = vunpack.c.h.b16 %v1107
        %v5193 = vunpack.c.l.b16 %v1108
        %v5194 = vunpack.c.h.b16 %v1108
        %v5195 = vunpack.c.l.b16 %v1109
        %v5196 = vunpack.c.h.b16 %v1109
        %v5197 = vunpack.c.l.b16 %v1110
        %v5198 = vunpack.c.h.b16 %v1110
        %v5199 = vunpack.c.l.b16 %v1111
        %v5200 = vunpack.c.h.b16 %v1111
        %v5201 = vunpack.c.l.b16 %v1112
        %v5202 = vunpack.c.h.b16 %v1112
        %v5203 = vunpack.c.l.b16 %v1113
        %v5204 = vunpack.c.h.b16 %v1113
        %v5205 = vunpack.c.l.b16 %v1114
        %v5206 = vunpack.c.h.b16 %v1114
        %v5207 = vunpack.c.l.b16 %v1115
        %v5208 = vunpack.c.h.b16 %v1115
        %v5209 = vunpack.c.l.b16 %v1116
        %v5210 = vunpack.c.h.b16 %v1116
        %v5211 = vunpack.c.l.b16 %v1117
        %v5212 = vunpack.c.h.b16 %v1117
        %v5213 = vunpack.c.l.b16 %v1118
        %v5214 = vunpack.c.h.b16 %v1118
        %v5215 = vunpack.c.l.b16 %v1119
        %v5216 = vunpack.c.h.b16 %v1119
        %v5217 = vunpack.c.l.b16 %v1120
        %v5218 = vunpack.c.h.b16 %v1120
        %v5219 = vunpack.c.l.b16 %v1121
        %v5220 = vunpack.c.h.b16 %v1121
        %v5221 = vunpack.c.l.b16 %v1122
        %v5222 = vunpack.c.h.b16 %v1122
        %v5223 = vunpack.c.l.b16 %v1123
        %v5224 = vunpack.c.h.b16 %v1123
        %v5225 = vunpack.c.l.b16 %v1124
        %v5226 = vunpack.c.h.b16 %v1124
        %v5227 = vunpack.c.l.b16 %v1125
        %v5228 = vunpack.c.h.b16 %v1125
        %v5229 = vunpack.c.l.b16 %v1126
        %v5230 = vunpack.c.h.b16 %v1126
        %v5231 = vunpack.c.l.b16 %v1127
        %v5232 = vunpack.c.h.b16 %v1127
        %v5233 = vunpack.c.l.b16 %v1128
        %v5234 = vunpack.c.h.b16 %v1128
        %v5235 = vunpack.c.l.b16 %v1129
        %v5236 = vunpack.c.h.b16 %v1129
        %v5237 = vunpack.c.l.b16 %v1130
        %v5238 = vunpack.c.h.b16 %v1130
        %v5239 = vunpack.c.l.b16 %v1131
        %v5240 = vunpack.c.h.b16 %v1131
        %v5241 = vunpack.c.l.b16 %v1132
        %v5242 = vunpack.c.h.b16 %v1132
        %v5243 = vunpack.c.l.b16 %v1133
        %v5244 = vunpack.c.h.b16 %v1133
        %v5245 = vunpack.c.l.b16 %v1134
        %v5246 = vunpack.c.h.b16 %v1134
        %v5247 = vunpack.c.l.b16 %v1135
        %v5248 = vunpack.c.h.b16 %v1135
        %v5249 = vunpack.c.l.b16 %v1136
        %v5250 = vunpack.c.h.b16 %v1136
        %v5251 = vunpack.c.l.b16 %v1137
        %v5252 = vunpack.c.h.b16 %v1137
        %v5253 = vunpack.c.l.b16 %v1138
        %v5254 = vunpack.c.h.b16 %v1138
        %v5255 = vunpack.c.l.b16 %v1139
        %v5256 = vunpack.c.h.b16 %v1139
        %v5257 = vunpack.c.l.b16 %v1140
        %v5258 = vunpack.c.h.b16 %v1140
        %v5259 = vunpack.c.l.b16 %v1141
        %v5260 = vunpack.c.h.b16 %v1141
        %v5261 = vunpack.c.l.b16 %v1142
        %v5262 = vunpack.c.h.b16 %v1142
        %v5263 = vunpack.c.l.b16 %v1143
        %v5264 = vunpack.c.h.b16 %v1143
        %v5265 = vunpack.c.l.b16 %v1144
        %v5266 = vunpack.c.h.b16 %v1144
        %v5267 = vunpack.c.l.b16 %v1145
        %v5268 = vunpack.c.h.b16 %v1145
        %v5269 = vunpack.c.l.b16 %v1146
        %v5270 = vunpack.c.h.b16 %v1146
        %v5271 = vunpack.c.l.b16 %v1147
        %v5272 = vunpack.c.h.b16 %v1147
        %v5273 = vunpack.c.l.b16 %v1148
        %v5274 = vunpack.c.h.b16 %v1148
        %v5275 = vunpack.c.l.b16 %v1149
        %v5276 = vunpack.c.h.b16 %v1149
        %v5277 = vunpack.c.l.b16 %v1150
        %v5278 = vunpack.c.h.b16 %v1150
        %v5279 = vunpack.c.l.b16 %v1151
        %v5280 = vunpack.c.h.b16 %v1151
        %v5281 = vunpack.c.l.b16 %v1152
        %v5282 = vunpack.c.h.b16 %v1152
        %v5283 = vunpack.c.l.b16 %v1153
        %v5284 = vunpack.c.h.b16 %v1153
        %v5285 = vunpack.c.l.b16 %v1154
        %v5286 = vunpack.c.h.b16 %v1154
        %v5287 = vunpack.c.l.b16 %v1155
        %v5288 = vunpack.c.h.b16 %v1155
        %v5289 = vunpack.c.l.b16 %v1156
        %v5290 = vunpack.c.h.b16 %v1156
        %v5291 = vunpack.c.l.b16 %v1157
        %v5292 = vunpack.c.h.b16 %v1157
        %v5293 = vunpack.c.l.b16 %v1158
        %v5294 = vunpack.c.h.b16 %v1158
        %v5295 = vunpack.c.l.b16 %v1159
        %v5296 = vunpack.c.h.b16 %v1159
        %v5297 = vunpack.c.l.b16 %v1160
        %v5298 = vunpack.c.h.b16 %v1160
        %v5299 = vunpack.c.l.b16 %v1161
        %v5300 = vunpack.c.h.b16 %v1161
        %v5301 = vunpack.c.l.b16 %v1162
        %v5302 = vunpack.c.h.b16 %v1162
        %v5303 = vunpack.c.l.b16 %v1163
        %v5304 = vunpack.c.h.b16 %v1163
        %v5305 = vunpack.c.l.b16 %v1164
        %v5306 = vunpack.c.h.b16 %v1164
        %v5307 = vunpack.c.l.b16 %v1165
        %v5308 = vunpack.c.h.b16 %v1165
        %v5309 = vunpack.c.l.b16 %v1166
        %v5310 = vunpack.c.h.b16 %v1166
        %v5311 = vunpack.c.l.b16 %v1167
        %v5312 = vunpack.c.h.b16 %v1167
        %v5313 = vunpack.c.l.b16 %v1168
        %v5314 = vunpack.c.h.b16 %v1168
        %v5315 = vunpack.c.l.b16 %v1169
        %v5316 = vunpack.c.h.b16 %v1169
        %v5317 = vunpack.c.l.b16 %v1170
        %v5318 = vunpack.c.h.b16 %v1170
        %v5319 = vunpack.c.l.b16 %v1171
        %v5320 = vunpack.c.h.b16 %v1171
        %v5321 = vunpack.c.l.b16 %v1172
        %v5322 = vunpack.c.h.b16 %v1172
        %v5323 = vunpack.c.l.b16 %v1173
        %v5324 = vunpack.c.h.b16 %v1173
        %v5325 = vunpack.c.l.b16 %v1174
        %v5326 = vunpack.c.h.b16 %v1174
        %v5327 = vunpack.c.l.b16 %v1175
        %v5328 = vunpack.c.h.b16 %v1175
        %v5329 = vunpack.c.l.b16 %v1176
        %v5330 = vunpack.c.h.b16 %v1176
        %v5331 = vunpack.c.l.b16 %v1177
        %v5332 = vunpack.c.h.b16 %v1177
        %v5333 = vunpack.c.l.b16 %v1178
        %v5334 = vunpack.c.h.b16 %v1178
        %v5335 = vunpack.c.l.b16 %v1179
        %v5336 = vunpack.c.h.b16 %v1179
        %v5337 = vunpack.c.l.b16 %v1180
        %v5338 = vunpack.c.h.b16 %v1180
        %v5339 = vunpack.c.l.b16 %v1181
        %v5340 = vunpack.c.h.b16 %v1181
        %v5341 = vunpack.c.l.b16 %v1182
        %v5342 = vunpack.c.h.b16 %v1182
        %v5343 = vunpack.c.l.b16 %v1183
        %v5344 = vunpack.c.h.b16 %v1183
        %v5345 = vunpack.c.l.b16 %v1184
        %v5346 = vunpack.c.h.b16 %v1184
        %v5347 = vunpack.c.l.b16 %v1185
        %v5348 = vunpack.c.h.b16 %v1185
        %v5349 = vunpack.c.l.b16 %v1186
        %v5350 = vunpack.c.h.b16 %v1186
        %v5351 = vunpack.c.l.b16 %v1187
        %v5352 = vunpack.c.h.b16 %v1187
        %v5353 = vunpack.c.l.b16 %v1188
        %v5354 = vunpack.c.h.b16 %v1188
        %v5355 = vunpack.c.l.b16 %v1189
        %v5356 = vunpack.c.h.b16 %v1189
        %v5357 = vunpack.c.l.b16 %v1190
        %v5358 = vunpack.c.h.b16 %v1190
        %v5359 = vunpack.c.l.b16 %v1191
        %v5360 = vunpack.c.h.b16 %v1191
        %v5361 = vunpack.c.l.b16 %v1192
        %v5362 = vunpack.c.h.b16 %v1192
        %v5363 = vunpack.c.l.b16 %v1193
        %v5364 = vunpack.c.h.b16 %v1193
        %v5365 = vunpack.c.l.b16 %v1194
        %v5366 = vunpack.c.h.b16 %v1194
        %v5367 = vunpack.c.l.b16 %v1195
        %v5368 = vunpack.c.h.b16 %v1195
        %v5369 = vunpack.c.l.b16 %v1196
        %v5370 = vunpack.c.h.b16 %v1196
        %v5371 = vunpack.c.l.b16 %v1197
        %v5372 = vunpack.c.h.b16 %v1197
        %v5373 = vunpack.c.l.b16 %v1198
        %v5374 = vunpack.c.h.b16 %v1198
        %v5375 = vunpack.c.l.b16 %v1199
        %v5376 = vunpack.c.h.b16 %v1199
        %v5377 = vunpack.c.l.b16 %v1200
        %v5378 = vunpack.c.h.b16 %v1200
        %v5379 = vunpack.c.l.b16 %v1201
        %v5380 = vunpack.c.h.b16 %v1201
        %v5381 = vunpack.c.l.b16 %v1202
        %v5382 = vunpack.c.h.b16 %v1202
        %v5383 = vunpack.c.l.b16 %v1203
        %v5384 = vunpack.c.h.b16 %v1203
        %v5385 = vunpack.c.l.b16 %v1204
        %v5386 = vunpack.c.h.b16 %v1204
        %v5387 = vunpack.c.l.b16 %v1205
        %v5388 = vunpack.c.h.b16 %v1205
        %v5389 = vunpack.c.l.b16 %v1206
        %v5390 = vunpack.c.h.b16 %v1206
        %v5391 = vunpack.c.l.b16 %v1207
        %v5392 = vunpack.c.h.b16 %v1207
        %v5393 = vunpack.c.l.b16 %v1208
        %v5394 = vunpack.c.h.b16 %v1208
        %v5395 = vunpack.c.l.b16 %v1209
        %v5396 = vunpack.c.h.b16 %v1209
        %v5397 = vunpack.c.l.b16 %v1210
        %v5398 = vunpack.c.h.b16 %v1210
        %v5399 = vunpack.c.l.b16 %v1211
        %v5400 = vunpack.c.h.b16 %v1211
        %v5401 = vunpack.c.l.b16 %v1212
        %v5402 = vunpack.c.h.b16 %v1212
        %v5403 = vunpack.c.l.b16 %v1213
        %v5404 = vunpack.c.h.b16 %v1213
        %v5405 = vunpack.c.l.b16 %v1214
        %v5406 = vunpack.c.h.b16 %v1214
        %v5407 = vunpack.c.l.b16 %v1215
        %v5408 = vunpack.c.h.b16 %v1215
        %v5409 = vunpack.c.l.b16 %v1216
        %v5410 = vunpack.c.h.b16 %v1216
        %v5411 = vunpack.c.l.b16 %v1217
        %v5412 = vunpack.c.h.b16 %v1217
        %v5413 = vunpack.c.l.b16 %v1218
        %v5414 = vunpack.c.h.b16 %v1218
        %v5415 = vunpack.c.l.b16 %v1219
        %v5416 = vunpack.c.h.b16 %v1219
        %v5417 = vunpack.c.l.b16 %v1220
        %v5418 = vunpack.c.h.b16 %v1220
        %v5419 = vunpack.c.l.b16 %v1221
        %v5420 = vunpack.c.h.b16 %v1221
        %v5421 = vunpack.c.l.b16 %v1222
        %v5422 = vunpack.c.h.b16 %v1222
        %v5423 = vunpack.c.l.b16 %v1223
        %v5424 = vunpack.c.h.b16 %v1223
        %v5425 = vunpack.c.l.b16 %v1224
        %v5426 = vunpack.c.h.b16 %v1224
        %v5427 = vunpack.c.l.b16 %v1225
        %v5428 = vunpack.c.h.b16 %v1225
        %v5429 = vunpack.c.l.b16 %v1226
        %v5430 = vunpack.c.h.b16 %v1226
        %v5431 = vunpack.c.l.b16 %v1227
        %v5432 = vunpack.c.h.b16 %v1227
        %v5433 = vunpack.c.l.b16 %v1228
        %v5434 = vunpack.c.h.b16 %v1228
        %v5435 = vunpack.c.l.b16 %v1229
        %v5436 = vunpack.c.h.b16 %v1229
        %v5437 = vunpack.c.l.b16 %v1230
        %v5438 = vunpack.c.h.b16 %v1230
        %v5439 = vunpack.c.l.b16 %v1231
        %v5440 = vunpack.c.h.b16 %v1231
        %v5441 = vunpack.c.l.b16 %v1232
        %v5442 = vunpack.c.h.b16 %v1232
        %v5443 = vunpack.c.l.b16 %v1233
        %v5444 = vunpack.c.h.b16 %v1233
        %v5445 = vunpack.c.l.b16 %v1234
        %v5446 = vunpack.c.h.b16 %v1234
        %v5447 = vunpack.c.l.b16 %v1235
        %v5448 = vunpack.c.h.b16 %v1235
        %v5449 = vunpack.c.l.b16 %v1236
        %v5450 = vunpack.c.h.b16 %v1236
        %v5451 = vunpack.c.l.b16 %v1237
        %v5452 = vunpack.c.h.b16 %v1237
        %v5453 = vunpack.c.l.b16 %v1238
        %v5454 = vunpack.c.h.b16 %v1238
        %v5455 = vunpack.c.l.b16 %v1239
        %v5456 = vunpack.c.h.b16 %v1239
        %v5457 = vunpack.c.l.b16 %v1240
        %v5458 = vunpack.c.h.b16 %v1240
        %v5459 = vunpack.c.l.b16 %v1241
        %v5460 = vunpack.c.h.b16 %v1241
        %v5461 = vunpack.c.l.b16 %v1242
        %v5462 = vunpack.c.h.b16 %v1242
        %v5463 = vunpack.c.l.b16 %v1243
        %v5464 = vunpack.c.h.b16 %v1243
        %v5465 = vunpack.c.l.b16 %v1244
        %v5466 = vunpack.c.h.b16 %v1244
        %v5467 = vunpack.c.l.b16 %v1245
        %v5468 = vunpack.c.h.b16 %v1245
        %v5469 = vunpack.c.l.b16 %v1246
        %v5470 = vunpack.c.h.b16 %v1246
        %v5471 = vunpack.c.l.b16 %v1247
        %v5472 = vunpack.c.h.b16 %v1247
        %v5473 = vunpack.c.l.b16 %v1248
        %v5474 = vunpack.c.h.b16 %v1248
        %v5475 = vunpack.c.l.b16 %v1249
        %v5476 = vunpack.c.h.b16 %v1249
        %v5477 = vunpack.c.l.b16 %v1250
        %v5478 = vunpack.c.h.b16 %v1250
        %v5479 = vunpack.c.l.b16 %v1251
        %v5480 = vunpack.c.h.b16 %v1251
        %v5481 = vunpack.c.l.b16 %v1252
        %v5482 = vunpack.c.h.b16 %v1252
        %v5483 = vunpack.c.l.b16 %v1253
        %v5484 = vunpack.c.h.b16 %v1253
        %v5485 = vunpack.c.l.b16 %v1254
        %v5486 = vunpack.c.h.b16 %v1254
        %v5487 = vunpack.c.l.b16 %v1255
        %v5488 = vunpack.c.h.b16 %v1255
        %v5489 = vunpack.c.l.b16 %v1256
        %v5490 = vunpack.c.h.b16 %v1256
        %v5491 = vunpack.c.l.b16 %v1257
        %v5492 = vunpack.c.h.b16 %v1257
        %v5493 = vunpack.c.l.b16 %v1258
        %v5494 = vunpack.c.h.b16 %v1258
        %v5495 = vunpack.c.l.b16 %v1259
        %v5496 = vunpack.c.h.b16 %v1259
        %v5497 = vunpack.c.l.b16 %v1260
        %v5498 = vunpack.c.h.b16 %v1260
        %v5499 = vunpack.c.l.b16 %v1261
        %v5500 = vunpack.c.h.b16 %v1261
        %v5501 = vunpack.c.l.b16 %v1262
        %v5502 = vunpack.c.h.b16 %v1262
        %v5503 = vunpack.c.l.b16 %v1263
        %v5504 = vunpack.c.h.b16 %v1263
        %v5505 = vunpack.c.l.b16 %v1264
        %v5506 = vunpack.c.h.b16 %v1264
        %v5507 = vunpack.c.l.b16 %v1265
        %v5508 = vunpack.c.h.b16 %v1265
        %v5509 = vunpack.c.l.b16 %v1266
        %v5510 = vunpack.c.h.b16 %v1266
        %v5511 = vunpack.c.l.b16 %v1267
        %v5512 = vunpack.c.h.b16 %v1267
        %v5513 = vunpack.c.l.b16 %v1268
        %v5514 = vunpack.c.h.b16 %v1268
        %v5515 = vunpack.c.l.b16 %v1269
        %v5516 = vunpack.c.h.b16 %v1269
        %v5517 = vunpack.c.l.b16 %v1270
        %v5518 = vunpack.c.h.b16 %v1270
        %v5519 = vunpack.c.l.b16 %v1271
        %v5520 = vunpack.c.h.b16 %v1271
        %v5521 = vunpack.c.l.b16 %v1272
        %v5522 = vunpack.c.h.b16 %v1272
        %v5523 = vunpack.c.l.b16 %v1273
        %v5524 = vunpack.c.h.b16 %v1273
        %v5525 = vunpack.c.l.b16 %v1274
        %v5526 = vunpack.c.h.b16 %v1274
        %v5527 = vunpack.c.l.b16 %v1275
        %v5528 = vunpack.c.h.b16 %v1275
        %v5529 = vunpack.c.l.b16 %v1276
        %v5530 = vunpack.c.h.b16 %v1276
        %v5531 = vunpack.c.l.b16 %v1277
        %v5532 = vunpack.c.h.b16 %v1277
        %v5533 = vunpack.c.l.b16 %v1278
        %v5534 = vunpack.c.h.b16 %v1278
        %v5535 = vunpack.c.l.b16 %v1279
        %v5536 = vunpack.c.h.b16 %v1279
        %v5537 = vunpack.c.l.b16 %v1280
        %v5538 = vunpack.c.h.b16 %v1280
        %v5539 = vunpack.c.l.b16 %v1281
        %v5540 = vunpack.c.h.b16 %v1281
        %v5541 = vunpack.c.l.b16 %v1282
        %v5542 = vunpack.c.h.b16 %v1282
        %v5543 = vunpack.c.l.b16 %v1283
        %v5544 = vunpack.c.h.b16 %v1283
        %v5545 = vunpack.c.l.b16 %v1284
        %v5546 = vunpack.c.h.b16 %v1284
        %v5547 = vunpack.c.l.b16 %v1285
        %v5548 = vunpack.c.h.b16 %v1285
        %v5549 = vunpack.c.l.b16 %v1286
        %v5550 = vunpack.c.h.b16 %v1286
        %v5551 = vunpack.c.l.b16 %v1287
        %v5552 = vunpack.c.h.b16 %v1287
        %v5553 = vunpack.c.l.b16 %v1288
        %v5554 = vunpack.c.h.b16 %v1288
        %v5555 = vunpack.c.l.b16 %v1289
        %v5556 = vunpack.c.h.b16 %v1289
        %v5557 = vunpack.c.l.b16 %v1290
        %v5558 = vunpack.c.h.b16 %v1290
        %v5559 = vunpack.c.l.b16 %v1291
        %v5560 = vunpack.c.h.b16 %v1291
        %v5561 = vunpack.c.l.b16 %v1292
        %v5562 = vunpack.c.h.b16 %v1292
        %v5563 = vunpack.c.l.b16 %v1293
        %v5564 = vunpack.c.h.b16 %v1293
        %v5565 = vunpack.c.l.b16 %v1294
        %v5566 = vunpack.c.h.b16 %v1294
        %v5567 = vunpack.c.l.b16 %v1295
        %v5568 = vunpack.c.h.b16 %v1295
        %v5569 = vunpack.c.l.b16 %v1296
        %v5570 = vunpack.c.h.b16 %v1296
        %v5571 = vunpack.c.l.b16 %v1297
        %v5572 = vunpack.c.h.b16 %v1297
        %v5573 = vunpack.c.l.b16 %v1298
        %v5574 = vunpack.c.h.b16 %v1298
        %v5575 = vunpack.c.l.b16 %v1299
        %v5576 = vunpack.c.h.b16 %v1299
        %v5577 = vunpack.c.l.b16 %v1300
        %v5578 = vunpack.c.h.b16 %v1300
        %v5579 = vunpack.c.l.b16 %v1301
        %v5580 = vunpack.c.h.b16 %v1301
        %v5581 = vunpack.c.l.b16 %v1302
        %v5582 = vunpack.c.h.b16 %v1302
        %v5583 = vunpack.c.l.b16 %v1303
        %v5584 = vunpack.c.h.b16 %v1303
        %v5585 = vunpack.c.l.b16 %v1304
        %v5586 = vunpack.c.h.b16 %v1304
        %v5587 = vunpack.c.l.b16 %v1305
        %v5588 = vunpack.c.h.b16 %v1305
        %v5589 = vunpack.c.l.b16 %v1306
        %v5590 = vunpack.c.h.b16 %v1306
        %v5591 = vunpack.c.l.b16 %v1307
        %v5592 = vunpack.c.h.b16 %v1307
        %v5593 = vunpack.c.l.b16 %v1308
        %v5594 = vunpack.c.h.b16 %v1308
        %v5595 = vunpack.c.l.b16 %v1309
        %v5596 = vunpack.c.h.b16 %v1309
        %v5597 = vunpack.c.l.b16 %v1310
        %v5598 = vunpack.c.h.b16 %v1310
        %v5599 = vunpack.c.l.b16 %v1311
        %v5600 = vunpack.c.h.b16 %v1311
        %v5601 = vunpack.c.l.b16 %v1312
        %v5602 = vunpack.c.h.b16 %v1312
        %v5603 = vunpack.c.l.b16 %v1313
        %v5604 = vunpack.c.h.b16 %v1313
        %v5605 = vunpack.c.l.b16 %v1314
        %v5606 = vunpack.c.h.b16 %v1314
        %v5607 = vunpack.c.l.b16 %v1315
        %v5608 = vunpack.c.h.b16 %v1315
        %v5609 = vunpack.c.l.b16 %v1316
        %v5610 = vunpack.c.h.b16 %v1316
        %v5611 = vunpack.c.l.b16 %v1317
        %v5612 = vunpack.c.h.b16 %v1317
        %v5613 = vunpack.c.l.b16 %v1318
        %v5614 = vunpack.c.h.b16 %v1318
        %v5615 = vunpack.c.l.b16 %v1319
        %v5616 = vunpack.c.h.b16 %v1319
        %v5617 = vunpack.c.l.b16 %v1320
        %v5618 = vunpack.c.h.b16 %v1320
        %v5619 = vunpack.c.l.b16 %v1321
        %v5620 = vunpack.c.h.b16 %v1321
        %v5621 = vunpack.c.l.b16 %v1322
        %v5622 = vunpack.c.h.b16 %v1322
        %v5623 = vunpack.c.l.b16 %v1323
        %v5624 = vunpack.c.h.b16 %v1323
        %v5625 = vunpack.c.l.b16 %v1324
        %v5626 = vunpack.c.h.b16 %v1324
        %v5627 = vunpack.c.l.b16 %v1325
        %v5628 = vunpack.c.h.b16 %v1325
        %v5629 = vunpack.c.l.b16 %v1326
        %v5630 = vunpack.c.h.b16 %v1326
        %v5631 = vunpack.c.l.b16 %v1327
        %v5632 = vunpack.c.h.b16 %v1327
        %v5633 = vunpack.c.l.b16 %v1328
        %v5634 = vunpack.c.h.b16 %v1328
        %v5635 = vunpack.c.l.b16 %v1329
        %v5636 = vunpack.c.h.b16 %v1329
        %v5637 = vunpack.c.l.b16 %v1330
        %v5638 = vunpack.c.h.b16 %v1330
        %v5639 = vunpack.c.l.b16 %v1331
        %v5640 = vunpack.c.h.b16 %v1331
        %v5641 = vunpack.c.l.b16 %v1332
        %v5642 = vunpack.c.h.b16 %v1332
        %v5643 = vunpack.c.l.b16 %v1333
        %v5644 = vunpack.c.h.b16 %v1333
        %v5645 = vunpack.c.l.b16 %v1334
        %v5646 = vunpack.c.h.b16 %v1334
        %v5647 = vunpack.c.l.b16 %v1335
        %v5648 = vunpack.c.h.b16 %v1335
        %v5649 = vunpack.c.l.b16 %v1336
        %v5650 = vunpack.c.h.b16 %v1336
        %v5651 = vunpack.c.l.b16 %v1337
        %v5652 = vunpack.c.h.b16 %v1337
        %v5653 = vunpack.c.l.b16 %v1338
        %v5654 = vunpack.c.h.b16 %v1338
        %v5655 = vunpack.c.l.b16 %v1339
        %v5656 = vunpack.c.h.b16 %v1339
        %v5657 = vunpack.c.l.b16 %v1340
        %v5658 = vunpack.c.h.b16 %v1340
        %v5659 = vunpack.c.l.b16 %v1341
        %v5660 = vunpack.c.h.b16 %v1341
        %v5661 = vunpack.c.l.b16 %v1342
        %v5662 = vunpack.c.h.b16 %v1342
        %v5663 = vunpack.c.l.b16 %v1343
        %v5664 = vunpack.c.h.b16 %v1343
        %v5665 = vunpack.c.l.b16 %v1344
        %v5666 = vunpack.c.h.b16 %v1344
        %v5667 = vunpack.c.l.b16 %v1345
        %v5668 = vunpack.c.h.b16 %v1345
        %v5669 = vunpack.c.l.b16 %v1346
        %v5670 = vunpack.c.h.b16 %v1346
        %v5671 = vunpack.c.l.b16 %v1347
        %v5672 = vunpack.c.h.b16 %v1347
        %v5673 = vunpack.c.l.b16 %v1348
        %v5674 = vunpack.c.h.b16 %v1348
        %v5675 = vunpack.c.l.b16 %v1349
        %v5676 = vunpack.c.h.b16 %v1349
        %v5677 = vunpack.c.l.b16 %v1350
        %v5678 = vunpack.c.h.b16 %v1350
        %v5679 = vunpack.c.l.b16 %v1351
        %v5680 = vunpack.c.h.b16 %v1351
        %v5681 = vunpack.c.l.b16 %v1352
        %v5682 = vunpack.c.h.b16 %v1352
        %v5683 = vunpack.c.l.b16 %v1353
        %v5684 = vunpack.c.h.b16 %v1353
        %v5685 = vunpack.c.l.b16 %v1354
        %v5686 = vunpack.c.h.b16 %v1354
        %v5687 = vunpack.c.l.b16 %v1355
        %v5688 = vunpack.c.h.b16 %v1355
        %v5689 = vunpack.c.l.b16 %v1356
        %v5690 = vunpack.c.h.b16 %v1356
        %v5691 = vunpack.c.l.b16 %v1357
        %v5692 = vunpack.c.h.b16 %v1357
        %v5693 = vunpack.c.l.b16 %v1358
        %v5694 = vunpack.c.h.b16 %v1358
        %v5695 = vunpack.c.l.b16 %v1359
        %v5696 = vunpack.c.h.b16 %v1359
        %v5697 = vunpack.c.l.b16 %v1360
        %v5698 = vunpack.c.h.b16 %v1360
        %v5699 = vunpack.c.l.b16 %v1361
        %v5700 = vunpack.c.h.b16 %v1361
        %v5701 = vunpack.c.l.b16 %v1362
        %v5702 = vunpack.c.h.b16 %v1362
        %v5703 = vunpack.c.l.b16 %v1363
        %v5704 = vunpack.c.h.b16 %v1363
        %v5705 = vunpack.c.l.b16 %v1364
        %v5706 = vunpack.c.h.b16 %v1364
        %v5707 = vunpack.c.l.b16 %v1365
        %v5708 = vunpack.c.h.b16 %v1365
        %v5709 = vunpack.c.l.b16 %v1366
        %v5710 = vunpack.c.h.b16 %v1366
        %v5711 = vunpack.c.l.b16 %v1367
        %v5712 = vunpack.c.h.b16 %v1367
        %v5713 = vunpack.c.l.b16 %v1368
        %v5714 = vunpack.c.h.b16 %v1368
        %v5715 = vunpack.c.l.b16 %v1369
        %v5716 = vunpack.c.h.b16 %v1369
        %v5717 = vunpack.c.l.b16 %v1370
        %v5718 = vunpack.c.h.b16 %v1370
        %v5719 = vunpack.c.l.b16 %v1371
        %v5720 = vunpack.c.h.b16 %v1371
        %v5721 = vunpack.c.l.b16 %v1372
        %v5722 = vunpack.c.h.b16 %v1372
        %v5723 = vunpack.c.l.b16 %v1373
        %v5724 = vunpack.c.h.b16 %v1373
        %v5725 = vunpack.c.l.b16 %v1374
        %v5726 = vunpack.c.h.b16 %v1374
        %v5727 = vunpack.c.l.b16 %v1375
        %v5728 = vunpack.c.h.b16 %v1375
        %v5729 = vunpack.c.l.b16 %v1376
        %v5730 = vunpack.c.h.b16 %v1376
        %v5731 = vunpack.c.l.b16 %v1377
        %v5732 = vunpack.c.h.b16 %v1377
        %v5733 = vunpack.c.l.b16 %v1378
        %v5734 = vunpack.c.h.b16 %v1378
        %v5735 = vunpack.c.l.b16 %v1379
        %v5736 = vunpack.c.h.b16 %v1379
        %v5737 = vunpack.c.l.b16 %v1380
        %v5738 = vunpack.c.h.b16 %v1380
        %v5739 = vunpack.c.l.b16 %v1381
        %v5740 = vunpack.c.h.b16 %v1381
        %v5741 = vunpack.c.l.b16 %v1382
        %v5742 = vunpack.c.h.b16 %v1382
        %v5743 = vunpack.c.l.b16 %v1383
        %v5744 = vunpack.c.h.b16 %v1383
        %v5745 = vunpack.c.l.b16 %v1384
        %v5746 = vunpack.c.h.b16 %v1384
        %v5747 = vunpack.c.l.b16 %v1385
        %v5748 = vunpack.c.h.b16 %v1385
        %v5749 = vunpack.c.l.b16 %v1386
        %v5750 = vunpack.c.h.b16 %v1386
        %v5751 = vunpack.c.l.b16 %v1387
        %v5752 = vunpack.c.h.b16 %v1387
        %v5753 = vunpack.c.l.b16 %v1388
        %v5754 = vunpack.c.h.b16 %v1388
        %v5755 = vunpack.c.l.b16 %v1389
        %v5756 = vunpack.c.h.b16 %v1389
        %v5757 = vunpack.c.l.b16 %v1390
        %v5758 = vunpack.c.h.b16 %v1390
        %v5759 = vunpack.c.l.b16 %v1391
        %v5760 = vunpack.c.h.b16 %v1391
        %v5761 = vunpack.c.l.b16 %v1392
        %v5762 = vunpack.c.h.b16 %v1392
        %v5763 = vunpack.c.l.b16 %v1393
        %v5764 = vunpack.c.h.b16 %v1393
        %v5765 = vunpack.c.l.b16 %v1394
        %v5766 = vunpack.c.h.b16 %v1394
        %v5767 = vunpack.c.l.b16 %v1395
        %v5768 = vunpack.c.h.b16 %v1395
        %v5769 = vunpack.c.l.b16 %v1396
        %v5770 = vunpack.c.h.b16 %v1396
        %v5771 = vunpack.c.l.b16 %v1397
        %v5772 = vunpack.c.h.b16 %v1397
        %v5773 = vunpack.c.l.b16 %v1398
        %v5774 = vunpack.c.h.b16 %v1398
        %v5775 = vunpack.c.l.b16 %v1399
        %v5776 = vunpack.c.h.b16 %v1399
        %v5777 = vunpack.c.l.b16 %v1400
        %v5778 = vunpack.c.h.b16 %v1400
        %v5779 = vunpack.c.l.b16 %v1401
        %v5780 = vunpack.c.h.b16 %v1401
        %v5781 = vunpack.c.l.b16 %v1402
        %v5782 = vunpack.c.h.b16 %v1402
        %v5783 = vunpack.c.l.b16 %v1403
        %v5784 = vunpack.c.h.b16 %v1403
        %v5785 = vunpack.c.l.b16 %v1404
        %v5786 = vunpack.c.h.b16 %v1404
        %v5787 = vunpack.c.l.b16 %v1405
        %v5788 = vunpack.c.h.b16 %v1405
        %v5789 = vunpack.c.l.b16 %v1406
        %v5790 = vunpack.c.h.b16 %v1406
        %v5791 = vunpack.c.l.b16 %v1407
        %v5792 = vunpack.c.h.b16 %v1407
        %v5793 = vunpack.c.l.b16 %v1408
        %v5794 = vunpack.c.h.b16 %v1408
        %v5795 = vunpack.c.l.b16 %v1409
        %v5796 = vunpack.c.h.b16 %v1409
        %v5797 = vunpack.c.l.b16 %v1410
        %v5798 = vunpack.c.h.b16 %v1410
        %v5799 = vunpack.c.l.b16 %v1411
        %v5800 = vunpack.c.h.b16 %v1411
        %v5801 = vunpack.c.l.b16 %v1412
        %v5802 = vunpack.c.h.b16 %v1412
        %v5803 = vunpack.c.l.b16 %v1413
        %v5804 = vunpack.c.h.b16 %v1413
        %v5805 = vunpack.c.l.b16 %v1414
        %v5806 = vunpack.c.h.b16 %v1414
        %v5807 = vunpack.c.l.b16 %v1415
        %v5808 = vunpack.c.h.b16 %v1415
        %v5809 = vunpack.c.l.b16 %v1416
        %v5810 = vunpack.c.h.b16 %v1416
        %v5811 = vunpack.c.l.b16 %v1417
        %v5812 = vunpack.c.h.b16 %v1417
        %v5813 = vunpack.c.l.b16 %v1418
        %v5814 = vunpack.c.h.b16 %v1418
        %v5815 = vunpack.c.l.b16 %v1419
        %v5816 = vunpack.c.h.b16 %v1419
        %v5817 = vunpack.c.l.b16 %v1420
        %v5818 = vunpack.c.h.b16 %v1420
        %v5819 = vunpack.c.l.b16 %v1421
        %v5820 = vunpack.c.h.b16 %v1421
        %v5821 = vunpack.c.l.b16 %v1422
        %v5822 = vunpack.c.h.b16 %v1422
        %v5823 = vunpack.c.l.b16 %v1423
        %v5824 = vunpack.c.h.b16 %v1423
        %v5825 = vunpack.c.l.b16 %v1424
        %v5826 = vunpack.c.h.b16 %v1424
        %v5827 = vunpack.c.l.b16 %v1425
        %v5828 = vunpack.c.h.b16 %v1425
        %v5829 = vunpack.c.l.b16 %v1426
        %v5830 = vunpack.c.h.b16 %v1426
        %v5831 = vunpack.c.l.b16 %v1427
        %v5832 = vunpack.c.h.b16 %v1427
        %v5833 = vunpack.c.l.b16 %v1428
        %v5834 = vunpack.c.h.b16 %v1428
        %v5835 = vunpack.c.l.b16 %v1429
        %v5836 = vunpack.c.h.b16 %v1429
        %v5837 = vunpack.c.l.b16 %v1430
        %v5838 = vunpack.c.h.b16 %v1430
        %v5839 = vunpack.c.l.b16 %v1431
        %v5840 = vunpack.c.h.b16 %v1431
        %v5841 = vunpack.c.l.b16 %v1432
        %v5842 = vunpack.c.h.b16 %v1432
        %v5843 = vunpack.c.l.b16 %v1433
        %v5844 = vunpack.c.h.b16 %v1433
        %v5845 = vunpack.c.l.b16 %v1434
        %v5846 = vunpack.c.h.b16 %v1434
        %v5847 = vunpack.c.l.b16 %v1435
        %v5848 = vunpack.c.h.b16 %v1435
        %v5849 = vunpack.c.l.b16 %v1436
        %v5850 = vunpack.c.h.b16 %v1436
        %v5851 = vunpack.c.l.b16 %v1437
        %v5852 = vunpack.c.h.b16 %v1437
        %v5853 = vunpack.c.l.b16 %v1438
        %v5854 = vunpack.c.h.b16 %v1438
        %v5855 = vunpack.c.l.b16 %v1439
        %v5856 = vunpack.c.h.b16 %v1439
        %v5857 = vunpack.c.l.b16 %v1440
        %v5858 = vunpack.c.h.b16 %v1440
        %v5859 = vunpack.c.l.b16 %v1441
        %v5860 = vunpack.c.h.b16 %v1441
        %v5861 = vunpack.c.l.b16 %v1442
        %v5862 = vunpack.c.h.b16 %v1442
        %v5863 = vunpack.c.l.b16 %v1443
        %v5864 = vunpack.c.h.b16 %v1443
        %v5865 = vunpack.c.l.b16 %v1444
        %v5866 = vunpack.c.h.b16 %v1444
        %v5867 = vunpack.c.l.b16 %v1445
        %v5868 = vunpack.c.h.b16 %v1445
        %v5869 = vunpack.c.l.b16 %v1446
        %v5870 = vunpack.c.h.b16 %v1446
        %v5871 = vunpack.c.l.b16 %v1447
        %v5872 = vunpack.c.h.b16 %v1447
        %v5873 = vunpack.c.l.b16 %v1448
        %v5874 = vunpack.c.h.b16 %v1448
        %v5875 = vunpack.c.l.b16 %v1449
        %v5876 = vunpack.c.h.b16 %v1449
        %v5877 = vunpack.c.l.b16 %v1450
        %v5878 = vunpack.c.h.b16 %v1450
        %v5879 = vunpack.c.l.b16 %v1451
        %v5880 = vunpack.c.h.b16 %v1451
        %v5881 = vunpack.c.l.b16 %v1452
        %v5882 = vunpack.c.h.b16 %v1452
        %v5883 = vunpack.c.l.b16 %v1453
        %v5884 = vunpack.c.h.b16 %v1453
        %v5885 = vunpack.c.l.b16 %v1454
        %v5886 = vunpack.c.h.b16 %v1454
        %v5887 = vunpack.c.l.b16 %v1455
        %v5888 = vunpack.c.h.b16 %v1455
        %v5889 = vunpack.c.l.b16 %v1456
        %v5890 = vunpack.c.h.b16 %v1456
        %v5891 = vunpack.c.l.b16 %v1457
        %v5892 = vunpack.c.h.b16 %v1457
        %v5893 = vunpack.c.l.b16 %v1458
        %v5894 = vunpack.c.h.b16 %v1458
        %v5895 = vunpack.c.l.b16 %v1459
        %v5896 = vunpack.c.h.b16 %v1459
        %v5897 = vunpack.c.l.b16 %v1460
        %v5898 = vunpack.c.h.b16 %v1460
        %v5899 = vunpack.c.l.b16 %v1461
        %v5900 = vunpack.c.h.b16 %v1461
        %v5901 = vunpack.c.l.b16 %v1462
        %v5902 = vunpack.c.h.b16 %v1462
        %v5903 = vunpack.c.l.b16 %v1463
        %v5904 = vunpack.c.h.b16 %v1463
        %v5905 = vunpack.c.l.b16 %v1464
        %v5906 = vunpack.c.h.b16 %v1464
        %v5907 = vunpack.c.l.b16 %v1465
        %v5908 = vunpack.c.h.b16 %v1465
        %v5909 = vunpack.c.l.b16 %v1466
        %v5910 = vunpack.c.h.b16 %v1466
        %v5911 = vunpack.c.l.b16 %v1467
        %v5912 = vunpack.c.h.b16 %v1467
        %v5913 = vunpack.c.l.b16 %v1468
        %v5914 = vunpack.c.h.b16 %v1468
        %v5915 = vunpack.c.l.b16 %v1469
        %v5916 = vunpack.c.h.b16 %v1469
        %v5917 = vunpack.c.l.b16 %v1470
        %v5918 = vunpack.c.h.b16 %v1470
        %v5919 = vunpack.c.l.b16 %v1471
        %v5920 = vunpack.c.h.b16 %v1471
        %v5921 = vunpack.c.l.b16 %v1472
        %v5922 = vunpack.c.h.b16 %v1472
        %v5923 = vunpack.c.l.b16 %v1473
        %v5924 = vunpack.c.h.b16 %v1473
        %v5925 = vunpack.c.l.b16 %v1474
        %v5926 = vunpack.c.h.b16 %v1474
        %v5927 = vunpack.c.l.b16 %v1475
        %v5928 = vunpack.c.h.b16 %v1475
        %v5929 = vunpack.c.l.b16 %v1476
        %v5930 = vunpack.c.h.b16 %v1476
        %v5931 = vunpack.c.l.b16 %v1477
        %v5932 = vunpack.c.h.b16 %v1477
        %v5933 = vunpack.c.l.b16 %v1478
        %v5934 = vunpack.c.h.b16 %v1478
        %v5935 = vunpack.c.l.b16 %v1479
        %v5936 = vunpack.c.h.b16 %v1479
        %v5937 = vunpack.c.l.b16 %v1480
        %v5938 = vunpack.c.h.b16 %v1480
        %v5939 = vunpack.c.l.b16 %v1481
        %v5940 = vunpack.c.h.b16 %v1481
        %v5941 = vunpack.c.l.b16 %v1482
        %v5942 = vunpack.c.h.b16 %v1482
        %v5943 = vunpack.c.l.b16 %v1483
        %v5944 = vunpack.c.h.b16 %v1483
        %v5945 = vunpack.c.l.b16 %v1484
        %v5946 = vunpack.c.h.b16 %v1484
        %v5947 = vunpack.c.l.b16 %v1485
        %v5948 = vunpack.c.h.b16 %v1485
        %v5949 = vunpack.c.l.b16 %v1486
        %v5950 = vunpack.c.h.b16 %v1486
        %v5951 = vunpack.c.l.b16 %v1487
        %v5952 = vunpack.c.h.b16 %v1487
        %v5953 = vunpack.c.l.b16 %v1488
        %v5954 = vunpack.c.h.b16 %v1488
        %v5955 = vunpack.c.l.b16 %v1489
        %v5956 = vunpack.c.h.b16 %v1489
        %v5957 = vunpack.c.l.b16 %v1490
        %v5958 = vunpack.c.h.b16 %v1490
        %v5959 = vunpack.c.l.b16 %v1491
        %v5960 = vunpack.c.h.b16 %v1491
        %v5961 = vunpack.c.l.b16 %v1492
        %v5962 = vunpack.c.h.b16 %v1492
        %v5963 = vunpack.c.l.b16 %v1493
        %v5964 = vunpack.c.h.b16 %v1493
        %v5965 = vunpack.c.l.b16 %v1494
        %v5966 = vunpack.c.h.b16 %v1494
        %v5967 = vunpack.c.l.b16 %v1495
        %v5968 = vunpack.c.h.b16 %v1495
        %v5969 = vunpack.c.l.b16 %v1496
        %v5970 = vunpack.c.h.b16 %v1496
        %v5971 = vunpack.c.l.b16 %v1497
        %v5972 = vunpack.c.h.b16 %v1497
        %v5973 = vunpack.c.l.b16 %v1498
        %v5974 = vunpack.c.h.b16 %v1498
        %v5975 = vunpack.c.l.b16 %v1499
        %v5976 = vunpack.c.h.b16 %v1499
        %v5977 = vunpack.c.l.b16 %v1500
        %v5978 = vunpack.c.h.b16 %v1500
        %v5979 = vunpack.c.l.b16 %v1501
        %v5980 = vunpack.c.h.b16 %v1501
        %v5981 = vunpack.c.l.b16 %v1502
        %v5982 = vunpack.c.h.b16 %v1502
        %v5983 = vunpack.c.l.b16 %v1503
        %v5984 = vunpack.c.h.b16 %v1503
        %v5985 = vunpack.c.l.b16 %v1504
        %v5986 = vunpack.c.h.b16 %v1504
        %v5987 = vunpack.c.l.b16 %v1505
        %v5988 = vunpack.c.h.b16 %v1505
        %v5989 = vunpack.c.l.b16 %v1506
        %v5990 = vunpack.c.h.b16 %v1506
        %v5991 = vunpack.c.l.b16 %v1507
        %v5992 = vunpack.c.h.b16 %v1507
        %v5993 = vunpack.c.l.b16 %v1508
        %v5994 = vunpack.c.h.b16 %v1508
        %v5995 = vunpack.c.l.b16 %v1509
        %v5996 = vunpack.c.h.b16 %v1509
        %v5997 = vunpack.c.l.b16 %v1510
        %v5998 = vunpack.c.h.b16 %v1510
        %v5999 = vunpack.c.l.b16 %v1511
        %v6000 = vunpack.c.h.b16 %v1511
        %v6001 = vunpack.c.l.b16 %v1512
        %v6002 = vunpack.c.h.b16 %v1512
        %v6003 = vunpack.c.l.b16 %v1513
        %v6004 = vunpack.c.h.b16 %v1513
        %v6005 = vunpack.c.l.b16 %v1514
        %v6006 = vunpack.c.h.b16 %v1514
        %v6007 = vunpack.c.l.b16 %v1515
        %v6008 = vunpack.c.h.b16 %v1515
        %v6009 = vunpack.c.l.b16 %v1516
        %v6010 = vunpack.c.h.b16 %v1516
        %v6011 = vunpack.c.l.b16 %v1517
        %v6012 = vunpack.c.h.b16 %v1517
        %v6013 = vunpack.c.l.b16 %v1518
        %v6014 = vunpack.c.h.b16 %v1518
        %v6015 = vunpack.c.l.b16 %v1519
        %v6016 = vunpack.c.h.b16 %v1519
        %v6017 = vunpack.c.l.b16 %v1520
        %v6018 = vunpack.c.h.b16 %v1520
        %v6019 = vunpack.c.l.b16 %v1521
        %v6020 = vunpack.c.h.b16 %v1521
        %v6021 = vunpack.c.l.b16 %v1522
        %v6022 = vunpack.c.h.b16 %v1522
        %v6023 = vunpack.c.l.b16 %v1523
        %v6024 = vunpack.c.h.b16 %v1523
        %v6025 = vunpack.c.l.b16 %v1524
        %v6026 = vunpack.c.h.b16 %v1524
        %v6027 = vunpack.c.l.b16 %v1525
        %v6028 = vunpack.c.h.b16 %v1525
        %v6029 = vunpack.c.l.b16 %v1526
        %v6030 = vunpack.c.h.b16 %v1526
        %v6031 = vunpack.c.l.b16 %v1527
        %v6032 = vunpack.c.h.b16 %v1527
        %v6033 = vunpack.c.l.b16 %v1528
        %v6034 = vunpack.c.h.b16 %v1528
        %v6035 = vunpack.c.l.b16 %v1529
        %v6036 = vunpack.c.h.b16 %v1529
        %v6037 = vunpack.c.l.b16 %v1530
        %v6038 = vunpack.c.h.b16 %v1530
        %v6039 = vunpack.c.l.b16 %v1531
        %v6040 = vunpack.c.h.b16 %v1531
        %v6041 = vunpack.c.l.b16 %v1532
        %v6042 = vunpack.c.h.b16 %v1532
        %v6043 = vunpack.c.l.b16 %v1533
        %v6044 = vunpack.c.h.b16 %v1533
        %v6045 = vunpack.c.l.b16 %v1534
        %v6046 = vunpack.c.h.b16 %v1534
        %v6047 = vunpack.c.l.b16 %v1535
        %v6048 = vunpack.c.h.b16 %v1535
        %v6049 = vunpack.c.l.b16 %v1536
        %v6050 = vunpack.c.h.b16 %v1536
        %v6051 = vunpack.c.l.b16 %v1537
        %v6052 = vunpack.c.h.b16 %v1537
        %v6053 = vunpack.c.l.b16 %v1538
        %v6054 = vunpack.c.h.b16 %v1538
        %v6055 = vunpack.c.l.b16 %v1539
        %v6056 = vunpack.c.h.b16 %v1539
        %v6057 = vunpack.c.l.b16 %v1540
        %v6058 = vunpack.c.h.b16 %v1540
        %v6059 = vunpack.c.l.b16 %v1541
        %v6060 = vunpack.c.h.b16 %v1541
        %v6061 = vunpack.c.l.b16 %v1542
        %v6062 = vunpack.c.h.b16 %v1542
        %v6063 = vunpack.c.l.b16 %v1543
        %v6064 = vunpack.c.h.b16 %v1543
        %v6065 = vunpack.c.l.b16 %v1544
        %v6066 = vunpack.c.h.b16 %v1544
        %v6067 = vunpack.c.l.b16 %v1545
        %v6068 = vunpack.c.h.b16 %v1545
        %v6069 = vunpack.c.l.b16 %v1546
        %v6070 = vunpack.c.h.b16 %v1546
        %v6071 = vunpack.c.l.b16 %v1547
        %v6072 = vunpack.c.h.b16 %v1547
        %v6073 = vunpack.c.l.b16 %v1548
        %v6074 = vunpack.c.h.b16 %v1548
        %v6075 = vunpack.c.l.b16 %v1549
        %v6076 = vunpack.c.h.b16 %v1549
        %v6077 = vunpack.c.l.b16 %v1550
        %v6078 = vunpack.c.h.b16 %v1550
        %v6079 = vunpack.c.l.b16 %v1551
        %v6080 = vunpack.c.h.b16 %v1551
        %v6081 = vunpack.c.l.b16 %v1552
        %v6082 = vunpack.c.h.b16 %v1552
        %v6083 = vunpack.c.l.b16 %v1553
        %v6084 = vunpack.c.h.b16 %v1553
        %v6085 = vunpack.c.l.b16 %v1554
        %v6086 = vunpack.c.h.b16 %v1554
        %v6087 = vunpack.c.l.b16 %v1555
        %v6088 = vunpack.c.h.b16 %v1555
        %v6089 = vunpack.c.l.b16 %v1556
        %v6090 = vunpack.c.h.b16 %v1556
        %v6091 = vunpack.c.l.b16 %v1557
        %v6092 = vunpack.c.h.b16 %v1557
        %v6093 = vunpack.c.l.b16 %v1558
        %v6094 = vunpack.c.h.b16 %v1558
        %v6095 = vunpack.c.l.b16 %v1559
        %v6096 = vunpack.c.h.b16 %v1559
        %v6097 = vunpack.c.l.b16 %v1560
        %v6098 = vunpack.c.h.b16 %v1560
        %v6099 = vunpack.c.l.b16 %v1561
        %v6100 = vunpack.c.h.b16 %v1561
        %v6101 = vunpack.c.l.b16 %v1562
        %v6102 = vunpack.c.h.b16 %v1562
        %v6103 = vunpack.c.l.b16 %v1563
        %v6104 = vunpack.c.h.b16 %v1563
        %v6105 = vunpack.c.l.b16 %v1564
        %v6106 = vunpack.c.h.b16 %v1564
        %v6107 = vunpack.c.l.b16 %v1565
        %v6108 = vunpack.c.h.b16 %v1565
        %v6109 = vunpack.c.l.b16 %v1566
        %v6110 = vunpack.c.h.b16 %v1566
        %v6111 = vunpack.c.l.b16 %v1567
        %v6112 = vunpack.c.h.b16 %v1567
        %v6113 = vunpack.c.l.b16 %v1568
        %v6114 = vunpack.c.h.b16 %v1568
        %v6115 = vunpack.c.l.b16 %v1569
        %v6116 = vunpack.c.h.b16 %v1569
        %v6117 = vunpack.c.l.b16 %v1570
        %v6118 = vunpack.c.h.b16 %v1570
        %v6119 = vunpack.c.l.b16 %v1571
        %v6120 = vunpack.c.h.b16 %v1571
        %v6121 = vunpack.c.l.b16 %v1572
        %v6122 = vunpack.c.h.b16 %v1572
        %v6123 = vunpack.c.l.b16 %v1573
        %v6124 = vunpack.c.h.b16 %v1573
        %v6125 = vunpack.c.l.b16 %v1574
        %v6126 = vunpack.c.h.b16 %v1574
        %v6127 = vunpack.c.l.b16 %v1575
        %v6128 = vunpack.c.h.b16 %v1575
        %v6129 = vunpack.c.l.b16 %v1576
        %v6130 = vunpack.c.h.b16 %v1576
        %v6131 = vunpack.c.l.b16 %v1577
        %v6132 = vunpack.c.h.b16 %v1577
        %v6133 = vunpack.c.l.b16 %v1578
        %v6134 = vunpack.c.h.b16 %v1578
        %v6135 = vunpack.c.l.b16 %v1579
        %v6136 = vunpack.c.h.b16 %v1579
        %v6137 = vunpack.c.l.b16 %v1580
        %v6138 = vunpack.c.h.b16 %v1580
        %v6139 = vunpack.c.l.b16 %v1581
        %v6140 = vunpack.c.h.b16 %v1581
        %v6141 = vunpack.c.l.b16 %v1582
        %v6142 = vunpack.c.h.b16 %v1582
        %v6143 = vunpack.c.l.b16 %v1583
        %v6144 = vunpack.c.h.b16 %v1583
        %v6145 = vunpack.c.l.b16 %v1584
        %v6146 = vunpack.c.h.b16 %v1584
        %v6147 = vunpack.c.l.b16 %v1585
        %v6148 = vunpack.c.h.b16 %v1585
        %v6149 = vunpack.c.l.b16 %v1586
        %v6150 = vunpack.c.h.b16 %v1586
        %v6151 = vunpack.c.l.b16 %v1587
        %v6152 = vunpack.c.h.b16 %v1587
        %v6153 = vunpack.c.l.b16 %v1588
        %v6154 = vunpack.c.h.b16 %v1588
        %v6155 = vunpack.c.l.b16 %v1589
        %v6156 = vunpack.c.h.b16 %v1589
        %v6157 = vunpack.c.l.b16 %v1590
        %v6158 = vunpack.c.h.b16 %v1590
        %v6159 = vunpack.c.l.b16 %v1591
        %v6160 = vunpack.c.h.b16 %v1591
        %v6161 = vunpack.c.l.b16 %v1592
        %v6162 = vunpack.c.h.b16 %v1592
        %v6163 = vunpack.c.l.b16 %v1593
        %v6164 = vunpack.c.h.b16 %v1593
        %v6165 = vunpack.c.l.b16 %v1594
        %v6166 = vunpack.c.h.b16 %v1594
        %v6167 = vunpack.c.l.b16 %v1595
        %v6168 = vunpack.c.h.b16 %v1595
        %v6169 = vunpack.c.l.b16 %v1596
        %v6170 = vunpack.c.h.b16 %v1596
        %v6171 = vunpack.c.l.b16 %v1597
        %v6172 = vunpack.c.h.b16 %v1597
        %v6173 = vunpack.c.l.b16 %v1598
        %v6174 = vunpack.c.h.b16 %v1598
        %v6175 = vunpack.c.l.b16 %v1599
        %v6176 = vunpack.c.h.b16 %v1599
        %v6177 = vunpack.c.l.b16 %v1600
        %v6178 = vunpack.c.h.b16 %v1600
        %v6179 = vunpack.c.l.b16 %v1601
        %v6180 = vunpack.c.h.b16 %v1601
        %v6181 = vunpack.c.l.b16 %v1602
        %v6182 = vunpack.c.h.b16 %v1602
        %v6183 = vunpack.c.l.b16 %v1603
        %v6184 = vunpack.c.h.b16 %v1603
        %v6185 = vunpack.c.l.b16 %v1604
        %v6186 = vunpack.c.h.b16 %v1604
        %v6187 = vunpack.c.l.b16 %v1605
        %v6188 = vunpack.c.h.b16 %v1605
        %v6189 = vunpack.c.l.b16 %v1606
        %v6190 = vunpack.c.h.b16 %v1606
        %v6191 = vunpack.c.l.b16 %v1607
        %v6192 = vunpack.c.h.b16 %v1607
        %v6193 = vunpack.c.l.b16 %v1608
        %v6194 = vunpack.c.h.b16 %v1608
        %v6195 = vunpack.c.l.b16 %v1609
        %v6196 = vunpack.c.h.b16 %v1609
        %v6197 = vunpack.c.l.b16 %v1610
        %v6198 = vunpack.c.h.b16 %v1610
        %v6199 = vunpack.c.l.b16 %v1611
        %v6200 = vunpack.c.h.b16 %v1611
        %v6201 = vunpack.c.l.b16 %v1612
        %v6202 = vunpack.c.h.b16 %v1612
        %v6203 = vunpack.c.l.b16 %v1613
        %v6204 = vunpack.c.h.b16 %v1613
        %v6205 = vunpack.c.l.b16 %v1614
        %v6206 = vunpack.c.h.b16 %v1614
        %v6207 = vunpack.c.l.b16 %v1615
        %v6208 = vunpack.c.h.b16 %v1615
        %v6209 = vunpack.c.l.b16 %v1616
        %v6210 = vunpack.c.h.b16 %v1616
        %v6211 = vunpack.c.l.b16 %v1617
        %v6212 = vunpack.c.h.b16 %v1617
        %v6213 = vunpack.c.l.b16 %v1618
        %v6214 = vunpack.c.h.b16 %v1618
        %v6215 = vunpack.c.l.b16 %v1619
        %v6216 = vunpack.c.h.b16 %v1619
        %v6217 = vunpack.c.l.b16 %v1620
        %v6218 = vunpack.c.h.b16 %v1620
        %v6219 = vunpack.c.l.b16 %v1621
        %v6220 = vunpack.c.h.b16 %v1621
        %v6221 = vunpack.c.l.b16 %v1622
        %v6222 = vunpack.c.h.b16 %v1622
        %v6223 = vunpack.c.l.b16 %v1623
        %v6224 = vunpack.c.h.b16 %v1623
        %v6225 = vunpack.c.l.b16 %v1624
        %v6226 = vunpack.c.h.b16 %v1624
        %v6227 = vunpack.c.l.b16 %v1625
        %v6228 = vunpack.c.h.b16 %v1625
        %v6229 = vunpack.c.l.b16 %v1626
        %v6230 = vunpack.c.h.b16 %v1626
        %v6231 = vunpack.c.l.b16 %v1627
        %v6232 = vunpack.c.h.b16 %v1627
        %v6233 = vunpack.c.l.b16 %v1628
        %v6234 = vunpack.c.h.b16 %v1628
        %v6235 = vunpack.c.l.b16 %v1629
        %v6236 = vunpack.c.h.b16 %v1629
        %v6237 = vunpack.c.l.b16 %v1630
        %v6238 = vunpack.c.h.b16 %v1630
        %v6239 = vunpack.c.l.b16 %v1631
        %v6240 = vunpack.c.h.b16 %v1631
        %v6241 = vunpack.c.l.b16 %v1632
        %v6242 = vunpack.c.h.b16 %v1632
        %v6243 = vunpack.c.l.b16 %v1633
        %v6244 = vunpack.c.h.b16 %v1633
        %v6245 = vunpack.c.l.b16 %v1634
        %v6246 = vunpack.c.h.b16 %v1634
        %v6247 = vunpack.c.l.b16 %v1635
        %v6248 = vunpack.c.h.b16 %v1635
        %v6249 = vunpack.c.l.b16 %v1636
        %v6250 = vunpack.c.h.b16 %v1636
        %v6251 = vunpack.c.l.b16 %v1637
        %v6252 = vunpack.c.h.b16 %v1637
        %v6253 = vunpack.c.l.b16 %v1638
        %v6254 = vunpack.c.h.b16 %v1638
        %v6255 = vunpack.c.l.b16 %v1639
        %v6256 = vunpack.c.h.b16 %v1639
        %v6257 = vunpack.c.l.b16 %v1640
        %v6258 = vunpack.c.h.b16 %v1640
        %v6259 = vunpack.c.l.b16 %v1641
        %v6260 = vunpack.c.h.b16 %v1641
        %v6261 = vunpack.c.l.b16 %v1642
        %v6262 = vunpack.c.h.b16 %v1642
        %v6263 = vunpack.c.l.b16 %v1643
        %v6264 = vunpack.c.h.b16 %v1643
        %v6265 = vunpack.c.l.b16 %v1644
        %v6266 = vunpack.c.h.b16 %v1644
        %v6267 = vunpack.c.l.b16 %v1645
        %v6268 = vunpack.c.h.b16 %v1645
        %v6269 = vunpack.c.l.b16 %v1646
        %v6270 = vunpack.c.h.b16 %v1646
        %v6271 = vunpack.c.l.b16 %v1647
        %v6272 = vunpack.c.h.b16 %v1647
        %v6273 = vunpack.c.l.b16 %v1648
        %v6274 = vunpack.c.h.b16 %v1648
        %v6275 = vunpack.c.l.b16 %v1649
        %v6276 = vunpack.c.h.b16 %v1649
        %v6277 = vunpack.c.l.b16 %v1650
        %v6278 = vunpack.c.h.b16 %v1650
        %v6279 = vunpack.c.l.b16 %v1651
        %v6280 = vunpack.c.h.b16 %v1651
        %v6281 = vunpack.c.l.b16 %v1652
        %v6282 = vunpack.c.h.b16 %v1652
        %v6283 = vunpack.c.l.b16 %v1653
        %v6284 = vunpack.c.h.b16 %v1653
        %v6285 = vunpack.c.l.b16 %v1654
        %v6286 = vunpack.c.h.b16 %v1654
        %v6287 = vunpack.c.l.b16 %v1655
        %v6288 = vunpack.c.h.b16 %v1655
        %v6289 = vunpack.c.l.b16 %v1656
        %v6290 = vunpack.c.h.b16 %v1656
        %v6291 = vunpack.c.l.b16 %v1657
        %v6292 = vunpack.c.h.b16 %v1657
        %v6293 = vunpack.c.l.b16 %v1658
        %v6294 = vunpack.c.h.b16 %v1658
        %v6295 = vunpack.c.l.b16 %v1659
        %v6296 = vunpack.c.h.b16 %v1659
        %v6297 = vunpack.c.l.b16 %v1660
        %v6298 = vunpack.c.h.b16 %v1660
        %v6299 = vunpack.c.l.b16 %v1661
        %v6300 = vunpack.c.h.b16 %v1661
        %v6301 = vunpack.c.l.b16 %v1662
        %v6302 = vunpack.c.h.b16 %v1662
        %v6303 = vunpack.c.l.b16 %v1663
        %v6304 = vunpack.c.h.b16 %v1663
        %v6305 = vunpack.c.l.b16 %v1664
        %v6306 = vunpack.c.h.b16 %v1664
        %v6307 = vunpack.c.l.b16 %v1665
        %v6308 = vunpack.c.h.b16 %v1665
        %v6309 = vunpack.c.l.b16 %v1666
        %v6310 = vunpack.c.h.b16 %v1666
        %v6311 = vunpack.c.l.b16 %v1667
        %v6312 = vunpack.c.h.b16 %v1667
        %v6313 = vunpack.c.l.b16 %v1668
        %v6314 = vunpack.c.h.b16 %v1668
        %v6315 = vunpack.c.l.b16 %v1669
        %v6316 = vunpack.c.h.b16 %v1669
        %v6317 = vunpack.c.l.b16 %v1670
        %v6318 = vunpack.c.h.b16 %v1670
        %v6319 = vunpack.c.l.b16 %v1671
        %v6320 = vunpack.c.h.b16 %v1671
        %v6321 = vunpack.c.l.b16 %v1672
        %v6322 = vunpack.c.h.b16 %v1672
        %v6323 = vunpack.c.l.b16 %v1673
        %v6324 = vunpack.c.h.b16 %v1673
        %v6325 = vunpack.c.l.b16 %v1674
        %v6326 = vunpack.c.h.b16 %v1674
        %v6327 = vunpack.c.l.b16 %v1675
        %v6328 = vunpack.c.h.b16 %v1675
        %v6329 = vunpack.c.l.b16 %v1676
        %v6330 = vunpack.c.h.b16 %v1676
        %v6331 = vunpack.c.l.b16 %v1677
        %v6332 = vunpack.c.h.b16 %v1677
        %v6333 = vunpack.c.l.b16 %v1678
        %v6334 = vunpack.c.h.b16 %v1678
        %v6335 = vunpack.c.l.b16 %v1679
        %v6336 = vunpack.c.h.b16 %v1679
        %v6337 = vunpack.c.l.b16 %v1680
        %v6338 = vunpack.c.h.b16 %v1680
        %v6339 = vunpack.c.l.b16 %v1681
        %v6340 = vunpack.c.h.b16 %v1681
        %v6341 = vunpack.c.l.b16 %v1682
        %v6342 = vunpack.c.h.b16 %v1682
        %v6343 = vunpack.c.l.b16 %v1683
        %v6344 = vunpack.c.h.b16 %v1683
        %v6345 = vunpack.c.l.b16 %v1684
        %v6346 = vunpack.c.h.b16 %v1684
        %v6347 = vunpack.c.l.b16 %v1685
        %v6348 = vunpack.c.h.b16 %v1685
        %v6349 = vunpack.c.l.b16 %v1686
        %v6350 = vunpack.c.h.b16 %v1686
        %v6351 = vunpack.c.l.b16 %v1687
        %v6352 = vunpack.c.h.b16 %v1687
        %v6353 = vunpack.c.l.b16 %v1688
        %v6354 = vunpack.c.h.b16 %v1688
        %v6355 = vunpack.c.l.b16 %v1689
        %v6356 = vunpack.c.h.b16 %v1689
        %v6357 = vunpack.c.l.b16 %v1690
        %v6358 = vunpack.c.h.b16 %v1690
        %v6359 = vunpack.c.l.b16 %v1691
        %v6360 = vunpack.c.h.b16 %v1691
        %v6361 = vunpack.c.l.b16 %v1692
        %v6362 = vunpack.c.h.b16 %v1692
        %v6363 = vunpack.c.l.b16 %v1693
        %v6364 = vunpack.c.h.b16 %v1693
        %v6365 = vunpack.c.l.b16 %v1694
        %v6366 = vunpack.c.h.b16 %v1694
        %v6367 = vunpack.c.l.b16 %v1695
        %v6368 = vunpack.c.h.b16 %v1695
        %v6369 = vunpack.c.l.b16 %v1696
        %v6370 = vunpack.c.h.b16 %v1696
        %v6371 = vunpack.c.l.b16 %v1697
        %v6372 = vunpack.c.h.b16 %v1697
        %v6373 = vunpack.c.l.b16 %v1698
        %v6374 = vunpack.c.h.b16 %v1698
        %v6375 = vunpack.c.l.b16 %v1699
        %v6376 = vunpack.c.h.b16 %v1699
        %v6377 = vunpack.c.l.b16 %v1700
        %v6378 = vunpack.c.h.b16 %v1700
        %v6379 = vunpack.c.l.b16 %v1701
        %v6380 = vunpack.c.h.b16 %v1701
        %v6381 = vunpack.c.l.b16 %v1702
        %v6382 = vunpack.c.h.b16 %v1702
        %v6383 = vunpack.c.l.b16 %v1703
        %v6384 = vunpack.c.h.b16 %v1703
        %v6385 = vunpack.c.l.b16 %v1704
        %v6386 = vunpack.c.h.b16 %v1704
        %v6387 = vunpack.c.l.b16 %v1705
        %v6388 = vunpack.c.h.b16 %v1705
        %v6389 = vunpack.c.l.b16 %v1706
        %v6390 = vunpack.c.h.b16 %v1706
        %v6391 = vunpack.c.l.b16 %v1707
        %v6392 = vunpack.c.h.b16 %v1707
        %v6393 = vunpack.c.l.b16 %v1708
        %v6394 = vunpack.c.h.b16 %v1708
        %v6395 = vunpack.c.l.b16 %v1709
        %v6396 = vunpack.c.h.b16 %v1709
        %v6397 = vunpack.c.l.b16 %v1710
        %v6398 = vunpack.c.h.b16 %v1710
        %v6399 = vunpack.c.l.b16 %v1711
        %v6400 = vunpack.c.h.b16 %v1711
        %v6401 = vunpack.c.l.b16 %v1712
        %v6402 = vunpack.c.h.b16 %v1712
        %v6403 = vunpack.c.l.b16 %v1713
        %v6404 = vunpack.c.h.b16 %v1713
        %v6405 = vunpack.c.l.b16 %v1714
        %v6406 = vunpack.c.h.b16 %v1714
        %v6407 = vunpack.c.l.b16 %v1715
        %v6408 = vunpack.c.h.b16 %v1715
        %v6409 = vunpack.c.l.b16 %v1716
        %v6410 = vunpack.c.h.b16 %v1716
        %v6411 = vunpack.c.l.b16 %v1717
        %v6412 = vunpack.c.h.b16 %v1717
        %v6413 = vunpack.c.l.b16 %v1718
        %v6414 = vunpack.c.h.b16 %v1718
        %v6415 = vunpack.c.l.b16 %v1719
        %v6416 = vunpack.c.h.b16 %v1719
        %v6417 = vunpack.c.l.b16 %v1720
        %v6418 = vunpack.c.h.b16 %v1720
        %v6419 = vunpack.c.l.b16 %v1721
        %v6420 = vunpack.c.h.b16 %v1721
        %v6421 = vunpack.c.l.b16 %v1722
        %v6422 = vunpack.c.h.b16 %v1722
        %v6423 = vunpack.c.l.b16 %v1723
        %v6424 = vunpack.c.h.b16 %v1723
        %v6425 = vunpack.c.l.b16 %v1724
        %v6426 = vunpack.c.h.b16 %v1724
        %v6427 = vunpack.c.l.b16 %v1725
        %v6428 = vunpack.c.h.b16 %v1725
        %v6429 = vunpack.c.l.b16 %v1726
        %v6430 = vunpack.c.h.b16 %v1726
        %v6431 = vunpack.c.l.b16 %v1727
        %v6432 = vunpack.c.h.b16 %v1727
        %v6433 = vunpack.c.l.b16 %v1728
        %v6434 = vunpack.c.h.b16 %v1728
        %v6435 = vunpack.c.l.b16 %v1729
        %v6436 = vunpack.c.h.b16 %v1729
        %v6437 = vunpack.c.l.b16 %v1730
        %v6438 = vunpack.c.h.b16 %v1730
        %v6439 = vunpack.c.l.b16 %v1731
        %v6440 = vunpack.c.h.b16 %v1731
        %v6441 = vunpack.c.l.b16 %v1732
        %v6442 = vunpack.c.h.b16 %v1732
        %v6443 = vunpack.c.l.b16 %v1733
        %v6444 = vunpack.c.h.b16 %v1733
        %v6445 = vunpack.c.l.b16 %v1734
        %v6446 = vunpack.c.h.b16 %v1734
        %v6447 = vunpack.c.l.b16 %v1735
        %v6448 = vunpack.c.h.b16 %v1735
        %v6449 = vunpack.c.l.b16 %v1736
        %v6450 = vunpack.c.h.b16 %v1736
        %v6451 = vunpack.c.l.b16 %v1737
        %v6452 = vunpack.c.h.b16 %v1737
        %v6453 = vunpack.c.l.b16 %v1738
        %v6454 = vunpack.c.h.b16 %v1738
        %v6455 = vunpack.c.l.b16 %v1739
        %v6456 = vunpack.c.h.b16 %v1739
        %v6457 = vunpack.c.l.b16 %v1740
        %v6458 = vunpack.c.h.b16 %v1740
        %v6459 = vunpack.c.l.b16 %v1741
        %v6460 = vunpack.c.h.b16 %v1741
        %v6461 = vunpack.c.l.b16 %v1742
        %v6462 = vunpack.c.h.b16 %v1742
        %v6463 = vunpack.c.l.b16 %v1743
        %v6464 = vunpack.c.h.b16 %v1743
        %v6465 = vunpack.c.l.b16 %v1744
        %v6466 = vunpack.c.h.b16 %v1744
        %v6467 = vunpack.c.l.b16 %v1745
        %v6468 = vunpack.c.h.b16 %v1745
        %v6469 = vunpack.c.l.b16 %v1746
        %v6470 = vunpack.c.h.b16 %v1746
        %v6471 = vunpack.c.l.b16 %v1747
        %v6472 = vunpack.c.h.b16 %v1747
        %v6473 = vunpack.c.l.b16 %v1748
        %v6474 = vunpack.c.h.b16 %v1748
        %v6475 = vunpack.c.l.b16 %v1749
        %v6476 = vunpack.c.h.b16 %v1749
        %v6477 = vunpack.c.l.b16 %v1750
        %v6478 = vunpack.c.h.b16 %v1750
        %v6479 = vunpack.c.l.b16 %v1751
        %v6480 = vunpack.c.h.b16 %v1751
        %v6481 = vunpack.c.l.b16 %v1752
        %v6482 = vunpack.c.h.b16 %v1752
        %v6483 = vunpack.c.l.b16 %v1753
        %v6484 = vunpack.c.h.b16 %v1753
        %v6485 = vunpack.c.l.b16 %v1754
        %v6486 = vunpack.c.h.b16 %v1754
        %v6487 = vunpack.c.l.b16 %v1755
        %v6488 = vunpack.c.h.b16 %v1755
        %v6489 = vunpack.c.l.b16 %v1756
        %v6490 = vunpack.c.h.b16 %v1756
        %v6491 = vunpack.c.l.b16 %v1757
        %v6492 = vunpack.c.h.b16 %v1757
        %v6493 = vunpack.c.l.b16 %v1758
        %v6494 = vunpack.c.h.b16 %v1758
        %v6495 = vunpack.c.l.b16 %v1759
        %v6496 = vunpack.c.h.b16 %v1759
        %v6497 = vunpack.c.l.b16 %v1760
        %v6498 = vunpack.c.h.b16 %v1760
        %v6499 = vunpack.c.l.b16 %v1761
        %v6500 = vunpack.c.h.b16 %v1761
        %v6501 = vunpack.c.l.b16 %v1762
        %v6502 = vunpack.c.h.b16 %v1762
        %v6503 = vunpack.c.l.b16 %v1763
        %v6504 = vunpack.c.h.b16 %v1763
        %v6505 = vunpack.c.l.b16 %v1764
        %v6506 = vunpack.c.h.b16 %v1764
        %v6507 = vunpack.c.l.b16 %v1765
        %v6508 = vunpack.c.h.b16 %v1765
        %v6509 = vunpack.c.l.b16 %v1766
        %v6510 = vunpack.c.h.b16 %v1766
        %v6511 = vunpack.c.l.b16 %v1767
        %v6512 = vunpack.c.h.b16 %v1767
        %v6513 = vunpack.c.l.b16 %v1768
        %v6514 = vunpack.c.h.b16 %v1768
        %v6515 = vunpack.c.l.b16 %v1769
        %v6516 = vunpack.c.h.b16 %v1769
        %v6517 = vunpack.c.l.b16 %v1770
        %v6518 = vunpack.c.h.b16 %v1770
        %v6519 = vunpack.c.l.b16 %v1771
        %v6520 = vunpack.c.h.b16 %v1771
        %v6521 = vunpack.c.l.b16 %v1772
        %v6522 = vunpack.c.h.b16 %v1772
        %v6523 = vunpack.c.l.b16 %v1773
        %v6524 = vunpack.c.h.b16 %v1773
        %v6525 = vunpack.c.l.b16 %v1774
        %v6526 = vunpack.c.h.b16 %v1774
        %v6527 = vunpack.c.l.b16 %v1775
        %v6528 = vunpack.c.h.b16 %v1775
        %v6529 = vunpack.c.l.b16 %v1776
        %v6530 = vunpack.c.h.b16 %v1776
        %v6531 = vunpack.c.l.b16 %v1777
        %v6532 = vunpack.c.h.b16 %v1777
        %v6533 = vunpack.c.l.b16 %v1778
        %v6534 = vunpack.c.h.b16 %v1778
        %v6535 = vunpack.c.l.b16 %v1779
        %v6536 = vunpack.c.h.b16 %v1779
        %v6537 = vunpack.c.l.b16 %v1780
        %v6538 = vunpack.c.h.b16 %v1780
        %v6539 = vunpack.c.l.b16 %v1781
        %v6540 = vunpack.c.h.b16 %v1781
        %v6541 = vunpack.c.l.b16 %v1782
        %v6542 = vunpack.c.h.b16 %v1782
        %v6543 = vunpack.c.l.b16 %v1783
        %v6544 = vunpack.c.h.b16 %v1783
        %v6545 = vunpack.c.l.b16 %v1784
        %v6546 = vunpack.c.h.b16 %v1784
        %v6547 = vunpack.c.l.b16 %v1785
        %v6548 = vunpack.c.h.b16 %v1785
        %v6549 = vunpack.c.l.b16 %v1786
        %v6550 = vunpack.c.h.b16 %v1786
        %v6551 = vunpack.c.l.b16 %v1787
        %v6552 = vunpack.c.h.b16 %v1787
        %v6553 = vunpack.c.l.b16 %v1788
        %v6554 = vunpack.c.h.b16 %v1788
        %v6555 = vunpack.c.l.b16 %v1789
        %v6556 = vunpack.c.h.b16 %v1789
        %v6557 = vunpack.c.l.b16 %v1790
        %v6558 = vunpack.c.h.b16 %v1790
        %v6559 = vunpack.c.l.b16 %v1791
        %v6560 = vunpack.c.h.b16 %v1791
        %v6561 = vunpack.c.l.b16 %v1792
        %v6562 = vunpack.c.h.b16 %v1792
        %v6563 = vunpack.c.l.b16 %v1793
        %v6564 = vunpack.c.h.b16 %v1793
        %v6565 = vunpack.c.l.b16 %v1794
        %v6566 = vunpack.c.h.b16 %v1794
        %v6567 = vunpack.c.l.b16 %v1795
        %v6568 = vunpack.c.h.b16 %v1795
        %v6569 = vunpack.c.l.b16 %v1796
        %v6570 = vunpack.c.h.b16 %v1796
        %v6571 = vunpack.c.l.b16 %v1797
        %v6572 = vunpack.c.h.b16 %v1797
        %v6573 = vunpack.c.l.b16 %v1798
        %v6574 = vunpack.c.h.b16 %v1798
        %v6575 = vunpack.c.l.b16 %v1799
        %v6576 = vunpack.c.h.b16 %v1799
        %v6577 = vunpack.c.l.b16 %v1800
        %v6578 = vunpack.c.h.b16 %v1800
        %v6579 = vunpack.c.l.b16 %v1801
        %v6580 = vunpack.c.h.b16 %v1801
        %v6581 = vunpack.c.l.b16 %v1802
        %v6582 = vunpack.c.h.b16 %v1802
        %v6583 = vunpack.c.l.b16 %v1803
        %v6584 = vunpack.c.h.b16 %v1803
        %v6585 = vunpack.c.l.b16 %v1804
        %v6586 = vunpack.c.h.b16 %v1804
        %v6587 = vunpack.c.l.b16 %v1805
        %v6588 = vunpack.c.h.b16 %v1805
        %v6589 = vunpack.c.l.b16 %v1806
        %v6590 = vunpack.c.h.b16 %v1806
        %v6591 = vunpack.c.l.b16 %v1807
        %v6592 = vunpack.c.h.b16 %v1807
        %v6593 = vunpack.c.l.b16 %v1808
        %v6594 = vunpack.c.h.b16 %v1808
        %v6595 = vunpack.c.l.b16 %v1809
        %v6596 = vunpack.c.h.b16 %v1809
        %v6597 = vunpack.c.l.b16 %v1810
        %v6598 = vunpack.c.h.b16 %v1810
        %v6599 = vunpack.c.l.b16 %v1811
        %v6600 = vunpack.c.h.b16 %v1811
        %v6601 = vunpack.c.l.b16 %v1812
        %v6602 = vunpack.c.h.b16 %v1812
        %v6603 = vunpack.c.l.b16 %v1813
        %v6604 = vunpack.c.h.b16 %v1813
        %v6605 = vunpack.c.l.b16 %v1814
        %v6606 = vunpack.c.h.b16 %v1814
        %v6607 = vunpack.c.l.b16 %v1815
        %v6608 = vunpack.c.h.b16 %v1815
        %v6609 = vunpack.c.l.b16 %v1816
        %v6610 = vunpack.c.h.b16 %v1816
        %v6611 = vunpack.c.l.b16 %v1817
        %v6612 = vunpack.c.h.b16 %v1817
        %v6613 = vunpack.c.l.b16 %v1818
        %v6614 = vunpack.c.h.b16 %v1818
        %v6615 = vunpack.c.l.b16 %v1819
        %v6616 = vunpack.c.h.b16 %v1819
        %v6617 = vunpack.c.l.b16 %v1820
        %v6618 = vunpack.c.h.b16 %v1820
        %v6619 = vunpack.c.l.b16 %v1821
        %v6620 = vunpack.c.h.b16 %v1821
        %v6621 = vunpack.c.l.b16 %v1822
        %v6622 = vunpack.c.h.b16 %v1822
        %v6623 = vunpack.c.l.b16 %v1823
        %v6624 = vunpack.c.h.b16 %v1823
        %v6625 = vunpack.c.l.b16 %v1824
        %v6626 = vunpack.c.h.b16 %v1824
        %v6627 = vunpack.c.l.b16 %v1825
        %v6628 = vunpack.c.h.b16 %v1825
        %v6629 = vunpack.c.l.b16 %v1826
        %v6630 = vunpack.c.h.b16 %v1826
        %v6631 = vunpack.c.l.b16 %v1827
        %v6632 = vunpack.c.h.b16 %v1827
        %v6633 = vunpack.c.l.b16 %v1828
        %v6634 = vunpack.c.h.b16 %v1828
        %v6635 = vunpack.c.l.b16 %v1829
        %v6636 = vunpack.c.h.b16 %v1829
        %v6637 = vunpack.c.l.b16 %v1830
        %v6638 = vunpack.c.h.b16 %v1830
        %v6639 = vunpack.c.l.b16 %v1831
        %v6640 = vunpack.c.h.b16 %v1831
        %v6641 = vunpack.c.l.b16 %v1832
        %v6642 = vunpack.c.h.b16 %v1832
        %v6643 = vunpack.c.l.b16 %v1833
        %v6644 = vunpack.c.h.b16 %v1833
        %v6645 = vunpack.c.l.b16 %v1834
        %v6646 = vunpack.c.h.b16 %v1834
        %v6647 = vunpack.c.l.b16 %v1835
        %v6648 = vunpack.c.h.b16 %v1835
        %v6649 = vunpack.c.l.b16 %v1836
        %v6650 = vunpack.c.h.b16 %v1836
        %v6651 = vunpack.c.l.b16 %v1837
        %v6652 = vunpack.c.h.b16 %v1837
        %v6653 = vunpack.c.l.b16 %v1838
        %v6654 = vunpack.c.h.b16 %v1838
        %v6655 = vunpack.c.l.b16 %v1839
        %v6656 = vunpack.c.h.b16 %v1839
        %v6657 = vunpack.c.l.b16 %v1840
        %v6658 = vunpack.c.h.b16 %v1840
        %v6659 = vunpack.c.l.b16 %v1841
        %v6660 = vunpack.c.h.b16 %v1841
        %v6661 = vunpack.c.l.b16 %v1842
        %v6662 = vunpack.c.h.b16 %v1842
        %v6663 = vunpack.c.l.b16 %v1843
        %v6664 = vunpack.c.h.b16 %v1843
        %v6665 = vunpack.c.l.b16 %v1844
        %v6666 = vunpack.c.h.b16 %v1844
        %v6667 = vunpack.c.l.b16 %v1845
        %v6668 = vunpack.c.h.b16 %v1845
        %v6669 = vunpack.c.l.b16 %v1846
        %v6670 = vunpack.c.h.b16 %v1846
        %v6671 = vunpack.c.l.b16 %v1847
        %v6672 = vunpack.c.h.b16 %v1847
        %v6673 = vunpack.c.l.b16 %v1848
        %v6674 = vunpack.c.h.b16 %v1848
        %v6675 = vunpack.c.l.b16 %v1849
        %v6676 = vunpack.c.h.b16 %v1849
        %v6677 = vunpack.c.l.b16 %v1850
        %v6678 = vunpack.c.h.b16 %v1850
        %v6679 = vunpack.c.l.b16 %v1851
        %v6680 = vunpack.c.h.b16 %v1851
        %v6681 = vunpack.c.l.b16 %v1852
        %v6682 = vunpack.c.h.b16 %v1852
        %v6683 = vunpack.c.l.b16 %v1853
        %v6684 = vunpack.c.h.b16 %v1853
        %v6685 = vunpack.c.l.b16 %v1854
        %v6686 = vunpack.c.h.b16 %v1854
        %v6687 = vunpack.c.l.b16 %v1855
        %v6688 = vunpack.c.h.b16 %v1855
        %v6689 = vunpack.c.l.b16 %v1856
        %v6690 = vunpack.c.h.b16 %v1856
        %v6691 = vunpack.c.l.b16 %v1857
        %v6692 = vunpack.c.h.b16 %v1857
        %v6693 = vunpack.c.l.b16 %v1858
        %v6694 = vunpack.c.h.b16 %v1858
        %v6695 = vunpack.c.l.b16 %v1859
        %v6696 = vunpack.c.h.b16 %v1859
        %v6697 = vunpack.c.l.b16 %v1860
        %v6698 = vunpack.c.h.b16 %v1860
        %v6699 = vunpack.c.l.b16 %v1861
        %v6700 = vunpack.c.h.b16 %v1861
        %v6701 = vunpack.c.l.b16 %v1862
        %v6702 = vunpack.c.h.b16 %v1862
        %v6703 = vunpack.c.l.b16 %v1863
        %v6704 = vunpack.c.h.b16 %v1863
        %v6705 = vunpack.c.l.b16 %v1864
        %v6706 = vunpack.c.h.b16 %v1864
        %v6707 = vunpack.c.l.b16 %v1865
        %v6708 = vunpack.c.h.b16 %v1865
        %v6709 = vunpack.c.l.b16 %v1866
        %v6710 = vunpack.c.h.b16 %v1866
        %v6711 = vunpack.c.l.b16 %v1867
        %v6712 = vunpack.c.h.b16 %v1867
        %v6713 = vunpack.c.l.b16 %v1868
        %v6714 = vunpack.c.h.b16 %v1868
        %v6715 = vunpack.c.l.b16 %v1869
        %v6716 = vunpack.c.h.b16 %v1869
        %v6717 = vunpack.c.l.b16 %v1870
        %v6718 = vunpack.c.h.b16 %v1870
        %v6719 = vunpack.c.l.b16 %v1871
        %v6720 = vunpack.c.h.b16 %v1871
        %v6721 = vunpack.c.l.b16 %v1872
        %v6722 = vunpack.c.h.b16 %v1872
        %v6723 = vunpack.c.l.b16 %v1873
        %v6724 = vunpack.c.h.b16 %v1873
        %v6725 = vunpack.c.l.b16 %v1874
        %v6726 = vunpack.c.h.b16 %v1874
        %v6727 = vunpack.c.l.b16 %v1875
        %v6728 = vunpack.c.h.b16 %v1875
        %v6729 = vunpack.c.l.b16 %v1876
        %v6730 = vunpack.c.h.b16 %v1876
        %v6731 = vunpack.c.l.b16 %v1877
        %v6732 = vunpack.c.h.b16 %v1877
        %v6733 = vunpack.c.l.b16 %v1878
        %v6734 = vunpack.c.h.b16 %v1878
        %v6735 = vunpack.c.l.b16 %v1879
        %v6736 = vunpack.c.h.b16 %v1879
        %v6737 = vunpack.c.l.b16 %v1880
        %v6738 = vunpack.c.h.b16 %v1880
        %v6739 = vunpack.c.l.b16 %v1881
        %v6740 = vunpack.c.h.b16 %v1881
        %v6741 = vunpack.c.l.b16 %v1882
        %v6742 = vunpack.c.h.b16 %v1882
        %v6743 = vunpack.c.l.b16 %v1883
        %v6744 = vunpack.c.h.b16 %v1883
        %v6745 = vunpack.c.l.b16 %v1884
        %v6746 = vunpack.c.h.b16 %v1884
        %v6747 = vunpack.c.l.b16 %v1885
        %v6748 = vunpack.c.h.b16 %v1885
        %v6749 = vunpack.c.l.b16 %v1886
        %v6750 = vunpack.c.h.b16 %v1886
        %v6751 = vunpack.c.l.b16 %v1887
        %v6752 = vunpack.c.h.b16 %v1887
        %v6753 = vunpack.c.l.b16 %v1888
        %v6754 = vunpack.c.h.b16 %v1888
        %v6755 = vunpack.c.l.b16 %v1889
        %v6756 = vunpack.c.h.b16 %v1889
        %v6757 = vunpack.c.l.b16 %v1890
        %v6758 = vunpack.c.h.b16 %v1890
        %v6759 = vunpack.c.l.b16 %v1891
        %v6760 = vunpack.c.h.b16 %v1891
        %v6761 = vunpack.c.l.b16 %v1892
        %v6762 = vunpack.c.h.b16 %v1892
        %v6763 = vunpack.c.l.b16 %v1893
        %v6764 = vunpack.c.h.b16 %v1893
        %v6765 = vunpack.c.l.b16 %v1894
        %v6766 = vunpack.c.h.b16 %v1894
        %v6767 = vunpack.c.l.b16 %v1895
        %v6768 = vunpack.c.h.b16 %v1895
        %v6769 = vunpack.c.l.b16 %v1896
        %v6770 = vunpack.c.h.b16 %v1896
        %v6771 = vunpack.c.l.b16 %v1897
        %v6772 = vunpack.c.h.b16 %v1897
        %v6773 = vunpack.c.l.b16 %v1898
        %v6774 = vunpack.c.h.b16 %v1898
        %v6775 = vunpack.c.l.b16 %v1899
        %v6776 = vunpack.c.h.b16 %v1899
        %v6777 = vunpack.c.l.b16 %v1900
        %v6778 = vunpack.c.h.b16 %v1900
        %v6779 = vunpack.c.l.b16 %v1901
        %v6780 = vunpack.c.h.b16 %v1901
        %v6781 = vunpack.c.l.b16 %v1902
        %v6782 = vunpack.c.h.b16 %v1902
        %v6783 = vunpack.c.l.b16 %v1903
        %v6784 = vunpack.c.h.b16 %v1903
        %v6785 = vunpack.c.l.b16 %v1904
        %v6786 = vunpack.c.h.b16 %v1904
        %v6787 = vunpack.c.l.b16 %v1905
        %v6788 = vunpack.c.h.b16 %v1905
        %v6789 = vunpack.c.l.b16 %v1906
        %v6790 = vunpack.c.h.b16 %v1906
        %v6791 = vunpack.c.l.b16 %v1907
        %v6792 = vunpack.c.h.b16 %v1907
        %v6793 = vunpack.c.l.b16 %v1908
        %v6794 = vunpack.c.h.b16 %v1908
        %v6795 = vunpack.c.l.b16 %v1909
        %v6796 = vunpack.c.h.b16 %v1909
        %v6797 = vunpack.c.l.b16 %v1910
        %v6798 = vunpack.c.h.b16 %v1910
        %v6799 = vunpack.c.l.b16 %v1911
        %v6800 = vunpack.c.h.b16 %v1911
        %v6801 = vunpack.c.l.b16 %v1912
        %v6802 = vunpack.c.h.b16 %v1912
        %v6803 = vunpack.c.l.b16 %v1913
        %v6804 = vunpack.c.h.b16 %v1913
        %v6805 = vunpack.c.l.b16 %v1914
        %v6806 = vunpack.c.h.b16 %v1914
        %v6807 = vunpack.c.l.b16 %v1915
        %v6808 = vunpack.c.h.b16 %v1915
        %v6809 = vunpack.c.l.b16 %v1916
        %v6810 = vunpack.c.h.b16 %v1916
        %v6811 = vunpack.c.l.b16 %v1917
        %v6812 = vunpack.c.h.b16 %v1917
        %v6813 = vunpack.c.l.b16 %v1918
        %v6814 = vunpack.c.h.b16 %v1918
        %v6815 = vunpack.c.l.b16 %v1919
        %v6816 = vunpack.c.h.b16 %v1919
        %v6817 = vunpack.c.l.b16 %v1920
        %v6818 = vunpack.c.h.b16 %v1920
        %v6819 = vunpack.c.l.b16 %v1921
        %v6820 = vunpack.c.h.b16 %v1921
        %v6821 = vunpack.c.l.b16 %v1922
        %v6822 = vunpack.c.h.b16 %v1922
        %v6823 = vunpack.c.l.b16 %v1923
        %v6824 = vunpack.c.h.b16 %v1923
        %v6825 = vunpack.c.l.b16 %v1924
        %v6826 = vunpack.c.h.b16 %v1924
        %v6827 = vunpack.c.l.b16 %v1925
        %v6828 = vunpack.c.h.b16 %v1925
        %v6829 = vunpack.c.l.b16 %v1926
        %v6830 = vunpack.c.h.b16 %v1926
        %v6831 = vunpack.c.l.b16 %v1927
        %v6832 = vunpack.c.h.b16 %v1927
        %v6833 = vunpack.c.l.b16 %v1928
        %v6834 = vunpack.c.h.b16 %v1928
        %v6835 = vunpack.c.l.b16 %v1929
        %v6836 = vunpack.c.h.b16 %v1929
        %v6837 = vunpack.c.l.b16 %v1930
        %v6838 = vunpack.c.h.b16 %v1930
        %v6839 = vunpack.c.l.b16 %v1931
        %v6840 = vunpack.c.h.b16 %v1931
        %v6841 = vunpack.c.l.b16 %v1932
        %v6842 = vunpack.c.h.b16 %v1932
        %v6843 = vunpack.c.l.b16 %v1933
        %v6844 = vunpack.c.h.b16 %v1933
        %v6845 = vunpack.c.l.b16 %v1934
        %v6846 = vunpack.c.h.b16 %v1934
        %v6847 = vunpack.c.l.b16 %v1935
        %v6848 = vunpack.c.h.b16 %v1935
        %v6849 = vunpack.c.l.b16 %v1936
        %v6850 = vunpack.c.h.b16 %v1936
        %v6851 = vunpack.c.l.b16 %v1937
        %v6852 = vunpack.c.h.b16 %v1937
        %v6853 = vunpack.c.l.b16 %v1938
        %v6854 = vunpack.c.h.b16 %v1938
        %v6855 = vunpack.c.l.b16 %v1939
        %v6856 = vunpack.c.h.b16 %v1939
        %v6857 = vunpack.c.l.b16 %v1940
        %v6858 = vunpack.c.h.b16 %v1940
        %v6859 = vunpack.c.l.b16 %v1941
        %v6860 = vunpack.c.h.b16 %v1941
        %v6861 = vunpack.c.l.b16 %v1942
        %v6862 = vunpack.c.h.b16 %v1942
        %v6863 = vunpack.c.l.b16 %v1943
        %v6864 = vunpack.c.h.b16 %v1943
        %v6865 = vunpack.c.l.b16 %v1944
        %v6866 = vunpack.c.h.b16 %v1944
        %v6867 = vunpack.c.l.b16 %v1945
        %v6868 = vunpack.c.h.b16 %v1945
        %v6869 = vunpack.c.l.b16 %v1946
        %v6870 = vunpack.c.h.b16 %v1946
        %v6871 = vunpack.c.l.b16 %v1947
        %v6872 = vunpack.c.h.b16 %v1947
        %v6873 = vunpack.c.l.b16 %v1948
        %v6874 = vunpack.c.h.b16 %v1948
        %v6875 = vunpack.c.l.b16 %v1949
        %v6876 = vunpack.c.h.b16 %v1949
        %v6877 = vunpack.c.l.b16 %v1950
        %v6878 = vunpack.c.h.b16 %v1950
        %v6879 = vunpack.c.l.b16 %v1951
        %v6880 = vunpack.c.h.b16 %v1951
        %v6881 = vunpack.c.l.b16 %v1952
        %v6882 = vunpack.c.h.b16 %v1952
        %v6883 = vunpack.c.l.b16 %v1953
        %v6884 = vunpack.c.h.b16 %v1953
        %v6885 = vunpack.c.l.b16 %v1954
        %v6886 = vunpack.c.h.b16 %v1954
        %v6887 = vunpack.c.l.b16 %v1955
        %v6888 = vunpack.c.h.b16 %v1955
        %v6889 = vunpack.c.l.b16 %v1956
        %v6890 = vunpack.c.h.b16 %v1956
        %v6891 = vunpack.c.l.b16 %v1957
        %v6892 = vunpack.c.h.b16 %v1957
        %v6893 = vunpack.c.l.b16 %v1958
        %v6894 = vunpack.c.h.b16 %v1958
        %v6895 = vunpack.c.l.b16 %v1959
        %v6896 = vunpack.c.h.b16 %v1959
        %v6897 = vunpack.c.l.b16 %v1960
        %v6898 = vunpack.c.h.b16 %v1960
        %v6899 = vunpack.c.l.b16 %v1961
        %v6900 = vunpack.c.h.b16 %v1961
        %v6901 = vunpack.c.l.b16 %v1962
        %v6902 = vunpack.c.h.b16 %v1962
        %v6903 = vunpack.c.l.b16 %v1963
        %v6904 = vunpack.c.h.b16 %v1963
        %v6905 = vunpack.c.l.b16 %v1964
        %v6906 = vunpack.c.h.b16 %v1964
        %v6907 = vunpack.c.l.b16 %v1965
        %v6908 = vunpack.c.h.b16 %v1965
        %v6909 = vunpack.c.l.b16 %v1966
        %v6910 = vunpack.c.h.b16 %v1966
        %v6911 = vunpack.c.l.b16 %v1967
        %v6912 = vunpack.c.h.b16 %v1967
        %v6913 = vunpack.c.l.b16 %v1968
        %v6914 = vunpack.c.h.b16 %v1968
        %v6915 = vunpack.c.l.b16 %v1969
        %v6916 = vunpack.c.h.b16 %v1969
        %v6917 = vunpack.c.l.b16 %v1970
        %v6918 = vunpack.c.h.b16 %v1970
        %v6919 = vunpack.c.l.b16 %v1971
        %v6920 = vunpack.c.h.b16 %v1971
        %v6921 = vunpack.c.l.b16 %v1972
        %v6922 = vunpack.c.h.b16 %v1972
        %v6923 = vunpack.c.l.b16 %v1973
        %v6924 = vunpack.c.h.b16 %v1973
        %v6925 = vunpack.c.l.b16 %v1974
        %v6926 = vunpack.c.h.b16 %v1974
        %v6927 = vunpack.c.l.b16 %v1975
        %v6928 = vunpack.c.h.b16 %v1975
        %v6929 = vunpack.c.l.b16 %v1976
        %v6930 = vunpack.c.h.b16 %v1976
        %v6931 = vunpack.c.l.b16 %v1977
        %v6932 = vunpack.c.h.b16 %v1977
        %v6933 = vunpack.c.l.b16 %v1978
        %v6934 = vunpack.c.h.b16 %v1978
        %v6935 = vunpack.c.l.b16 %v1979
        %v6936 = vunpack.c.h.b16 %v1979
        %v6937 = vunpack.c.l.b16 %v1980
        %v6938 = vunpack.c.h.b16 %v1980
        %v6939 = vunpack.c.l.b16 %v1981
        %v6940 = vunpack.c.h.b16 %v1981
        %v6941 = vunpack.c.l.b16 %v1982
        %v6942 = vunpack.c.h.b16 %v1982
        %v6943 = vunpack.c.l.b16 %v1983
        %v6944 = vunpack.c.h.b16 %v1983
        %v6945 = vunpack.c.l.b16 %v1984
        %v6946 = vunpack.c.h.b16 %v1984
        %v6947 = vunpack.c.l.b16 %v1985
        %v6948 = vunpack.c.h.b16 %v1985
        %v6949 = vunpack.c.l.b16 %v1986
        %v6950 = vunpack.c.h.b16 %v1986
        %v6951 = vunpack.c.l.b16 %v1987
        %v6952 = vunpack.c.h.b16 %v1987
        %v6953 = vunpack.c.l.b16 %v1988
        %v6954 = vunpack.c.h.b16 %v1988
        %v6955 = vunpack.c.l.b16 %v1989
        %v6956 = vunpack.c.h.b16 %v1989
        %v6957 = vunpack.c.l.b16 %v1990
        %v6958 = vunpack.c.h.b16 %v1990
        %v6959 = vunpack.c.l.b16 %v1991
        %v6960 = vunpack.c.h.b16 %v1991
        %v6961 = vunpack.c.l.b16 %v1992
        %v6962 = vunpack.c.h.b16 %v1992
        %v6963 = vunpack.c.l.b16 %v1993
        %v6964 = vunpack.c.h.b16 %v1993
        %v6965 = vunpack.c.l.b16 %v1994
        %v6966 = vunpack.c.h.b16 %v1994
        %v6967 = vunpack.c.l.b16 %v1995
        %v6968 = vunpack.c.h.b16 %v1995
        %v6969 = vunpack.c.l.b16 %v1996
        %v6970 = vunpack.c.h.b16 %v1996
        %v6971 = vunpack.c.l.b16 %v1997
        %v6972 = vunpack.c.h.b16 %v1997
        %v6973 = vunpack.c.l.b16 %v1998
        %v6974 = vunpack.c.h.b16 %v1998
        %v6975 = vunpack.c.l.b16 %v1999
        %v6976 = vunpack.c.h.b16 %v1999
        %v6977 = vunpack.c.l.b16 %v2000
        %v6978 = vunpack.c.h.b16 %v2000
        %v6979 = vunpack.c.l.b16 %v2001
        %v6980 = vunpack.c.h.b16 %v2001
        %v6981 = vunpack.c.l.b16 %v2002
        %v6982 = vunpack.c.h.b16 %v2002
        %v6983 = vunpack.c.l.b16 %v2003
        %v6984 = vunpack.c.h.b16 %v2003
        %v6985 = vunpack.c.l.b16 %v2004
        %v6986 = vunpack.c.h.b16 %v2004
        %v6987 = vunpack.c.l.b16 %v2005
        %v6988 = vunpack.c.h.b16 %v2005
        %v6989 = vunpack.c.l.b16 %v2006
        %v6990 = vunpack.c.h.b16 %v2006
        %v6991 = vunpack.c.l.b16 %v2007
        %v6992 = vunpack.c.h.b16 %v2007
        %v6993 = vunpack.c.l.b16 %v2008
        %v6994 = vunpack.c.h.b16 %v2008
        %v6995 = vunpack.c.l.b16 %v2009
        %v6996 = vunpack.c.h.b16 %v2009
        %v6997 = vunpack.c.l.b16 %v2010
        %v6998 = vunpack.c.h.b16 %v2010
        %v6999 = vunpack.c.l.b16 %v2011
        %v7000 = vunpack.c.h.b16 %v2011
        %v7001 = vunpack.c.l.b16 %v2012
        %v7002 = vunpack.c.h.b16 %v2012
        %v7003 = vpack.c.b16 %v3811, %v3803
        %v7004 = vpack.c.b16 %v3812, %v3804
        %v7005 = vpack.c.b16 %v3813, %v3805
        %v7006 = vpack.c.b16 %v3814, %v3806
        %v7007 = vpack.c.b16 %v3815, %v3807
        %v7008 = vpack.c.b16 %v3816, %v3808
        %v7009 = vpack.c.b16 %v3817, %v3809
        %v7010 = vpack.c.b16 %v3818, %v3810
        %v7011 = vpack.c.b16 %v3827, %v3819
        %v7012 = vpack.c.b16 %v3828, %v3820
        %v7013 = vpack.c.b16 %v3829, %v3821
        %v7014 = vpack.c.b16 %v3830, %v3822
        %v7015 = vpack.c.b16 %v3831, %v3823
        %v7016 = vpack.c.b16 %v3832, %v3824
        %v7017 = vpack.c.b16 %v3833, %v3825
        %v7018 = vpack.c.b16 %v3834, %v3826
        %v7019 = vpack.c.b16 %v3843, %v3835
        %v7020 = vpack.c.b16 %v3844, %v3836
        %v7021 = vpack.c.b16 %v3845, %v3837
        %v7022 = vpack.c.b16 %v3846, %v3838
        %v7023 = vpack.c.b16 %v3847, %v3839
        %v7024 = vpack.c.b16 %v3848, %v3840
        %v7025 = vpack.c.b16 %v3849, %v3841
        %v7026 = vpack.c.b16 %v3850, %v3842
        %v7027 = vpack.c.b16 %v3859, %v3851
        %v7028 = vpack.c.b16 %v3860, %v3852
        %v7029 = vpack.c.b16 %v3861, %v3853
        %v7030 = vpack.c.b16 %v3862, %v3854
        %v7031 = vpack.c.b16 %v3863, %v3855
        %v7032 = vpack.c.b16 %v3864, %v3856
        %v7033 = vpack.c.b16 %v3865, %v3857
        %v7034 = vpack.c.b16 %v3866, %v3858
        %v7035 = vpack.c.b16 %v3875, %v3867
        %v7036 = vpack.c.b16 %v3876, %v3868
        %v7037 = vpack.c.b16 %v3877, %v3869
        %v7038 = vpack.c.b16 %v3878, %v3870
        %v7039 = vpack.c.b16 %v3879, %v3871
        %v7040 = vpack.c.b16 %v3880, %v3872
        %v7041 = vpack.c.b16 %v3881, %v3873
        %v7042 = vpack.c.b16 %v3882, %v3874
        %v7043 = vpack.c.b16 %v3891, %v3883
        %v7044 = vpack.c.b16 %v3892, %v3884
        %v7045 = vpack.c.b16 %v3893, %v3885
        %v7046 = vpack.c.b16 %v3894, %v3886
        %v7047 = vpack.c.b16 %v3895, %v3887
        %v7048 = vpack.c.b16 %v3896, %v3888
        %v7049 = vpack.c.b16 %v3897, %v3889
        %v7050 = vpack.c.b16 %v3898, %v3890
        %v7051 = vpack.c.b16 %v3907, %v3899
        %v7052 = vpack.c.b16 %v3908, %v3900
        %v7053 = vpack.c.b16 %v3909, %v3901
        %v7054 = vpack.c.b16 %v3910, %v3902
        %v7055 = vpack.c.b16 %v3911, %v3903
        %v7056 = vpack.c.b16 %v3912, %v3904
        %v7057 = vpack.c.b16 %v3913, %v3905
        %v7058 = vpack.c.b16 %v3914, %v3906
        %v7059 = vpack.c.b16 %v3923, %v3915
        %v7060 = vpack.c.b16 %v3924, %v3916
        %v7061 = vpack.c.b16 %v3925, %v3917
        %v7062 = vpack.c.b16 %v3926, %v3918
        %v7063 = vpack.c.b16 %v3927, %v3919
        %v7064 = vpack.c.b16 %v3928, %v3920
        %v7065 = vpack.c.b16 %v3929, %v3921
        %v7066 = vpack.c.b16 %v3930, %v3922
        %v7067 = vpack.c.b16 %v3939, %v3931
        %v7068 = vpack.c.b16 %v3940, %v3932
        %v7069 = vpack.c.b16 %v3941, %v3933
        %v7070 = vpack.c.b16 %v3942, %v3934
        %v7071 = vpack.c.b16 %v3943, %v3935
        %v7072 = vpack.c.b16 %v3944, %v3936
        %v7073 = vpack.c.b16 %v3945, %v3937
        %v7074 = vpack.c.b16 %v3946, %v3938
        %v7075 = vpack.c.b16 %v3955, %v3947
        %v7076 = vpack.c.b16 %v3956, %v3948
        %v7077 = vpack.c.b16 %v3957, %v3949
        %v7078 = vpack.c.b16 %v3958, %v3950
        %v7079 = vpack.c.b16 %v3959, %v3951
        %v7080 = vpack.c.b16 %v3960, %v3952
        %v7081 = vpack.c.b16 %v3961, %v3953
        %v7082 = vpack.c.b16 %v3962, %v3954
        %v7083 = vpack.c.b16 %v3971, %v3963
        %v7084 = vpack.c.b16 %v3972, %v3964
        %v7085 = vpack.c.b16 %v3973, %v3965
        %v7086 = vpack.c.b16 %v3974, %v3966
        %v7087 = vpack.c.b16 %v3975, %v3967
        %v7088 = vpack.c.b16 %v3976, %v3968
        %v7089 = vpack.c.b16 %v3977, %v3969
        %v7090 = vpack.c.b16 %v3978, %v3970
        %v7091 = vpack.c.b16 %v3987, %v3979
        %v7092 = vpack.c.b16 %v3988, %v3980
        %v7093 = vpack.c.b16 %v3989, %v3981
        %v7094 = vpack.c.b16 %v3990, %v3982
        %v7095 = vpack.c.b16 %v3991, %v3983
        %v7096 = vpack.c.b16 %v3992, %v3984
        %v7097 = vpack.c.b16 %v3993, %v3985
        %v7098 = vpack.c.b16 %v3994, %v3986
        %v7099 = vpack.c.b16 %v4003, %v3995
        %v7100 = vpack.c.b16 %v4004, %v3996
        %v7101 = vpack.c.b16 %v4005, %v3997
        %v7102 = vpack.c.b16 %v4006, %v3998
        %v7103 = vpack.c.b16 %v4007, %v3999
        %v7104 = vpack.c.b16 %v4008, %v4000
        %v7105 = vpack.c.b16 %v4009, %v4001
        %v7106 = vpack.c.b16 %v4010, %v4002
        %v7107 = vpack.c.b16 %v4019, %v4011
        %v7108 = vpack.c.b16 %v4020, %v4012
        %v7109 = vpack.c.b16 %v4021, %v4013
        %v7110 = vpack.c.b16 %v4022, %v4014
        %v7111 = vpack.c.b16 %v4023, %v4015
        %v7112 = vpack.c.b16 %v4024, %v4016
        %v7113 = vpack.c.b16 %v4025, %v4017
        %v7114 = vpack.c.b16 %v4026, %v4018
        %v7115 = vpack.c.b16 %v4035, %v4027
        %v7116 = vpack.c.b16 %v4036, %v4028
        %v7117 = vpack.c.b16 %v4037, %v4029
        %v7118 = vpack.c.b16 %v4038, %v4030
        %v7119 = vpack.c.b16 %v4039, %v4031
        %v7120 = vpack.c.b16 %v4040, %v4032
        %v7121 = vpack.c.b16 %v4041, %v4033
        %v7122 = vpack.c.b16 %v4042, %v4034
        %v7123 = vpack.c.b16 %v4051, %v4043
        %v7124 = vpack.c.b16 %v4052, %v4044
        %v7125 = vpack.c.b16 %v4053, %v4045
        %v7126 = vpack.c.b16 %v4054, %v4046
        %v7127 = vpack.c.b16 %v4055, %v4047
        %v7128 = vpack.c.b16 %v4056, %v4048
        %v7129 = vpack.c.b16 %v4057, %v4049
        %v7130 = vpack.c.b16 %v4058, %v4050
        %v7131 = vpack.c.b16 %v4067, %v4059
        %v7132 = vpack.c.b16 %v4068, %v4060
        %v7133 = vpack.c.b16 %v4069, %v4061
        %v7134 = vpack.c.b16 %v4070, %v4062
        %v7135 = vpack.c.b16 %v4071, %v4063
        %v7136 = vpack.c.b16 %v4072, %v4064
        %v7137 = vpack.c.b16 %v4073, %v4065
        %v7138 = vpack.c.b16 %v4074, %v4066
        %v7139 = vpack.c.b16 %v4083, %v4075
        %v7140 = vpack.c.b16 %v4084, %v4076
        %v7141 = vpack.c.b16 %v4085, %v4077
        %v7142 = vpack.c.b16 %v4086, %v4078
        %v7143 = vpack.c.b16 %v4087, %v4079
        %v7144 = vpack.c.b16 %v4088, %v4080
        %v7145 = vpack.c.b16 %v4089, %v4081
        %v7146 = vpack.c.b16 %v4090, %v4082
        %v7147 = vpack.c.b16 %v4099, %v4091
        %v7148 = vpack.c.b16 %v4100, %v4092
        %v7149 = vpack.c.b16 %v4101, %v4093
        %v7150 = vpack.c.b16 %v4102, %v4094
        %v7151 = vpack.c.b16 %v4103, %v4095
        %v7152 = vpack.c.b16 %v4104, %v4096
        %v7153 = vpack.c.b16 %v4105, %v4097
        %v7154 = vpack.c.b16 %v4106, %v4098
        %v7155 = vpack.c.b16 %v4115, %v4107
        %v7156 = vpack.c.b16 %v4116, %v4108
        %v7157 = vpack.c.b16 %v4117, %v4109
        %v7158 = vpack.c.b16 %v4118, %v4110
        %v7159 = vpack.c.b16 %v4119, %v4111
        %v7160 = vpack.c.b16 %v4120, %v4112
        %v7161 = vpack.c.b16 %v4121, %v4113
        %v7162 = vpack.c.b16 %v4122, %v4114
        %v7163 = vpack.c.b16 %v4131, %v4123
        %v7164 = vpack.c.b16 %v4132, %v4124
        %v7165 = vpack.c.b16 %v4133, %v4125
        %v7166 = vpack.c.b16 %v4134, %v4126
        %v7167 = vpack.c.b16 %v4135, %v4127
        %v7168 = vpack.c.b16 %v4136, %v4128
        %v7169 = vpack.c.b16 %v4137, %v4129
        %v7170 = vpack.c.b16 %v4138, %v4130
        %v7171 = vpack.c.b16 %v4147, %v4139
        %v7172 = vpack.c.b16 %v4148, %v4140
        %v7173 = vpack.c.b16 %v4149, %v4141
        %v7174 = vpack.c.b16 %v4150, %v4142
        %v7175 = vpack.c.b16 %v4151, %v4143
        %v7176 = vpack.c.b16 %v4152, %v4144
        %v7177 = vpack.c.b16 %v4153, %v4145
        %v7178 = vpack.c.b16 %v4154, %v4146
        %v7179 = vpack.c.b16 %v4163, %v4155
        %v7180 = vpack.c.b16 %v4164, %v4156
        %v7181 = vpack.c.b16 %v4165, %v4157
        %v7182 = vpack.c.b16 %v4166, %v4158
        %v7183 = vpack.c.b16 %v4167, %v4159
        %v7184 = vpack.c.b16 %v4168, %v4160
        %v7185 = vpack.c.b16 %v4169, %v4161
        %v7186 = vpack.c.b16 %v4170, %v4162
        %v7187 = vpack.c.b16 %v4179, %v4171
        %v7188 = vpack.c.b16 %v4180, %v4172
        %v7189 = vpack.c.b16 %v4181, %v4173
        %v7190 = vpack.c.b16 %v4182, %v4174
        %v7191 = vpack.c.b16 %v4183, %v4175
        %v7192 = vpack.c.b16 %v4184, %v4176
        %v7193 = vpack.c.b16 %v4185, %v4177
        %v7194 = vpack.c.b16 %v4186, %v4178
        %v7195 = vpack.c.b16 %v4195, %v4187
        %v7196 = vpack.c.b16 %v4196, %v4188
        %v7197 = vpack.c.b16 %v4197, %v4189
        %v7198 = vpack.c.b16 %v4198, %v4190
        %v7199 = vpack.c.b16 %v4199, %v4191
        %v7200 = vpack.c.b16 %v4200, %v4192
        %v7201 = vpack.c.b16 %v4201, %v4193
        %v7202 = vpack.c.b16 %v4202, %v4194
        %v7203 = vpack.c.b16 %v4211, %v4203
        %v7204 = vpack.c.b16 %v4212, %v4204
        %v7205 = vpack.c.b16 %v4213, %v4205
        %v7206 = vpack.c.b16 %v4214, %v4206
        %v7207 = vpack.c.b16 %v4215, %v4207
        %v7208 = vpack.c.b16 %v4216, %v4208
        %v7209 = vpack.c.b16 %v4217, %v4209
        %v7210 = vpack.c.b16 %v4218, %v4210
        %v7211 = vpack.c.b16 %v4227, %v4219
        %v7212 = vpack.c.b16 %v4228, %v4220
        %v7213 = vpack.c.b16 %v4229, %v4221
        %v7214 = vpack.c.b16 %v4230, %v4222
        %v7215 = vpack.c.b16 %v4231, %v4223
        %v7216 = vpack.c.b16 %v4232, %v4224
        %v7217 = vpack.c.b16 %v4233, %v4225
        %v7218 = vpack.c.b16 %v4234, %v4226
        %v7219 = vpack.c.b16 %v4243, %v4235
        %v7220 = vpack.c.b16 %v4244, %v4236
        %v7221 = vpack.c.b16 %v4245, %v4237
        %v7222 = vpack.c.b16 %v4246, %v4238
        %v7223 = vpack.c.b16 %v4247, %v4239
        %v7224 = vpack.c.b16 %v4248, %v4240
        %v7225 = vpack.c.b16 %v4249, %v4241
        %v7226 = vpack.c.b16 %v4250, %v4242
        %v7227 = vpack.c.b16 %v4259, %v4251
        %v7228 = vpack.c.b16 %v4260, %v4252
        %v7229 = vpack.c.b16 %v4261, %v4253
        %v7230 = vpack.c.b16 %v4262, %v4254
        %v7231 = vpack.c.b16 %v4263, %v4255
        %v7232 = vpack.c.b16 %v4264, %v4256
        %v7233 = vpack.c.b16 %v4265, %v4257
        %v7234 = vpack.c.b16 %v4266, %v4258
        %v7235 = vpack.c.b16 %v4275, %v4267
        %v7236 = vpack.c.b16 %v4276, %v4268
        %v7237 = vpack.c.b16 %v4277, %v4269
        %v7238 = vpack.c.b16 %v4278, %v4270
        %v7239 = vpack.c.b16 %v4279, %v4271
        %v7240 = vpack.c.b16 %v4280, %v4272
        %v7241 = vpack.c.b16 %v4281, %v4273
        %v7242 = vpack.c.b16 %v4282, %v4274
        %v7243 = vpack.c.b16 %v4291, %v4283
        %v7244 = vpack.c.b16 %v4292, %v4284
        %v7245 = vpack.c.b16 %v4293, %v4285
        %v7246 = vpack.c.b16 %v4294, %v4286
        %v7247 = vpack.c.b16 %v4295, %v4287
        %v7248 = vpack.c.b16 %v4296, %v4288
        %v7249 = vpack.c.b16 %v4297, %v4289
        %v7250 = vpack.c.b16 %v4298, %v4290
        %v7251 = vpack.c.b16 %v4307, %v4299
        %v7252 = vpack.c.b16 %v4308, %v4300
        %v7253 = vpack.c.b16 %v4309, %v4301
        %v7254 = vpack.c.b16 %v4310, %v4302
        %v7255 = vpack.c.b16 %v4311, %v4303
        %v7256 = vpack.c.b16 %v4312, %v4304
        %v7257 = vpack.c.b16 %v4313, %v4305
        %v7258 = vpack.c.b16 %v4314, %v4306
        %v7259 = vpack.c.b16 %v4323, %v4315
        %v7260 = vpack.c.b16 %v4324, %v4316
        %v7261 = vpack.c.b16 %v4325, %v4317
        %v7262 = vpack.c.b16 %v4326, %v4318
        %v7263 = vpack.c.b16 %v4327, %v4319
        %v7264 = vpack.c.b16 %v4328, %v4320
        %v7265 = vpack.c.b16 %v4329, %v4321
        %v7266 = vpack.c.b16 %v4330, %v4322
        %v7267 = vpack.c.b16 %v4339, %v4331
        %v7268 = vpack.c.b16 %v4340, %v4332
        %v7269 = vpack.c.b16 %v4341, %v4333
        %v7270 = vpack.c.b16 %v4342, %v4334
        %v7271 = vpack.c.b16 %v4343, %v4335
        %v7272 = vpack.c.b16 %v4344, %v4336
        %v7273 = vpack.c.b16 %v4345, %v4337
        %v7274 = vpack.c.b16 %v4346, %v4338
        %v7275 = vpack.c.b16 %v4355, %v4347
        %v7276 = vpack.c.b16 %v4356, %v4348
        %v7277 = vpack.c.b16 %v4357, %v4349
        %v7278 = vpack.c.b16 %v4358, %v4350
        %v7279 = vpack.c.b16 %v4359, %v4351
        %v7280 = vpack.c.b16 %v4360, %v4352
        %v7281 = vpack.c.b16 %v4361, %v4353
        %v7282 = vpack.c.b16 %v4362, %v4354
        %v7283 = vpack.c.b16 %v4371, %v4363
        %v7284 = vpack.c.b16 %v4372, %v4364
        %v7285 = vpack.c.b16 %v4373, %v4365
        %v7286 = vpack.c.b16 %v4374, %v4366
        %v7287 = vpack.c.b16 %v4375, %v4367
        %v7288 = vpack.c.b16 %v4376, %v4368
        %v7289 = vpack.c.b16 %v4377, %v4369
        %v7290 = vpack.c.b16 %v4378, %v4370
        %v7291 = vpack.c.b16 %v4387, %v4379
        %v7292 = vpack.c.b16 %v4388, %v4380
        %v7293 = vpack.c.b16 %v4389, %v4381
        %v7294 = vpack.c.b16 %v4390, %v4382
        %v7295 = vpack.c.b16 %v4391, %v4383
        %v7296 = vpack.c.b16 %v4392, %v4384
        %v7297 = vpack.c.b16 %v4393, %v4385
        %v7298 = vpack.c.b16 %v4394, %v4386
        %v7299 = vpack.c.b16 %v4403, %v4395
        %v7300 = vpack.c.b16 %v4404, %v4396
        %v7301 = vpack.c.b16 %v4405, %v4397
        %v7302 = vpack.c.b16 %v4406, %v4398
        %v7303 = vpack.c.b16 %v4407, %v4399
        %v7304 = vpack.c.b16 %v4408, %v4400
        %v7305 = vpack.c.b16 %v4409, %v4401
        %v7306 = vpack.c.b16 %v4410, %v4402
        %v7307 = vpack.c.b16 %v4419, %v4411
        %v7308 = vpack.c.b16 %v4420, %v4412
        %v7309 = vpack.c.b16 %v4421, %v4413
        %v7310 = vpack.c.b16 %v4422, %v4414
        %v7311 = vpack.c.b16 %v4423, %v4415
        %v7312 = vpack.c.b16 %v4424, %v4416
        %v7313 = vpack.c.b16 %v4425, %v4417
        %v7314 = vpack.c.b16 %v4426, %v4418
        %v7315 = vpack.c.b16 %v4435, %v4427
        %v7316 = vpack.c.b16 %v4436, %v4428
        %v7317 = vpack.c.b16 %v4437, %v4429
        %v7318 = vpack.c.b16 %v4438, %v4430
        %v7319 = vpack.c.b16 %v4439, %v4431
        %v7320 = vpack.c.b16 %v4440, %v4432
        %v7321 = vpack.c.b16 %v4441, %v4433
        %v7322 = vpack.c.b16 %v4442, %v4434
        %v7323 = vpack.c.b16 %v4451, %v4443
        %v7324 = vpack.c.b16 %v4452, %v4444
        %v7325 = vpack.c.b16 %v4453, %v4445
        %v7326 = vpack.c.b16 %v4454, %v4446
        %v7327 = vpack.c.b16 %v4455, %v4447
        %v7328 = vpack.c.b16 %v4456, %v4448
        %v7329 = vpack.c.b16 %v4457, %v4449
        %v7330 = vpack.c.b16 %v4458, %v4450
        %v7331 = vpack.c.b16 %v4467, %v4459
        %v7332 = vpack.c.b16 %v4468, %v4460
        %v7333 = vpack.c.b16 %v4469, %v4461
        %v7334 = vpack.c.b16 %v4470, %v4462
        %v7335 = vpack.c.b16 %v4471, %v4463
        %v7336 = vpack.c.b16 %v4472, %v4464
        %v7337 = vpack.c.b16 %v4473, %v4465
        %v7338 = vpack.c.b16 %v4474, %v4466
        %v7339 = vpack.c.b16 %v4483, %v4475
        %v7340 = vpack.c.b16 %v4484, %v4476
        %v7341 = vpack.c.b16 %v4485, %v4477
        %v7342 = vpack.c.b16 %v4486, %v4478
        %v7343 = vpack.c.b16 %v4487, %v4479
        %v7344 = vpack.c.b16 %v4488, %v4480
        %v7345 = vpack.c.b16 %v4489, %v4481
        %v7346 = vpack.c.b16 %v4490, %v4482
        %v7347 = vpack.c.b16 %v4499, %v4491
        %v7348 = vpack.c.b16 %v4500, %v4492
        %v7349 = vpack.c.b16 %v4501, %v4493
        %v7350 = vpack.c.b16 %v4502, %v4494
        %v7351 = vpack.c.b16 %v4503, %v4495
        %v7352 = vpack.c.b16 %v4504, %v4496
        %v7353 = vpack.c.b16 %v4505, %v4497
        %v7354 = vpack.c.b16 %v4506, %v4498
        %v7355 = vpack.c.b16 %v4515, %v4507
        %v7356 = vpack.c.b16 %v4516, %v4508
        %v7357 = vpack.c.b16 %v4517, %v4509
        %v7358 = vpack.c.b16 %v4518, %v4510
        %v7359 = vpack.c.b16 %v4519, %v4511
        %v7360 = vpack.c.b16 %v4520, %v4512
        %v7361 = vpack.c.b16 %v4521, %v4513
        %v7362 = vpack.c.b16 %v4522, %v4514
        %v7363 = vpack.c.b16 %v4531, %v4523
        %v7364 = vpack.c.b16 %v4532, %v4524
        %v7365 = vpack.c.b16 %v4533, %v4525
        %v7366 = vpack.c.b16 %v4534, %v4526
        %v7367 = vpack.c.b16 %v4535, %v4527
        %v7368 = vpack.c.b16 %v4536, %v4528
        %v7369 = vpack.c.b16 %v4537, %v4529
        %v7370 = vpack.c.b16 %v4538, %v4530
        %v7371 = vpack.c.b16 %v4547, %v4539
        %v7372 = vpack.c.b16 %v4548, %v4540
        %v7373 = vpack.c.b16 %v4549, %v4541
        %v7374 = vpack.c.b16 %v4550, %v4542
        %v7375 = vpack.c.b16 %v4551, %v4543
        %v7376 = vpack.c.b16 %v4552, %v4544
        %v7377 = vpack.c.b16 %v4553, %v4545
        %v7378 = vpack.c.b16 %v4554, %v4546
        %v7379 = vpack.c.b16 %v4563, %v4555
        %v7380 = vpack.c.b16 %v4564, %v4556
        %v7381 = vpack.c.b16 %v4565, %v4557
        %v7382 = vpack.c.b16 %v4566, %v4558
        %v7383 = vpack.c.b16 %v4567, %v4559
        %v7384 = vpack.c.b16 %v4568, %v4560
        %v7385 = vpack.c.b16 %v4569, %v4561
        %v7386 = vpack.c.b16 %v4570, %v4562
        %v7387 = vpack.c.b16 %v4579, %v4571
        %v7388 = vpack.c.b16 %v4580, %v4572
        %v7389 = vpack.c.b16 %v4581, %v4573
        %v7390 = vpack.c.b16 %v4582, %v4574
        %v7391 = vpack.c.b16 %v4583, %v4575
        %v7392 = vpack.c.b16 %v4584, %v4576
        %v7393 = vpack.c.b16 %v4585, %v4577
        %v7394 = vpack.c.b16 %v4586, %v4578
        %v7395 = vpack.c.b16 %v4595, %v4587
        %v7396 = vpack.c.b16 %v4596, %v4588
        %v7397 = vpack.c.b16 %v4597, %v4589
        %v7398 = vpack.c.b16 %v4598, %v4590
        %v7399 = vpack.c.b16 %v4599, %v4591
        %v7400 = vpack.c.b16 %v4600, %v4592
        %v7401 = vpack.c.b16 %v4601, %v4593
        %v7402 = vpack.c.b16 %v4602, %v4594
        %v7403 = vpack.c.b16 %v4611, %v4603
        %v7404 = vpack.c.b16 %v4612, %v4604
        %v7405 = vpack.c.b16 %v4613, %v4605
        %v7406 = vpack.c.b16 %v4614, %v4606
        %v7407 = vpack.c.b16 %v4615, %v4607
        %v7408 = vpack.c.b16 %v4616, %v4608
        %v7409 = vpack.c.b16 %v4617, %v4609
        %v7410 = vpack.c.b16 %v4618, %v4610
        %v7411 = vpack.c.b16 %v4627, %v4619
        %v7412 = vpack.c.b16 %v4628, %v4620
        %v7413 = vpack.c.b16 %v4629, %v4621
        %v7414 = vpack.c.b16 %v4630, %v4622
        %v7415 = vpack.c.b16 %v4631, %v4623
        %v7416 = vpack.c.b16 %v4632, %v4624
        %v7417 = vpack.c.b16 %v4633, %v4625
        %v7418 = vpack.c.b16 %v4634, %v4626
        %v7419 = vpack.c.b16 %v4643, %v4635
        %v7420 = vpack.c.b16 %v4644, %v4636
        %v7421 = vpack.c.b16 %v4645, %v4637
        %v7422 = vpack.c.b16 %v4646, %v4638
        %v7423 = vpack.c.b16 %v4647, %v4639
        %v7424 = vpack.c.b16 %v4648, %v4640
        %v7425 = vpack.c.b16 %v4649, %v4641
        %v7426 = vpack.c.b16 %v4650, %v4642
        %v7427 = vpack.c.b16 %v4659, %v4651
        %v7428 = vpack.c.b16 %v4660, %v4652
        %v7429 = vpack.c.b16 %v4661, %v4653
        %v7430 = vpack.c.b16 %v4662, %v4654
        %v7431 = vpack.c.b16 %v4663, %v4655
        %v7432 = vpack.c.b16 %v4664, %v4656
        %v7433 = vpack.c.b16 %v4665, %v4657
        %v7434 = vpack.c.b16 %v4666, %v4658
        %v7435 = vpack.c.b16 %v4675, %v4667
        %v7436 = vpack.c.b16 %v4676, %v4668
        %v7437 = vpack.c.b16 %v4677, %v4669
        %v7438 = vpack.c.b16 %v4678, %v4670
        %v7439 = vpack.c.b16 %v4679, %v4671
        %v7440 = vpack.c.b16 %v4680, %v4672
        %v7441 = vpack.c.b16 %v4681, %v4673
        %v7442 = vpack.c.b16 %v4682, %v4674
        %v7443 = vpack.c.b16 %v4691, %v4683
        %v7444 = vpack.c.b16 %v4692, %v4684
        %v7445 = vpack.c.b16 %v4693, %v4685
        %v7446 = vpack.c.b16 %v4694, %v4686
        %v7447 = vpack.c.b16 %v4695, %v4687
        %v7448 = vpack.c.b16 %v4696, %v4688
        %v7449 = vpack.c.b16 %v4697, %v4689
        %v7450 = vpack.c.b16 %v4698, %v4690
        %v7451 = vpack.c.b16 %v4707, %v4699
        %v7452 = vpack.c.b16 %v4708, %v4700
        %v7453 = vpack.c.b16 %v4709, %v4701
        %v7454 = vpack.c.b16 %v4710, %v4702
        %v7455 = vpack.c.b16 %v4711, %v4703
        %v7456 = vpack.c.b16 %v4712, %v4704
        %v7457 = vpack.c.b16 %v4713, %v4705
        %v7458 = vpack.c.b16 %v4714, %v4706
        %v7459 = vpack.c.b16 %v4723, %v4715
        %v7460 = vpack.c.b16 %v4724, %v4716
        %v7461 = vpack.c.b16 %v4725, %v4717
        %v7462 = vpack.c.b16 %v4726, %v4718
        %v7463 = vpack.c.b16 %v4727, %v4719
        %v7464 = vpack.c.b16 %v4728, %v4720
        %v7465 = vpack.c.b16 %v4729, %v4721
        %v7466 = vpack.c.b16 %v4730, %v4722
        %v7467 = vpack.c.b16 %v4739, %v4731
        %v7468 = vpack.c.b16 %v4740, %v4732
        %v7469 = vpack.c.b16 %v4741, %v4733
        %v7470 = vpack.c.b16 %v4742, %v4734
        %v7471 = vpack.c.b16 %v4743, %v4735
        %v7472 = vpack.c.b16 %v4744, %v4736
        %v7473 = vpack.c.b16 %v4745, %v4737
        %v7474 = vpack.c.b16 %v4746, %v4738
        %v7475 = vpack.c.b16 %v4755, %v4747
        %v7476 = vpack.c.b16 %v4756, %v4748
        %v7477 = vpack.c.b16 %v4757, %v4749
        %v7478 = vpack.c.b16 %v4758, %v4750
        %v7479 = vpack.c.b16 %v4759, %v4751
        %v7480 = vpack.c.b16 %v4760, %v4752
        %v7481 = vpack.c.b16 %v4761, %v4753
        %v7482 = vpack.c.b16 %v4762, %v4754
        %v7483 = vpack.c.b16 %v4771, %v4763
        %v7484 = vpack.c.b16 %v4772, %v4764
        %v7485 = vpack.c.b16 %v4773, %v4765
        %v7486 = vpack.c.b16 %v4774, %v4766
        %v7487 = vpack.c.b16 %v4775, %v4767
        %v7488 = vpack.c.b16 %v4776, %v4768
        %v7489 = vpack.c.b16 %v4777, %v4769
        %v7490 = vpack.c.b16 %v4778, %v4770
        %v7491 = vpack.c.b16 %v4787, %v4779
        %v7492 = vpack.c.b16 %v4788, %v4780
        %v7493 = vpack.c.b16 %v4789, %v4781
        %v7494 = vpack.c.b16 %v4790, %v4782
        %v7495 = vpack.c.b16 %v4791, %v4783
        %v7496 = vpack.c.b16 %v4792, %v4784
        %v7497 = vpack.c.b16 %v4793, %v4785
        %v7498 = vpack.c.b16 %v4794, %v4786
        %v7499 = vpack.c.b16 %v4803, %v4795
        %v7500 = vpack.c.b16 %v4804, %v4796
        %v7501 = vpack.c.b16 %v4805, %v4797
        %v7502 = vpack.c.b16 %v4806, %v4798
        %v7503 = vpack.c.b16 %v4807, %v4799
        %v7504 = vpack.c.b16 %v4808, %v4800
        %v7505 = vpack.c.b16 %v4809, %v4801
        %v7506 = vpack.c.b16 %v4810, %v4802
        %v7507 = vpack.c.b16 %v4819, %v4811
        %v7508 = vpack.c.b16 %v4820, %v4812
        %v7509 = vpack.c.b16 %v4821, %v4813
        %v7510 = vpack.c.b16 %v4822, %v4814
        %v7511 = vpack.c.b16 %v4823, %v4815
        %v7512 = vpack.c.b16 %v4824, %v4816
        %v7513 = vpack.c.b16 %v4825, %v4817
        %v7514 = vpack.c.b16 %v4826, %v4818
        %v7515 = vpack.c.b16 %v4835, %v4827
        %v7516 = vpack.c.b16 %v4836, %v4828
        %v7517 = vpack.c.b16 %v4837, %v4829
        %v7518 = vpack.c.b16 %v4838, %v4830
        %v7519 = vpack.c.b16 %v4839, %v4831
        %v7520 = vpack.c.b16 %v4840, %v4832
        %v7521 = vpack.c.b16 %v4841, %v4833
        %v7522 = vpack.c.b16 %v4842, %v4834
        %v7523 = vpack.c.b16 %v4851, %v4843
        %v7524 = vpack.c.b16 %v4852, %v4844
        %v7525 = vpack.c.b16 %v4853, %v4845
        %v7526 = vpack.c.b16 %v4854, %v4846
        %v7527 = vpack.c.b16 %v4855, %v4847
        %v7528 = vpack.c.b16 %v4856, %v4848
        %v7529 = vpack.c.b16 %v4857, %v4849
        %v7530 = vpack.c.b16 %v4858, %v4850
        %v7531 = vpack.c.b16 %v4867, %v4859
        %v7532 = vpack.c.b16 %v4868, %v4860
        %v7533 = vpack.c.b16 %v4869, %v4861
        %v7534 = vpack.c.b16 %v4870, %v4862
        %v7535 = vpack.c.b16 %v4871, %v4863
        %v7536 = vpack.c.b16 %v4872, %v4864
        %v7537 = vpack.c.b16 %v4873, %v4865
        %v7538 = vpack.c.b16 %v4874, %v4866
        %v7539 = vpack.c.b16 %v4883, %v4875
        %v7540 = vpack.c.b16 %v4884, %v4876
        %v7541 = vpack.c.b16 %v4885, %v4877
        %v7542 = vpack.c.b16 %v4886, %v4878
        %v7543 = vpack.c.b16 %v4887, %v4879
        %v7544 = vpack.c.b16 %v4888, %v4880
        %v7545 = vpack.c.b16 %v4889, %v4881
        %v7546 = vpack.c.b16 %v4890, %v4882
        %v7547 = vpack.c.b16 %v4899, %v4891
        %v7548 = vpack.c.b16 %v4900, %v4892
        %v7549 = vpack.c.b16 %v4901, %v4893
        %v7550 = vpack.c.b16 %v4902, %v4894
        %v7551 = vpack.c.b16 %v4903, %v4895
        %v7552 = vpack.c.b16 %v4904, %v4896
        %v7553 = vpack.c.b16 %v4905, %v4897
        %v7554 = vpack.c.b16 %v4906, %v4898
        %v7555 = vpack.c.b16 %v4915, %v4907
        %v7556 = vpack.c.b16 %v4916, %v4908
        %v7557 = vpack.c.b16 %v4917, %v4909
        %v7558 = vpack.c.b16 %v4918, %v4910
        %v7559 = vpack.c.b16 %v4919, %v4911
        %v7560 = vpack.c.b16 %v4920, %v4912
        %v7561 = vpack.c.b16 %v4921, %v4913
        %v7562 = vpack.c.b16 %v4922, %v4914
        %v7563 = vpack.c.b16 %v4931, %v4923
        %v7564 = vpack.c.b16 %v4932, %v4924
        %v7565 = vpack.c.b16 %v4933, %v4925
        %v7566 = vpack.c.b16 %v4934, %v4926
        %v7567 = vpack.c.b16 %v4935, %v4927
        %v7568 = vpack.c.b16 %v4936, %v4928
        %v7569 = vpack.c.b16 %v4937, %v4929
        %v7570 = vpack.c.b16 %v4938, %v4930
        %v7571 = vpack.c.b16 %v4947, %v4939
        %v7572 = vpack.c.b16 %v4948, %v4940
        %v7573 = vpack.c.b16 %v4949, %v4941
        %v7574 = vpack.c.b16 %v4950, %v4942
        %v7575 = vpack.c.b16 %v4951, %v4943
        %v7576 = vpack.c.b16 %v4952, %v4944
        %v7577 = vpack.c.b16 %v4953, %v4945
        %v7578 = vpack.c.b16 %v4954, %v4946
        %v7579 = vpack.c.b16 %v4963, %v4955
        %v7580 = vpack.c.b16 %v4964, %v4956
        %v7581 = vpack.c.b16 %v4965, %v4957
        %v7582 = vpack.c.b16 %v4966, %v4958
        %v7583 = vpack.c.b16 %v4967, %v4959
        %v7584 = vpack.c.b16 %v4968, %v4960
        %v7585 = vpack.c.b16 %v4969, %v4961
        %v7586 = vpack.c.b16 %v4970, %v4962
        %v7587 = vpack.c.b16 %v4979, %v4971
        %v7588 = vpack.c.b16 %v4980, %v4972
        %v7589 = vpack.c.b16 %v4981, %v4973
        %v7590 = vpack.c.b16 %v4982, %v4974
        %v7591 = vpack.c.b16 %v4983, %v4975
        %v7592 = vpack.c.b16 %v4984, %v4976
        %v7593 = vpack.c.b16 %v4985, %v4977
        %v7594 = vpack.c.b16 %v4986, %v4978
        %v7595 = vpack.c.b16 %v4995, %v4987
        %v7596 = vpack.c.b16 %v4996, %v4988
        %v7597 = vpack.c.b16 %v4997, %v4989
        %v7598 = vpack.c.b16 %v4998, %v4990
        %v7599 = vpack.c.b16 %v4999, %v4991
        %v7600 = vpack.c.b16 %v5000, %v4992
        %v7601 = vpack.c.b16 %v5001, %v4993
        %v7602 = vpack.c.b16 %v5002, %v4994
        %v7603 = vpack.c.b16 %v5011, %v5003
        %v7604 = vpack.c.b16 %v5012, %v5004
        %v7605 = vpack.c.b16 %v5013, %v5005
        %v7606 = vpack.c.b16 %v5014, %v5006
        %v7607 = vpack.c.b16 %v5015, %v5007
        %v7608 = vpack.c.b16 %v5016, %v5008
        %v7609 = vpack.c.b16 %v5017, %v5009
        %v7610 = vpack.c.b16 %v5018, %v5010
        %v7611 = vpack.c.b16 %v5027, %v5019
        %v7612 = vpack.c.b16 %v5028, %v5020
        %v7613 = vpack.c.b16 %v5029, %v5021
        %v7614 = vpack.c.b16 %v5030, %v5022
        %v7615 = vpack.c.b16 %v5031, %v5023
        %v7616 = vpack.c.b16 %v5032, %v5024
        %v7617 = vpack.c.b16 %v5033, %v5025
        %v7618 = vpack.c.b16 %v5034, %v5026
        %v7619 = vpack.c.b16 %v5043, %v5035
        %v7620 = vpack.c.b16 %v5044, %v5036
        %v7621 = vpack.c.b16 %v5045, %v5037
        %v7622 = vpack.c.b16 %v5046, %v5038
        %v7623 = vpack.c.b16 %v5047, %v5039
        %v7624 = vpack.c.b16 %v5048, %v5040
        %v7625 = vpack.c.b16 %v5049, %v5041
        %v7626 = vpack.c.b16 %v5050, %v5042
        %v7627 = vpack.c.b16 %v5059, %v5051
        %v7628 = vpack.c.b16 %v5060, %v5052
        %v7629 = vpack.c.b16 %v5061, %v5053
        %v7630 = vpack.c.b16 %v5062, %v5054
        %v7631 = vpack.c.b16 %v5063, %v5055
        %v7632 = vpack.c.b16 %v5064, %v5056
        %v7633 = vpack.c.b16 %v5065, %v5057
        %v7634 = vpack.c.b16 %v5066, %v5058
        %v7635 = vpack.c.b16 %v5075, %v5067
        %v7636 = vpack.c.b16 %v5076, %v5068
        %v7637 = vpack.c.b16 %v5077, %v5069
        %v7638 = vpack.c.b16 %v5078, %v5070
        %v7639 = vpack.c.b16 %v5079, %v5071
        %v7640 = vpack.c.b16 %v5080, %v5072
        %v7641 = vpack.c.b16 %v5081, %v5073
        %v7642 = vpack.c.b16 %v5082, %v5074
        %v7643 = vpack.c.b16 %v5091, %v5083
        %v7644 = vpack.c.b16 %v5092, %v5084
        %v7645 = vpack.c.b16 %v5093, %v5085
        %v7646 = vpack.c.b16 %v5094, %v5086
        %v7647 = vpack.c.b16 %v5095, %v5087
        %v7648 = vpack.c.b16 %v5096, %v5088
        %v7649 = vpack.c.b16 %v5097, %v5089
        %v7650 = vpack.c.b16 %v5098, %v5090
        %v7651 = vpack.c.b16 %v5107, %v5099
        %v7652 = vpack.c.b16 %v5108, %v5100
        %v7653 = vpack.c.b16 %v5109, %v5101
        %v7654 = vpack.c.b16 %v5110, %v5102
        %v7655 = vpack.c.b16 %v5111, %v5103
        %v7656 = vpack.c.b16 %v5112, %v5104
        %v7657 = vpack.c.b16 %v5113, %v5105
        %v7658 = vpack.c.b16 %v5114, %v5106
        %v7659 = vpack.c.b16 %v5123, %v5115
        %v7660 = vpack.c.b16 %v5124, %v5116
        %v7661 = vpack.c.b16 %v5125, %v5117
        %v7662 = vpack.c.b16 %v5126, %v5118
        %v7663 = vpack.c.b16 %v5127, %v5119
        %v7664 = vpack.c.b16 %v5128, %v5120
        %v7665 = vpack.c.b16 %v5129, %v5121
        %v7666 = vpack.c.b16 %v5130, %v5122
        %v7667 = vpack.c.b16 %v5139, %v5131
        %v7668 = vpack.c.b16 %v5140, %v5132
        %v7669 = vpack.c.b16 %v5141, %v5133
        %v7670 = vpack.c.b16 %v5142, %v5134
        %v7671 = vpack.c.b16 %v5143, %v5135
        %v7672 = vpack.c.b16 %v5144, %v5136
        %v7673 = vpack.c.b16 %v5145, %v5137
        %v7674 = vpack.c.b16 %v5146, %v5138
        %v7675 = vpack.c.b16 %v5155, %v5147
        %v7676 = vpack.c.b16 %v5156, %v5148
        %v7677 = vpack.c.b16 %v5157, %v5149
        %v7678 = vpack.c.b16 %v5158, %v5150
        %v7679 = vpack.c.b16 %v5159, %v5151
        %v7680 = vpack.c.b16 %v5160, %v5152
        %v7681 = vpack.c.b16 %v5161, %v5153
        %v7682 = vpack.c.b16 %v5162, %v5154
        %v7683 = vpack.c.b16 %v5171, %v5163
        %v7684 = vpack.c.b16 %v5172, %v5164
        %v7685 = vpack.c.b16 %v5173, %v5165
        %v7686 = vpack.c.b16 %v5174, %v5166
        %v7687 = vpack.c.b16 %v5175, %v5167
        %v7688 = vpack.c.b16 %v5176, %v5168
        %v7689 = vpack.c.b16 %v5177, %v5169
        %v7690 = vpack.c.b16 %v5178, %v5170
        %v7691 = vpack.c.b16 %v5187, %v5179
        %v7692 = vpack.c.b16 %v5188, %v5180
        %v7693 = vpack.c.b16 %v5189, %v5181
        %v7694 = vpack.c.b16 %v5190, %v5182
        %v7695 = vpack.c.b16 %v5191, %v5183
        %v7696 = vpack.c.b16 %v5192, %v5184
        %v7697 = vpack.c.b16 %v5193, %v5185
        %v7698 = vpack.c.b16 %v5194, %v5186
        %v7699 = vpack.c.b16 %v5203, %v5195
        %v7700 = vpack.c.b16 %v5204, %v5196
        %v7701 = vpack.c.b16 %v5205, %v5197
        %v7702 = vpack.c.b16 %v5206, %v5198
        %v7703 = vpack.c.b16 %v5207, %v5199
        %v7704 = vpack.c.b16 %v5208, %v5200
        %v7705 = vpack.c.b16 %v5209, %v5201
        %v7706 = vpack.c.b16 %v5210, %v5202
        %v7707 = vpack.c.b16 %v5219, %v5211
        %v7708 = vpack.c.b16 %v5220, %v5212
        %v7709 = vpack.c.b16 %v5221, %v5213
        %v7710 = vpack.c.b16 %v5222, %v5214
        %v7711 = vpack.c.b16 %v5223, %v5215
        %v7712 = vpack.c.b16 %v5224, %v5216
        %v7713 = vpack.c.b16 %v5225, %v5217
        %v7714 = vpack.c.b16 %v5226, %v5218
        %v7715 = vpack.c.b16 %v5235, %v5227
        %v7716 = vpack.c.b16 %v5236, %v5228
        %v7717 = vpack.c.b16 %v5237, %v5229
        %v7718 = vpack.c.b16 %v5238, %v5230
        %v7719 = vpack.c.b16 %v5239, %v5231
        %v7720 = vpack.c.b16 %v5240, %v5232
        %v7721 = vpack.c.b16 %v5241, %v5233
        %v7722 = vpack.c.b16 %v5242, %v5234
        %v7723 = vpack.c.b16 %v5251, %v5243
        %v7724 = vpack.c.b16 %v5252, %v5244
        %v7725 = vpack.c.b16 %v5253, %v5245
        %v7726 = vpack.c.b16 %v5254, %v5246
        %v7727 = vpack.c.b16 %v5255, %v5247
        %v7728 = vpack.c.b16 %v5256, %v5248
        %v7729 = vpack.c.b16 %v5257, %v5249
        %v7730 = vpack.c.b16 %v5258, %v5250
        %v7731 = vpack.c.b16 %v5267, %v5259
        %v7732 = vpack.c.b16 %v5268, %v5260
        %v7733 = vpack.c.b16 %v5269, %v5261
        %v7734 = vpack.c.b16 %v5270, %v5262
        %v7735 = vpack.c.b16 %v5271, %v5263
        %v7736 = vpack.c.b16 %v5272, %v5264
        %v7737 = vpack.c.b16 %v5273, %v5265
        %v7738 = vpack.c.b16 %v5274, %v5266
        %v7739 = vpack.c.b16 %v5283, %v5275
        %v7740 = vpack.c.b16 %v5284, %v5276
        %v7741 = vpack.c.b16 %v5285, %v5277
        %v7742 = vpack.c.b16 %v5286, %v5278
        %v7743 = vpack.c.b16 %v5287, %v5279
        %v7744 = vpack.c.b16 %v5288, %v5280
        %v7745 = vpack.c.b16 %v5289, %v5281
        %v7746 = vpack.c.b16 %v5290, %v5282
        %v7747 = vpack.c.b16 %v5299, %v5291
        %v7748 = vpack.c.b16 %v5300, %v5292
        %v7749 = vpack.c.b16 %v5301, %v5293
        %v7750 = vpack.c.b16 %v5302, %v5294
        %v7751 = vpack.c.b16 %v5303, %v5295
        %v7752 = vpack.c.b16 %v5304, %v5296
        %v7753 = vpack.c.b16 %v5305, %v5297
        %v7754 = vpack.c.b16 %v5306, %v5298
        %v7755 = vpack.c.b16 %v5315, %v5307
        %v7756 = vpack.c.b16 %v5316, %v5308
        %v7757 = vpack.c.b16 %v5317, %v5309
        %v7758 = vpack.c.b16 %v5318, %v5310
        %v7759 = vpack.c.b16 %v5319, %v5311
        %v7760 = vpack.c.b16 %v5320, %v5312
        %v7761 = vpack.c.b16 %v5321, %v5313
        %v7762 = vpack.c.b16 %v5322, %v5314
        %v7763 = vpack.c.b16 %v5331, %v5323
        %v7764 = vpack.c.b16 %v5332, %v5324
        %v7765 = vpack.c.b16 %v5333, %v5325
        %v7766 = vpack.c.b16 %v5334, %v5326
        %v7767 = vpack.c.b16 %v5335, %v5327
        %v7768 = vpack.c.b16 %v5336, %v5328
        %v7769 = vpack.c.b16 %v5337, %v5329
        %v7770 = vpack.c.b16 %v5338, %v5330
        %v7771 = vpack.c.b16 %v5347, %v5339
        %v7772 = vpack.c.b16 %v5348, %v5340
        %v7773 = vpack.c.b16 %v5349, %v5341
        %v7774 = vpack.c.b16 %v5350, %v5342
        %v7775 = vpack.c.b16 %v5351, %v5343
        %v7776 = vpack.c.b16 %v5352, %v5344
        %v7777 = vpack.c.b16 %v5353, %v5345
        %v7778 = vpack.c.b16 %v5354, %v5346
        %v7779 = vpack.c.b16 %v5363, %v5355
        %v7780 = vpack.c.b16 %v5364, %v5356
        %v7781 = vpack.c.b16 %v5365, %v5357
        %v7782 = vpack.c.b16 %v5366, %v5358
        %v7783 = vpack.c.b16 %v5367, %v5359
        %v7784 = vpack.c.b16 %v5368, %v5360
        %v7785 = vpack.c.b16 %v5369, %v5361
        %v7786 = vpack.c.b16 %v5370, %v5362
        %v7787 = vpack.c.b16 %v5379, %v5371
        %v7788 = vpack.c.b16 %v5380, %v5372
        %v7789 = vpack.c.b16 %v5381, %v5373
        %v7790 = vpack.c.b16 %v5382, %v5374
        %v7791 = vpack.c.b16 %v5383, %v5375
        %v7792 = vpack.c.b16 %v5384, %v5376
        %v7793 = vpack.c.b16 %v5385, %v5377
        %v7794 = vpack.c.b16 %v5386, %v5378
        %v7795 = vpack.c.b16 %v5395, %v5387
        %v7796 = vpack.c.b16 %v5396, %v5388
        %v7797 = vpack.c.b16 %v5397, %v5389
        %v7798 = vpack.c.b16 %v5398, %v5390
        %v7799 = vpack.c.b16 %v5399, %v5391
        %v7800 = vpack.c.b16 %v5400, %v5392
        %v7801 = vpack.c.b16 %v5401, %v5393
        %v7802 = vpack.c.b16 %v5402, %v5394
        %v7803 = vpack.c.b16 %v5411, %v5403
        %v7804 = vpack.c.b16 %v5412, %v5404
        %v7805 = vpack.c.b16 %v5413, %v5405
        %v7806 = vpack.c.b16 %v5414, %v5406
        %v7807 = vpack.c.b16 %v5415, %v5407
        %v7808 = vpack.c.b16 %v5416, %v5408
        %v7809 = vpack.c.b16 %v5417, %v5409
        %v7810 = vpack.c.b16 %v5418, %v5410
        %v7811 = vpack.c.b16 %v5427, %v5419
        %v7812 = vpack.c.b16 %v5428, %v5420
        %v7813 = vpack.c.b16 %v5429, %v5421
        %v7814 = vpack.c.b16 %v5430, %v5422
        %v7815 = vpack.c.b16 %v5431, %v5423
        %v7816 = vpack.c.b16 %v5432, %v5424
        %v7817 = vpack.c.b16 %v5433, %v5425
        %v7818 = vpack.c.b16 %v5434, %v5426
        %v7819 = vpack.c.b16 %v5443, %v5435
        %v7820 = vpack.c.b16 %v5444, %v5436
        %v7821 = vpack.c.b16 %v5445, %v5437
        %v7822 = vpack.c.b16 %v5446, %v5438
        %v7823 = vpack.c.b16 %v5447, %v5439
        %v7824 = vpack.c.b16 %v5448, %v5440
        %v7825 = vpack.c.b16 %v5449, %v5441
        %v7826 = vpack.c.b16 %v5450, %v5442
        %v7827 = vpack.c.b16 %v5459, %v5451
        %v7828 = vpack.c.b16 %v5460, %v5452
        %v7829 = vpack.c.b16 %v5461, %v5453
        %v7830 = vpack.c.b16 %v5462, %v5454
        %v7831 = vpack.c.b16 %v5463, %v5455
        %v7832 = vpack.c.b16 %v5464, %v5456
        %v7833 = vpack.c.b16 %v5465, %v5457
        %v7834 = vpack.c.b16 %v5466, %v5458
        %v7835 = vpack.c.b16 %v5475, %v5467
        %v7836 = vpack.c.b16 %v5476, %v5468
        %v7837 = vpack.c.b16 %v5477, %v5469
        %v7838 = vpack.c.b16 %v5478, %v5470
        %v7839 = vpack.c.b16 %v5479, %v5471
        %v7840 = vpack.c.b16 %v5480, %v5472
        %v7841 = vpack.c.b16 %v5481, %v5473
        %v7842 = vpack.c.b16 %v5482, %v5474
        %v7843 = vpack.c.b16 %v5491, %v5483
        %v7844 = vpack.c.b16 %v5492, %v5484
        %v7845 = vpack.c.b16 %v5493, %v5485
        %v7846 = vpack.c.b16 %v5494, %v5486
        %v7847 = vpack.c.b16 %v5495, %v5487
        %v7848 = vpack.c.b16 %v5496, %v5488
        %v7849 = vpack.c.b16 %v5497, %v5489
        %v7850 = vpack.c.b16 %v5498, %v5490
        %v7851 = vpack.c.b16 %v5507, %v5499
        %v7852 = vpack.c.b16 %v5508, %v5500
        %v7853 = vpack.c.b16 %v5509, %v5501
        %v7854 = vpack.c.b16 %v5510, %v5502
        %v7855 = vpack.c.b16 %v5511, %v5503
        %v7856 = vpack.c.b16 %v5512, %v5504
        %v7857 = vpack.c.b16 %v5513, %v5505
        %v7858 = vpack.c.b16 %v5514, %v5506
        %v7859 = vpack.c.b16 %v5523, %v5515
        %v7860 = vpack.c.b16 %v5524, %v5516
        %v7861 = vpack.c.b16 %v5525, %v5517
        %v7862 = vpack.c.b16 %v5526, %v5518
        %v7863 = vpack.c.b16 %v5527, %v5519
        %v7864 = vpack.c.b16 %v5528, %v5520
        %v7865 = vpack.c.b16 %v5529, %v5521
        %v7866 = vpack.c.b16 %v5530, %v5522
        %v7867 = vpack.c.b16 %v5539, %v5531
        %v7868 = vpack.c.b16 %v5540, %v5532
        %v7869 = vpack.c.b16 %v5541, %v5533
        %v7870 = vpack.c.b16 %v5542, %v5534
        %v7871 = vpack.c.b16 %v5543, %v5535
        %v7872 = vpack.c.b16 %v5544, %v5536
        %v7873 = vpack.c.b16 %v5545, %v5537
        %v7874 = vpack.c.b16 %v5546, %v5538
        %v7875 = vpack.c.b16 %v5555, %v5547
        %v7876 = vpack.c.b16 %v5556, %v5548
        %v7877 = vpack.c.b16 %v5557, %v5549
        %v7878 = vpack.c.b16 %v5558, %v5550
        %v7879 = vpack.c.b16 %v5559, %v5551
        %v7880 = vpack.c.b16 %v5560, %v5552
        %v7881 = vpack.c.b16 %v5561, %v5553
        %v7882 = vpack.c.b16 %v5562, %v5554
        %v7883 = vpack.c.b16 %v5571, %v5563
        %v7884 = vpack.c.b16 %v5572, %v5564
        %v7885 = vpack.c.b16 %v5573, %v5565
        %v7886 = vpack.c.b16 %v5574, %v5566
        %v7887 = vpack.c.b16 %v5575, %v5567
        %v7888 = vpack.c.b16 %v5576, %v5568
        %v7889 = vpack.c.b16 %v5577, %v5569
        %v7890 = vpack.c.b16 %v5578, %v5570
        %v7891 = vpack.c.b16 %v5587, %v5579
        %v7892 = vpack.c.b16 %v5588, %v5580
        %v7893 = vpack.c.b16 %v5589, %v5581
        %v7894 = vpack.c.b16 %v5590, %v5582
        %v7895 = vpack.c.b16 %v5591, %v5583
        %v7896 = vpack.c.b16 %v5592, %v5584
        %v7897 = vpack.c.b16 %v5593, %v5585
        %v7898 = vpack.c.b16 %v5594, %v5586
        %v7899 = vpack.c.b16 %v5603, %v5595
        %v7900 = vpack.c.b16 %v5604, %v5596
        %v7901 = vpack.c.b16 %v5605, %v5597
        %v7902 = vpack.c.b16 %v5606, %v5598
        %v7903 = vpack.c.b16 %v5607, %v5599
        %v7904 = vpack.c.b16 %v5608, %v5600
        %v7905 = vpack.c.b16 %v5609, %v5601
        %v7906 = vpack.c.b16 %v5610, %v5602
        %v7907 = vpack.c.b16 %v5619, %v5611
        %v7908 = vpack.c.b16 %v5620, %v5612
        %v7909 = vpack.c.b16 %v5621, %v5613
        %v7910 = vpack.c.b16 %v5622, %v5614
        %v7911 = vpack.c.b16 %v5623, %v5615
        %v7912 = vpack.c.b16 %v5624, %v5616
        %v7913 = vpack.c.b16 %v5625, %v5617
        %v7914 = vpack.c.b16 %v5626, %v5618
        %v7915 = vpack.c.b16 %v5635, %v5627
        %v7916 = vpack.c.b16 %v5636, %v5628
        %v7917 = vpack.c.b16 %v5637, %v5629
        %v7918 = vpack.c.b16 %v5638, %v5630
        %v7919 = vpack.c.b16 %v5639, %v5631
        %v7920 = vpack.c.b16 %v5640, %v5632
        %v7921 = vpack.c.b16 %v5641, %v5633
        %v7922 = vpack.c.b16 %v5642, %v5634
        %v7923 = vpack.c.b16 %v5651, %v5643
        %v7924 = vpack.c.b16 %v5652, %v5644
        %v7925 = vpack.c.b16 %v5653, %v5645
        %v7926 = vpack.c.b16 %v5654, %v5646
        %v7927 = vpack.c.b16 %v5655, %v5647
        %v7928 = vpack.c.b16 %v5656, %v5648
        %v7929 = vpack.c.b16 %v5657, %v5649
        %v7930 = vpack.c.b16 %v5658, %v5650
        %v7931 = vpack.c.b16 %v5667, %v5659
        %v7932 = vpack.c.b16 %v5668, %v5660
        %v7933 = vpack.c.b16 %v5669, %v5661
        %v7934 = vpack.c.b16 %v5670, %v5662
        %v7935 = vpack.c.b16 %v5671, %v5663
        %v7936 = vpack.c.b16 %v5672, %v5664
        %v7937 = vpack.c.b16 %v5673, %v5665
        %v7938 = vpack.c.b16 %v5674, %v5666
        %v7939 = vpack.c.b16 %v5683, %v5675
        %v7940 = vpack.c.b16 %v5684, %v5676
        %v7941 = vpack.c.b16 %v5685, %v5677
        %v7942 = vpack.c.b16 %v5686, %v5678
        %v7943 = vpack.c.b16 %v5687, %v5679
        %v7944 = vpack.c.b16 %v5688, %v5680
        %v7945 = vpack.c.b16 %v5689, %v5681
        %v7946 = vpack.c.b16 %v5690, %v5682
        %v7947 = vpack.c.b16 %v5699, %v5691
        %v7948 = vpack.c.b16 %v5700, %v5692
        %v7949 = vpack.c.b16 %v5701, %v5693
        %v7950 = vpack.c.b16 %v5702, %v5694
        %v7951 = vpack.c.b16 %v5703, %v5695
        %v7952 = vpack.c.b16 %v5704, %v5696
        %v7953 = vpack.c.b16 %v5705, %v5697
        %v7954 = vpack.c.b16 %v5706, %v5698
        %v7955 = vpack.c.b16 %v5715, %v5707
        %v7956 = vpack.c.b16 %v5716, %v5708
        %v7957 = vpack.c.b16 %v5717, %v5709
        %v7958 = vpack.c.b16 %v5718, %v5710
        %v7959 = vpack.c.b16 %v5719, %v5711
        %v7960 = vpack.c.b16 %v5720, %v5712
        %v7961 = vpack.c.b16 %v5721, %v5713
        %v7962 = vpack.c.b16 %v5722, %v5714
        %v7963 = vpack.c.b16 %v5731, %v5723
        %v7964 = vpack.c.b16 %v5732, %v5724
        %v7965 = vpack.c.b16 %v5733, %v5725
        %v7966 = vpack.c.b16 %v5734, %v5726
        %v7967 = vpack.c.b16 %v5735, %v5727
        %v7968 = vpack.c.b16 %v5736, %v5728
        %v7969 = vpack.c.b16 %v5737, %v5729
        %v7970 = vpack.c.b16 %v5738, %v5730
        %v7971 = vpack.c.b16 %v5747, %v5739
        %v7972 = vpack.c.b16 %v5748, %v5740
        %v7973 = vpack.c.b16 %v5749, %v5741
        %v7974 = vpack.c.b16 %v5750, %v5742
        %v7975 = vpack.c.b16 %v5751, %v5743
        %v7976 = vpack.c.b16 %v5752, %v5744
        %v7977 = vpack.c.b16 %v5753, %v5745
        %v7978 = vpack.c.b16 %v5754, %v5746
        %v7979 = vpack.c.b16 %v5763, %v5755
        %v7980 = vpack.c.b16 %v5764, %v5756
        %v7981 = vpack.c.b16 %v5765, %v5757
        %v7982 = vpack.c.b16 %v5766, %v5758
        %v7983 = vpack.c.b16 %v5767, %v5759
        %v7984 = vpack.c.b16 %v5768, %v5760
        %v7985 = vpack.c.b16 %v5769, %v5761
        %v7986 = vpack.c.b16 %v5770, %v5762
        %v7987 = vpack.c.b16 %v5779, %v5771
        %v7988 = vpack.c.b16 %v5780, %v5772
        %v7989 = vpack.c.b16 %v5781, %v5773
        %v7990 = vpack.c.b16 %v5782, %v5774
        %v7991 = vpack.c.b16 %v5783, %v5775
        %v7992 = vpack.c.b16 %v5784, %v5776
        %v7993 = vpack.c.b16 %v5785, %v5777
        %v7994 = vpack.c.b16 %v5786, %v5778
        %v7995 = vpack.c.b16 %v5795, %v5787
        %v7996 = vpack.c.b16 %v5796, %v5788
        %v7997 = vpack.c.b16 %v5797, %v5789
        %v7998 = vpack.c.b16 %v5798, %v5790
        %v7999 = vpack.c.b16 %v5799, %v5791
        %v8000 = vpack.c.b16 %v5800, %v5792
        %v8001 = vpack.c.b16 %v5801, %v5793
        %v8002 = vpack.c.b16 %v5802, %v5794
        %v8003 = vpack.c.b16 %v5811, %v5803
        %v8004 = vpack.c.b16 %v5812, %v5804
        %v8005 = vpack.c.b16 %v5813, %v5805
        %v8006 = vpack.c.b16 %v5814, %v5806
        %v8007 = vpack.c.b16 %v5815, %v5807
        %v8008 = vpack.c.b16 %v5816, %v5808
        %v8009 = vpack.c.b16 %v5817, %v5809
        %v8010 = vpack.c.b16 %v5818, %v5810
        %v8011 = vpack.c.b16 %v5827, %v5819
        %v8012 = vpack.c.b16 %v5828, %v5820
        %v8013 = vpack.c.b16 %v5829, %v5821
        %v8014 = vpack.c.b16 %v5830, %v5822
        %v8015 = vpack.c.b16 %v5831, %v5823
        %v8016 = vpack.c.b16 %v5832, %v5824
        %v8017 = vpack.c.b16 %v5833, %v5825
        %v8018 = vpack.c.b16 %v5834, %v5826
        %v8019 = vpack.c.b16 %v5843, %v5835
        %v8020 = vpack.c.b16 %v5844, %v5836
        %v8021 = vpack.c.b16 %v5845, %v5837
        %v8022 = vpack.c.b16 %v5846, %v5838
        %v8023 = vpack.c.b16 %v5847, %v5839
        %v8024 = vpack.c.b16 %v5848, %v5840
        %v8025 = vpack.c.b16 %v5849, %v5841
        %v8026 = vpack.c.b16 %v5850, %v5842
        %v8027 = vpack.c.b16 %v5859, %v5851
        %v8028 = vpack.c.b16 %v5860, %v5852
        %v8029 = vpack.c.b16 %v5861, %v5853
        %v8030 = vpack.c.b16 %v5862, %v5854
        %v8031 = vpack.c.b16 %v5863, %v5855
        %v8032 = vpack.c.b16 %v5864, %v5856
        %v8033 = vpack.c.b16 %v5865, %v5857
        %v8034 = vpack.c.b16 %v5866, %v5858
        %v8035 = vpack.c.b16 %v5875, %v5867
        %v8036 = vpack.c.b16 %v5876, %v5868
        %v8037 = vpack.c.b16 %v5877, %v5869
        %v8038 = vpack.c.b16 %v5878, %v5870
        %v8039 = vpack.c.b16 %v5879, %v5871
        %v8040 = vpack.c.b16 %v5880, %v5872
        %v8041 = vpack.c.b16 %v5881, %v5873
        %v8042 = vpack.c.b16 %v5882, %v5874
        %v8043 = vpack.c.b16 %v5891, %v5883
        %v8044 = vpack.c.b16 %v5892, %v5884
        %v8045 = vpack.c.b16 %v5893, %v5885
        %v8046 = vpack.c.b16 %v5894, %v5886
        %v8047 = vpack.c.b16 %v5895, %v5887
        %v8048 = vpack.c.b16 %v5896, %v5888
        %v8049 = vpack.c.b16 %v5897, %v5889
        %v8050 = vpack.c.b16 %v5898, %v5890
        %v8051 = vpack.c.b16 %v5907, %v5899
        %v8052 = vpack.c.b16 %v5908, %v5900
        %v8053 = vpack.c.b16 %v5909, %v5901
        %v8054 = vpack.c.b16 %v5910, %v5902
        %v8055 = vpack.c.b16 %v5911, %v5903
        %v8056 = vpack.c.b16 %v5912, %v5904
        %v8057 = vpack.c.b16 %v5913, %v5905
        %v8058 = vpack.c.b16 %v5914, %v5906
        %v8059 = vpack.c.b16 %v5923, %v5915
        %v8060 = vpack.c.b16 %v5924, %v5916
        %v8061 = vpack.c.b16 %v5925, %v5917
        %v8062 = vpack.c.b16 %v5926, %v5918
        %v8063 = vpack.c.b16 %v5927, %v5919
        %v8064 = vpack.c.b16 %v5928, %v5920
        %v8065 = vpack.c.b16 %v5929, %v5921
        %v8066 = vpack.c.b16 %v5930, %v5922
        %v8067 = vpack.c.b16 %v5939, %v5931
        %v8068 = vpack.c.b16 %v5940, %v5932
        %v8069 = vpack.c.b16 %v5941, %v5933
        %v8070 = vpack.c.b16 %v5942, %v5934
        %v8071 = vpack.c.b16 %v5943, %v5935
        %v8072 = vpack.c.b16 %v5944, %v5936
        %v8073 = vpack.c.b16 %v5945, %v5937
        %v8074 = vpack.c.b16 %v5946, %v5938
        %v8075 = vpack.c.b16 %v5955, %v5947
        %v8076 = vpack.c.b16 %v5956, %v5948
        %v8077 = vpack.c.b16 %v5957, %v5949
        %v8078 = vpack.c.b16 %v5958, %v5950
        %v8079 = vpack.c.b16 %v5959, %v5951
        %v8080 = vpack.c.b16 %v5960, %v5952
        %v8081 = vpack.c.b16 %v5961, %v5953
        %v8082 = vpack.c.b16 %v5962, %v5954
        %v8083 = vpack.c.b16 %v5971, %v5963
        %v8084 = vpack.c.b16 %v5972, %v5964
        %v8085 = vpack.c.b16 %v5973, %v5965
        %v8086 = vpack.c.b16 %v5974, %v5966
        %v8087 = vpack.c.b16 %v5975, %v5967
        %v8088 = vpack.c.b16 %v5976, %v5968
        %v8089 = vpack.c.b16 %v5977, %v5969
        %v8090 = vpack.c.b16 %v5978, %v5970
        %v8091 = vpack.c.b16 %v5987, %v5979
        %v8092 = vpack.c.b16 %v5988, %v5980
        %v8093 = vpack.c.b16 %v5989, %v5981
        %v8094 = vpack.c.b16 %v5990, %v5982
        %v8095 = vpack.c.b16 %v5991, %v5983
        %v8096 = vpack.c.b16 %v5992, %v5984
        %v8097 = vpack.c.b16 %v5993, %v5985
        %v8098 = vpack.c.b16 %v5994, %v5986
        %v8099 = vpack.c.b16 %v6003, %v5995
        %v8100 = vpack.c.b16 %v6004, %v5996
        %v8101 = vpack.c.b16 %v6005, %v5997
        %v8102 = vpack.c.b16 %v6006, %v5998
        %v8103 = vpack.c.b16 %v6007, %v5999
        %v8104 = vpack.c.b16 %v6008, %v6000
        %v8105 = vpack.c.b16 %v6009, %v6001
        %v8106 = vpack.c.b16 %v6010, %v6002
        %v8107 = vpack.c.b16 %v6019, %v6011
        %v8108 = vpack.c.b16 %v6020, %v6012
        %v8109 = vpack.c.b16 %v6021, %v6013
        %v8110 = vpack.c.b16 %v6022, %v6014
        %v8111 = vpack.c.b16 %v6023, %v6015
        %v8112 = vpack.c.b16 %v6024, %v6016
        %v8113 = vpack.c.b16 %v6025, %v6017
        %v8114 = vpack.c.b16 %v6026, %v6018
        %v8115 = vpack.c.b16 %v6035, %v6027
        %v8116 = vpack.c.b16 %v6036, %v6028
        %v8117 = vpack.c.b16 %v6037, %v6029
        %v8118 = vpack.c.b16 %v6038, %v6030
        %v8119 = vpack.c.b16 %v6039, %v6031
        %v8120 = vpack.c.b16 %v6040, %v6032
        %v8121 = vpack.c.b16 %v6041, %v6033
        %v8122 = vpack.c.b16 %v6042, %v6034
        %v8123 = vpack.c.b16 %v6051, %v6043
        %v8124 = vpack.c.b16 %v6052, %v6044
        %v8125 = vpack.c.b16 %v6053, %v6045
        %v8126 = vpack.c.b16 %v6054, %v6046
        %v8127 = vpack.c.b16 %v6055, %v6047
        %v8128 = vpack.c.b16 %v6056, %v6048
        %v8129 = vpack.c.b16 %v6057, %v6049
        %v8130 = vpack.c.b16 %v6058, %v6050
        %v8131 = vpack.c.b16 %v6067, %v6059
        %v8132 = vpack.c.b16 %v6068, %v6060
        %v8133 = vpack.c.b16 %v6069, %v6061
        %v8134 = vpack.c.b16 %v6070, %v6062
        %v8135 = vpack.c.b16 %v6071, %v6063
        %v8136 = vpack.c.b16 %v6072, %v6064
        %v8137 = vpack.c.b16 %v6073, %v6065
        %v8138 = vpack.c.b16 %v6074, %v6066
        %v8139 = vpack.c.b16 %v6083, %v6075
        %v8140 = vpack.c.b16 %v6084, %v6076
        %v8141 = vpack.c.b16 %v6085, %v6077
        %v8142 = vpack.c.b16 %v6086, %v6078
        %v8143 = vpack.c.b16 %v6087, %v6079
        %v8144 = vpack.c.b16 %v6088, %v6080
        %v8145 = vpack.c.b16 %v6089, %v6081
        %v8146 = vpack.c.b16 %v6090, %v6082
        %v8147 = vpack.c.b16 %v6099, %v6091
        %v8148 = vpack.c.b16 %v6100, %v6092
        %v8149 = vpack.c.b16 %v6101, %v6093
        %v8150 = vpack.c.b16 %v6102, %v6094
        %v8151 = vpack.c.b16 %v6103, %v6095
        %v8152 = vpack.c.b16 %v6104, %v6096
        %v8153 = vpack.c.b16 %v6105, %v6097
        %v8154 = vpack.c.b16 %v6106, %v6098
        %v8155 = vpack.c.b16 %v6115, %v6107
        %v8156 = vpack.c.b16 %v6116, %v6108
        %v8157 = vpack.c.b16 %v6117, %v6109
        %v8158 = vpack.c.b16 %v6118, %v6110
        %v8159 = vpack.c.b16 %v6119, %v6111
        %v8160 = vpack.c.b16 %v6120, %v6112
        %v8161 = vpack.c.b16 %v6121, %v6113
        %v8162 = vpack.c.b16 %v6122, %v6114
        %v8163 = vpack.c.b16 %v6131, %v6123
        %v8164 = vpack.c.b16 %v6132, %v6124
        %v8165 = vpack.c.b16 %v6133, %v6125
        %v8166 = vpack.c.b16 %v6134, %v6126
        %v8167 = vpack.c.b16 %v6135, %v6127
        %v8168 = vpack.c.b16 %v6136, %v6128
        %v8169 = vpack.c.b16 %v6137, %v6129
        %v8170 = vpack.c.b16 %v6138, %v6130
        %v8171 = vpack.c.b16 %v6147, %v6139
        %v8172 = vpack.c.b16 %v6148, %v6140
        %v8173 = vpack.c.b16 %v6149, %v6141
        %v8174 = vpack.c.b16 %v6150, %v6142
        %v8175 = vpack.c.b16 %v6151, %v6143
        %v8176 = vpack.c.b16 %v6152, %v6144
        %v8177 = vpack.c.b16 %v6153, %v6145
        %v8178 = vpack.c.b16 %v6154, %v6146
        %v8179 = vpack.c.b16 %v6163, %v6155
        %v8180 = vpack.c.b16 %v6164, %v6156
        %v8181 = vpack.c.b16 %v6165, %v6157
        %v8182 = vpack.c.b16 %v6166, %v6158
        %v8183 = vpack.c.b16 %v6167, %v6159
        %v8184 = vpack.c.b16 %v6168, %v6160
        %v8185 = vpack.c.b16 %v6169, %v6161
        %v8186 = vpack.c.b16 %v6170, %v6162
        %v8187 = vpack.c.b16 %v6179, %v6171
        %v8188 = vpack.c.b16 %v6180, %v6172
        %v8189 = vpack.c.b16 %v6181, %v6173
        %v8190 = vpack.c.b16 %v6182, %v6174
        %v8191 = vpack.c.b16 %v6183, %v6175
        %v8192 = vpack.c.b16 %v6184, %v6176
        %v8193 = vpack.c.b16 %v6185, %v6177
        %v8194 = vpack.c.b16 %v6186, %v6178
        %v8195 = vpack.c.b16 %v6195, %v6187
        %v8196 = vpack.c.b16 %v6196, %v6188
        %v8197 = vpack.c.b16 %v6197, %v6189
        %v8198 = vpack.c.b16 %v6198, %v6190
        %v8199 = vpack.c.b16 %v6199, %v6191
        %v8200 = vpack.c.b16 %v6200, %v6192
        %v8201 = vpack.c.b16 %v6201, %v6193
        %v8202 = vpack.c.b16 %v6202, %v6194
        %v8203 = vpack.c.b16 %v6211, %v6203
        %v8204 = vpack.c.b16 %v6212, %v6204
        %v8205 = vpack.c.b16 %v6213, %v6205
        %v8206 = vpack.c.b16 %v6214, %v6206
        %v8207 = vpack.c.b16 %v6215, %v6207
        %v8208 = vpack.c.b16 %v6216, %v6208
        %v8209 = vpack.c.b16 %v6217, %v6209
        %v8210 = vpack.c.b16 %v6218, %v6210
        %v8211 = vpack.c.b16 %v6227, %v6219
        %v8212 = vpack.c.b16 %v6228, %v6220
        %v8213 = vpack.c.b16 %v6229, %v6221
        %v8214 = vpack.c.b16 %v6230, %v6222
        %v8215 = vpack.c.b16 %v6231, %v6223
        %v8216 = vpack.c.b16 %v6232, %v6224
        %v8217 = vpack.c.b16 %v6233, %v6225
        %v8218 = vpack.c.b16 %v6234, %v6226
        %v8219 = vpack.c.b16 %v6243, %v6235
        %v8220 = vpack.c.b16 %v6244, %v6236
        %v8221 = vpack.c.b16 %v6245, %v6237
        %v8222 = vpack.c.b16 %v6246, %v6238
        %v8223 = vpack.c.b16 %v6247, %v6239
        %v8224 = vpack.c.b16 %v6248, %v6240
        %v8225 = vpack.c.b16 %v6249, %v6241
        %v8226 = vpack.c.b16 %v6250, %v6242
        %v8227 = vpack.c.b16 %v6259, %v6251
        %v8228 = vpack.c.b16 %v6260, %v6252
        %v8229 = vpack.c.b16 %v6261, %v6253
        %v8230 = vpack.c.b16 %v6262, %v6254
        %v8231 = vpack.c.b16 %v6263, %v6255
        %v8232 = vpack.c.b16 %v6264, %v6256
        %v8233 = vpack.c.b16 %v6265, %v6257
        %v8234 = vpack.c.b16 %v6266, %v6258
        %v8235 = vpack.c.b16 %v6275, %v6267
        %v8236 = vpack.c.b16 %v6276, %v6268
        %v8237 = vpack.c.b16 %v6277, %v6269
        %v8238 = vpack.c.b16 %v6278, %v6270
        %v8239 = vpack.c.b16 %v6279, %v6271
        %v8240 = vpack.c.b16 %v6280, %v6272
        %v8241 = vpack.c.b16 %v6281, %v6273
        %v8242 = vpack.c.b16 %v6282, %v6274
        %v8243 = vpack.c.b16 %v6291, %v6283
        %v8244 = vpack.c.b16 %v6292, %v6284
        %v8245 = vpack.c.b16 %v6293, %v6285
        %v8246 = vpack.c.b16 %v6294, %v6286
        %v8247 = vpack.c.b16 %v6295, %v6287
        %v8248 = vpack.c.b16 %v6296, %v6288
        %v8249 = vpack.c.b16 %v6297, %v6289
        %v8250 = vpack.c.b16 %v6298, %v6290
        %v8251 = vpack.c.b16 %v6307, %v6299
        %v8252 = vpack.c.b16 %v6308, %v6300
        %v8253 = vpack.c.b16 %v6309, %v6301
        %v8254 = vpack.c.b16 %v6310, %v6302
        %v8255 = vpack.c.b16 %v6311, %v6303
        %v8256 = vpack.c.b16 %v6312, %v6304
        %v8257 = vpack.c.b16 %v6313, %v6305
        %v8258 = vpack.c.b16 %v6314, %v6306
        %v8259 = vpack.c.b16 %v6323, %v6315
        %v8260 = vpack.c.b16 %v6324, %v6316
        %v8261 = vpack.c.b16 %v6325, %v6317
        %v8262 = vpack.c.b16 %v6326, %v6318
        %v8263 = vpack.c.b16 %v6327, %v6319
        %v8264 = vpack.c.b16 %v6328, %v6320
        %v8265 = vpack.c.b16 %v6329, %v6321
        %v8266 = vpack.c.b16 %v6330, %v6322
        %v8267 = vpack.c.b16 %v6339, %v6331
        %v8268 = vpack.c.b16 %v6340, %v6332
        %v8269 = vpack.c.b16 %v6341, %v6333
        %v8270 = vpack.c.b16 %v6342, %v6334
        %v8271 = vpack.c.b16 %v6343, %v6335
        %v8272 = vpack.c.b16 %v6344, %v6336
        %v8273 = vpack.c.b16 %v6345, %v6337
        %v8274 = vpack.c.b16 %v6346, %v6338
        %v8275 = vpack.c.b16 %v6355, %v6347
        %v8276 = vpack.c.b16 %v6356, %v6348
        %v8277 = vpack.c.b16 %v6357, %v6349
        %v8278 = vpack.c.b16 %v6358, %v6350
        %v8279 = vpack.c.b16 %v6359, %v6351
        %v8280 = vpack.c.b16 %v6360, %v6352
        %v8281 = vpack.c.b16 %v6361, %v6353
        %v8282 = vpack.c.b16 %v6362, %v6354
        %v8283 = vpack.c.b16 %v6371, %v6363
        %v8284 = vpack.c.b16 %v6372, %v6364
        %v8285 = vpack.c.b16 %v6373, %v6365
        %v8286 = vpack.c.b16 %v6374, %v6366
        %v8287 = vpack.c.b16 %v6375, %v6367
        %v8288 = vpack.c.b16 %v6376, %v6368
        %v8289 = vpack.c.b16 %v6377, %v6369
        %v8290 = vpack.c.b16 %v6378, %v6370
        %v8291 = vpack.c.b16 %v6387, %v6379
        %v8292 = vpack.c.b16 %v6388, %v6380
        %v8293 = vpack.c.b16 %v6389, %v6381
        %v8294 = vpack.c.b16 %v6390, %v6382
        %v8295 = vpack.c.b16 %v6391, %v6383
        %v8296 = vpack.c.b16 %v6392, %v6384
        %v8297 = vpack.c.b16 %v6393, %v6385
        %v8298 = vpack.c.b16 %v6394, %v6386
        %v8299 = vpack.c.b16 %v6403, %v6395
        %v8300 = vpack.c.b16 %v6404, %v6396
        %v8301 = vpack.c.b16 %v6405, %v6397
        %v8302 = vpack.c.b16 %v6406, %v6398
        %v8303 = vpack.c.b16 %v6407, %v6399
        %v8304 = vpack.c.b16 %v6408, %v6400
        %v8305 = vpack.c.b16 %v6409, %v6401
        %v8306 = vpack.c.b16 %v6410, %v6402
        %v8307 = vpack.c.b16 %v6419, %v6411
        %v8308 = vpack.c.b16 %v6420, %v6412
        %v8309 = vpack.c.b16 %v6421, %v6413
        %v8310 = vpack.c.b16 %v6422, %v6414
        %v8311 = vpack.c.b16 %v6423, %v6415
        %v8312 = vpack.c.b16 %v6424, %v6416
        %v8313 = vpack.c.b16 %v6425, %v6417
        %v8314 = vpack.c.b16 %v6426, %v6418
        %v8315 = vpack.c.b16 %v6435, %v6427
        %v8316 = vpack.c.b16 %v6436, %v6428
        %v8317 = vpack.c.b16 %v6437, %v6429
        %v8318 = vpack.c.b16 %v6438, %v6430
        %v8319 = vpack.c.b16 %v6439, %v6431
        %v8320 = vpack.c.b16 %v6440, %v6432
        %v8321 = vpack.c.b16 %v6441, %v6433
        %v8322 = vpack.c.b16 %v6442, %v6434
        %v8323 = vpack.c.b16 %v6451, %v6443
        %v8324 = vpack.c.b16 %v6452, %v6444
        %v8325 = vpack.c.b16 %v6453, %v6445
        %v8326 = vpack.c.b16 %v6454, %v6446
        %v8327 = vpack.c.b16 %v6455, %v6447
        %v8328 = vpack.c.b16 %v6456, %v6448
        %v8329 = vpack.c.b16 %v6457, %v6449
        %v8330 = vpack.c.b16 %v6458, %v6450
        %v8331 = vpack.c.b16 %v6467, %v6459
        %v8332 = vpack.c.b16 %v6468, %v6460
        %v8333 = vpack.c.b16 %v6469, %v6461
        %v8334 = vpack.c.b16 %v6470, %v6462
        %v8335 = vpack.c.b16 %v6471, %v6463
        %v8336 = vpack.c.b16 %v6472, %v6464
        %v8337 = vpack.c.b16 %v6473, %v6465
        %v8338 = vpack.c.b16 %v6474, %v6466
        %v8339 = vpack.c.b16 %v6483, %v6475
        %v8340 = vpack.c.b16 %v6484, %v6476
        %v8341 = vpack.c.b16 %v6485, %v6477
        %v8342 = vpack.c.b16 %v6486, %v6478
        %v8343 = vpack.c.b16 %v6487, %v6479
        %v8344 = vpack.c.b16 %v6488, %v6480
        %v8345 = vpack.c.b16 %v6489, %v6481
        %v8346 = vpack.c.b16 %v6490, %v6482
        %v8347 = vpack.c.b16 %v6499, %v6491
        %v8348 = vpack.c.b16 %v6500, %v6492
        %v8349 = vpack.c.b16 %v6501, %v6493
        %v8350 = vpack.c.b16 %v6502, %v6494
        %v8351 = vpack.c.b16 %v6503, %v6495
        %v8352 = vpack.c.b16 %v6504, %v6496
        %v8353 = vpack.c.b16 %v6505, %v6497
        %v8354 = vpack.c.b16 %v6506, %v6498
        %v8355 = vpack.c.b16 %v6515, %v6507
        %v8356 = vpack.c.b16 %v6516, %v6508
        %v8357 = vpack.c.b16 %v6517, %v6509
        %v8358 = vpack.c.b16 %v6518, %v6510
        %v8359 = vpack.c.b16 %v6519, %v6511
        %v8360 = vpack.c.b16 %v6520, %v6512
        %v8361 = vpack.c.b16 %v6521, %v6513
        %v8362 = vpack.c.b16 %v6522, %v6514
        %v8363 = vpack.c.b16 %v6531, %v6523
        %v8364 = vpack.c.b16 %v6532, %v6524
        %v8365 = vpack.c.b16 %v6533, %v6525
        %v8366 = vpack.c.b16 %v6534, %v6526
        %v8367 = vpack.c.b16 %v6535, %v6527
        %v8368 = vpack.c.b16 %v6536, %v6528
        %v8369 = vpack.c.b16 %v6537, %v6529
        %v8370 = vpack.c.b16 %v6538, %v6530
        %v8371 = vpack.c.b16 %v6547, %v6539
        %v8372 = vpack.c.b16 %v6548, %v6540
        %v8373 = vpack.c.b16 %v6549, %v6541
        %v8374 = vpack.c.b16 %v6550, %v6542
        %v8375 = vpack.c.b16 %v6551, %v6543
        %v8376 = vpack.c.b16 %v6552, %v6544
        %v8377 = vpack.c.b16 %v6553, %v6545
        %v8378 = vpack.c.b16 %v6554, %v6546
        %v8379 = vpack.c.b16 %v6563, %v6555
        %v8380 = vpack.c.b16 %v6564, %v6556
        %v8381 = vpack.c.b16 %v6565, %v6557
        %v8382 = vpack.c.b16 %v6566, %v6558
        %v8383 = vpack.c.b16 %v6567, %v6559
        %v8384 = vpack.c.b16 %v6568, %v6560
        %v8385 = vpack.c.b16 %v6569, %v6561
        %v8386 = vpack.c.b16 %v6570, %v6562
        %v8387 = vpack.c.b16 %v6579, %v6571
        %v8388 = vpack.c.b16 %v6580, %v6572
        %v8389 = vpack.c.b16 %v6581, %v6573
        %v8390 = vpack.c.b16 %v6582, %v6574
        %v8391 = vpack.c.b16 %v6583, %v6575
        %v8392 = vpack.c.b16 %v6584, %v6576
        %v8393 = vpack.c.b16 %v6585, %v6577
        %v8394 = vpack.c.b16 %v6586, %v6578
        %v8395 = vpack.c.b16 %v6595, %v6587
        %v8396 = vpack.c.b16 %v6596, %v6588
        %v8397 = vpack.c.b16 %v6597, %v6589
        %v8398 = vpack.c.b16 %v6598, %v6590
        %v8399 = vpack.c.b16 %v6599, %v6591
        %v8400 = vpack.c.b16 %v6600, %v6592
        %v8401 = vpack.c.b16 %v6601, %v6593
        %v8402 = vpack.c.b16 %v6602, %v6594
        %v8403 = vpack.c.b16 %v6611, %v6603
        %v8404 = vpack.c.b16 %v6612, %v6604
        %v8405 = vpack.c.b16 %v6613, %v6605
        %v8406 = vpack.c.b16 %v6614, %v6606
        %v8407 = vpack.c.b16 %v6615, %v6607
        %v8408 = vpack.c.b16 %v6616, %v6608
        %v8409 = vpack.c.b16 %v6617, %v6609
        %v8410 = vpack.c.b16 %v6618, %v6610
        %v8411 = vpack.c.b16 %v6627, %v6619
        %v8412 = vpack.c.b16 %v6628, %v6620
        %v8413 = vpack.c.b16 %v6629, %v6621
        %v8414 = vpack.c.b16 %v6630, %v6622
        %v8415 = vpack.c.b16 %v6631, %v6623
        %v8416 = vpack.c.b16 %v6632, %v6624
        %v8417 = vpack.c.b16 %v6633, %v6625
        %v8418 = vpack.c.b16 %v6634, %v6626
        %v8419 = vpack.c.b16 %v6643, %v6635
        %v8420 = vpack.c.b16 %v6644, %v6636
        %v8421 = vpack.c.b16 %v6645, %v6637
        %v8422 = vpack.c.b16 %v6646, %v6638
        %v8423 = vpack.c.b16 %v6647, %v6639
        %v8424 = vpack.c.b16 %v6648, %v6640
        %v8425 = vpack.c.b16 %v6649, %v6641
        %v8426 = vpack.c.b16 %v6650, %v6642
        %v8427 = vpack.c.b16 %v6659, %v6651
        %v8428 = vpack.c.b16 %v6660, %v6652
        %v8429 = vpack.c.b16 %v6661, %v6653
        %v8430 = vpack.c.b16 %v6662, %v6654
        %v8431 = vpack.c.b16 %v6663, %v6655
        %v8432 = vpack.c.b16 %v6664, %v6656
        %v8433 = vpack.c.b16 %v6665, %v6657
        %v8434 = vpack.c.b16 %v6666, %v6658
        %v8435 = vpack.c.b16 %v6675, %v6667
        %v8436 = vpack.c.b16 %v6676, %v6668
        %v8437 = vpack.c.b16 %v6677, %v6669
        %v8438 = vpack.c.b16 %v6678, %v6670
        %v8439 = vpack.c.b16 %v6679, %v6671
        %v8440 = vpack.c.b16 %v6680, %v6672
        %v8441 = vpack.c.b16 %v6681, %v6673
        %v8442 = vpack.c.b16 %v6682, %v6674
        %v8443 = vpack.c.b16 %v6691, %v6683
        %v8444 = vpack.c.b16 %v6692, %v6684
        %v8445 = vpack.c.b16 %v6693, %v6685
        %v8446 = vpack.c.b16 %v6694, %v6686
        %v8447 = vpack.c.b16 %v6695, %v6687
        %v8448 = vpack.c.b16 %v6696, %v6688
        %v8449 = vpack.c.b16 %v6697, %v6689
        %v8450 = vpack.c.b16 %v6698, %v6690
        %v8451 = vpack.c.b16 %v6707, %v6699
        %v8452 = vpack.c.b16 %v6708, %v6700
        %v8453 = vpack.c.b16 %v6709, %v6701
        %v8454 = vpack.c.b16 %v6710, %v6702
        %v8455 = vpack.c.b16 %v6711, %v6703
        %v8456 = vpack.c.b16 %v6712, %v6704
        %v8457 = vpack.c.b16 %v6713, %v6705
        %v8458 = vpack.c.b16 %v6714, %v6706
        %v8459 = vpack.c.b16 %v6723, %v6715
        %v8460 = vpack.c.b16 %v6724, %v6716
        %v8461 = vpack.c.b16 %v6725, %v6717
        %v8462 = vpack.c.b16 %v6726, %v6718
        %v8463 = vpack.c.b16 %v6727, %v6719
        %v8464 = vpack.c.b16 %v6728, %v6720
        %v8465 = vpack.c.b16 %v6729, %v6721
        %v8466 = vpack.c.b16 %v6730, %v6722
        %v8467 = vpack.c.b16 %v6739, %v6731
        %v8468 = vpack.c.b16 %v6740, %v6732
        %v8469 = vpack.c.b16 %v6741, %v6733
        %v8470 = vpack.c.b16 %v6742, %v6734
        %v8471 = vpack.c.b16 %v6743, %v6735
        %v8472 = vpack.c.b16 %v6744, %v6736
        %v8473 = vpack.c.b16 %v6745, %v6737
        %v8474 = vpack.c.b16 %v6746, %v6738
        %v8475 = vpack.c.b16 %v6755, %v6747
        %v8476 = vpack.c.b16 %v6756, %v6748
        %v8477 = vpack.c.b16 %v6757, %v6749
        %v8478 = vpack.c.b16 %v6758, %v6750
        %v8479 = vpack.c.b16 %v6759, %v6751
        %v8480 = vpack.c.b16 %v6760, %v6752
        %v8481 = vpack.c.b16 %v6761, %v6753
        %v8482 = vpack.c.b16 %v6762, %v6754
        %v8483 = vpack.c.b16 %v6771, %v6763
        %v8484 = vpack.c.b16 %v6772, %v6764
        %v8485 = vpack.c.b16 %v6773, %v6765
        %v8486 = vpack.c.b16 %v6774, %v6766
        %v8487 = vpack.c.b16 %v6775, %v6767
        %v8488 = vpack.c.b16 %v6776, %v6768
        %v8489 = vpack.c.b16 %v6777, %v6769
        %v8490 = vpack.c.b16 %v6778, %v6770
        %v8491 = vpack.c.b16 %v6787, %v6779
        %v8492 = vpack.c.b16 %v6788, %v6780
        %v8493 = vpack.c.b16 %v6789, %v6781
        %v8494 = vpack.c.b16 %v6790, %v6782
        %v8495 = vpack.c.b16 %v6791, %v6783
        %v8496 = vpack.c.b16 %v6792, %v6784
        %v8497 = vpack.c.b16 %v6793, %v6785
        %v8498 = vpack.c.b16 %v6794, %v6786
        %v8499 = vpack.c.b16 %v6803, %v6795
        %v8500 = vpack.c.b16 %v6804, %v6796
        %v8501 = vpack.c.b16 %v6805, %v6797
        %v8502 = vpack.c.b16 %v6806, %v6798
        %v8503 = vpack.c.b16 %v6807, %v6799
        %v8504 = vpack.c.b16 %v6808, %v6800
        %v8505 = vpack.c.b16 %v6809, %v6801
        %v8506 = vpack.c.b16 %v6810, %v6802
        %v8507 = vpack.c.b16 %v6819, %v6811
        %v8508 = vpack.c.b16 %v6820, %v6812
        %v8509 = vpack.c.b16 %v6821, %v6813
        %v8510 = vpack.c.b16 %v6822, %v6814
        %v8511 = vpack.c.b16 %v6823, %v6815
        %v8512 = vpack.c.b16 %v6824, %v6816
        %v8513 = vpack.c.b16 %v6825, %v6817
        %v8514 = vpack.c.b16 %v6826, %v6818
        %v8515 = vpack.c.b16 %v6835, %v6827
        %v8516 = vpack.c.b16 %v6836, %v6828
        %v8517 = vpack.c.b16 %v6837, %v6829
        %v8518 = vpack.c.b16 %v6838, %v6830
        %v8519 = vpack.c.b16 %v6839, %v6831
        %v8520 = vpack.c.b16 %v6840, %v6832
        %v8521 = vpack.c.b16 %v6841, %v6833
        %v8522 = vpack.c.b16 %v6842, %v6834
        %v8523 = vpack.c.b16 %v6851, %v6843
        %v8524 = vpack.c.b16 %v6852, %v6844
        %v8525 = vpack.c.b16 %v6853, %v6845
        %v8526 = vpack.c.b16 %v6854, %v6846
        %v8527 = vpack.c.b16 %v6855, %v6847
        %v8528 = vpack.c.b16 %v6856, %v6848
        %v8529 = vpack.c.b16 %v6857, %v6849
        %v8530 = vpack.c.b16 %v6858, %v6850
        %v8531 = vpack.c.b16 %v6867, %v6859
        %v8532 = vpack.c.b16 %v6868, %v6860
        %v8533 = vpack.c.b16 %v6869, %v6861
        %v8534 = vpack.c.b16 %v6870, %v6862
        %v8535 = vpack.c.b16 %v6871, %v6863
        %v8536 = vpack.c.b16 %v6872, %v6864
        %v8537 = vpack.c.b16 %v6873, %v6865
        %v8538 = vpack.c.b16 %v6874, %v6866
        %v8539 = vpack.c.b16 %v6883, %v6875
        %v8540 = vpack.c.b16 %v6884, %v6876
        %v8541 = vpack.c.b16 %v6885, %v6877
        %v8542 = vpack.c.b16 %v6886, %v6878
        %v8543 = vpack.c.b16 %v6887, %v6879
        %v8544 = vpack.c.b16 %v6888, %v6880
        %v8545 = vpack.c.b16 %v6889, %v6881
        %v8546 = vpack.c.b16 %v6890, %v6882
        %v8547 = vpack.c.b16 %v6899, %v6891
        %v8548 = vpack.c.b16 %v6900, %v6892
        %v8549 = vpack.c.b16 %v6901, %v6893
        %v8550 = vpack.c.b16 %v6902, %v6894
        %v8551 = vpack.c.b16 %v6903, %v6895
        %v8552 = vpack.c.b16 %v6904, %v6896
        %v8553 = vpack.c.b16 %v6905, %v6897
        %v8554 = vpack.c.b16 %v6906, %v6898
        %v8555 = vpack.c.b16 %v6915, %v6907
        %v8556 = vpack.c.b16 %v6916, %v6908
        %v8557 = vpack.c.b16 %v6917, %v6909
        %v8558 = vpack.c.b16 %v6918, %v6910
        %v8559 = vpack.c.b16 %v6919, %v6911
        %v8560 = vpack.c.b16 %v6920, %v6912
        %v8561 = vpack.c.b16 %v6921, %v6913
        %v8562 = vpack.c.b16 %v6922, %v6914
        %v8563 = vpack.c.b16 %v6931, %v6923
        %v8564 = vpack.c.b16 %v6932, %v6924
        %v8565 = vpack.c.b16 %v6933, %v6925
        %v8566 = vpack.c.b16 %v6934, %v6926
        %v8567 = vpack.c.b16 %v6935, %v6927
        %v8568 = vpack.c.b16 %v6936, %v6928
        %v8569 = vpack.c.b16 %v6937, %v6929
        %v8570 = vpack.c.b16 %v6938, %v6930
        %v8571 = vpack.c.b16 %v6947, %v6939
        %v8572 = vpack.c.b16 %v6948, %v6940
        %v8573 = vpack.c.b16 %v6949, %v6941
        %v8574 = vpack.c.b16 %v6950, %v6942
        %v8575 = vpack.c.b16 %v6951, %v6943
        %v8576 = vpack.c.b16 %v6952, %v6944
        %v8577 = vpack.c.b16 %v6953, %v6945
        %v8578 = vpack.c.b16 %v6954, %v6946
        %v8579 = vpack.c.b16 %v6963, %v6955
        %v8580 = vpack.c.b16 %v6964, %v6956
        %v8581 = vpack.c.b16 %v6965, %v6957
        %v8582 = vpack.c.b16 %v6966, %v6958
        %v8583 = vpack.c.b16 %v6967, %v6959
        %v8584 = vpack.c.b16 %v6968, %v6960
        %v8585 = vpack.c.b16 %v6969, %v6961
        %v8586 = vpack.c.b16 %v6970, %v6962
        %v8587 = vpack.c.b16 %v6979, %v6971
        %v8588 = vpack.c.b16 %v6980, %v6972
        %v8589 = vpack.c.b16 %v6981, %v6973
        %v8590 = vpack.c.b16 %v6982, %v6974
        %v8591 = vpack.c.b16 %v6983, %v6975
        %v8592 = vpack.c.b16 %v6984, %v6976
        %v8593 = vpack.c.b16 %v6985, %v6977
        %v8594 = vpack.c.b16 %v6986, %v6978
        %v8595 = vpack.c.b16 %v6995, %v6987
        %v8596 = vpack.c.b16 %v6996, %v6988
        %v8597 = vpack.c.b16 %v6997, %v6989
        %v8598 = vpack.c.b16 %v6998, %v6990
        %v8599 = vpack.c.b16 %v6999, %v6991
        %v8600 = vpack.c.b16 %v7000, %v6992
        %v8601 = vpack.c.b16 %v7001, %v6993
        %v8602 = vpack.c.b16 %v7002, %v6994
        %10203 = vmatprep.subr.bf16.mxu0 %v7004
        %10204 = vmatpush1.bf16.msra.mxu0 %v7003
        %10205 = vmatprep.subr.bf16.mxu0 %v7012
        %10206 = vmatpush1.bf16.msra.mxu0 %v7011
        %10207 = vmatprep.subr.bf16.mxu0 %v7020
        %10208 = vmatpush1.bf16.msra.mxu0 %v7019
        %10209 = vmatprep.subr.bf16.mxu0 %v7028
        %10210 = vmatpush1.bf16.msra.mxu0 %v7027
        %10211 = vmatprep.subr.bf16.mxu0 %v7036
        %10212 = vmatpush1.bf16.msra.mxu0 %v7035
        %10213 = vmatprep.subr.bf16.mxu0 %v7044
        %10214 = vmatpush1.bf16.msra.mxu0 %v7043
        %10215 = vmatprep.subr.bf16.mxu0 %v7052
        %10216 = vmatpush1.bf16.msra.mxu0 %v7051
        %10217 = vmatprep.subr.bf16.mxu0 %v7060
        %10218 = vmatpush1.bf16.msra.mxu0 %v7059
        %10219 = vmatprep.subr.bf16.mxu0 %v7068
        %10220 = vmatpush1.bf16.msra.mxu0 %v7067
        %10221 = vmatprep.subr.bf16.mxu0 %v7076
        %10222 = vmatpush1.bf16.msra.mxu0 %v7075
        %10223 = vmatprep.subr.bf16.mxu0 %v7084
        %10224 = vmatpush1.bf16.msra.mxu0 %v7083
        %10225 = vmatprep.subr.bf16.mxu0 %v7092
        %10226 = vmatpush1.bf16.msra.mxu0 %v7091
        %10227 = vmatprep.subr.bf16.mxu0 %v7100
        %10228 = vmatpush1.bf16.msra.mxu0 %v7099
        %10229 = vmatprep.subr.bf16.mxu0 %v7108
        %10230 = vmatpush1.bf16.msra.mxu0 %v7107
        %10231 = vmatprep.subr.bf16.mxu0 %v7116
        %10232 = vmatpush1.bf16.msra.mxu0 %v7115
        %10233 = vmatprep.subr.bf16.mxu0 %v7124
        %10234 = vmatpush1.bf16.msra.mxu0 %v7123
        %10235 = vmatprep.mubr.bf16.mxu0 %v2054
        %10236 = vmatmul.mubr.bf16.gmra.mrb[0].mxu0 %v2040
        %v10237 = vpop.f32.mrb[0].mxu0
        %v10238 = vadd.f32 0.0, %v10237
        %v10239 = vpop.f32.mrb[0].mxu0
        %v10240 = vadd.f32 0.0, %v10239
        %v10241 = vpop.f32.mrb[0].mxu0
        %v10242 = vpop.f32.mrb[0].mxu0
        %10243 = vdwg.mxu0
        %10244 = vmatprep.subr.bf16.mxu0 %v7132
        %10245 = vmatpush1.bf16.msra.mxu0 %v7131
        %10246 = vmatprep.subr.bf16.mxu0 %v7140
        %10247 = vmatpush1.bf16.msra.mxu0 %v7139
        %10248 = vmatprep.subr.bf16.mxu0 %v7148
        %10249 = vmatpush1.bf16.msra.mxu0 %v7147
        %10250 = vmatprep.subr.bf16.mxu0 %v7156
        %10251 = vmatpush1.bf16.msra.mxu0 %v7155
        %10252 = vmatprep.subr.bf16.mxu0 %v7164
        %10253 = vmatpush1.bf16.msra.mxu0 %v7163
        %10254 = vmatprep.subr.bf16.mxu0 %v7172
        %10255 = vmatpush1.bf16.msra.mxu0 %v7171
        %10256 = vmatprep.subr.bf16.mxu0 %v7180
        %10257 = vmatpush1.bf16.msra.mxu0 %v7179
        %10258 = vmatprep.subr.bf16.mxu0 %v7188
        %10259 = vmatpush1.bf16.msra.mxu0 %v7187
        %10260 = vmatprep.subr.bf16.mxu0 %v7196
        %10261 = vmatpush1.bf16.msra.mxu0 %v7195
        %10262 = vmatprep.subr.bf16.mxu0 %v7204
        %10263 = vmatpush1.bf16.msra.mxu0 %v7203
        %10264 = vmatprep.subr.bf16.mxu0 %v7212
        %10265 = vmatpush1.bf16.msra.mxu0 %v7211
        %10266 = vmatprep.subr.bf16.mxu0 %v7220
        %10267 = vmatpush1.bf16.msra.mxu0 %v7219
        %10268 = vmatprep.subr.bf16.mxu0 %v7228
        %10269 = vmatpush1.bf16.msra.mxu0 %v7227
        %10270 = vmatprep.subr.bf16.mxu0 %v7236
        %10271 = vmatpush1.bf16.msra.mxu0 %v7235
        %10272 = vmatprep.subr.bf16.mxu0 %v7244
        %10273 = vmatpush1.bf16.msra.mxu0 %v7243
        %10274 = vmatprep.subr.bf16.mxu0 %v7252
        %10275 = vmatpush1.bf16.msra.mxu0 %v7251
        %10276 = vmatprep.mubr.bf16.mxu0 %v2064
        %10277 = vmatmul.mubr.bf16.gmra.mrb[0].mxu0 %v2062
        %v10278 = vpop.f32.mrb[0].mxu0
        %v10279 = vadd.f32 %v10238, %v10278
        %v10280 = vpop.f32.mrb[0].mxu0
        %v10281 = vadd.f32 %v10240, %v10280
        %v10282 = vpop.f32.mrb[0].mxu0
        %v10283 = vpop.f32.mrb[0].mxu0
        %10284 = vdwg.mxu0
        %10285 = vmatprep.subr.bf16.mxu0 %v7260
        %10286 = vmatpush1.bf16.msra.mxu0 %v7259
        %10287 = vmatprep.subr.bf16.mxu0 %v7268
        %10288 = vmatpush1.bf16.msra.mxu0 %v7267
        %10289 = vmatprep.subr.bf16.mxu0 %v7276
        %10290 = vmatpush1.bf16.msra.mxu0 %v7275
        %10291 = vmatprep.subr.bf16.mxu0 %v7284
        %10292 = vmatpush1.bf16.msra.mxu0 %v7283
        %10293 = vmatprep.subr.bf16.mxu0 %v7292
        %10294 = vmatpush1.bf16.msra.mxu0 %v7291
        %10295 = vmatprep.subr.bf16.mxu0 %v7300
        %10296 = vmatpush1.bf16.msra.mxu0 %v7299
        %10297 = vmatprep.subr.bf16.mxu0 %v7308
        %10298 = vmatpush1.bf16.msra.mxu0 %v7307
        %10299 = vmatprep.subr.bf16.mxu0 %v7316
        %10300 = vmatpush1.bf16.msra.mxu0 %v7315
        %10301 = vmatprep.subr.bf16.mxu0 %v7324
        %10302 = vmatpush1.bf16.msra.mxu0 %v7323
        %10303 = vmatprep.subr.bf16.mxu0 %v7332
        %10304 = vmatpush1.bf16.msra.mxu0 %v7331
        %10305 = vmatprep.subr.bf16.mxu0 %v7340
        %10306 = vmatpush1.bf16.msra.mxu0 %v7339
        %10307 = vmatprep.subr.bf16.mxu0 %v7348
        %10308 = vmatpush1.bf16.msra.mxu0 %v7347
        %10309 = vmatprep.subr.bf16.mxu0 %v7356
        %10310 = vmatpush1.bf16.msra.mxu0 %v7355
        %10311 = vmatprep.subr.bf16.mxu0 %v7364
        %10312 = vmatpush1.bf16.msra.mxu0 %v7363
        %10313 = vmatprep.subr.bf16.mxu0 %v7372
        %10314 = vmatpush1.bf16.msra.mxu0 %v7371
        %10315 = vmatprep.subr.bf16.mxu0 %v7380
        %10316 = vmatpush1.bf16.msra.mxu0 %v7379
        %10317 = vmatprep.mubr.bf16.mxu0 %v2061
        %10318 = vmatmul.mubr.bf16.gmra.mrb[0].mxu0 %v2047
        %v10319 = vpop.f32.mrb[0].mxu0
        %v10320 = vadd.f32 %v10279, %v10319
        %v10321 = vpop.f32.mrb[0].mxu0
        %v10322 = vadd.f32 %v10281, %v10321
        %v10323 = vpop.f32.mrb[0].mxu0
        %v10324 = vpop.f32.mrb[0].mxu0
        %10325 = vdwg.mxu0
        %10326 = vmatprep.subr.bf16.mxu0 %v7388
        %10327 = vmatpush1.bf16.msra.mxu0 %v7387
        %10328 = vmatprep.subr.bf16.mxu0 %v7396
        %10329 = vmatpush1.bf16.msra.mxu0 %v7395
        %10330 = vmatprep.subr.bf16.mxu0 %v7404
        %10331 = vmatpush1.bf16.msra.mxu0 %v7403
        %10332 = vmatprep.subr.bf16.mxu0 %v7412
        %10333 = vmatpush1.bf16.msra.mxu0 %v7411
        %10334 = vmatprep.subr.bf16.mxu0 %v7420
        %10335 = vmatpush1.bf16.msra.mxu0 %v7419
        %10336 = vmatprep.subr.bf16.mxu0 %v7428
        %10337 = vmatpush1.bf16.msra.mxu0 %v7427
        %10338 = vmatprep.subr.bf16.mxu0 %v7436
        %10339 = vmatpush1.bf16.msra.mxu0 %v7435
        %10340 = vmatprep.subr.bf16.mxu0 %v7444
        %10341 = vmatpush1.bf16.msra.mxu0 %v7443
        %10342 = vmatprep.subr.bf16.mxu0 %v7452
        %10343 = vmatpush1.bf16.msra.mxu0 %v7451
        %10344 = vmatprep.subr.bf16.mxu0 %v7460
        %10345 = vmatpush1.bf16.msra.mxu0 %v7459
        %10346 = vmatprep.subr.bf16.mxu0 %v7468
        %10347 = vmatpush1.bf16.msra.mxu0 %v7467
        %10348 = vmatprep.subr.bf16.mxu0 %v7476
        %10349 = vmatpush1.bf16.msra.mxu0 %v7475
        %10350 = vmatprep.subr.bf16.mxu0 %v7484
        %10351 = vmatpush1.bf16.msra.mxu0 %v7483
        %10352 = vmatprep.subr.bf16.mxu0 %v7492
        %10353 = vmatpush1.bf16.msra.mxu0 %v7491
        %10354 = vmatprep.subr.bf16.mxu0 %v7500
        %10355 = vmatpush1.bf16.msra.mxu0 %v7499
        %10356 = vmatprep.subr.bf16.mxu0 %v7508
        %10357 = vmatpush1.bf16.msra.mxu0 %v7507
        %10358 = vmatprep.mubr.bf16.mxu0 %v2065
        %10359 = vmatmul.mubr.bf16.gmra.mrb[0].mxu0 %v2063
        %v10360 = vpop.f32.mrb[0].mxu0
        %v10361 = vadd.f32 %v10320, %v10360
        %v10362 = vpop.f32.mrb[0].mxu0
        %v10363 = vadd.f32 %v10322, %v10362
        %v10364 = vpop.f32.mrb[0].mxu0
        %v10365 = vpop.f32.mrb[0].mxu0
        %10366 = vdwg.mxu0
        %10367 = vmatprep.subr.bf16.mxu0 %v7516
        %10368 = vmatpush1.bf16.msra.mxu0 %v7515
        %10369 = vmatprep.subr.bf16.mxu0 %v7524
        %10370 = vmatpush1.bf16.msra.mxu0 %v7523
        %10371 = vmatprep.subr.bf16.mxu0 %v7532
        %10372 = vmatpush1.bf16.msra.mxu0 %v7531
        %10373 = vmatprep.subr.bf16.mxu0 %v7540
        %10374 = vmatpush1.bf16.msra.mxu0 %v7539
        %10375 = vmatprep.subr.bf16.mxu0 %v7548
        %10376 = vmatpush1.bf16.msra.mxu0 %v7547
        %10377 = vmatprep.subr.bf16.mxu0 %v7556
        %10378 = vmatpush1.bf16.msra.mxu0 %v7555
        %10379 = vmatprep.subr.bf16.mxu0 %v7564
        %10380 = vmatpush1.bf16.msra.mxu0 %v7563
        %10381 = vmatprep.subr.bf16.mxu0 %v7572
        %10382 = vmatpush1.bf16.msra.mxu0 %v7571
        %10383 = vmatprep.subr.bf16.mxu0 %v7580
        %10384 = vmatpush1.bf16.msra.mxu0 %v7579
        %10385 = vmatprep.subr.bf16.mxu0 %v7588
        %10386 = vmatpush1.bf16.msra.mxu0 %v7587
        %10387 = vmatprep.subr.bf16.mxu0 %v7596
        %10388 = vmatpush1.bf16.msra.mxu0 %v7595
        %10389 = vmatprep.subr.bf16.mxu0 %v7604
        %10390 = vmatpush1.bf16.msra.mxu0 %v7603
        %10391 = vmatprep.subr.bf16.mxu0 %v7612
        %10392 = vmatpush1.bf16.msra.mxu0 %v7611
        %10393 = vmatprep.subr.bf16.mxu0 %v7620
        %10394 = vmatpush1.bf16.msra.mxu0 %v7619
        %10395 = vmatprep.subr.bf16.mxu0 %v7628
        %10396 = vmatpush1.bf16.msra.mxu0 %v7627
        %10397 = vmatprep.subr.bf16.mxu0 %v7636
        %10398 = vmatpush1.bf16.msra.mxu0 %v7635
        %10399 = vmatprep.mubr.bf16.mxu0 %v2103
        %10400 = vmatmul.mubr.bf16.gmra.mrb[0].mxu0 %v2089
        %v10401 = vpop.f32.mrb[0].mxu0
        %v10402 = vadd.f32 %v10361, %v10401
        %v10403 = vpop.f32.mrb[0].mxu0
        %v10404 = vadd.f32 %v10363, %v10403
        %v10405 = vpop.f32.mrb[0].mxu0
        %v10406 = vpop.f32.mrb[0].mxu0
        %10407 = vdwg.mxu0
        %10408 = vmatprep.subr.bf16.mxu0 %v7644
        %10409 = vmatpush1.bf16.msra.mxu0 %v7643
        %10410 = vmatprep.subr.bf16.mxu0 %v7652
        %10411 = vmatpush1.bf16.msra.mxu0 %v7651
        %10412 = vmatprep.subr.bf16.mxu0 %v7660
        %10413 = vmatpush1.bf16.msra.mxu0 %v7659
        %10414 = vmatprep.subr.bf16.mxu0 %v7668
        %10415 = vmatpush1.bf16.msra.mxu0 %v7667
        %10416 = vmatprep.subr.bf16.mxu0 %v7676
        %10417 = vmatpush1.bf16.msra.mxu0 %v7675
        %10418 = vmatprep.subr.bf16.mxu0 %v7684
        %10419 = vmatpush1.bf16.msra.mxu0 %v7683
        %10420 = vmatprep.subr.bf16.mxu0 %v7692
        %10421 = vmatpush1.bf16.msra.mxu0 %v7691
        %10422 = vmatprep.subr.bf16.mxu0 %v7700
        %10423 = vmatpush1.bf16.msra.mxu0 %v7699
        %10424 = vmatprep.subr.bf16.mxu0 %v7708
        %10425 = vmatpush1.bf16.msra.mxu0 %v7707
        %10426 = vmatprep.subr.bf16.mxu0 %v7716
        %10427 = vmatpush1.bf16.msra.mxu0 %v7715
        %10428 = vmatprep.subr.bf16.mxu0 %v7724
        %10429 = vmatpush1.bf16.msra.mxu0 %v7723
        %10430 = vmatprep.subr.bf16.mxu0 %v7732
        %10431 = vmatpush1.bf16.msra.mxu0 %v7731
        %10432 = vmatprep.subr.bf16.mxu0 %v7740
        %10433 = vmatpush1.bf16.msra.mxu0 %v7739
        %10434 = vmatprep.subr.bf16.mxu0 %v7748
        %10435 = vmatpush1.bf16.msra.mxu0 %v7747
        %10436 = vmatprep.subr.bf16.mxu0 %v7756
        %10437 = vmatpush1.bf16.msra.mxu0 %v7755
        %10438 = vmatprep.subr.bf16.mxu0 %v7764
        %10439 = vmatpush1.bf16.msra.mxu0 %v7763
        %10440 = vmatprep.mubr.bf16.mxu0 %v2113
        %10441 = vmatmul.mubr.bf16.gmra.mrb[0].mxu0 %v2111
        %v10442 = vpop.f32.mrb[0].mxu0
        %v10443 = vadd.f32 %v10402, %v10442
        %v10444 = vpop.f32.mrb[0].mxu0
        %v10445 = vadd.f32 %v10404, %v10444
        %v10446 = vpop.f32.mrb[0].mxu0
        %v10447 = vpop.f32.mrb[0].mxu0
        %10448 = vdwg.mxu0
        %10449 = vmatprep.subr.bf16.mxu0 %v7772
        %10450 = vmatpush1.bf16.msra.mxu0 %v7771
        %10451 = vmatprep.subr.bf16.mxu0 %v7780
        %10452 = vmatpush1.bf16.msra.mxu0 %v7779
        %10453 = vmatprep.subr.bf16.mxu0 %v7788
        %10454 = vmatpush1.bf16.msra.mxu0 %v7787
        %10455 = vmatprep.subr.bf16.mxu0 %v7796
        %10456 = vmatpush1.bf16.msra.mxu0 %v7795
        %10457 = vmatprep.subr.bf16.mxu0 %v7804
        %10458 = vmatpush1.bf16.msra.mxu0 %v7803
        %10459 = vmatprep.subr.bf16.mxu0 %v7812
        %10460 = vmatpush1.bf16.msra.mxu0 %v7811
        %10461 = vmatprep.subr.bf16.mxu0 %v7820
        %10462 = vmatpush1.bf16.msra.mxu0 %v7819
        %10463 = vmatprep.subr.bf16.mxu0 %v7828
        %10464 = vmatpush1.bf16.msra.mxu0 %v7827
        %10465 = vmatprep.subr.bf16.mxu0 %v7836
        %10466 = vmatpush1.bf16.msra.mxu0 %v7835
        %10467 = vmatprep.subr.bf16.mxu0 %v7844
        %10468 = vmatpush1.bf16.msra.mxu0 %v7843
        %10469 = vmatprep.subr.bf16.mxu0 %v7852
        %10470 = vmatpush1.bf16.msra.mxu0 %v7851
        %10471 = vmatprep.subr.bf16.mxu0 %v7860
        %10472 = vmatpush1.bf16.msra.mxu0 %v7859
        %10473 = vmatprep.subr.bf16.mxu0 %v7868
        %10474 = vmatpush1.bf16.msra.mxu0 %v7867
        %10475 = vmatprep.subr.bf16.mxu0 %v7876
        %10476 = vmatpush1.bf16.msra.mxu0 %v7875
        %10477 = vmatprep.subr.bf16.mxu0 %v7884
        %10478 = vmatpush1.bf16.msra.mxu0 %v7883
        %10479 = vmatprep.subr.bf16.mxu0 %v7892
        %10480 = vmatpush1.bf16.msra.mxu0 %v7891
        %10481 = vmatprep.mubr.bf16.mxu0 %v2110
        %10482 = vmatmul.mubr.bf16.gmra.mrb[0].mxu0 %v2096
        %v10483 = vpop.f32.mrb[0].mxu0
        %v10484 = vadd.f32 %v10443, %v10483
        %v10485 = vpop.f32.mrb[0].mxu0
        %v10486 = vadd.f32 %v10445, %v10485
        %v10487 = vpop.f32.mrb[0].mxu0
        %v10488 = vpop.f32.mrb[0].mxu0
        %10489 = vdwg.mxu0
        %10490 = vmatprep.subr.bf16.mxu0 %v7900
        %10491 = vmatpush1.bf16.msra.mxu0 %v7899
        %10492 = vmatprep.subr.bf16.mxu0 %v7908
        %10493 = vmatpush1.bf16.msra.mxu0 %v7907
        %10494 = vmatprep.subr.bf16.mxu0 %v7916
        %10495 = vmatpush1.bf16.msra.mxu0 %v7915
        %10496 = vmatprep.subr.bf16.mxu0 %v7924
        %10497 = vmatpush1.bf16.msra.mxu0 %v7923
        %10498 = vmatprep.subr.bf16.mxu0 %v7932
        %10499 = vmatpush1.bf16.msra.mxu0 %v7931
        %10500 = vmatprep.subr.bf16.mxu0 %v7940
        %10501 = vmatpush1.bf16.msra.mxu0 %v7939
        %10502 = vmatprep.subr.bf16.mxu0 %v7948
        %10503 = vmatpush1.bf16.msra.mxu0 %v7947
        %10504 = vmatprep.subr.bf16.mxu0 %v7956
        %10505 = vmatpush1.bf16.msra.mxu0 %v7955
        %10506 = vmatprep.subr.bf16.mxu0 %v7964
        %10507 = vmatpush1.bf16.msra.mxu0 %v7963
        %10508 = vmatprep.subr.bf16.mxu0 %v7972
        %10509 = vmatpush1.bf16.msra.mxu0 %v7971
        %10510 = vmatprep.subr.bf16.mxu0 %v7980
        %10511 = vmatpush1.bf16.msra.mxu0 %v7979
        %10512 = vmatprep.subr.bf16.mxu0 %v7988
        %10513 = vmatpush1.bf16.msra.mxu0 %v7987
        %10514 = vmatprep.subr.bf16.mxu0 %v7996
        %10515 = vmatpush1.bf16.msra.mxu0 %v7995
        %10516 = vmatprep.subr.bf16.mxu0 %v8004
        %10517 = vmatpush1.bf16.msra.mxu0 %v8003
        %10518 = vmatprep.subr.bf16.mxu0 %v8012
        %10519 = vmatpush1.bf16.msra.mxu0 %v8011
        %10520 = vmatprep.subr.bf16.mxu0 %v8020
        %10521 = vmatpush1.bf16.msra.mxu0 %v8019
        %10522 = vmatprep.mubr.bf16.mxu0 %v2114
        %10523 = vmatmul.mubr.bf16.gmra.mrb[0].mxu0 %v2112
        %v10524 = vpop.f32.mrb[0].mxu0
        %v10525 = vadd.f32 %v10484, %v10524
        %v10526 = vpop.f32.mrb[0].mxu0
        %v10527 = vadd.f32 %v10486, %v10526
        %v10528 = vpop.f32.mrb[0].mxu0
        %v10529 = vpop.f32.mrb[0].mxu0
        %10530 = vdwg.mxu0
        %10531 = vmatprep.subr.bf16.mxu0 %v8028
        %10532 = vmatpush1.bf16.msra.mxu0 %v8027
        %10533 = vmatprep.subr.bf16.mxu0 %v8036
        %10534 = vmatpush1.bf16.msra.mxu0 %v8035
        %10535 = vmatprep.subr.bf16.mxu0 %v8044
        %10536 = vmatpush1.bf16.msra.mxu0 %v8043
        %10537 = vmatprep.subr.bf16.mxu0 %v8052
        %10538 = vmatpush1.bf16.msra.mxu0 %v8051
        %10539 = vmatprep.subr.bf16.mxu0 %v8060
        %10540 = vmatpush1.bf16.msra.mxu0 %v8059
        %10541 = vmatprep.subr.bf16.mxu0 %v8068
        %10542 = vmatpush1.bf16.msra.mxu0 %v8067
        %10543 = vmatprep.subr.bf16.mxu0 %v8076
        %10544 = vmatpush1.bf16.msra.mxu0 %v8075
        %10545 = vmatprep.subr.bf16.mxu0 %v8084
        %10546 = vmatpush1.bf16.msra.mxu0 %v8083
        %10547 = vmatprep.subr.bf16.mxu0 %v8092
        %10548 = vmatpush1.bf16.msra.mxu0 %v8091
        %10549 = vmatprep.subr.bf16.mxu0 %v8100
        %10550 = vmatpush1.bf16.msra.mxu0 %v8099
        %10551 = vmatprep.subr.bf16.mxu0 %v8108
        %10552 = vmatpush1.bf16.msra.mxu0 %v8107
        %10553 = vmatprep.subr.bf16.mxu0 %v8116
        %10554 = vmatpush1.bf16.msra.mxu0 %v8115
        %10555 = vmatprep.subr.bf16.mxu0 %v8124
        %10556 = vmatpush1.bf16.msra.mxu0 %v8123
        %10557 = vmatprep.subr.bf16.mxu0 %v8132
        %10558 = vmatpush1.bf16.msra.mxu0 %v8131
        %10559 = vmatprep.subr.bf16.mxu0 %v8140
        %10560 = vmatpush1.bf16.msra.mxu0 %v8139
        %10561 = vmatprep.subr.bf16.mxu0 %v8148
        %10562 = vmatpush1.bf16.msra.mxu0 %v8147
        %10563 = vmatprep.mubr.bf16.mxu0 %v2152
        %10564 = vmatmul.mubr.bf16.gmra.mrb[0].mxu0 %v2138
        %v10565 = vpop.f32.mrb[0].mxu0
        %v10566 = vadd.f32 %v10525, %v10565
        %v10567 = vpop.f32.mrb[0].mxu0
        %v10568 = vadd.f32 %v10527, %v10567
        %v10569 = vpop.f32.mrb[0].mxu0
        %v10570 = vpop.f32.mrb[0].mxu0
        %10571 = vdwg.mxu0
        %10572 = vmatprep.subr.bf16.mxu0 %v8156
        %10573 = vmatpush1.bf16.msra.mxu0 %v8155
        %10574 = vmatprep.subr.bf16.mxu0 %v8164
        %10575 = vmatpush1.bf16.msra.mxu0 %v8163
        %10576 = vmatprep.subr.bf16.mxu0 %v8172
        %10577 = vmatpush1.bf16.msra.mxu0 %v8171
        %10578 = vmatprep.subr.bf16.mxu0 %v8180
        %10579 = vmatpush1.bf16.msra.mxu0 %v8179
        %10580 = vmatprep.subr.bf16.mxu0 %v8188
        %10581 = vmatpush1.bf16.msra.mxu0 %v8187
        %10582 = vmatprep.subr.bf16.mxu0 %v8196
        %10583 = vmatpush1.bf16.msra.mxu0 %v8195
        %10584 = vmatprep.subr.bf16.mxu0 %v8204
        %10585 = vmatpush1.bf16.msra.mxu0 %v8203
        %10586 = vmatprep.subr.bf16.mxu0 %v8212
        %10587 = vmatpush1.bf16.msra.mxu0 %v8211
        %10588 = vmatprep.subr.bf16.mxu0 %v8220
        %10589 = vmatpush1.bf16.msra.mxu0 %v8219
        %10590 = vmatprep.subr.bf16.mxu0 %v8228
        %10591 = vmatpush1.bf16.msra.mxu0 %v8227
        %10592 = vmatprep.subr.bf16.mxu0 %v8236
        %10593 = vmatpush1.bf16.msra.mxu0 %v8235
        %10594 = vmatprep.subr.bf16.mxu0 %v8244
        %10595 = vmatpush1.bf16.msra.mxu0 %v8243
        %10596 = vmatprep.subr.bf16.mxu0 %v8252
        %10597 = vmatpush1.bf16.msra.mxu0 %v8251
        %10598 = vmatprep.subr.bf16.mxu0 %v8260
        %10599 = vmatpush1.bf16.msra.mxu0 %v8259
        %10600 = vmatprep.subr.bf16.mxu0 %v8268
        %10601 = vmatpush1.bf16.msra.mxu0 %v8267
        %10602 = vmatprep.subr.bf16.mxu0 %v8276
        %10603 = vmatpush1.bf16.msra.mxu0 %v8275
        %10604 = vmatprep.mubr.bf16.mxu0 %v2162
        %10605 = vmatmul.mubr.bf16.gmra.mrb[0].mxu0 %v2160
        %v10606 = vpop.f32.mrb[0].mxu0
        %v10607 = vadd.f32 %v10566, %v10606
        %v10608 = vpop.f32.mrb[0].mxu0
        %v10609 = vadd.f32 %v10568, %v10608
        %v10610 = vpop.f32.mrb[0].mxu0
        %v10611 = vpop.f32.mrb[0].mxu0
        %10612 = vdwg.mxu0
        %10613 = vmatprep.subr.bf16.mxu0 %v8284
        %10614 = vmatpush1.bf16.msra.mxu0 %v8283
        %10615 = vmatprep.subr.bf16.mxu0 %v8292
        %10616 = vmatpush1.bf16.msra.mxu0 %v8291
        %10617 = vmatprep.subr.bf16.mxu0 %v8300
        %10618 = vmatpush1.bf16.msra.mxu0 %v8299
        %10619 = vmatprep.subr.bf16.mxu0 %v8308
        %10620 = vmatpush1.bf16.msra.mxu0 %v8307
        %10621 = vmatprep.subr.bf16.mxu0 %v8316
        %10622 = vmatpush1.bf16.msra.mxu0 %v8315
        %10623 = vmatprep.subr.bf16.mxu0 %v8324
        %10624 = vmatpush1.bf16.msra.mxu0 %v8323
        %10625 = vmatprep.subr.bf16.mxu0 %v8332
        %10626 = vmatpush1.bf16.msra.mxu0 %v8331
        %10627 = vmatprep.subr.bf16.mxu0 %v8340
        %10628 = vmatpush1.bf16.msra.mxu0 %v8339
        %10629 = vmatprep.subr.bf16.mxu0 %v8348
        %10630 = vmatpush1.bf16.msra.mxu0 %v8347
        %10631 = vmatprep.subr.bf16.mxu0 %v8356
        %10632 = vmatpush1.bf16.msra.mxu0 %v8355
        %10633 = vmatprep.subr.bf16.mxu0 %v8364
        %10634 = vmatpush1.bf16.msra.mxu0 %v8363
        %10635 = vmatprep.subr.bf16.mxu0 %v8372
        %10636 = vmatpush1.bf16.msra.mxu0 %v8371
        %10637 = vmatprep.subr.bf16.mxu0 %v8380
        %10638 = vmatpush1.bf16.msra.mxu0 %v8379
        %10639 = vmatprep.subr.bf16.mxu0 %v8388
        %10640 = vmatpush1.bf16.msra.mxu0 %v8387
        %10641 = vmatprep.subr.bf16.mxu0 %v8396
        %10642 = vmatpush1.bf16.msra.mxu0 %v8395
        %10643 = vmatprep.subr.bf16.mxu0 %v8404
        %10644 = vmatpush1.bf16.msra.mxu0 %v8403
        %10645 = vmatprep.mubr.bf16.mxu0 %v2159
        %10646 = vmatmul.mubr.bf16.gmra.mrb[0].mxu0 %v2145
        %v10647 = vpop.f32.mrb[0].mxu0
        %v10648 = vadd.f32 %v10607, %v10647
        %v10649 = vpop.f32.mrb[0].mxu0
        %v10650 = vadd.f32 %v10609, %v10649
        %v10651 = vpop.f32.mrb[0].mxu0
        %v10652 = vpop.f32.mrb[0].mxu0
        %10653 = vdwg.mxu0
        %10654 = vmatprep.subr.bf16.mxu0 %v8412
        %10655 = vmatpush1.bf16.msra.mxu0 %v8411
        %10656 = vmatprep.subr.bf16.mxu0 %v8420
        %10657 = vmatpush1.bf16.msra.mxu0 %v8419
        %10658 = vmatprep.subr.bf16.mxu0 %v8428
        %10659 = vmatpush1.bf16.msra.mxu0 %v8427
        %10660 = vmatprep.subr.bf16.mxu0 %v8436
        %10661 = vmatpush1.bf16.msra.mxu0 %v8435
        %10662 = vmatprep.subr.bf16.mxu0 %v8444
        %10663 = vmatpush1.bf16.msra.mxu0 %v8443
        %10664 = vmatprep.subr.bf16.mxu0 %v8452
        %10665 = vmatpush1.bf16.msra.mxu0 %v8451
        %10666 = vmatprep.subr.bf16.mxu0 %v8460
        %10667 = vmatpush1.bf16.msra.mxu0 %v8459
        %10668 = vmatprep.subr.bf16.mxu0 %v8468
        %10669 = vmatpush1.bf16.msra.mxu0 %v8467
        %10670 = vmatprep.subr.bf16.mxu0 %v8476
        %10671 = vmatpush1.bf16.msra.mxu0 %v8475
        %10672 = vmatprep.subr.bf16.mxu0 %v8484
        %10673 = vmatpush1.bf16.msra.mxu0 %v8483
        %10674 = vmatprep.subr.bf16.mxu0 %v8492
        %10675 = vmatpush1.bf16.msra.mxu0 %v8491
        %10676 = vmatprep.subr.bf16.mxu0 %v8500
        %10677 = vmatpush1.bf16.msra.mxu0 %v8499
        %10678 = vmatprep.subr.bf16.mxu0 %v8508
        %10679 = vmatpush1.bf16.msra.mxu0 %v8507
        %10680 = vmatprep.subr.bf16.mxu0 %v8516
        %10681 = vmatpush1.bf16.msra.mxu0 %v8515
        %10682 = vmatprep.subr.bf16.mxu0 %v8524
        %10683 = vmatpush1.bf16.msra.mxu0 %v8523
        %10684 = vmatprep.subr.bf16.mxu0 %v8532
        %10685 = vmatpush1.bf16.msra.mxu0 %v8531
        %10686 = vmatprep.mubr.bf16.mxu0 %v2163
        %10687 = vmatmul.mubr.bf16.gmra.mrb[0].mxu0 %v2161
        %v10688 = vpop.f32.mrb[0].mxu0
        %v10689 = vadd.f32 %v10648, %v10688
        %v10690 = vpop.f32.mrb[0].mxu0
        %v10691 = vadd.f32 %v10650, %v10690
        %v10692 = vpop.f32.mrb[0].mxu0
        %v10693 = vpop.f32.mrb[0].mxu0
        %10694 = vdwg.mxu0
        %10695 = vmatprep.subr.bf16.mxu0 %v8540
        %10696 = vmatpush1.bf16.msra.mxu0 %v8539
        %10697 = vmatprep.subr.bf16.mxu0 %v8548
        %10698 = vmatpush1.bf16.msra.mxu0 %v8547
        %10699 = vmatprep.subr.bf16.mxu0 %v8556
        %10700 = vmatpush1.bf16.msra.mxu0 %v8555
        %10701 = vmatprep.subr.bf16.mxu0 %v8564
        %10702 = vmatpush1.bf16.msra.mxu0 %v8563
        %10703 = vmatprep.subr.bf16.mxu0 %v8572
        %10704 = vmatpush1.bf16.msra.mxu0 %v8571
        %10705 = vmatprep.subr.bf16.mxu0 %v8580
        %10706 = vmatpush1.bf16.msra.mxu0 %v8579
        %10707 = vmatprep.subr.bf16.mxu0 %v8588
        %10708 = vmatpush1.bf16.msra.mxu0 %v8587
        %10709 = vmatprep.subr.bf16.mxu0 %v8596
        %10710 = vmatpush1.bf16.msra.mxu0 %v8595
        %10711 = vmatprep.subr.bf16.mxu0 0
        %10712 = vmatpush1.bf16.msra.mxu0 0
        %10713 = vmatprep.subr.bf16.mxu0 0
        %10714 = vmatpush1.bf16.msra.mxu0 0
        %10715 = vmatprep.subr.bf16.mxu0 0
        %10716 = vmatpush1.bf16.msra.mxu0 0
        %10717 = vmatprep.subr.bf16.mxu0 0
        %10718 = vmatpush1.bf16.msra.mxu0 0
        %10719 = vmatprep.subr.bf16.mxu0 0
        %10720 = vmatpush1.bf16.msra.mxu0 0
        %10721 = vmatprep.subr.bf16.mxu0 0
        %10722 = vmatpush1.bf16.msra.mxu0 0
        %10723 = vmatprep.subr.bf16.mxu0 0
        %10724 = vmatpush1.bf16.msra.mxu0 0
        %10725 = vmatprep.subr.bf16.mxu0 0
        %10726 = vmatpush1.bf16.msra.mxu0 0
        %10727 = vmatprep.mubr.bf16.mxu0 0
        %10728 = vmatmul.mubr.bf16.gmra.mrb[0].mxu0 %v2177
        %v10729 = vpop.f32.mrb[0].mxu0
        %v10730 = vadd.f32 %v10689, %v10729
        %v10731 = vpop.f32.mrb[0].mxu0
        %v10732 = vadd.f32 %v10691, %v10731
        %v10733 = vpop.f32.mrb[0].mxu0
        %v10734 = vpop.f32.mrb[0].mxu0
        %10735 = vdwg.mxu0
        %10736 = vmatprep.subr.bf16.mxu0 %v7006
        %10737 = vmatpush1.bf16.msra.mxu0 %v7005
        %10738 = vmatprep.subr.bf16.mxu0 %v7014
        %10739 = vmatpush1.bf16.msra.mxu0 %v7013
        %10740 = vmatprep.subr.bf16.mxu0 %v7022
        %10741 = vmatpush1.bf16.msra.mxu0 %v7021
        %10742 = vmatprep.subr.bf16.mxu0 %v7030
        %10743 = vmatpush1.bf16.msra.mxu0 %v7029
        %10744 = vmatprep.subr.bf16.mxu0 %v7038
        %10745 = vmatpush1.bf16.msra.mxu0 %v7037
        %10746 = vmatprep.subr.bf16.mxu0 %v7046
        %10747 = vmatpush1.bf16.msra.mxu0 %v7045
        %10748 = vmatprep.subr.bf16.mxu0 %v7054
        %10749 = vmatpush1.bf16.msra.mxu0 %v7053
        %10750 = vmatprep.subr.bf16.mxu0 %v7062
        %10751 = vmatpush1.bf16.msra.mxu0 %v7061
        %10752 = vmatprep.subr.bf16.mxu0 %v7070
        %10753 = vmatpush1.bf16.msra.mxu0 %v7069
        %10754 = vmatprep.subr.bf16.mxu0 %v7078
        %10755 = vmatpush1.bf16.msra.mxu0 %v7077
        %10756 = vmatprep.subr.bf16.mxu0 %v7086
        %10757 = vmatpush1.bf16.msra.mxu0 %v7085
        %10758 = vmatprep.subr.bf16.mxu0 %v7094
        %10759 = vmatpush1.bf16.msra.mxu0 %v7093
        %10760 = vmatprep.subr.bf16.mxu0 %v7102
        %10761 = vmatpush1.bf16.msra.mxu0 %v7101
        %10762 = vmatprep.subr.bf16.mxu0 %v7110
        %10763 = vmatpush1.bf16.msra.mxu0 %v7109
        %10764 = vmatprep.subr.bf16.mxu0 %v7118
        %10765 = vmatpush1.bf16.msra.mxu0 %v7117
        %10766 = vmatprep.subr.bf16.mxu0 %v7126
        %10767 = vmatpush1.bf16.msra.mxu0 %v7125
        %10768 = vmatprep.mubr.bf16.mxu0 %v2054
        %10769 = vmatmul.mubr.bf16.gmra.mrb[0].mxu0 %v2040
        %v10770 = vpop.f32.mrb[0].mxu0
        %v10771 = vadd.f32 0.0, %v10770
        %v10772 = vpop.f32.mrb[0].mxu0
        %v10773 = vadd.f32 0.0, %v10772
        %v10774 = vpop.f32.mrb[0].mxu0
        %v10775 = vpop.f32.mrb[0].mxu0
        %10776 = vdwg.mxu0
        %10777 = vmatprep.subr.bf16.mxu0 %v7134
        %10778 = vmatpush1.bf16.msra.mxu0 %v7133
        %10779 = vmatprep.subr.bf16.mxu0 %v7142
        %10780 = vmatpush1.bf16.msra.mxu0 %v7141
        %10781 = vmatprep.subr.bf16.mxu0 %v7150
        %10782 = vmatpush1.bf16.msra.mxu0 %v7149
        %10783 = vmatprep.subr.bf16.mxu0 %v7158
        %10784 = vmatpush1.bf16.msra.mxu0 %v7157
        %10785 = vmatprep.subr.bf16.mxu0 %v7166
        %10786 = vmatpush1.bf16.msra.mxu0 %v7165
        %10787 = vmatprep.subr.bf16.mxu0 %v7174
        %10788 = vmatpush1.bf16.msra.mxu0 %v7173
        %10789 = vmatprep.subr.bf16.mxu0 %v7182
        %10790 = vmatpush1.bf16.msra.mxu0 %v7181
        %10791 = vmatprep.subr.bf16.mxu0 %v7190
        %10792 = vmatpush1.bf16.msra.mxu0 %v7189
        %10793 = vmatprep.subr.bf16.mxu0 %v7198
        %10794 = vmatpush1.bf16.msra.mxu0 %v7197
        %10795 = vmatprep.subr.bf16.mxu0 %v7206
        %10796 = vmatpush1.bf16.msra.mxu0 %v7205
        %10797 = vmatprep.subr.bf16.mxu0 %v7214
        %10798 = vmatpush1.bf16.msra.mxu0 %v7213
        %10799 = vmatprep.subr.bf16.mxu0 %v7222
        %10800 = vmatpush1.bf16.msra.mxu0 %v7221
        %10801 = vmatprep.subr.bf16.mxu0 %v7230
        %10802 = vmatpush1.bf16.msra.mxu0 %v7229
        %10803 = vmatprep.subr.bf16.mxu0 %v7238
        %10804 = vmatpush1.bf16.msra.mxu0 %v7237
        %10805 = vmatprep.subr.bf16.mxu0 %v7246
        %10806 = vmatpush1.bf16.msra.mxu0 %v7245
        %10807 = vmatprep.subr.bf16.mxu0 %v7254
        %10808 = vmatpush1.bf16.msra.mxu0 %v7253
        %10809 = vmatprep.mubr.bf16.mxu0 %v2064
        %10810 = vmatmul.mubr.bf16.gmra.mrb[0].mxu0 %v2062
        %v10811 = vpop.f32.mrb[0].mxu0
        %v10812 = vadd.f32 %v10771, %v10811
        %v10813 = vpop.f32.mrb[0].mxu0
        %v10814 = vadd.f32 %v10773, %v10813
        %v10815 = vpop.f32.mrb[0].mxu0
        %v10816 = vpop.f32.mrb[0].mxu0
        %10817 = vdwg.mxu0
        %10818 = vmatprep.subr.bf16.mxu0 %v7262
        %10819 = vmatpush1.bf16.msra.mxu0 %v7261
        %10820 = vmatprep.subr.bf16.mxu0 %v7270
        %10821 = vmatpush1.bf16.msra.mxu0 %v7269
        %10822 = vmatprep.subr.bf16.mxu0 %v7278
        %10823 = vmatpush1.bf16.msra.mxu0 %v7277
        %10824 = vmatprep.subr.bf16.mxu0 %v7286
        %10825 = vmatpush1.bf16.msra.mxu0 %v7285
        %10826 = vmatprep.subr.bf16.mxu0 %v7294
        %10827 = vmatpush1.bf16.msra.mxu0 %v7293
        %10828 = vmatprep.subr.bf16.mxu0 %v7302
        %10829 = vmatpush1.bf16.msra.mxu0 %v7301
        %10830 = vmatprep.subr.bf16.mxu0 %v7310
        %10831 = vmatpush1.bf16.msra.mxu0 %v7309
        %10832 = vmatprep.subr.bf16.mxu0 %v7318
        %10833 = vmatpush1.bf16.msra.mxu0 %v7317
        %10834 = vmatprep.subr.bf16.mxu0 %v7326
        %10835 = vmatpush1.bf16.msra.mxu0 %v7325
        %10836 = vmatprep.subr.bf16.mxu0 %v7334
        %10837 = vmatpush1.bf16.msra.mxu0 %v7333
        %10838 = vmatprep.subr.bf16.mxu0 %v7342
        %10839 = vmatpush1.bf16.msra.mxu0 %v7341
        %10840 = vmatprep.subr.bf16.mxu0 %v7350
        %10841 = vmatpush1.bf16.msra.mxu0 %v7349
        %10842 = vmatprep.subr.bf16.mxu0 %v7358
        %10843 = vmatpush1.bf16.msra.mxu0 %v7357
        %10844 = vmatprep.subr.bf16.mxu0 %v7366
        %10845 = vmatpush1.bf16.msra.mxu0 %v7365
        %10846 = vmatprep.subr.bf16.mxu0 %v7374
        %10847 = vmatpush1.bf16.msra.mxu0 %v7373
        %10848 = vmatprep.subr.bf16.mxu0 %v7382
        %10849 = vmatpush1.bf16.msra.mxu0 %v7381
        %10850 = vmatprep.mubr.bf16.mxu0 %v2061
        %10851 = vmatmul.mubr.bf16.gmra.mrb[0].mxu0 %v2047
        %v10852 = vpop.f32.mrb[0].mxu0
        %v10853 = vadd.f32 %v10812, %v10852
        %v10854 = vpop.f32.mrb[0].mxu0
        %v10855 = vadd.f32 %v10814, %v10854
        %v10856 = vpop.f32.mrb[0].mxu0
        %v10857 = vpop.f32.mrb[0].mxu0
        %10858 = vdwg.mxu0
        %10859 = vmatprep.subr.bf16.mxu0 %v7390
        %10860 = vmatpush1.bf16.msra.mxu0 %v7389
        %10861 = vmatprep.subr.bf16.mxu0 %v7398
        %10862 = vmatpush1.bf16.msra.mxu0 %v7397
        %10863 = vmatprep.subr.bf16.mxu0 %v7406
        %10864 = vmatpush1.bf16.msra.mxu0 %v7405
        %10865 = vmatprep.subr.bf16.mxu0 %v7414
        %10866 = vmatpush1.bf16.msra.mxu0 %v7413
        %10867 = vmatprep.subr.bf16.mxu0 %v7422
        %10868 = vmatpush1.bf16.msra.mxu0 %v7421
        %10869 = vmatprep.subr.bf16.mxu0 %v7430
        %10870 = vmatpush1.bf16.msra.mxu0 %v7429
        %10871 = vmatprep.subr.bf16.mxu0 %v7438
        %10872 = vmatpush1.bf16.msra.mxu0 %v7437
        %10873 = vmatprep.subr.bf16.mxu0 %v7446
        %10874 = vmatpush1.bf16.msra.mxu0 %v7445
        %10875 = vmatprep.subr.bf16.mxu0 %v7454
        %10876 = vmatpush1.bf16.msra.mxu0 %v7453
        %10877 = vmatprep.subr.bf16.mxu0 %v7462
        %10878 = vmatpush1.bf16.msra.mxu0 %v7461
        %10879 = vmatprep.subr.bf16.mxu0 %v7470
        %10880 = vmatpush1.bf16.msra.mxu0 %v7469
        %10881 = vmatprep.subr.bf16.mxu0 %v7478
        %10882 = vmatpush1.bf16.msra.mxu0 %v7477
        %10883 = vmatprep.subr.bf16.mxu0 %v7486
        %10884 = vmatpush1.bf16.msra.mxu0 %v7485
        %10885 = vmatprep.subr.bf16.mxu0 %v7494
        %10886 = vmatpush1.bf16.msra.mxu0 %v7493
        %10887 = vmatprep.subr.bf16.mxu0 %v7502
        %10888 = vmatpush1.bf16.msra.mxu0 %v7501
        %10889 = vmatprep.subr.bf16.mxu0 %v7510
        %10890 = vmatpush1.bf16.msra.mxu0 %v7509
        %10891 = vmatprep.mubr.bf16.mxu0 %v2065
        %10892 = vmatmul.mubr.bf16.gmra.mrb[0].mxu0 %v2063
        %v10893 = vpop.f32.mrb[0].mxu0
        %v10894 = vadd.f32 %v10853, %v10893
        %v10895 = vpop.f32.mrb[0].mxu0
        %v10896 = vadd.f32 %v10855, %v10895
        %v10897 = vpop.f32.mrb[0].mxu0
        %v10898 = vpop.f32.mrb[0].mxu0
        %10899 = vdwg.mxu0
        %10900 = vmatprep.subr.bf16.mxu0 %v7518
        %10901 = vmatpush1.bf16.msra.mxu0 %v7517
        %10902 = vmatprep.subr.bf16.mxu0 %v7526
        %10903 = vmatpush1.bf16.msra.mxu0 %v7525
        %10904 = vmatprep.subr.bf16.mxu0 %v7534
        %10905 = vmatpush1.bf16.msra.mxu0 %v7533
        %10906 = vmatprep.subr.bf16.mxu0 %v7542
        %10907 = vmatpush1.bf16.msra.mxu0 %v7541
        %10908 = vmatprep.subr.bf16.mxu0 %v7550
        %10909 = vmatpush1.bf16.msra.mxu0 %v7549
        %10910 = vmatprep.subr.bf16.mxu0 %v7558
        %10911 = vmatpush1.bf16.msra.mxu0 %v7557
        %10912 = vmatprep.subr.bf16.mxu0 %v7566
        %10913 = vmatpush1.bf16.msra.mxu0 %v7565
        %10914 = vmatprep.subr.bf16.mxu0 %v7574
        %10915 = vmatpush1.bf16.msra.mxu0 %v7573
        %10916 = vmatprep.subr.bf16.mxu0 %v7582
        %10917 = vmatpush1.bf16.msra.mxu0 %v7581
        %10918 = vmatprep.subr.bf16.mxu0 %v7590
        %10919 = vmatpush1.bf16.msra.mxu0 %v7589
        %10920 = vmatprep.subr.bf16.mxu0 %v7598
        %10921 = vmatpush1.bf16.msra.mxu0 %v7597
        %10922 = vmatprep.subr.bf16.mxu0 %v7606
        %10923 = vmatpush1.bf16.msra.mxu0 %v7605
        %10924 = vmatprep.subr.bf16.mxu0 %v7614
        %10925 = vmatpush1.bf16.msra.mxu0 %v7613
        %10926 = vmatprep.subr.bf16.mxu0 %v7622
        %10927 = vmatpush1.bf16.msra.mxu0 %v7621
        %10928 = vmatprep.subr.bf16.mxu0 %v7630
        %10929 = vmatpush1.bf16.msra.mxu0 %v7629
        %10930 = vmatprep.subr.bf16.mxu0 %v7638
        %10931 = vmatpush1.bf16.msra.mxu0 %v7637
        %10932 = vmatprep.mubr.bf16.mxu0 %v2103
        %10933 = vmatmul.mubr.bf16.gmra.mrb[0].mxu0 %v2089
        %v10934 = vpop.f32.mrb[0].mxu0
        %v10935 = vadd.f32 %v10894, %v10934
        %v10936 = vpop.f32.mrb[0].mxu0
        %v10937 = vadd.f32 %v10896, %v10936
        %v10938 = vpop.f32.mrb[0].mxu0
        %v10939 = vpop.f32.mrb[0].mxu0
        %10940 = vdwg.mxu0
        %10941 = vmatprep.subr.bf16.mxu0 %v7646
        %10942 = vmatpush1.bf16.msra.mxu0 %v7645
        %10943 = vmatprep.subr.bf16.mxu0 %v7654
        %10944 = vmatpush1.bf16.msra.mxu0 %v7653
        %10945 = vmatprep.subr.bf16.mxu0 %v7662
        %10946 = vmatpush1.bf16.msra.mxu0 %v7661
        %10947 = vmatprep.subr.bf16.mxu0 %v7670
        %10948 = vmatpush1.bf16.msra.mxu0 %v7669
        %10949 = vmatprep.subr.bf16.mxu0 %v7678
        %10950 = vmatpush1.bf16.msra.mxu0 %v7677
        %10951 = vmatprep.subr.bf16.mxu0 %v7686
        %10952 = vmatpush1.bf16.msra.mxu0 %v7685
        %10953 = vmatprep.subr.bf16.mxu0 %v7694
        %10954 = vmatpush1.bf16.msra.mxu0 %v7693
        %10955 = vmatprep.subr.bf16.mxu0 %v7702
        %10956 = vmatpush1.bf16.msra.mxu0 %v7701
        %10957 = vmatprep.subr.bf16.mxu0 %v7710
        %10958 = vmatpush1.bf16.msra.mxu0 %v7709
        %10959 = vmatprep.subr.bf16.mxu0 %v7718
        %10960 = vmatpush1.bf16.msra.mxu0 %v7717
        %10961 = vmatprep.subr.bf16.mxu0 %v7726
        %10962 = vmatpush1.bf16.msra.mxu0 %v7725
        %10963 = vmatprep.subr.bf16.mxu0 %v7734
        %10964 = vmatpush1.bf16.msra.mxu0 %v7733
        %10965 = vmatprep.subr.bf16.mxu0 %v7742
        %10966 = vmatpush1.bf16.msra.mxu0 %v7741
        %10967 = vmatprep.subr.bf16.mxu0 %v7750
        %10968 = vmatpush1.bf16.msra.mxu0 %v7749
        %10969 = vmatprep.subr.bf16.mxu0 %v7758
        %10970 = vmatpush1.bf16.msra.mxu0 %v7757
        %10971 = vmatprep.subr.bf16.mxu0 %v7766
        %10972 = vmatpush1.bf16.msra.mxu0 %v7765
        %10973 = vmatprep.mubr.bf16.mxu0 %v2113
        %10974 = vmatmul.mubr.bf16.gmra.mrb[0].mxu0 %v2111
        %v10975 = vpop.f32.mrb[0].mxu0
        %v10976 = vadd.f32 %v10935, %v10975
        %v10977 = vpop.f32.mrb[0].mxu0
        %v10978 = vadd.f32 %v10937, %v10977
        %v10979 = vpop.f32.mrb[0].mxu0
        %v10980 = vpop.f32.mrb[0].mxu0
        %10981 = vdwg.mxu0
        %10982 = vmatprep.subr.bf16.mxu0 %v7774
        %10983 = vmatpush1.bf16.msra.mxu0 %v7773
        %10984 = vmatprep.subr.bf16.mxu0 %v7782
        %10985 = vmatpush1.bf16.msra.mxu0 %v7781
        %10986 = vmatprep.subr.bf16.mxu0 %v7790
        %10987 = vmatpush1.bf16.msra.mxu0 %v7789
        %10988 = vmatprep.subr.bf16.mxu0 %v7798
        %10989 = vmatpush1.bf16.msra.mxu0 %v7797
        %10990 = vmatprep.subr.bf16.mxu0 %v7806
        %10991 = vmatpush1.bf16.msra.mxu0 %v7805
        %10992 = vmatprep.subr.bf16.mxu0 %v7814
        %10993 = vmatpush1.bf16.msra.mxu0 %v7813
        %10994 = vmatprep.subr.bf16.mxu0 %v7822
        %10995 = vmatpush1.bf16.msra.mxu0 %v7821
        %10996 = vmatprep.subr.bf16.mxu0 %v7830
        %10997 = vmatpush1.bf16.msra.mxu0 %v7829
        %10998 = vmatprep.subr.bf16.mxu0 %v7838
        %10999 = vmatpush1.bf16.msra.mxu0 %v7837
        %11000 = vmatprep.subr.bf16.mxu0 %v7846
        %11001 = vmatpush1.bf16.msra.mxu0 %v7845
        %11002 = vmatprep.subr.bf16.mxu0 %v7854
        %11003 = vmatpush1.bf16.msra.mxu0 %v7853
        %11004 = vmatprep.subr.bf16.mxu0 %v7862
        %11005 = vmatpush1.bf16.msra.mxu0 %v7861
        %11006 = vmatprep.subr.bf16.mxu0 %v7870
        %11007 = vmatpush1.bf16.msra.mxu0 %v7869
        %11008 = vmatprep.subr.bf16.mxu0 %v7878
        %11009 = vmatpush1.bf16.msra.mxu0 %v7877
        %11010 = vmatprep.subr.bf16.mxu0 %v7886
        %11011 = vmatpush1.bf16.msra.mxu0 %v7885
        %11012 = vmatprep.subr.bf16.mxu0 %v7894
        %11013 = vmatpush1.bf16.msra.mxu0 %v7893
        %11014 = vmatprep.mubr.bf16.mxu0 %v2110
        %11015 = vmatmul.mubr.bf16.gmra.mrb[0].mxu0 %v2096
        %v11016 = vpop.f32.mrb[0].mxu0
        %v11017 = vadd.f32 %v10976, %v11016
        %v11018 = vpop.f32.mrb[0].mxu0
        %v11019 = vadd.f32 %v10978, %v11018
        %v11020 = vpop.f32.mrb[0].mxu0
        %v11021 = vpop.f32.mrb[0].mxu0
        %11022 = vdwg.mxu0
        %11023 = vmatprep.subr.bf16.mxu0 %v7902
        %11024 = vmatpush1.bf16.msra.mxu0 %v7901
        %11025 = vmatprep.subr.bf16.mxu0 %v7910
        %11026 = vmatpush1.bf16.msra.mxu0 %v7909
        %11027 = vmatprep.subr.bf16.mxu0 %v7918
        %11028 = vmatpush1.bf16.msra.mxu0 %v7917
        %11029 = vmatprep.subr.bf16.mxu0 %v7926
        %11030 = vmatpush1.bf16.msra.mxu0 %v7925
        %11031 = vmatprep.subr.bf16.mxu0 %v7934
        %11032 = vmatpush1.bf16.msra.mxu0 %v7933
        %11033 = vmatprep.subr.bf16.mxu0 %v7942
        %11034 = vmatpush1.bf16.msra.mxu0 %v7941
        %11035 = vmatprep.subr.bf16.mxu0 %v7950
        %11036 = vmatpush1.bf16.msra.mxu0 %v7949
        %11037 = vmatprep.subr.bf16.mxu0 %v7958
        %11038 = vmatpush1.bf16.msra.mxu0 %v7957
        %11039 = vmatprep.subr.bf16.mxu0 %v7966
        %11040 = vmatpush1.bf16.msra.mxu0 %v7965
        %11041 = vmatprep.subr.bf16.mxu0 %v7974
        %11042 = vmatpush1.bf16.msra.mxu0 %v7973
        %11043 = vmatprep.subr.bf16.mxu0 %v7982
        %11044 = vmatpush1.bf16.msra.mxu0 %v7981
        %11045 = vmatprep.subr.bf16.mxu0 %v7990
        %11046 = vmatpush1.bf16.msra.mxu0 %v7989
        %11047 = vmatprep.subr.bf16.mxu0 %v7998
        %11048 = vmatpush1.bf16.msra.mxu0 %v7997
        %11049 = vmatprep.subr.bf16.mxu0 %v8006
        %11050 = vmatpush1.bf16.msra.mxu0 %v8005
        %11051 = vmatprep.subr.bf16.mxu0 %v8014
        %11052 = vmatpush1.bf16.msra.mxu0 %v8013
        %11053 = vmatprep.subr.bf16.mxu0 %v8022
        %11054 = vmatpush1.bf16.msra.mxu0 %v8021
        %11055 = vmatprep.mubr.bf16.mxu0 %v2114
        %11056 = vmatmul.mubr.bf16.gmra.mrb[0].mxu0 %v2112
        %v11057 = vpop.f32.mrb[0].mxu0
        %v11058 = vadd.f32 %v11017, %v11057
        %v11059 = vpop.f32.mrb[0].mxu0
        %v11060 = vadd.f32 %v11019, %v11059
        %v11061 = vpop.f32.mrb[0].mxu0
        %v11062 = vpop.f32.mrb[0].mxu0
        %11063 = vdwg.mxu0
        %11064 = vmatprep.subr.bf16.mxu0 %v8030
        %11065 = vmatpush1.bf16.msra.mxu0 %v8029
        %11066 = vmatprep.subr.bf16.mxu0 %v8038
        %11067 = vmatpush1.bf16.msra.mxu0 %v8037
        %11068 = vmatprep.subr.bf16.mxu0 %v8046
        %11069 = vmatpush1.bf16.msra.mxu0 %v8045
        %11070 = vmatprep.subr.bf16.mxu0 %v8054
        %11071 = vmatpush1.bf16.msra.mxu0 %v8053
        %11072 = vmatprep.subr.bf16.mxu0 %v8062
        %11073 = vmatpush1.bf16.msra.mxu0 %v8061
        %11074 = vmatprep.subr.bf16.mxu0 %v8070
        %11075 = vmatpush1.bf16.msra.mxu0 %v8069
        %11076 = vmatprep.subr.bf16.mxu0 %v8078
        %11077 = vmatpush1.bf16.msra.mxu0 %v8077
        %11078 = vmatprep.subr.bf16.mxu0 %v8086
        %11079 = vmatpush1.bf16.msra.mxu0 %v8085
        %11080 = vmatprep.subr.bf16.mxu0 %v8094
        %11081 = vmatpush1.bf16.msra.mxu0 %v8093
        %11082 = vmatprep.subr.bf16.mxu0 %v8102
        %11083 = vmatpush1.bf16.msra.mxu0 %v8101
        %11084 = vmatprep.subr.bf16.mxu0 %v8110
        %11085 = vmatpush1.bf16.msra.mxu0 %v8109
        %11086 = vmatprep.subr.bf16.mxu0 %v8118
        %11087 = vmatpush1.bf16.msra.mxu0 %v8117
        %11088 = vmatprep.subr.bf16.mxu0 %v8126
        %11089 = vmatpush1.bf16.msra.mxu0 %v8125
        %11090 = vmatprep.subr.bf16.mxu0 %v8134
        %11091 = vmatpush1.bf16.msra.mxu0 %v8133
        %11092 = vmatprep.subr.bf16.mxu0 %v8142
        %11093 = vmatpush1.bf16.msra.mxu0 %v8141
        %11094 = vmatprep.subr.bf16.mxu0 %v8150
        %11095 = vmatpush1.bf16.msra.mxu0 %v8149
        %11096 = vmatprep.mubr.bf16.mxu0 %v2152
        %11097 = vmatmul.mubr.bf16.gmra.mrb[0].mxu0 %v2138
        %v11098 = vpop.f32.mrb[0].mxu0
        %v11099 = vadd.f32 %v11058, %v11098
        %v11100 = vpop.f32.mrb[0].mxu0
        %v11101 = vadd.f32 %v11060, %v11100
        %v11102 = vpop.f32.mrb[0].mxu0
        %v11103 = vpop.f32.mrb[0].mxu0
        %11104 = vdwg.mxu0
        %11105 = vmatprep.subr.bf16.mxu0 %v8158
        %11106 = vmatpush1.bf16.msra.mxu0 %v8157
        %11107 = vmatprep.subr.bf16.mxu0 %v8166
        %11108 = vmatpush1.bf16.msra.mxu0 %v8165
        %11109 = vmatprep.subr.bf16.mxu0 %v8174
        %11110 = vmatpush1.bf16.msra.mxu0 %v8173
        %11111 = vmatprep.subr.bf16.mxu0 %v8182
        %11112 = vmatpush1.bf16.msra.mxu0 %v8181
        %11113 = vmatprep.subr.bf16.mxu0 %v8190
        %11114 = vmatpush1.bf16.msra.mxu0 %v8189
        %11115 = vmatprep.subr.bf16.mxu0 %v8198
        %11116 = vmatpush1.bf16.msra.mxu0 %v8197
        %11117 = vmatprep.subr.bf16.mxu0 %v8206
        %11118 = vmatpush1.bf16.msra.mxu0 %v8205
        %11119 = vmatprep.subr.bf16.mxu0 %v8214
        %11120 = vmatpush1.bf16.msra.mxu0 %v8213
        %11121 = vmatprep.subr.bf16.mxu0 %v8222
        %11122 = vmatpush1.bf16.msra.mxu0 %v8221
        %11123 = vmatprep.subr.bf16.mxu0 %v8230
        %11124 = vmatpush1.bf16.msra.mxu0 %v8229
        %11125 = vmatprep.subr.bf16.mxu0 %v8238
        %11126 = vmatpush1.bf16.msra.mxu0 %v8237
        %11127 = vmatprep.subr.bf16.mxu0 %v8246
        %11128 = vmatpush1.bf16.msra.mxu0 %v8245
        %11129 = vmatprep.subr.bf16.mxu0 %v8254
        %11130 = vmatpush1.bf16.msra.mxu0 %v8253
        %11131 = vmatprep.subr.bf16.mxu0 %v8262
        %11132 = vmatpush1.bf16.msra.mxu0 %v8261
        %11133 = vmatprep.subr.bf16.mxu0 %v8270
        %11134 = vmatpush1.bf16.msra.mxu0 %v8269
        %11135 = vmatprep.subr.bf16.mxu0 %v8278
        %11136 = vmatpush1.bf16.msra.mxu0 %v8277
        %11137 = vmatprep.mubr.bf16.mxu0 %v2162
        %11138 = vmatmul.mubr.bf16.gmra.mrb[0].mxu0 %v2160
        %v11139 = vpop.f32.mrb[0].mxu0
        %v11140 = vadd.f32 %v11099, %v11139
        %v11141 = vpop.f32.mrb[0].mxu0
        %v11142 = vadd.f32 %v11101, %v11141
        %v11143 = vpop.f32.mrb[0].mxu0
        %v11144 = vpop.f32.mrb[0].mxu0
        %11145 = vdwg.mxu0
        %11146 = vmatprep.subr.bf16.mxu0 %v8286
        %11147 = vmatpush1.bf16.msra.mxu0 %v8285
        %11148 = vmatprep.subr.bf16.mxu0 %v8294
        %11149 = vmatpush1.bf16.msra.mxu0 %v8293
        %11150 = vmatprep.subr.bf16.mxu0 %v8302
        %11151 = vmatpush1.bf16.msra.mxu0 %v8301
        %11152 = vmatprep.subr.bf16.mxu0 %v8310
        %11153 = vmatpush1.bf16.msra.mxu0 %v8309
        %11154 = vmatprep.subr.bf16.mxu0 %v8318
        %11155 = vmatpush1.bf16.msra.mxu0 %v8317
        %11156 = vmatprep.subr.bf16.mxu0 %v8326
        %11157 = vmatpush1.bf16.msra.mxu0 %v8325
        %11158 = vmatprep.subr.bf16.mxu0 %v8334
        %11159 = vmatpush1.bf16.msra.mxu0 %v8333
        %11160 = vmatprep.subr.bf16.mxu0 %v8342
        %11161 = vmatpush1.bf16.msra.mxu0 %v8341
        %11162 = vmatprep.subr.bf16.mxu0 %v8350
        %11163 = vmatpush1.bf16.msra.mxu0 %v8349
        %11164 = vmatprep.subr.bf16.mxu0 %v8358
        %11165 = vmatpush1.bf16.msra.mxu0 %v8357
        %11166 = vmatprep.subr.bf16.mxu0 %v8366
        %11167 = vmatpush1.bf16.msra.mxu0 %v8365
        %11168 = vmatprep.subr.bf16.mxu0 %v8374
        %11169 = vmatpush1.bf16.msra.mxu0 %v8373
        %11170 = vmatprep.subr.bf16.mxu0 %v8382
        %11171 = vmatpush1.bf16.msra.mxu0 %v8381
        %11172 = vmatprep.subr.bf16.mxu0 %v8390
        %11173 = vmatpush1.bf16.msra.mxu0 %v8389
        %11174 = vmatprep.subr.bf16.mxu0 %v8398
        %11175 = vmatpush1.bf16.msra.mxu0 %v8397
        %11176 = vmatprep.subr.bf16.mxu0 %v8406
        %11177 = vmatpush1.bf16.msra.mxu0 %v8405
        %11178 = vmatprep.mubr.bf16.mxu0 %v2159
        %11179 = vmatmul.mubr.bf16.gmra.mrb[0].mxu0 %v2145
        %v11180 = vpop.f32.mrb[0].mxu0
        %v11181 = vadd.f32 %v11140, %v11180
        %v11182 = vpop.f32.mrb[0].mxu0
        %v11183 = vadd.f32 %v11142, %v11182
        %v11184 = vpop.f32.mrb[0].mxu0
        %v11185 = vpop.f32.mrb[0].mxu0
        %11186 = vdwg.mxu0
        %11187 = vmatprep.subr.bf16.mxu0 %v8414
        %11188 = vmatpush1.bf16.msra.mxu0 %v8413
        %11189 = vmatprep.subr.bf16.mxu0 %v8422
        %11190 = vmatpush1.bf16.msra.mxu0 %v8421
        %11191 = vmatprep.subr.bf16.mxu0 %v8430
        %11192 = vmatpush1.bf16.msra.mxu0 %v8429
        %11193 = vmatprep.subr.bf16.mxu0 %v8438
        %11194 = vmatpush1.bf16.msra.mxu0 %v8437
        %11195 = vmatprep.subr.bf16.mxu0 %v8446
        %11196 = vmatpush1.bf16.msra.mxu0 %v8445
        %11197 = vmatprep.subr.bf16.mxu0 %v8454
        %11198 = vmatpush1.bf16.msra.mxu0 %v8453
        %11199 = vmatprep.subr.bf16.mxu0 %v8462
        %11200 = vmatpush1.bf16.msra.mxu0 %v8461
        %11201 = vmatprep.subr.bf16.mxu0 %v8470
        %11202 = vmatpush1.bf16.msra.mxu0 %v8469
        %11203 = vmatprep.subr.bf16.mxu0 %v8478
        %11204 = vmatpush1.bf16.msra.mxu0 %v8477
        %11205 = vmatprep.subr.bf16.mxu0 %v8486
        %11206 = vmatpush1.bf16.msra.mxu0 %v8485
        %11207 = vmatprep.subr.bf16.mxu0 %v8494
        %11208 = vmatpush1.bf16.msra.mxu0 %v8493
        %11209 = vmatprep.subr.bf16.mxu0 %v8502
        %11210 = vmatpush1.bf16.msra.mxu0 %v8501
        %11211 = vmatprep.subr.bf16.mxu0 %v8510
        %11212 = vmatpush1.bf16.msra.mxu0 %v8509
        %11213 = vmatprep.subr.bf16.mxu0 %v8518
        %11214 = vmatpush1.bf16.msra.mxu0 %v8517
        %11215 = vmatprep.subr.bf16.mxu0 %v8526
        %11216 = vmatpush1.bf16.msra.mxu0 %v8525
        %11217 = vmatprep.subr.bf16.mxu0 %v8534
        %11218 = vmatpush1.bf16.msra.mxu0 %v8533
        %11219 = vmatprep.mubr.bf16.mxu0 %v2163
        %11220 = vmatmul.mubr.bf16.gmra.mrb[0].mxu0 %v2161
        %v11221 = vpop.f32.mrb[0].mxu0
        %v11222 = vadd.f32 %v11181, %v11221
        %v11223 = vpop.f32.mrb[0].mxu0
        %v11224 = vadd.f32 %v11183, %v11223
        %v11225 = vpop.f32.mrb[0].mxu0
        %v11226 = vpop.f32.mrb[0].mxu0
        %11227 = vdwg.mxu0
        %11228 = vmatprep.subr.bf16.mxu0 %v8542
        %11229 = vmatpush1.bf16.msra.mxu0 %v8541
        %11230 = vmatprep.subr.bf16.mxu0 %v8550
        %11231 = vmatpush1.bf16.msra.mxu0 %v8549
        %11232 = vmatprep.subr.bf16.mxu0 %v8558
        %11233 = vmatpush1.bf16.msra.mxu0 %v8557
        %11234 = vmatprep.subr.bf16.mxu0 %v8566
        %11235 = vmatpush1.bf16.msra.mxu0 %v8565
        %11236 = vmatprep.subr.bf16.mxu0 %v8574
        %11237 = vmatpush1.bf16.msra.mxu0 %v8573
        %11238 = vmatprep.subr.bf16.mxu0 %v8582
        %11239 = vmatpush1.bf16.msra.mxu0 %v8581
        %11240 = vmatprep.subr.bf16.mxu0 %v8590
        %11241 = vmatpush1.bf16.msra.mxu0 %v8589
        %11242 = vmatprep.subr.bf16.mxu0 %v8598
        %11243 = vmatpush1.bf16.msra.mxu0 %v8597
        %11244 = vmatprep.subr.bf16.mxu0 0
        %11245 = vmatpush1.bf16.msra.mxu0 0
        %11246 = vmatprep.subr.bf16.mxu0 0
        %11247 = vmatpush1.bf16.msra.mxu0 0
        %11248 = vmatprep.subr.bf16.mxu0 0
        %11249 = vmatpush1.bf16.msra.mxu0 0
        %11250 = vmatprep.subr.bf16.mxu0 0
        %11251 = vmatpush1.bf16.msra.mxu0 0
        %11252 = vmatprep.subr.bf16.mxu0 0
        %11253 = vmatpush1.bf16.msra.mxu0 0
        %11254 = vmatprep.subr.bf16.mxu0 0
        %11255 = vmatpush1.bf16.msra.mxu0 0
        %11256 = vmatprep.subr.bf16.mxu0 0
        %11257 = vmatpush1.bf16.msra.mxu0 0
        %11258 = vmatprep.subr.bf16.mxu0 0
        %11259 = vmatpush1.bf16.msra.mxu0 0
        %11260 = vmatprep.mubr.bf16.mxu0 0
        %11261 = vmatmul.mubr.bf16.gmra.mrb[0].mxu0 %v2177
        %v11262 = vpop.f32.mrb[0].mxu0
        %v11263 = vadd.f32 %v11222, %v11262
        %v11264 = vpop.f32.mrb[0].mxu0
        %v11265 = vadd.f32 %v11224, %v11264
        %v11266 = vpop.f32.mrb[0].mxu0
        %v11267 = vpop.f32.mrb[0].mxu0
        %11268 = vdwg.mxu0
        %11269 = vmatprep.subr.bf16.mxu0 %v7008
        %11270 = vmatpush1.bf16.msra.mxu0 %v7007
        %11271 = vmatprep.subr.bf16.mxu0 %v7016
        %11272 = vmatpush1.bf16.msra.mxu0 %v7015
        %11273 = vmatprep.subr.bf16.mxu0 %v7024
        %11274 = vmatpush1.bf16.msra.mxu0 %v7023
        %11275 = vmatprep.subr.bf16.mxu0 %v7032
        %11276 = vmatpush1.bf16.msra.mxu0 %v7031
        %11277 = vmatprep.subr.bf16.mxu0 %v7040
        %11278 = vmatpush1.bf16.msra.mxu0 %v7039
        %11279 = vmatprep.subr.bf16.mxu0 %v7048
        %11280 = vmatpush1.bf16.msra.mxu0 %v7047
        %11281 = vmatprep.subr.bf16.mxu0 %v7056
        %11282 = vmatpush1.bf16.msra.mxu0 %v7055
        %11283 = vmatprep.subr.bf16.mxu0 %v7064
        %11284 = vmatpush1.bf16.msra.mxu0 %v7063
        %11285 = vmatprep.subr.bf16.mxu0 %v7072
        %11286 = vmatpush1.bf16.msra.mxu0 %v7071
        %11287 = vmatprep.subr.bf16.mxu0 %v7080
        %11288 = vmatpush1.bf16.msra.mxu0 %v7079
        %11289 = vmatprep.subr.bf16.mxu0 %v7088
        %11290 = vmatpush1.bf16.msra.mxu0 %v7087
        %11291 = vmatprep.subr.bf16.mxu0 %v7096
        %11292 = vmatpush1.bf16.msra.mxu0 %v7095
        %11293 = vmatprep.subr.bf16.mxu0 %v7104
        %11294 = vmatpush1.bf16.msra.mxu0 %v7103
        %11295 = vmatprep.subr.bf16.mxu0 %v7112
        %11296 = vmatpush1.bf16.msra.mxu0 %v7111
        %11297 = vmatprep.subr.bf16.mxu0 %v7120
        %11298 = vmatpush1.bf16.msra.mxu0 %v7119
        %11299 = vmatprep.subr.bf16.mxu0 %v7128
        %11300 = vmatpush1.bf16.msra.mxu0 %v7127
        %11301 = vmatprep.mubr.bf16.mxu0 %v2054
        %11302 = vmatmul.mubr.bf16.gmra.mrb[0].mxu0 %v2040
        %v11303 = vpop.f32.mrb[0].mxu0
        %v11304 = vadd.f32 0.0, %v11303
        %v11305 = vpop.f32.mrb[0].mxu0
        %v11306 = vadd.f32 0.0, %v11305
        %v11307 = vpop.f32.mrb[0].mxu0
        %v11308 = vpop.f32.mrb[0].mxu0
        %11309 = vdwg.mxu0
        %11310 = vmatprep.subr.bf16.mxu0 %v7136
        %11311 = vmatpush1.bf16.msra.mxu0 %v7135
        %11312 = vmatprep.subr.bf16.mxu0 %v7144
        %11313 = vmatpush1.bf16.msra.mxu0 %v7143
        %11314 = vmatprep.subr.bf16.mxu0 %v7152
        %11315 = vmatpush1.bf16.msra.mxu0 %v7151
        %11316 = vmatprep.subr.bf16.mxu0 %v7160
        %11317 = vmatpush1.bf16.msra.mxu0 %v7159
        %11318 = vmatprep.subr.bf16.mxu0 %v7168
        %11319 = vmatpush1.bf16.msra.mxu0 %v7167
        %11320 = vmatprep.subr.bf16.mxu0 %v7176
        %11321 = vmatpush1.bf16.msra.mxu0 %v7175
        %11322 = vmatprep.subr.bf16.mxu0 %v7184
        %11323 = vmatpush1.bf16.msra.mxu0 %v7183
        %11324 = vmatprep.subr.bf16.mxu0 %v7192
        %11325 = vmatpush1.bf16.msra.mxu0 %v7191
        %11326 = vmatprep.subr.bf16.mxu0 %v7200
        %11327 = vmatpush1.bf16.msra.mxu0 %v7199
        %11328 = vmatprep.subr.bf16.mxu0 %v7208
        %11329 = vmatpush1.bf16.msra.mxu0 %v7207
        %11330 = vmatprep.subr.bf16.mxu0 %v7216
        %11331 = vmatpush1.bf16.msra.mxu0 %v7215
        %11332 = vmatprep.subr.bf16.mxu0 %v7224
        %11333 = vmatpush1.bf16.msra.mxu0 %v7223
        %11334 = vmatprep.subr.bf16.mxu0 %v7232
        %11335 = vmatpush1.bf16.msra.mxu0 %v7231
        %11336 = vmatprep.subr.bf16.mxu0 %v7240
        %11337 = vmatpush1.bf16.msra.mxu0 %v7239
        %11338 = vmatprep.subr.bf16.mxu0 %v7248
        %11339 = vmatpush1.bf16.msra.mxu0 %v7247
        %11340 = vmatprep.subr.bf16.mxu0 %v7256
        %11341 = vmatpush1.bf16.msra.mxu0 %v7255
        %11342 = vmatprep.mubr.bf16.mxu0 %v2064
        %11343 = vmatmul.mubr.bf16.gmra.mrb[0].mxu0 %v2062
        %v11344 = vpop.f32.mrb[0].mxu0
        %v11345 = vadd.f32 %v11304, %v11344
        %v11346 = vpop.f32.mrb[0].mxu0
        %v11347 = vadd.f32 %v11306, %v11346
        %v11348 = vpop.f32.mrb[0].mxu0
        %v11349 = vpop.f32.mrb[0].mxu0
        %11350 = vdwg.mxu0
        %11351 = vmatprep.subr.bf16.mxu0 %v7264
        %11352 = vmatpush1.bf16.msra.mxu0 %v7263
        %11353 = vmatprep.subr.bf16.mxu0 %v7272
        %11354 = vmatpush1.bf16.msra.mxu0 %v7271
        %11355 = vmatprep.subr.bf16.mxu0 %v7280
        %11356 = vmatpush1.bf16.msra.mxu0 %v7279
        %11357 = vmatprep.subr.bf16.mxu0 %v7288
        %11358 = vmatpush1.bf16.msra.mxu0 %v7287
        %11359 = vmatprep.subr.bf16.mxu0 %v7296
        %11360 = vmatpush1.bf16.msra.mxu0 %v7295
        %11361 = vmatprep.subr.bf16.mxu0 %v7304
        %11362 = vmatpush1.bf16.msra.mxu0 %v7303
        %11363 = vmatprep.subr.bf16.mxu0 %v7312
        %11364 = vmatpush1.bf16.msra.mxu0 %v7311
        %11365 = vmatprep.subr.bf16.mxu0 %v7320
        %11366 = vmatpush1.bf16.msra.mxu0 %v7319
        %11367 = vmatprep.subr.bf16.mxu0 %v7328
        %11368 = vmatpush1.bf16.msra.mxu0 %v7327
        %11369 = vmatprep.subr.bf16.mxu0 %v7336
        %11370 = vmatpush1.bf16.msra.mxu0 %v7335
        %11371 = vmatprep.subr.bf16.mxu0 %v7344
        %11372 = vmatpush1.bf16.msra.mxu0 %v7343
        %11373 = vmatprep.subr.bf16.mxu0 %v7352
        %11374 = vmatpush1.bf16.msra.mxu0 %v7351
        %11375 = vmatprep.subr.bf16.mxu0 %v7360
        %11376 = vmatpush1.bf16.msra.mxu0 %v7359
        %11377 = vmatprep.subr.bf16.mxu0 %v7368
        %11378 = vmatpush1.bf16.msra.mxu0 %v7367
        %11379 = vmatprep.subr.bf16.mxu0 %v7376
        %11380 = vmatpush1.bf16.msra.mxu0 %v7375
        %11381 = vmatprep.subr.bf16.mxu0 %v7384
        %11382 = vmatpush1.bf16.msra.mxu0 %v7383
        %11383 = vmatprep.mubr.bf16.mxu0 %v2061
        %11384 = vmatmul.mubr.bf16.gmra.mrb[0].mxu0 %v2047
        %v11385 = vpop.f32.mrb[0].mxu0
        %v11386 = vadd.f32 %v11345, %v11385
        %v11387 = vpop.f32.mrb[0].mxu0
        %v11388 = vadd.f32 %v11347, %v11387
        %v11389 = vpop.f32.mrb[0].mxu0
        %v11390 = vpop.f32.mrb[0].mxu0
        %11391 = vdwg.mxu0
        %11392 = vmatprep.subr.bf16.mxu0 %v7392
        %11393 = vmatpush1.bf16.msra.mxu0 %v7391
        %11394 = vmatprep.subr.bf16.mxu0 %v7400
        %11395 = vmatpush1.bf16.msra.mxu0 %v7399
        %11396 = vmatprep.subr.bf16.mxu0 %v7408
        %11397 = vmatpush1.bf16.msra.mxu0 %v7407
        %11398 = vmatprep.subr.bf16.mxu0 %v7416
        %11399 = vmatpush1.bf16.msra.mxu0 %v7415
        %11400 = vmatprep.subr.bf16.mxu0 %v7424
        %11401 = vmatpush1.bf16.msra.mxu0 %v7423
        %11402 = vmatprep.subr.bf16.mxu0 %v7432
        %11403 = vmatpush1.bf16.msra.mxu0 %v7431
        %11404 = vmatprep.subr.bf16.mxu0 %v7440
        %11405 = vmatpush1.bf16.msra.mxu0 %v7439
        %11406 = vmatprep.subr.bf16.mxu0 %v7448
        %11407 = vmatpush1.bf16.msra.mxu0 %v7447
        %11408 = vmatprep.subr.bf16.mxu0 %v7456
        %11409 = vmatpush1.bf16.msra.mxu0 %v7455
        %11410 = vmatprep.subr.bf16.mxu0 %v7464
        %11411 = vmatpush1.bf16.msra.mxu0 %v7463
        %11412 = vmatprep.subr.bf16.mxu0 %v7472
        %11413 = vmatpush1.bf16.msra.mxu0 %v7471
        %11414 = vmatprep.subr.bf16.mxu0 %v7480
        %11415 = vmatpush1.bf16.msra.mxu0 %v7479
        %11416 = vmatprep.subr.bf16.mxu0 %v7488
        %11417 = vmatpush1.bf16.msra.mxu0 %v7487
        %11418 = vmatprep.subr.bf16.mxu0 %v7496
        %11419 = vmatpush1.bf16.msra.mxu0 %v7495
        %11420 = vmatprep.subr.bf16.mxu0 %v7504
        %11421 = vmatpush1.bf16.msra.mxu0 %v7503
        %11422 = vmatprep.subr.bf16.mxu0 %v7512
        %11423 = vmatpush1.bf16.msra.mxu0 %v7511
        %11424 = vmatprep.mubr.bf16.mxu0 %v2065
        %11425 = vmatmul.mubr.bf16.gmra.mrb[0].mxu0 %v2063
        %v11426 = vpop.f32.mrb[0].mxu0
        %v11427 = vadd.f32 %v11386, %v11426
        %v11428 = vpop.f32.mrb[0].mxu0
        %v11429 = vadd.f32 %v11388, %v11428
        %v11430 = vpop.f32.mrb[0].mxu0
        %v11431 = vpop.f32.mrb[0].mxu0
        %11432 = vdwg.mxu0
        %11433 = vmatprep.subr.bf16.mxu0 %v7520
        %11434 = vmatpush1.bf16.msra.mxu0 %v7519
        %11435 = vmatprep.subr.bf16.mxu0 %v7528
        %11436 = vmatpush1.bf16.msra.mxu0 %v7527
        %11437 = vmatprep.subr.bf16.mxu0 %v7536
        %11438 = vmatpush1.bf16.msra.mxu0 %v7535
        %11439 = vmatprep.subr.bf16.mxu0 %v7544
        %11440 = vmatpush1.bf16.msra.mxu0 %v7543
        %11441 = vmatprep.subr.bf16.mxu0 %v7552
        %11442 = vmatpush1.bf16.msra.mxu0 %v7551
        %11443 = vmatprep.subr.bf16.mxu0 %v7560
        %11444 = vmatpush1.bf16.msra.mxu0 %v7559
        %11445 = vmatprep.subr.bf16.mxu0 %v7568
        %11446 = vmatpush1.bf16.msra.mxu0 %v7567
        %11447 = vmatprep.subr.bf16.mxu0 %v7576
        %11448 = vmatpush1.bf16.msra.mxu0 %v7575
        %11449 = vmatprep.subr.bf16.mxu0 %v7584
        %11450 = vmatpush1.bf16.msra.mxu0 %v7583
        %11451 = vmatprep.subr.bf16.mxu0 %v7592
        %11452 = vmatpush1.bf16.msra.mxu0 %v7591
        %11453 = vmatprep.subr.bf16.mxu0 %v7600
        %11454 = vmatpush1.bf16.msra.mxu0 %v7599
        %11455 = vmatprep.subr.bf16.mxu0 %v7608
        %11456 = vmatpush1.bf16.msra.mxu0 %v7607
        %11457 = vmatprep.subr.bf16.mxu0 %v7616
        %11458 = vmatpush1.bf16.msra.mxu0 %v7615
        %11459 = vmatprep.subr.bf16.mxu0 %v7624
        %11460 = vmatpush1.bf16.msra.mxu0 %v7623
        %11461 = vmatprep.subr.bf16.mxu0 %v7632
        %11462 = vmatpush1.bf16.msra.mxu0 %v7631
        %11463 = vmatprep.subr.bf16.mxu0 %v7640
        %11464 = vmatpush1.bf16.msra.mxu0 %v7639
        %11465 = vmatprep.mubr.bf16.mxu0 %v2103
        %11466 = vmatmul.mubr.bf16.gmra.mrb[0].mxu0 %v2089
        %v11467 = vpop.f32.mrb[0].mxu0
        %v11468 = vadd.f32 %v11427, %v11467
        %v11469 = vpop.f32.mrb[0].mxu0
        %v11470 = vadd.f32 %v11429, %v11469
        %v11471 = vpop.f32.mrb[0].mxu0
        %v11472 = vpop.f32.mrb[0].mxu0
        %11473 = vdwg.mxu0
        %11474 = vmatprep.subr.bf16.mxu0 %v7648
        %11475 = vmatpush1.bf16.msra.mxu0 %v7647
        %11476 = vmatprep.subr.bf16.mxu0 %v7656
        %11477 = vmatpush1.bf16.msra.mxu0 %v7655
        %11478 = vmatprep.subr.bf16.mxu0 %v7664
        %11479 = vmatpush1.bf16.msra.mxu0 %v7663
        %11480 = vmatprep.subr.bf16.mxu0 %v7672
        %11481 = vmatpush1.bf16.msra.mxu0 %v7671
        %11482 = vmatprep.subr.bf16.mxu0 %v7680
        %11483 = vmatpush1.bf16.msra.mxu0 %v7679
        %11484 = vmatprep.subr.bf16.mxu0 %v7688
        %11485 = vmatpush1.bf16.msra.mxu0 %v7687
        %11486 = vmatprep.subr.bf16.mxu0 %v7696
        %11487 = vmatpush1.bf16.msra.mxu0 %v7695
        %11488 = vmatprep.subr.bf16.mxu0 %v7704
        %11489 = vmatpush1.bf16.msra.mxu0 %v7703
        %11490 = vmatprep.subr.bf16.mxu0 %v7712
        %11491 = vmatpush1.bf16.msra.mxu0 %v7711
        %11492 = vmatprep.subr.bf16.mxu0 %v7720
        %11493 = vmatpush1.bf16.msra.mxu0 %v7719
        %11494 = vmatprep.subr.bf16.mxu0 %v7728
        %11495 = vmatpush1.bf16.msra.mxu0 %v7727
        %11496 = vmatprep.subr.bf16.mxu0 %v7736
        %11497 = vmatpush1.bf16.msra.mxu0 %v7735
        %11498 = vmatprep.subr.bf16.mxu0 %v7744
        %11499 = vmatpush1.bf16.msra.mxu0 %v7743
        %11500 = vmatprep.subr.bf16.mxu0 %v7752
        %11501 = vmatpush1.bf16.msra.mxu0 %v7751
        %11502 = vmatprep.subr.bf16.mxu0 %v7760
        %11503 = vmatpush1.bf16.msra.mxu0 %v7759
        %11504 = vmatprep.subr.bf16.mxu0 %v7768
        %11505 = vmatpush1.bf16.msra.mxu0 %v7767
        %11506 = vmatprep.mubr.bf16.mxu0 %v2113
        %11507 = vmatmul.mubr.bf16.gmra.mrb[0].mxu0 %v2111
        %v11508 = vpop.f32.mrb[0].mxu0
        %v11509 = vadd.f32 %v11468, %v11508
        %v11510 = vpop.f32.mrb[0].mxu0
        %v11511 = vadd.f32 %v11470, %v11510
        %v11512 = vpop.f32.mrb[0].mxu0
        %v11513 = vpop.f32.mrb[0].mxu0
        %11514 = vdwg.mxu0
        %11515 = vmatprep.subr.bf16.mxu0 %v7776
        %11516 = vmatpush1.bf16.msra.mxu0 %v7775
        %11517 = vmatprep.subr.bf16.mxu0 %v7784
        %11518 = vmatpush1.bf16.msra.mxu0 %v7783
        %11519 = vmatprep.subr.bf16.mxu0 %v7792
        %11520 = vmatpush1.bf16.msra.mxu0 %v7791
        %11521 = vmatprep.subr.bf16.mxu0 %v7800
        %11522 = vmatpush1.bf16.msra.mxu0 %v7799
        %11523 = vmatprep.subr.bf16.mxu0 %v7808
        %11524 = vmatpush1.bf16.msra.mxu0 %v7807
        %11525 = vmatprep.subr.bf16.mxu0 %v7816
        %11526 = vmatpush1.bf16.msra.mxu0 %v7815
        %11527 = vmatprep.subr.bf16.mxu0 %v7824
        %11528 = vmatpush1.bf16.msra.mxu0 %v7823
        %11529 = vmatprep.subr.bf16.mxu0 %v7832
        %11530 = vmatpush1.bf16.msra.mxu0 %v7831
        %11531 = vmatprep.subr.bf16.mxu0 %v7840
        %11532 = vmatpush1.bf16.msra.mxu0 %v7839
        %11533 = vmatprep.subr.bf16.mxu0 %v7848
        %11534 = vmatpush1.bf16.msra.mxu0 %v7847
        %11535 = vmatprep.subr.bf16.mxu0 %v7856
        %11536 = vmatpush1.bf16.msra.mxu0 %v7855
        %11537 = vmatprep.subr.bf16.mxu0 %v7864
        %11538 = vmatpush1.bf16.msra.mxu0 %v7863
        %11539 = vmatprep.subr.bf16.mxu0 %v7872
        %11540 = vmatpush1.bf16.msra.mxu0 %v7871
        %11541 = vmatprep.subr.bf16.mxu0 %v7880
        %11542 = vmatpush1.bf16.msra.mxu0 %v7879
        %11543 = vmatprep.subr.bf16.mxu0 %v7888
        %11544 = vmatpush1.bf16.msra.mxu0 %v7887
        %11545 = vmatprep.subr.bf16.mxu0 %v7896
        %11546 = vmatpush1.bf16.msra.mxu0 %v7895
        %11547 = vmatprep.mubr.bf16.mxu0 %v2110
        %11548 = vmatmul.mubr.bf16.gmra.mrb[0].mxu0 %v2096
        %v11549 = vpop.f32.mrb[0].mxu0
        %v11550 = vadd.f32 %v11509, %v11549
        %v11551 = vpop.f32.mrb[0].mxu0
        %v11552 = vadd.f32 %v11511, %v11551
        %v11553 = vpop.f32.mrb[0].mxu0
        %v11554 = vpop.f32.mrb[0].mxu0
        %11555 = vdwg.mxu0
        %11556 = vmatprep.subr.bf16.mxu0 %v7904
        %11557 = vmatpush1.bf16.msra.mxu0 %v7903
        %11558 = vmatprep.subr.bf16.mxu0 %v7912
        %11559 = vmatpush1.bf16.msra.mxu0 %v7911
        %11560 = vmatprep.subr.bf16.mxu0 %v7920
        %11561 = vmatpush1.bf16.msra.mxu0 %v7919
        %11562 = vmatprep.subr.bf16.mxu0 %v7928
        %11563 = vmatpush1.bf16.msra.mxu0 %v7927
        %11564 = vmatprep.subr.bf16.mxu0 %v7936
        %11565 = vmatpush1.bf16.msra.mxu0 %v7935
        %11566 = vmatprep.subr.bf16.mxu0 %v7944
        %11567 = vmatpush1.bf16.msra.mxu0 %v7943
        %11568 = vmatprep.subr.bf16.mxu0 %v7952
        %11569 = vmatpush1.bf16.msra.mxu0 %v7951
        %11570 = vmatprep.subr.bf16.mxu0 %v7960
        %11571 = vmatpush1.bf16.msra.mxu0 %v7959
        %11572 = vmatprep.subr.bf16.mxu0 %v7968
        %11573 = vmatpush1.bf16.msra.mxu0 %v7967
        %11574 = vmatprep.subr.bf16.mxu0 %v7976
        %11575 = vmatpush1.bf16.msra.mxu0 %v7975
        %11576 = vmatprep.subr.bf16.mxu0 %v7984
        %11577 = vmatpush1.bf16.msra.mxu0 %v7983
        %11578 = vmatprep.subr.bf16.mxu0 %v7992
        %11579 = vmatpush1.bf16.msra.mxu0 %v7991
        %11580 = vmatprep.subr.bf16.mxu0 %v8000
        %11581 = vmatpush1.bf16.msra.mxu0 %v7999
        %11582 = vmatprep.subr.bf16.mxu0 %v8008
        %11583 = vmatpush1.bf16.msra.mxu0 %v8007
        %11584 = vmatprep.subr.bf16.mxu0 %v8016
        %11585 = vmatpush1.bf16.msra.mxu0 %v8015
        %11586 = vmatprep.subr.bf16.mxu0 %v8024
        %11587 = vmatpush1.bf16.msra.mxu0 %v8023
        %11588 = vmatprep.mubr.bf16.mxu0 %v2114
        %11589 = vmatmul.mubr.bf16.gmra.mrb[0].mxu0 %v2112
        %v11590 = vpop.f32.mrb[0].mxu0
        %v11591 = vadd.f32 %v11550, %v11590
        %v11592 = vpop.f32.mrb[0].mxu0
        %v11593 = vadd.f32 %v11552, %v11592
        %v11594 = vpop.f32.mrb[0].mxu0
        %v11595 = vpop.f32.mrb[0].mxu0
        %11596 = vdwg.mxu0
        %11597 = vmatprep.subr.bf16.mxu0 %v8032
        %11598 = vmatpush1.bf16.msra.mxu0 %v8031
        %11599 = vmatprep.subr.bf16.mxu0 %v8040
        %11600 = vmatpush1.bf16.msra.mxu0 %v8039
        %11601 = vmatprep.subr.bf16.mxu0 %v8048
        %11602 = vmatpush1.bf16.msra.mxu0 %v8047
        %11603 = vmatprep.subr.bf16.mxu0 %v8056
        %11604 = vmatpush1.bf16.msra.mxu0 %v8055
        %11605 = vmatprep.subr.bf16.mxu0 %v8064
        %11606 = vmatpush1.bf16.msra.mxu0 %v8063
        %11607 = vmatprep.subr.bf16.mxu0 %v8072
        %11608 = vmatpush1.bf16.msra.mxu0 %v8071
        %11609 = vmatprep.subr.bf16.mxu0 %v8080
        %11610 = vmatpush1.bf16.msra.mxu0 %v8079
        %11611 = vmatprep.subr.bf16.mxu0 %v8088
        %11612 = vmatpush1.bf16.msra.mxu0 %v8087
        %11613 = vmatprep.subr.bf16.mxu0 %v8096
        %11614 = vmatpush1.bf16.msra.mxu0 %v8095
        %11615 = vmatprep.subr.bf16.mxu0 %v8104
        %11616 = vmatpush1.bf16.msra.mxu0 %v8103
        %11617 = vmatprep.subr.bf16.mxu0 %v8112
        %11618 = vmatpush1.bf16.msra.mxu0 %v8111
        %11619 = vmatprep.subr.bf16.mxu0 %v8120
        %11620 = vmatpush1.bf16.msra.mxu0 %v8119
        %11621 = vmatprep.subr.bf16.mxu0 %v8128
        %11622 = vmatpush1.bf16.msra.mxu0 %v8127
        %11623 = vmatprep.subr.bf16.mxu0 %v8136
        %11624 = vmatpush1.bf16.msra.mxu0 %v8135
        %11625 = vmatprep.subr.bf16.mxu0 %v8144
        %11626 = vmatpush1.bf16.msra.mxu0 %v8143
        %11627 = vmatprep.subr.bf16.mxu0 %v8152
        %11628 = vmatpush1.bf16.msra.mxu0 %v8151
        %11629 = vmatprep.mubr.bf16.mxu0 %v2152
        %11630 = vmatmul.mubr.bf16.gmra.mrb[0].mxu0 %v2138
        %v11631 = vpop.f32.mrb[0].mxu0
        %v11632 = vadd.f32 %v11591, %v11631
        %v11633 = vpop.f32.mrb[0].mxu0
        %v11634 = vadd.f32 %v11593, %v11633
        %v11635 = vpop.f32.mrb[0].mxu0
        %v11636 = vpop.f32.mrb[0].mxu0
        %11637 = vdwg.mxu0
        %11638 = vmatprep.subr.bf16.mxu0 %v8160
        %11639 = vmatpush1.bf16.msra.mxu0 %v8159
        %11640 = vmatprep.subr.bf16.mxu0 %v8168
        %11641 = vmatpush1.bf16.msra.mxu0 %v8167
        %11642 = vmatprep.subr.bf16.mxu0 %v8176
        %11643 = vmatpush1.bf16.msra.mxu0 %v8175
        %11644 = vmatprep.subr.bf16.mxu0 %v8184
        %11645 = vmatpush1.bf16.msra.mxu0 %v8183
        %11646 = vmatprep.subr.bf16.mxu0 %v8192
        %11647 = vmatpush1.bf16.msra.mxu0 %v8191
        %11648 = vmatprep.subr.bf16.mxu0 %v8200
        %11649 = vmatpush1.bf16.msra.mxu0 %v8199
        %11650 = vmatprep.subr.bf16.mxu0 %v8208
        %11651 = vmatpush1.bf16.msra.mxu0 %v8207
        %11652 = vmatprep.subr.bf16.mxu0 %v8216
        %11653 = vmatpush1.bf16.msra.mxu0 %v8215
        %11654 = vmatprep.subr.bf16.mxu0 %v8224
        %11655 = vmatpush1.bf16.msra.mxu0 %v8223
        %11656 = vmatprep.subr.bf16.mxu0 %v8232
        %11657 = vmatpush1.bf16.msra.mxu0 %v8231
        %11658 = vmatprep.subr.bf16.mxu0 %v8240
        %11659 = vmatpush1.bf16.msra.mxu0 %v8239
        %11660 = vmatprep.subr.bf16.mxu0 %v8248
        %11661 = vmatpush1.bf16.msra.mxu0 %v8247
        %11662 = vmatprep.subr.bf16.mxu0 %v8256
        %11663 = vmatpush1.bf16.msra.mxu0 %v8255
        %11664 = vmatprep.subr.bf16.mxu0 %v8264
        %11665 = vmatpush1.bf16.msra.mxu0 %v8263
        %11666 = vmatprep.subr.bf16.mxu0 %v8272
        %11667 = vmatpush1.bf16.msra.mxu0 %v8271
        %11668 = vmatprep.subr.bf16.mxu0 %v8280
        %11669 = vmatpush1.bf16.msra.mxu0 %v8279
        %11670 = vmatprep.mubr.bf16.mxu0 %v2162
        %11671 = vmatmul.mubr.bf16.gmra.mrb[0].mxu0 %v2160
        %v11672 = vpop.f32.mrb[0].mxu0
        %v11673 = vadd.f32 %v11632, %v11672
        %v11674 = vpop.f32.mrb[0].mxu0
        %v11675 = vadd.f32 %v11634, %v11674
        %v11676 = vpop.f32.mrb[0].mxu0
        %v11677 = vpop.f32.mrb[0].mxu0
        %11678 = vdwg.mxu0
        %11679 = vmatprep.subr.bf16.mxu0 %v8288
        %11680 = vmatpush1.bf16.msra.mxu0 %v8287
        %11681 = vmatprep.subr.bf16.mxu0 %v8296
        %11682 = vmatpush1.bf16.msra.mxu0 %v8295
        %11683 = vmatprep.subr.bf16.mxu0 %v8304
        %11684 = vmatpush1.bf16.msra.mxu0 %v8303
        %11685 = vmatprep.subr.bf16.mxu0 %v8312
        %11686 = vmatpush1.bf16.msra.mxu0 %v8311
        %11687 = vmatprep.subr.bf16.mxu0 %v8320
        %11688 = vmatpush1.bf16.msra.mxu0 %v8319
        %11689 = vmatprep.subr.bf16.mxu0 %v8328
        %11690 = vmatpush1.bf16.msra.mxu0 %v8327
        %11691 = vmatprep.subr.bf16.mxu0 %v8336
        %11692 = vmatpush1.bf16.msra.mxu0 %v8335
        %11693 = vmatprep.subr.bf16.mxu0 %v8344
        %11694 = vmatpush1.bf16.msra.mxu0 %v8343
        %11695 = vmatprep.subr.bf16.mxu0 %v8352
        %11696 = vmatpush1.bf16.msra.mxu0 %v8351
        %11697 = vmatprep.subr.bf16.mxu0 %v8360
        %11698 = vmatpush1.bf16.msra.mxu0 %v8359
        %11699 = vmatprep.subr.bf16.mxu0 %v8368
        %11700 = vmatpush1.bf16.msra.mxu0 %v8367
        %11701 = vmatprep.subr.bf16.mxu0 %v8376
        %11702 = vmatpush1.bf16.msra.mxu0 %v8375
        %11703 = vmatprep.subr.bf16.mxu0 %v8384
        %11704 = vmatpush1.bf16.msra.mxu0 %v8383
        %11705 = vmatprep.subr.bf16.mxu0 %v8392
        %11706 = vmatpush1.bf16.msra.mxu0 %v8391
        %11707 = vmatprep.subr.bf16.mxu0 %v8400
        %11708 = vmatpush1.bf16.msra.mxu0 %v8399
        %11709 = vmatprep.subr.bf16.mxu0 %v8408
        %11710 = vmatpush1.bf16.msra.mxu0 %v8407
        %11711 = vmatprep.mubr.bf16.mxu0 %v2159
        %11712 = vmatmul.mubr.bf16.gmra.mrb[0].mxu0 %v2145
        %v11713 = vpop.f32.mrb[0].mxu0
        %v11714 = vadd.f32 %v11673, %v11713
        %v11715 = vpop.f32.mrb[0].mxu0
        %v11716 = vadd.f32 %v11675, %v11715
        %v11717 = vpop.f32.mrb[0].mxu0
        %v11718 = vpop.f32.mrb[0].mxu0
        %11719 = vdwg.mxu0
        %11720 = vmatprep.subr.bf16.mxu0 %v8416
        %11721 = vmatpush1.bf16.msra.mxu0 %v8415
        %11722 = vmatprep.subr.bf16.mxu0 %v8424
        %11723 = vmatpush1.bf16.msra.mxu0 %v8423
        %11724 = vmatprep.subr.bf16.mxu0 %v8432
        %11725 = vmatpush1.bf16.msra.mxu0 %v8431
        %11726 = vmatprep.subr.bf16.mxu0 %v8440
        %11727 = vmatpush1.bf16.msra.mxu0 %v8439
        %11728 = vmatprep.subr.bf16.mxu0 %v8448
        %11729 = vmatpush1.bf16.msra.mxu0 %v8447
        %11730 = vmatprep.subr.bf16.mxu0 %v8456
        %11731 = vmatpush1.bf16.msra.mxu0 %v8455
        %11732 = vmatprep.subr.bf16.mxu0 %v8464
        %11733 = vmatpush1.bf16.msra.mxu0 %v8463
        %11734 = vmatprep.subr.bf16.mxu0 %v8472
        %11735 = vmatpush1.bf16.msra.mxu0 %v8471
        %11736 = vmatprep.subr.bf16.mxu0 %v8480
        %11737 = vmatpush1.bf16.msra.mxu0 %v8479
        %11738 = vmatprep.subr.bf16.mxu0 %v8488
        %11739 = vmatpush1.bf16.msra.mxu0 %v8487
        %11740 = vmatprep.subr.bf16.mxu0 %v8496
        %11741 = vmatpush1.bf16.msra.mxu0 %v8495
        %11742 = vmatprep.subr.bf16.mxu0 %v8504
        %11743 = vmatpush1.bf16.msra.mxu0 %v8503
        %11744 = vmatprep.subr.bf16.mxu0 %v8512
        %11745 = vmatpush1.bf16.msra.mxu0 %v8511
        %11746 = vmatprep.subr.bf16.mxu0 %v8520
        %11747 = vmatpush1.bf16.msra.mxu0 %v8519
        %11748 = vmatprep.subr.bf16.mxu0 %v8528
        %11749 = vmatpush1.bf16.msra.mxu0 %v8527
        %11750 = vmatprep.subr.bf16.mxu0 %v8536
        %11751 = vmatpush1.bf16.msra.mxu0 %v8535
        %11752 = vmatprep.mubr.bf16.mxu0 %v2163
        %11753 = vmatmul.mubr.bf16.gmra.mrb[0].mxu0 %v2161
        %v11754 = vpop.f32.mrb[0].mxu0
        %v11755 = vadd.f32 %v11714, %v11754
        %v11756 = vpop.f32.mrb[0].mxu0
        %v11757 = vadd.f32 %v11716, %v11756
        %v11758 = vpop.f32.mrb[0].mxu0
        %v11759 = vpop.f32.mrb[0].mxu0
        %11760 = vdwg.mxu0
        %11761 = vmatprep.subr.bf16.mxu0 %v8544
        %11762 = vmatpush1.bf16.msra.mxu0 %v8543
        %11763 = vmatprep.subr.bf16.mxu0 %v8552
        %11764 = vmatpush1.bf16.msra.mxu0 %v8551
        %11765 = vmatprep.subr.bf16.mxu0 %v8560
        %11766 = vmatpush1.bf16.msra.mxu0 %v8559
        %11767 = vmatprep.subr.bf16.mxu0 %v8568
        %11768 = vmatpush1.bf16.msra.mxu0 %v8567
        %11769 = vmatprep.subr.bf16.mxu0 %v8576
        %11770 = vmatpush1.bf16.msra.mxu0 %v8575
        %11771 = vmatprep.subr.bf16.mxu0 %v8584
        %11772 = vmatpush1.bf16.msra.mxu0 %v8583
        %11773 = vmatprep.subr.bf16.mxu0 %v8592
        %11774 = vmatpush1.bf16.msra.mxu0 %v8591
        %11775 = vmatprep.subr.bf16.mxu0 %v8600
        %11776 = vmatpush1.bf16.msra.mxu0 %v8599
        %11777 = vmatprep.subr.bf16.mxu0 0
        %11778 = vmatpush1.bf16.msra.mxu0 0
        %11779 = vmatprep.subr.bf16.mxu0 0
        %11780 = vmatpush1.bf16.msra.mxu0 0
        %11781 = vmatprep.subr.bf16.mxu0 0
        %11782 = vmatpush1.bf16.msra.mxu0 0
        %11783 = vmatprep.subr.bf16.mxu0 0
        %11784 = vmatpush1.bf16.msra.mxu0 0
        %11785 = vmatprep.subr.bf16.mxu0 0
        %11786 = vmatpush1.bf16.msra.mxu0 0
        %11787 = vmatprep.subr.bf16.mxu0 0
        %11788 = vmatpush1.bf16.msra.mxu0 0
        %11789 = vmatprep.subr.bf16.mxu0 0
        %11790 = vmatpush1.bf16.msra.mxu0 0
        %11791 = vmatprep.subr.bf16.mxu0 0
        %11792 = vmatpush1.bf16.msra.mxu0 0
        %11793 = vmatprep.mubr.bf16.mxu0 0
        %11794 = vmatmul.mubr.bf16.gmra.mrb[0].mxu0 %v2177
        %v11795 = vpop.f32.mrb[0].mxu0
        %v11796 = vadd.f32 %v11755, %v11795
        %v11797 = vpop.f32.mrb[0].mxu0
        %v11798 = vadd.f32 %v11757, %v11797
        %v11799 = vpop.f32.mrb[0].mxu0
        %v11800 = vpop.f32.mrb[0].mxu0
        %11801 = vdwg.mxu0
        %11802 = vmatprep.subr.bf16.mxu0 %v7010
        %11803 = vmatpush1.bf16.msra.mxu0 %v7009
        %11804 = vmatprep.subr.bf16.mxu0 %v7018
        %11805 = vmatpush1.bf16.msra.mxu0 %v7017
        %11806 = vmatprep.subr.bf16.mxu0 %v7026
        %11807 = vmatpush1.bf16.msra.mxu0 %v7025
        %11808 = vmatprep.subr.bf16.mxu0 %v7034
        %11809 = vmatpush1.bf16.msra.mxu0 %v7033
        %11810 = vmatprep.subr.bf16.mxu0 %v7042
        %11811 = vmatpush1.bf16.msra.mxu0 %v7041
        %11812 = vmatprep.subr.bf16.mxu0 %v7050
        %11813 = vmatpush1.bf16.msra.mxu0 %v7049
        %11814 = vmatprep.subr.bf16.mxu0 %v7058
        %11815 = vmatpush1.bf16.msra.mxu0 %v7057
        %11816 = vmatprep.subr.bf16.mxu0 %v7066
        %11817 = vmatpush1.bf16.msra.mxu0 %v7065
        %11818 = vmatprep.subr.bf16.mxu0 %v7074
        %11819 = vmatpush1.bf16.msra.mxu0 %v7073
        %11820 = vmatprep.subr.bf16.mxu0 %v7082
        %11821 = vmatpush1.bf16.msra.mxu0 %v7081
        %11822 = vmatprep.subr.bf16.mxu0 %v7090
        %11823 = vmatpush1.bf16.msra.mxu0 %v7089
        %11824 = vmatprep.subr.bf16.mxu0 %v7098
        %11825 = vmatpush1.bf16.msra.mxu0 %v7097
        %11826 = vmatprep.subr.bf16.mxu0 %v7106
        %11827 = vmatpush1.bf16.msra.mxu0 %v7105
        %11828 = vmatprep.subr.bf16.mxu0 %v7114
        %11829 = vmatpush1.bf16.msra.mxu0 %v7113
        %11830 = vmatprep.subr.bf16.mxu0 %v7122
        %11831 = vmatpush1.bf16.msra.mxu0 %v7121
        %11832 = vmatprep.subr.bf16.mxu0 %v7130
        %11833 = vmatpush1.bf16.msra.mxu0 %v7129
        %11834 = vmatprep.mubr.bf16.mxu0 %v2054
        %11835 = vmatmul.mubr.bf16.gmra.mrb[0].mxu0 %v2040
        %v11836 = vpop.f32.mrb[0].mxu0
        %v11837 = vadd.f32 0.0, %v11836
        %v11838 = vpop.f32.mrb[0].mxu0
        %v11839 = vadd.f32 0.0, %v11838
        %v11840 = vpop.f32.mrb[0].mxu0
        %v11841 = vpop.f32.mrb[0].mxu0
        %11842 = vdwg.mxu0
        %11843 = vmatprep.subr.bf16.mxu0 %v7138
        %11844 = vmatpush1.bf16.msra.mxu0 %v7137
        %11845 = vmatprep.subr.bf16.mxu0 %v7146
        %11846 = vmatpush1.bf16.msra.mxu0 %v7145
        %11847 = vmatprep.subr.bf16.mxu0 %v7154
        %11848 = vmatpush1.bf16.msra.mxu0 %v7153
        %11849 = vmatprep.subr.bf16.mxu0 %v7162
        %11850 = vmatpush1.bf16.msra.mxu0 %v7161
        %11851 = vmatprep.subr.bf16.mxu0 %v7170
        %11852 = vmatpush1.bf16.msra.mxu0 %v7169
        %11853 = vmatprep.subr.bf16.mxu0 %v7178
        %11854 = vmatpush1.bf16.msra.mxu0 %v7177
        %11855 = vmatprep.subr.bf16.mxu0 %v7186
        %11856 = vmatpush1.bf16.msra.mxu0 %v7185
        %11857 = vmatprep.subr.bf16.mxu0 %v7194
        %11858 = vmatpush1.bf16.msra.mxu0 %v7193
        %11859 = vmatprep.subr.bf16.mxu0 %v7202
        %11860 = vmatpush1.bf16.msra.mxu0 %v7201
        %11861 = vmatprep.subr.bf16.mxu0 %v7210
        %11862 = vmatpush1.bf16.msra.mxu0 %v7209
        %11863 = vmatprep.subr.bf16.mxu0 %v7218
        %11864 = vmatpush1.bf16.msra.mxu0 %v7217
        %11865 = vmatprep.subr.bf16.mxu0 %v7226
        %11866 = vmatpush1.bf16.msra.mxu0 %v7225
        %11867 = vmatprep.subr.bf16.mxu0 %v7234
        %11868 = vmatpush1.bf16.msra.mxu0 %v7233
        %11869 = vmatprep.subr.bf16.mxu0 %v7242
        %11870 = vmatpush1.bf16.msra.mxu0 %v7241
        %11871 = vmatprep.subr.bf16.mxu0 %v7250
        %11872 = vmatpush1.bf16.msra.mxu0 %v7249
        %11873 = vmatprep.subr.bf16.mxu0 %v7258
        %11874 = vmatpush1.bf16.msra.mxu0 %v7257
        %11875 = vmatprep.mubr.bf16.mxu0 %v2064
        %11876 = vmatmul.mubr.bf16.gmra.mrb[0].mxu0 %v2062
        %v11877 = vpop.f32.mrb[0].mxu0
        %v11878 = vadd.f32 %v11837, %v11877
        %v11879 = vpop.f32.mrb[0].mxu0
        %v11880 = vadd.f32 %v11839, %v11879
        %v11881 = vpop.f32.mrb[0].mxu0
        %v11882 = vpop.f32.mrb[0].mxu0
        %11883 = vdwg.mxu0
        %11884 = vmatprep.subr.bf16.mxu0 %v7266
        %11885 = vmatpush1.bf16.msra.mxu0 %v7265
        %11886 = vmatprep.subr.bf16.mxu0 %v7274
        %11887 = vmatpush1.bf16.msra.mxu0 %v7273
        %11888 = vmatprep.subr.bf16.mxu0 %v7282
        %11889 = vmatpush1.bf16.msra.mxu0 %v7281
        %11890 = vmatprep.subr.bf16.mxu0 %v7290
        %11891 = vmatpush1.bf16.msra.mxu0 %v7289
        %11892 = vmatprep.subr.bf16.mxu0 %v7298
        %11893 = vmatpush1.bf16.msra.mxu0 %v7297
        %11894 = vmatprep.subr.bf16.mxu0 %v7306
        %11895 = vmatpush1.bf16.msra.mxu0 %v7305
        %11896 = vmatprep.subr.bf16.mxu0 %v7314
        %11897 = vmatpush1.bf16.msra.mxu0 %v7313
        %11898 = vmatprep.subr.bf16.mxu0 %v7322
        %11899 = vmatpush1.bf16.msra.mxu0 %v7321
        %11900 = vmatprep.subr.bf16.mxu0 %v7330
        %11901 = vmatpush1.bf16.msra.mxu0 %v7329
        %11902 = vmatprep.subr.bf16.mxu0 %v7338
        %11903 = vmatpush1.bf16.msra.mxu0 %v7337
        %11904 = vmatprep.subr.bf16.mxu0 %v7346
        %11905 = vmatpush1.bf16.msra.mxu0 %v7345
        %11906 = vmatprep.subr.bf16.mxu0 %v7354
        %11907 = vmatpush1.bf16.msra.mxu0 %v7353
        %11908 = vmatprep.subr.bf16.mxu0 %v7362
        %11909 = vmatpush1.bf16.msra.mxu0 %v7361
        %11910 = vmatprep.subr.bf16.mxu0 %v7370
        %11911 = vmatpush1.bf16.msra.mxu0 %v7369
        %11912 = vmatprep.subr.bf16.mxu0 %v7378
        %11913 = vmatpush1.bf16.msra.mxu0 %v7377
        %11914 = vmatprep.subr.bf16.mxu0 %v7386
        %11915 = vmatpush1.bf16.msra.mxu0 %v7385
        %11916 = vmatprep.mubr.bf16.mxu0 %v2061
        %11917 = vmatmul.mubr.bf16.gmra.mrb[0].mxu0 %v2047
        %v11918 = vpop.f32.mrb[0].mxu0
        %v11919 = vadd.f32 %v11878, %v11918
        %v11920 = vpop.f32.mrb[0].mxu0
        %v11921 = vadd.f32 %v11880, %v11920
        %v11922 = vpop.f32.mrb[0].mxu0
        %v11923 = vpop.f32.mrb[0].mxu0
        %11924 = vdwg.mxu0
        %11925 = vmatprep.subr.bf16.mxu0 %v7394
        %11926 = vmatpush1.bf16.msra.mxu0 %v7393
        %11927 = vmatprep.subr.bf16.mxu0 %v7402
        %11928 = vmatpush1.bf16.msra.mxu0 %v7401
        %11929 = vmatprep.subr.bf16.mxu0 %v7410
        %11930 = vmatpush1.bf16.msra.mxu0 %v7409
        %11931 = vmatprep.subr.bf16.mxu0 %v7418
        %11932 = vmatpush1.bf16.msra.mxu0 %v7417
        %11933 = vmatprep.subr.bf16.mxu0 %v7426
        %11934 = vmatpush1.bf16.msra.mxu0 %v7425
        %11935 = vmatprep.subr.bf16.mxu0 %v7434
        %11936 = vmatpush1.bf16.msra.mxu0 %v7433
        %11937 = vmatprep.subr.bf16.mxu0 %v7442
        %11938 = vmatpush1.bf16.msra.mxu0 %v7441
        %11939 = vmatprep.subr.bf16.mxu0 %v7450
        %11940 = vmatpush1.bf16.msra.mxu0 %v7449
        %11941 = vmatprep.subr.bf16.mxu0 %v7458
        %11942 = vmatpush1.bf16.msra.mxu0 %v7457
        %11943 = vmatprep.subr.bf16.mxu0 %v7466
        %11944 = vmatpush1.bf16.msra.mxu0 %v7465
        %11945 = vmatprep.subr.bf16.mxu0 %v7474
        %11946 = vmatpush1.bf16.msra.mxu0 %v7473
        %11947 = vmatprep.subr.bf16.mxu0 %v7482
        %11948 = vmatpush1.bf16.msra.mxu0 %v7481
        %11949 = vmatprep.subr.bf16.mxu0 %v7490
        %11950 = vmatpush1.bf16.msra.mxu0 %v7489
        %11951 = vmatprep.subr.bf16.mxu0 %v7498
        %11952 = vmatpush1.bf16.msra.mxu0 %v7497
        %11953 = vmatprep.subr.bf16.mxu0 %v7506
        %11954 = vmatpush1.bf16.msra.mxu0 %v7505
        %11955 = vmatprep.subr.bf16.mxu0 %v7514
        %11956 = vmatpush1.bf16.msra.mxu0 %v7513
        %11957 = vmatprep.mubr.bf16.mxu0 %v2065
        %11958 = vmatmul.mubr.bf16.gmra.mrb[0].mxu0 %v2063
        %v11959 = vpop.f32.mrb[0].mxu0
        %v11960 = vadd.f32 %v11919, %v11959
        %v11961 = vpop.f32.mrb[0].mxu0
        %v11962 = vadd.f32 %v11921, %v11961
        %v11963 = vpop.f32.mrb[0].mxu0
        %v11964 = vpop.f32.mrb[0].mxu0
        %11965 = vdwg.mxu0
        %11966 = vmatprep.subr.bf16.mxu0 %v7522
        %11967 = vmatpush1.bf16.msra.mxu0 %v7521
        %11968 = vmatprep.subr.bf16.mxu0 %v7530
        %11969 = vmatpush1.bf16.msra.mxu0 %v7529
        %11970 = vmatprep.subr.bf16.mxu0 %v7538
        %11971 = vmatpush1.bf16.msra.mxu0 %v7537
        %11972 = vmatprep.subr.bf16.mxu0 %v7546
        %11973 = vmatpush1.bf16.msra.mxu0 %v7545
        %11974 = vmatprep.subr.bf16.mxu0 %v7554
        %11975 = vmatpush1.bf16.msra.mxu0 %v7553
        %11976 = vmatprep.subr.bf16.mxu0 %v7562
        %11977 = vmatpush1.bf16.msra.mxu0 %v7561
        %11978 = vmatprep.subr.bf16.mxu0 %v7570
        %11979 = vmatpush1.bf16.msra.mxu0 %v7569
        %11980 = vmatprep.subr.bf16.mxu0 %v7578
        %11981 = vmatpush1.bf16.msra.mxu0 %v7577
        %11982 = vmatprep.subr.bf16.mxu0 %v7586
        %11983 = vmatpush1.bf16.msra.mxu0 %v7585
        %11984 = vmatprep.subr.bf16.mxu0 %v7594
        %11985 = vmatpush1.bf16.msra.mxu0 %v7593
        %11986 = vmatprep.subr.bf16.mxu0 %v7602
        %11987 = vmatpush1.bf16.msra.mxu0 %v7601
        %11988 = vmatprep.subr.bf16.mxu0 %v7610
        %11989 = vmatpush1.bf16.msra.mxu0 %v7609
        %11990 = vmatprep.subr.bf16.mxu0 %v7618
        %11991 = vmatpush1.bf16.msra.mxu0 %v7617
        %11992 = vmatprep.subr.bf16.mxu0 %v7626
        %11993 = vmatpush1.bf16.msra.mxu0 %v7625
        %11994 = vmatprep.subr.bf16.mxu0 %v7634
        %11995 = vmatpush1.bf16.msra.mxu0 %v7633
        %11996 = vmatprep.subr.bf16.mxu0 %v7642
        %11997 = vmatpush1.bf16.msra.mxu0 %v7641
        %11998 = vmatprep.mubr.bf16.mxu0 %v2103
        %11999 = vmatmul.mubr.bf16.gmra.mrb[0].mxu0 %v2089
        %v12000 = vpop.f32.mrb[0].mxu0
        %v12001 = vadd.f32 %v11960, %v12000
        %v12002 = vpop.f32.mrb[0].mxu0
        %v12003 = vadd.f32 %v11962, %v12002
        %v12004 = vpop.f32.mrb[0].mxu0
        %v12005 = vpop.f32.mrb[0].mxu0
        %12006 = vdwg.mxu0
        %12007 = vmatprep.subr.bf16.mxu0 %v7650
        %12008 = vmatpush1.bf16.msra.mxu0 %v7649
        %12009 = vmatprep.subr.bf16.mxu0 %v7658
        %12010 = vmatpush1.bf16.msra.mxu0 %v7657
        %12011 = vmatprep.subr.bf16.mxu0 %v7666
        %12012 = vmatpush1.bf16.msra.mxu0 %v7665
        %12013 = vmatprep.subr.bf16.mxu0 %v7674
        %12014 = vmatpush1.bf16.msra.mxu0 %v7673
        %12015 = vmatprep.subr.bf16.mxu0 %v7682
        %12016 = vmatpush1.bf16.msra.mxu0 %v7681
        %12017 = vmatprep.subr.bf16.mxu0 %v7690
        %12018 = vmatpush1.bf16.msra.mxu0 %v7689
        %12019 = vmatprep.subr.bf16.mxu0 %v7698
        %12020 = vmatpush1.bf16.msra.mxu0 %v7697
        %12021 = vmatprep.subr.bf16.mxu0 %v7706
        %12022 = vmatpush1.bf16.msra.mxu0 %v7705
        %12023 = vmatprep.subr.bf16.mxu0 %v7714
        %12024 = vmatpush1.bf16.msra.mxu0 %v7713
        %12025 = vmatprep.subr.bf16.mxu0 %v7722
        %12026 = vmatpush1.bf16.msra.mxu0 %v7721
        %12027 = vmatprep.subr.bf16.mxu0 %v7730
        %12028 = vmatpush1.bf16.msra.mxu0 %v7729
        %12029 = vmatprep.subr.bf16.mxu0 %v7738
        %12030 = vmatpush1.bf16.msra.mxu0 %v7737
        %12031 = vmatprep.subr.bf16.mxu0 %v7746
        %12032 = vmatpush1.bf16.msra.mxu0 %v7745
        %12033 = vmatprep.subr.bf16.mxu0 %v7754
        %12034 = vmatpush1.bf16.msra.mxu0 %v7753
        %12035 = vmatprep.subr.bf16.mxu0 %v7762
        %12036 = vmatpush1.bf16.msra.mxu0 %v7761
        %12037 = vmatprep.subr.bf16.mxu0 %v7770
        %12038 = vmatpush1.bf16.msra.mxu0 %v7769
        %12039 = vmatprep.mubr.bf16.mxu0 %v2113
        %12040 = vmatmul.mubr.bf16.gmra.mrb[0].mxu0 %v2111
        %v12041 = vpop.f32.mrb[0].mxu0
        %v12042 = vadd.f32 %v12001, %v12041
        %v12043 = vpop.f32.mrb[0].mxu0
        %v12044 = vadd.f32 %v12003, %v12043
        %v12045 = vpop.f32.mrb[0].mxu0
        %v12046 = vpop.f32.mrb[0].mxu0
        %12047 = vdwg.mxu0
        %12048 = vmatprep.subr.bf16.mxu0 %v7778
        %12049 = vmatpush1.bf16.msra.mxu0 %v7777
        %12050 = vmatprep.subr.bf16.mxu0 %v7786
        %12051 = vmatpush1.bf16.msra.mxu0 %v7785
        %12052 = vmatprep.subr.bf16.mxu0 %v7794
        %12053 = vmatpush1.bf16.msra.mxu0 %v7793
        %12054 = vmatprep.subr.bf16.mxu0 %v7802
        %12055 = vmatpush1.bf16.msra.mxu0 %v7801
        %12056 = vmatprep.subr.bf16.mxu0 %v7810
        %12057 = vmatpush1.bf16.msra.mxu0 %v7809
        %12058 = vmatprep.subr.bf16.mxu0 %v7818
        %12059 = vmatpush1.bf16.msra.mxu0 %v7817
        %12060 = vmatprep.subr.bf16.mxu0 %v7826
        %12061 = vmatpush1.bf16.msra.mxu0 %v7825
        %12062 = vmatprep.subr.bf16.mxu0 %v7834
        %12063 = vmatpush1.bf16.msra.mxu0 %v7833
        %12064 = vmatprep.subr.bf16.mxu0 %v7842
        %12065 = vmatpush1.bf16.msra.mxu0 %v7841
        %12066 = vmatprep.subr.bf16.mxu0 %v7850
        %12067 = vmatpush1.bf16.msra.mxu0 %v7849
        %12068 = vmatprep.subr.bf16.mxu0 %v7858
        %12069 = vmatpush1.bf16.msra.mxu0 %v7857
        %12070 = vmatprep.subr.bf16.mxu0 %v7866
        %12071 = vmatpush1.bf16.msra.mxu0 %v7865
        %12072 = vmatprep.subr.bf16.mxu0 %v7874
        %12073 = vmatpush1.bf16.msra.mxu0 %v7873
        %12074 = vmatprep.subr.bf16.mxu0 %v7882
        %12075 = vmatpush1.bf16.msra.mxu0 %v7881
        %12076 = vmatprep.subr.bf16.mxu0 %v7890
        %12077 = vmatpush1.bf16.msra.mxu0 %v7889
        %12078 = vmatprep.subr.bf16.mxu0 %v7898
        %12079 = vmatpush1.bf16.msra.mxu0 %v7897
        %12080 = vmatprep.mubr.bf16.mxu0 %v2110
        %12081 = vmatmul.mubr.bf16.gmra.mrb[0].mxu0 %v2096
        %v12082 = vpop.f32.mrb[0].mxu0
        %v12083 = vadd.f32 %v12042, %v12082
        %v12084 = vpop.f32.mrb[0].mxu0
        %v12085 = vadd.f32 %v12044, %v12084
        %v12086 = vpop.f32.mrb[0].mxu0
        %v12087 = vpop.f32.mrb[0].mxu0
        %12088 = vdwg.mxu0
        %12089 = vmatprep.subr.bf16.mxu0 %v7906
        %12090 = vmatpush1.bf16.msra.mxu0 %v7905
        %12091 = vmatprep.subr.bf16.mxu0 %v7914
        %12092 = vmatpush1.bf16.msra.mxu0 %v7913
        %12093 = vmatprep.subr.bf16.mxu0 %v7922
        %12094 = vmatpush1.bf16.msra.mxu0 %v7921
        %12095 = vmatprep.subr.bf16.mxu0 %v7930
        %12096 = vmatpush1.bf16.msra.mxu0 %v7929
        %12097 = vmatprep.subr.bf16.mxu0 %v7938
        %12098 = vmatpush1.bf16.msra.mxu0 %v7937
        %12099 = vmatprep.subr.bf16.mxu0 %v7946
        %12100 = vmatpush1.bf16.msra.mxu0 %v7945
        %12101 = vmatprep.subr.bf16.mxu0 %v7954
        %12102 = vmatpush1.bf16.msra.mxu0 %v7953
        %12103 = vmatprep.subr.bf16.mxu0 %v7962
        %12104 = vmatpush1.bf16.msra.mxu0 %v7961
        %12105 = vmatprep.subr.bf16.mxu0 %v7970
        %12106 = vmatpush1.bf16.msra.mxu0 %v7969
        %12107 = vmatprep.subr.bf16.mxu0 %v7978
        %12108 = vmatpush1.bf16.msra.mxu0 %v7977
        %12109 = vmatprep.subr.bf16.mxu0 %v7986
        %12110 = vmatpush1.bf16.msra.mxu0 %v7985
        %12111 = vmatprep.subr.bf16.mxu0 %v7994
        %12112 = vmatpush1.bf16.msra.mxu0 %v7993
        %12113 = vmatprep.subr.bf16.mxu0 %v8002
        %12114 = vmatpush1.bf16.msra.mxu0 %v8001
        %12115 = vmatprep.subr.bf16.mxu0 %v8010
        %12116 = vmatpush1.bf16.msra.mxu0 %v8009
        %12117 = vmatprep.subr.bf16.mxu0 %v8018
        %12118 = vmatpush1.bf16.msra.mxu0 %v8017
        %12119 = vmatprep.subr.bf16.mxu0 %v8026
        %12120 = vmatpush1.bf16.msra.mxu0 %v8025
        %12121 = vmatprep.mubr.bf16.mxu0 %v2114
        %12122 = vmatmul.mubr.bf16.gmra.mrb[0].mxu0 %v2112
        %v12123 = vpop.f32.mrb[0].mxu0
        %v12124 = vadd.f32 %v12083, %v12123
        %v12125 = vpop.f32.mrb[0].mxu0
        %v12126 = vadd.f32 %v12085, %v12125
        %v12127 = vpop.f32.mrb[0].mxu0
        %v12128 = vpop.f32.mrb[0].mxu0
        %12129 = vdwg.mxu0
        %12130 = vmatprep.subr.bf16.mxu0 %v8034
        %12131 = vmatpush1.bf16.msra.mxu0 %v8033
        %12132 = vmatprep.subr.bf16.mxu0 %v8042
        %12133 = vmatpush1.bf16.msra.mxu0 %v8041
        %12134 = vmatprep.subr.bf16.mxu0 %v8050
        %12135 = vmatpush1.bf16.msra.mxu0 %v8049
        %12136 = vmatprep.subr.bf16.mxu0 %v8058
        %12137 = vmatpush1.bf16.msra.mxu0 %v8057
        %12138 = vmatprep.subr.bf16.mxu0 %v8066
        %12139 = vmatpush1.bf16.msra.mxu0 %v8065
        %12140 = vmatprep.subr.bf16.mxu0 %v8074
        %12141 = vmatpush1.bf16.msra.mxu0 %v8073
        %12142 = vmatprep.subr.bf16.mxu0 %v8082
        %12143 = vmatpush1.bf16.msra.mxu0 %v8081
        %12144 = vmatprep.subr.bf16.mxu0 %v8090
        %12145 = vmatpush1.bf16.msra.mxu0 %v8089
        %12146 = vmatprep.subr.bf16.mxu0 %v8098
        %12147 = vmatpush1.bf16.msra.mxu0 %v8097
        %12148 = vmatprep.subr.bf16.mxu0 %v8106
        %12149 = vmatpush1.bf16.msra.mxu0 %v8105
        %12150 = vmatprep.subr.bf16.mxu0 %v8114
        %12151 = vmatpush1.bf16.msra.mxu0 %v8113
        %12152 = vmatprep.subr.bf16.mxu0 %v8122
        %12153 = vmatpush1.bf16.msra.mxu0 %v8121
        %12154 = vmatprep.subr.bf16.mxu0 %v8130
        %12155 = vmatpush1.bf16.msra.mxu0 %v8129
        %12156 = vmatprep.subr.bf16.mxu0 %v8138
        %12157 = vmatpush1.bf16.msra.mxu0 %v8137
        %12158 = vmatprep.subr.bf16.mxu0 %v8146
        %12159 = vmatpush1.bf16.msra.mxu0 %v8145
        %12160 = vmatprep.subr.bf16.mxu0 %v8154
        %12161 = vmatpush1.bf16.msra.mxu0 %v8153
        %12162 = vmatprep.mubr.bf16.mxu0 %v2152
        %12163 = vmatmul.mubr.bf16.gmra.mrb[0].mxu0 %v2138
        %v12164 = vpop.f32.mrb[0].mxu0
        %v12165 = vadd.f32 %v12124, %v12164
        %v12166 = vpop.f32.mrb[0].mxu0
        %v12167 = vadd.f32 %v12126, %v12166
        %v12168 = vpop.f32.mrb[0].mxu0
        %v12169 = vpop.f32.mrb[0].mxu0
        %12170 = vdwg.mxu0
        %12171 = vmatprep.subr.bf16.mxu0 %v8162
        %12172 = vmatpush1.bf16.msra.mxu0 %v8161
        %12173 = vmatprep.subr.bf16.mxu0 %v8170
        %12174 = vmatpush1.bf16.msra.mxu0 %v8169
        %12175 = vmatprep.subr.bf16.mxu0 %v8178
        %12176 = vmatpush1.bf16.msra.mxu0 %v8177
        %12177 = vmatprep.subr.bf16.mxu0 %v8186
        %12178 = vmatpush1.bf16.msra.mxu0 %v8185
        %12179 = vmatprep.subr.bf16.mxu0 %v8194
        %12180 = vmatpush1.bf16.msra.mxu0 %v8193
        %12181 = vmatprep.subr.bf16.mxu0 %v8202
        %12182 = vmatpush1.bf16.msra.mxu0 %v8201
        %12183 = vmatprep.subr.bf16.mxu0 %v8210
        %12184 = vmatpush1.bf16.msra.mxu0 %v8209
        %12185 = vmatprep.subr.bf16.mxu0 %v8218
        %12186 = vmatpush1.bf16.msra.mxu0 %v8217
        %12187 = vmatprep.subr.bf16.mxu0 %v8226
        %12188 = vmatpush1.bf16.msra.mxu0 %v8225
        %12189 = vmatprep.subr.bf16.mxu0 %v8234
        %12190 = vmatpush1.bf16.msra.mxu0 %v8233
        %12191 = vmatprep.subr.bf16.mxu0 %v8242
        %12192 = vmatpush1.bf16.msra.mxu0 %v8241
        %12193 = vmatprep.subr.bf16.mxu0 %v8250
        %12194 = vmatpush1.bf16.msra.mxu0 %v8249
        %12195 = vmatprep.subr.bf16.mxu0 %v8258
        %12196 = vmatpush1.bf16.msra.mxu0 %v8257
        %12197 = vmatprep.subr.bf16.mxu0 %v8266
        %12198 = vmatpush1.bf16.msra.mxu0 %v8265
        %12199 = vmatprep.subr.bf16.mxu0 %v8274
        %12200 = vmatpush1.bf16.msra.mxu0 %v8273
        %12201 = vmatprep.subr.bf16.mxu0 %v8282
        %12202 = vmatpush1.bf16.msra.mxu0 %v8281
        %12203 = vmatprep.mubr.bf16.mxu0 %v2162
        %12204 = vmatmul.mubr.bf16.gmra.mrb[0].mxu0 %v2160
        %v12205 = vpop.f32.mrb[0].mxu0
        %v12206 = vadd.f32 %v12165, %v12205
        %v12207 = vpop.f32.mrb[0].mxu0
        %v12208 = vadd.f32 %v12167, %v12207
        %v12209 = vpop.f32.mrb[0].mxu0
        %v12210 = vpop.f32.mrb[0].mxu0
        %12211 = vdwg.mxu0
        %12212 = vmatprep.subr.bf16.mxu0 %v8290
        %12213 = vmatpush1.bf16.msra.mxu0 %v8289
        %12214 = vmatprep.subr.bf16.mxu0 %v8298
        %12215 = vmatpush1.bf16.msra.mxu0 %v8297
        %12216 = vmatprep.subr.bf16.mxu0 %v8306
        %12217 = vmatpush1.bf16.msra.mxu0 %v8305
        %12218 = vmatprep.subr.bf16.mxu0 %v8314
        %12219 = vmatpush1.bf16.msra.mxu0 %v8313
        %12220 = vmatprep.subr.bf16.mxu0 %v8322
        %12221 = vmatpush1.bf16.msra.mxu0 %v8321
        %12222 = vmatprep.subr.bf16.mxu0 %v8330
        %12223 = vmatpush1.bf16.msra.mxu0 %v8329
        %12224 = vmatprep.subr.bf16.mxu0 %v8338
        %12225 = vmatpush1.bf16.msra.mxu0 %v8337
        %12226 = vmatprep.subr.bf16.mxu0 %v8346
        %12227 = vmatpush1.bf16.msra.mxu0 %v8345
        %12228 = vmatprep.subr.bf16.mxu0 %v8354
        %12229 = vmatpush1.bf16.msra.mxu0 %v8353
        %12230 = vmatprep.subr.bf16.mxu0 %v8362
        %12231 = vmatpush1.bf16.msra.mxu0 %v8361
        %12232 = vmatprep.subr.bf16.mxu0 %v8370
        %12233 = vmatpush1.bf16.msra.mxu0 %v8369
        %12234 = vmatprep.subr.bf16.mxu0 %v8378
        %12235 = vmatpush1.bf16.msra.mxu0 %v8377
        %12236 = vmatprep.subr.bf16.mxu0 %v8386
        %12237 = vmatpush1.bf16.msra.mxu0 %v8385
        %12238 = vmatprep.subr.bf16.mxu0 %v8394
        %12239 = vmatpush1.bf16.msra.mxu0 %v8393
        %12240 = vmatprep.subr.bf16.mxu0 %v8402
        %12241 = vmatpush1.bf16.msra.mxu0 %v8401
        %12242 = vmatprep.subr.bf16.mxu0 %v8410
        %12243 = vmatpush1.bf16.msra.mxu0 %v8409
        %12244 = vmatprep.mubr.bf16.mxu0 %v2159
        %12245 = vmatmul.mubr.bf16.gmra.mrb[0].mxu0 %v2145
        %v12246 = vpop.f32.mrb[0].mxu0
        %v12247 = vadd.f32 %v12206, %v12246
        %v12248 = vpop.f32.mrb[0].mxu0
        %v12249 = vadd.f32 %v12208, %v12248
        %v12250 = vpop.f32.mrb[0].mxu0
        %v12251 = vpop.f32.mrb[0].mxu0
        %12252 = vdwg.mxu0
        %12253 = vmatprep.subr.bf16.mxu0 %v8418
        %12254 = vmatpush1.bf16.msra.mxu0 %v8417
        %12255 = vmatprep.subr.bf16.mxu0 %v8426
        %12256 = vmatpush1.bf16.msra.mxu0 %v8425
        %12257 = vmatprep.subr.bf16.mxu0 %v8434
        %12258 = vmatpush1.bf16.msra.mxu0 %v8433
        %12259 = vmatprep.subr.bf16.mxu0 %v8442
        %12260 = vmatpush1.bf16.msra.mxu0 %v8441
        %12261 = vmatprep.subr.bf16.mxu0 %v8450
        %12262 = vmatpush1.bf16.msra.mxu0 %v8449
        %12263 = vmatprep.subr.bf16.mxu0 %v8458
        %12264 = vmatpush1.bf16.msra.mxu0 %v8457
        %12265 = vmatprep.subr.bf16.mxu0 %v8466
        %12266 = vmatpush1.bf16.msra.mxu0 %v8465
        %12267 = vmatprep.subr.bf16.mxu0 %v8474
        %12268 = vmatpush1.bf16.msra.mxu0 %v8473
        %12269 = vmatprep.subr.bf16.mxu0 %v8482
        %12270 = vmatpush1.bf16.msra.mxu0 %v8481
        %12271 = vmatprep.subr.bf16.mxu0 %v8490
        %12272 = vmatpush1.bf16.msra.mxu0 %v8489
        %12273 = vmatprep.subr.bf16.mxu0 %v8498
        %12274 = vmatpush1.bf16.msra.mxu0 %v8497
        %12275 = vmatprep.subr.bf16.mxu0 %v8506
        %12276 = vmatpush1.bf16.msra.mxu0 %v8505
        %12277 = vmatprep.subr.bf16.mxu0 %v8514
        %12278 = vmatpush1.bf16.msra.mxu0 %v8513
        %12279 = vmatprep.subr.bf16.mxu0 %v8522
        %12280 = vmatpush1.bf16.msra.mxu0 %v8521
        %12281 = vmatprep.subr.bf16.mxu0 %v8530
        %12282 = vmatpush1.bf16.msra.mxu0 %v8529
        %12283 = vmatprep.subr.bf16.mxu0 %v8538
        %12284 = vmatpush1.bf16.msra.mxu0 %v8537
        %12285 = vmatprep.mubr.bf16.mxu0 %v2163
        %12286 = vmatmul.mubr.bf16.gmra.mrb[0].mxu0 %v2161
        %v12287 = vpop.f32.mrb[0].mxu0
        %v12288 = vadd.f32 %v12247, %v12287
        %v12289 = vpop.f32.mrb[0].mxu0
        %v12290 = vadd.f32 %v12249, %v12289
        %v12291 = vpop.f32.mrb[0].mxu0
        %v12292 = vpop.f32.mrb[0].mxu0
        %12293 = vdwg.mxu0
        %12294 = vmatprep.subr.bf16.mxu0 %v8546
        %12295 = vmatpush1.bf16.msra.mxu0 %v8545
        %12296 = vmatprep.subr.bf16.mxu0 %v8554
        %12297 = vmatpush1.bf16.msra.mxu0 %v8553
        %12298 = vmatprep.subr.bf16.mxu0 %v8562
        %12299 = vmatpush1.bf16.msra.mxu0 %v8561
        %12300 = vmatprep.subr.bf16.mxu0 %v8570
        %12301 = vmatpush1.bf16.msra.mxu0 %v8569
        %12302 = vmatprep.subr.bf16.mxu0 %v8578
        %12303 = vmatpush1.bf16.msra.mxu0 %v8577
        %12304 = vmatprep.subr.bf16.mxu0 %v8586
        %12305 = vmatpush1.bf16.msra.mxu0 %v8585
        %12306 = vmatprep.subr.bf16.mxu0 %v8594
        %12307 = vmatpush1.bf16.msra.mxu0 %v8593
        %12308 = vmatprep.subr.bf16.mxu0 %v8602
        %12309 = vmatpush1.bf16.msra.mxu0 %v8601
        %12310 = vmatprep.subr.bf16.mxu0 0
        %12311 = vmatpush1.bf16.msra.mxu0 0
        %12312 = vmatprep.subr.bf16.mxu0 0
        %12313 = vmatpush1.bf16.msra.mxu0 0
        %12314 = vmatprep.subr.bf16.mxu0 0
        %12315 = vmatpush1.bf16.msra.mxu0 0
        %12316 = vmatprep.subr.bf16.mxu0 0
        %12317 = vmatpush1.bf16.msra.mxu0 0
        %12318 = vmatprep.subr.bf16.mxu0 0
        %12319 = vmatpush1.bf16.msra.mxu0 0
        %12320 = vmatprep.subr.bf16.mxu0 0
        %12321 = vmatpush1.bf16.msra.mxu0 0
        %12322 = vmatprep.subr.bf16.mxu0 0
        %12323 = vmatpush1.bf16.msra.mxu0 0
        %12324 = vmatprep.subr.bf16.mxu0 0
        %12325 = vmatpush1.bf16.msra.mxu0 0
        %12326 = vmatprep.mubr.bf16.mxu0 0
        %12327 = vmatmul.mubr.bf16.gmra.mrb[0].mxu0 %v2177
        %v12328 = vpop.f32.mrb[0].mxu0
        %v12329 = vadd.f32 %v12288, %v12328
        %v12330 = vpop.f32.mrb[0].mxu0
        %v12331 = vadd.f32 %v12290, %v12330
        %v12332 = vpop.f32.mrb[0].mxu0
        %v12333 = vpop.f32.mrb[0].mxu0
        %12334 = vdwg.mxu0
        %v12335 = vld [vmem:[%s343] ss:$2 sm:$0xff]
        %v12337 = vlaneseq
        %v12338 = vshrl.u32 %v12337, 7
        %v12339 = vsub.s32 0, %v12338
        %v12340 = vrot.slane %v12335, %v12339
        %v12341 = vlaneseq
        %v12342 = vshrl.u32 %v12341, 7
        %v12343 = vsub.s32 1, %v12342
        %v12344 = vrot.slane %v12335, %v12343
        %v12345 = vlaneseq
        %v12346 = vshrl.u32 %v12345, 7
        %v12347 = vsub.s32 2, %v12346
        %v12348 = vrot.slane %v12335, %v12347
        %v12349 = vlaneseq
        %v12350 = vshrl.u32 %v12349, 7
        %v12351 = vsub.s32 3, %v12350
        %v12352 = vrot.slane %v12335, %v12351
        %v12353 = vlaneseq
        %v12354 = vshrl.u32 %v12353, 7
        %v12355 = vsub.s32 4, %v12354
        %v12356 = vrot.slane %v12335, %v12355
        %v12357 = vlaneseq
        %v12358 = vshrl.u32 %v12357, 7
        %v12359 = vsub.s32 5, %v12358
        %v12360 = vrot.slane %v12335, %v12359
        %v12361 = vlaneseq
        %v12362 = vshrl.u32 %v12361, 7
        %v12363 = vsub.s32 6, %v12362
        %v12364 = vrot.slane %v12335, %v12363
        %v12365 = vlaneseq
        %v12366 = vshrl.u32 %v12365, 7
        %v12367 = vsub.s32 7, %v12366
        %v12368 = vrot.slane %v12335, %v12367
        %v12377 = vmul.f32 %v10730, %v12340
        %v12378 = vmul.f32 %v10732, %v12344
        %v12379 = vmul.f32 %v11263, %v12348
        %v12380 = vmul.f32 %v11265, %v12352
        %v12381 = vmul.f32 %v11796, %v12356
        %v12382 = vmul.f32 %v11798, %v12360
        %v12383 = vmul.f32 %v12329, %v12364
        %v12384 = vmul.f32 %v12331, %v12368
        %s12385 = scalar_lea.vmem %s343, 1 [#allocation6]
        %v12386 = vld [vmem:[%s12385] ss:$2 sm:$0xff]
        %v12388 = vlaneseq
        %v12389 = vshrl.u32 %v12388, 7
        %v12390 = vsub.s32 0, %v12389
        %v12391 = vrot.slane %v12386, %v12390
        %v12392 = vlaneseq
        %v12393 = vshrl.u32 %v12392, 7
        %v12394 = vsub.s32 1, %v12393
        %v12395 = vrot.slane %v12386, %v12394
        %v12396 = vlaneseq
        %v12397 = vshrl.u32 %v12396, 7
        %v12398 = vsub.s32 2, %v12397
        %v12399 = vrot.slane %v12386, %v12398
        %v12400 = vlaneseq
        %v12401 = vshrl.u32 %v12400, 7
        %v12402 = vsub.s32 3, %v12401
        %v12403 = vrot.slane %v12386, %v12402
        %v12404 = vlaneseq
        %v12405 = vshrl.u32 %v12404, 7
        %v12406 = vsub.s32 4, %v12405
        %v12407 = vrot.slane %v12386, %v12406
        %v12408 = vlaneseq
        %v12409 = vshrl.u32 %v12408, 7
        %v12410 = vsub.s32 5, %v12409
        %v12411 = vrot.slane %v12386, %v12410
        %v12412 = vlaneseq
        %v12413 = vshrl.u32 %v12412, 7
        %v12414 = vsub.s32 6, %v12413
        %v12415 = vrot.slane %v12386, %v12414
        %v12416 = vlaneseq
        %v12417 = vshrl.u32 %v12416, 7
        %v12418 = vsub.s32 7, %v12417
        %v12419 = vrot.slane %v12386, %v12418
        %v12428 = vadd.f32 %v12377, %v12391
        %v12429 = vadd.f32 %v12378, %v12395
        %v12430 = vadd.f32 %v12379, %v12399
        %v12431 = vadd.f32 %v12380, %v12403
        %v12432 = vadd.f32 %v12381, %v12407
        %v12433 = vadd.f32 %v12382, %v12411
        %v12434 = vadd.f32 %v12383, %v12415
        %v12435 = vadd.f32 %v12384, %v12419
        %v12436 = vmax.f32 %v12428, 0.0
        %v12437 = vmax.f32 %v12429, 0.0
        %v12438 = vmax.f32 %v12430, 0.0
        %v12439 = vmax.f32 %v12431, 0.0
        %v12440 = vmax.f32 %v12432, 0.0
        %v12441 = vmax.f32 %v12433, 0.0
        %v12442 = vmax.f32 %v12434, 0.0
        %v12443 = vmax.f32 %v12435, 0.0
        %v12444 = vld [vmem:[#allocation2] sm:$0x3]
        %v12445 = vpack.c.bf16 %v12436, %v12436
        %v12446 = vpack.c.bf16 %v12437, %v12437
        %v12447 = vpack.c.bf16 %v12438, %v12438
        %v12448 = vpack.c.bf16 %v12439, %v12439
        %v12449 = vpack.c.bf16 %v12440, %v12440
        %v12450 = vpack.c.bf16 %v12441, %v12441
        %v12451 = vpack.c.bf16 %v12442, %v12442
        %v12452 = vpack.c.bf16 %v12443, %v12443
        %v12453 = vld [vmem:[%s352] sm:$0xf]
        %v12454 = vld [vmem:[%s352 + $0x4] sm:$0xf]
        %v12455 = vld [vmem:[%s352 + $0x8] sm:$0xf]
        %v12456 = vld [vmem:[%s352 + $0xc] sm:$0xf]
        %v12457 = vld [vmem:[%s352 + $0x10] sm:$0xf]
        %v12458 = vld [vmem:[%s352 + $0x14] sm:$0xf]
        %v12459 = vld [vmem:[%s352 + $0x18] sm:$0xf]
        %v12460 = vld [vmem:[%s352 + $0x1c] sm:$0xf]
        %v12461 = vld [vmem:[%s352 + $0x20] sm:$0xf]
        %v12462 = vld [vmem:[%s352 + $0x24] sm:$0xf]
        %v12463 = vld [vmem:[%s352 + $0x28] sm:$0xf]
        %v12464 = vld [vmem:[%s352 + $0x2c] sm:$0xf]
        %v12465 = vld [vmem:[%s352 + $0x30] sm:$0xf]
        %v12466 = vld [vmem:[%s352 + $0x34] sm:$0xf]
        %v12467 = vld [vmem:[%s352 + $0x38] sm:$0xf]
        %v12468 = vld [vmem:[%s352 + $0x3c] sm:$0xf]
        %v12469 = vld [vmem:[%s352 + $0x40] sm:$0xf]
        %v12470 = vld [vmem:[%s352 + $0x44] sm:$0xf]
        %v12471 = vld [vmem:[%s352 + $0x48] sm:$0xf]
        %v12472 = vld [vmem:[%s352 + $0x4c] sm:$0xf]
        %v12473 = vld [vmem:[%s352 + $0x50] sm:$0xf]
        %v12474 = vld [vmem:[%s352 + $0x54] sm:$0xf]
        %v12475 = vld [vmem:[%s352 + $0x58] sm:$0xf]
        %v12476 = vld [vmem:[%s352 + $0x5c] sm:$0xf]
        %v12477 = vld [vmem:[%s352 + $0x60] sm:$0xf]
        %v12478 = vld [vmem:[%s352 + $0x64] sm:$0xf]
        %v12479 = vld [vmem:[%s352 + $0x68] sm:$0xf]
        %v12480 = vld [vmem:[%s352 + $0x6c] sm:$0xf]
        %v12481 = vld [vmem:[%s352 + $0x70] sm:$0xf]
        %v12482 = vld [vmem:[%s352 + $0x74] sm:$0xf]
        %v12483 = vld [vmem:[%s352 + $0x78] sm:$0xf]
        %v12484 = vld [vmem:[%s352 + $0x7c] sm:$0xf]
        %v12485 = vld [vmem:[%s352 + $0x80] sm:$0xf]
        %v12486 = vld [vmem:[%s352 + $0x84] sm:$0xf]
        %v12487 = vld [vmem:[%s352 + $0x88] sm:$0xf]
        %v12488 = vld [vmem:[%s352 + $0x8c] sm:$0xf]
        %v12489 = vld [vmem:[%s352 + $0x90] sm:$0xf]
        %v12490 = vld [vmem:[%s352 + $0x94] sm:$0xf]
        %v12491 = vld [vmem:[%s352 + $0x98] sm:$0xf]
        %v12492 = vld [vmem:[%s352 + $0x9c] sm:$0xf]
        %v12493 = vld [vmem:[%s352 + $0xa0] sm:$0xf]
        %v12494 = vld [vmem:[%s352 + $0xa4] sm:$0xf]
        %v12495 = vld [vmem:[%s352 + $0xa8] sm:$0xf]
        %v12496 = vld [vmem:[%s352 + $0xac] sm:$0xf]
        %v12497 = vld [vmem:[%s352 + $0xb0] sm:$0xf]
        %v12498 = vld [vmem:[%s352 + $0xb4] sm:$0xf]
        %v12499 = vld [vmem:[%s352 + $0xb8] sm:$0xf]
        %v12500 = vld [vmem:[%s352 + $0xbc] sm:$0xf]
        %v12501 = vld [vmem:[%s352 + $0xc0] sm:$0xf]
        %v12502 = vld [vmem:[%s352 + $0xc4] sm:$0xf]
        %v12503 = vld [vmem:[%s352 + $0xc8] sm:$0xf]
        %v12504 = vld [vmem:[%s352 + $0xcc] sm:$0xf]
        %v12505 = vld [vmem:[%s352 + $0xd0] sm:$0xf]
        %v12506 = vld [vmem:[%s352 + $0xd4] sm:$0xf]
        %v12507 = vld [vmem:[%s352 + $0xd8] sm:$0xf]
        %v12508 = vld [vmem:[%s352 + $0xdc] sm:$0xf]
        %v12509 = vld [vmem:[%s352 + $0xe0] sm:$0xf]
        %v12510 = vld [vmem:[%s352 + $0xe4] sm:$0xf]
        %v12511 = vld [vmem:[%s352 + $0xe8] sm:$0xf]
        %v12512 = vld [vmem:[%s352 + $0xec] sm:$0xf]
        %v12513 = vld [vmem:[%s352 + $0xf0] sm:$0xf]
        %v12514 = vld [vmem:[%s352 + $0xf4] sm:$0xf]
        %v12515 = vld [vmem:[%s352 + $0xf8] sm:$0xf]
        %v12516 = vld [vmem:[%s352 + $0xfc] sm:$0xf]
        %v12517 = vld [vmem:[%s352 + $0x100] sm:$0xf]
        %v12518 = vld [vmem:[%s352 + $0x104] sm:$0xf]
        %v12519 = vld [vmem:[%s352 + $0x108] sm:$0xf]
        %v12520 = vld [vmem:[%s352 + $0x10c] sm:$0xf]
        %v12521 = vld [vmem:[%s352 + $0x110] sm:$0xf]
        %v12522 = vld [vmem:[%s352 + $0x114] sm:$0xf]
        %v12523 = vld [vmem:[%s352 + $0x118] sm:$0xf]
        %v12524 = vld [vmem:[%s352 + $0x11c] sm:$0xf]
        %v12525 = vld [vmem:[%s352 + $0x120] sm:$0xf]
        %v12526 = vld [vmem:[%s352 + $0x124] sm:$0xf]
        %v12527 = vld [vmem:[%s352 + $0x128] sm:$0xf]
        %v12528 = vld [vmem:[%s352 + $0x12c] sm:$0xf]
        %v12529 = vld [vmem:[%s352 + $0x130] sm:$0xf]
        %v12530 = vld [vmem:[%s352 + $0x134] sm:$0xf]
        %v12531 = vld [vmem:[%s352 + $0x138] sm:$0xf]
        %v12532 = vld [vmem:[%s352 + $0x13c] sm:$0xf]
        %v12533 = vld [vmem:[%s352 + $0x140] sm:$0xf]
        %v12534 = vld [vmem:[%s352 + $0x144] sm:$0xf]
        %v12535 = vld [vmem:[%s352 + $0x148] sm:$0xf]
        %v12536 = vld [vmem:[%s352 + $0x14c] sm:$0xf]
        %v12537 = vld [vmem:[%s352 + $0x150] sm:$0xf]
        %v12538 = vld [vmem:[%s352 + $0x154] sm:$0xf]
        %v12539 = vld [vmem:[%s352 + $0x158] sm:$0xf]
        %v12540 = vld [vmem:[%s352 + $0x15c] sm:$0xf]
        %v12541 = vld [vmem:[%s352 + $0x160] sm:$0xf]
        %v12542 = vld [vmem:[%s352 + $0x164] sm:$0xf]
        %v12543 = vld [vmem:[%s352 + $0x168] sm:$0xf]
        %v12544 = vld [vmem:[%s352 + $0x16c] sm:$0xf]
        %v12545 = vld [vmem:[%s352 + $0x170] sm:$0xf]
        %v12546 = vld [vmem:[%s352 + $0x174] sm:$0xf]
        %v12547 = vld [vmem:[%s352 + $0x178] sm:$0xf]
        %v12548 = vld [vmem:[%s352 + $0x17c] sm:$0xf]
        %v12549 = vld [vmem:[%s352 + $0x180] sm:$0xf]
        %v12550 = vld [vmem:[%s352 + $0x184] sm:$0xf]
        %v12551 = vld [vmem:[%s352 + $0x188] sm:$0xf]
        %v12552 = vld [vmem:[%s352 + $0x18c] sm:$0xf]
        %v12553 = vld [vmem:[%s352 + $0x190] sm:$0xf]
        %v12554 = vld [vmem:[%s352 + $0x194] sm:$0xf]
        %v12555 = vld [vmem:[%s352 + $0x198] sm:$0xf]
        %v12556 = vld [vmem:[%s352 + $0x19c] sm:$0xf]
        %v12557 = vld [vmem:[%s352 + $0x1a0] sm:$0xf]
        %v12558 = vld [vmem:[%s352 + $0x1a4] sm:$0xf]
        %v12559 = vld [vmem:[%s352 + $0x1a8] sm:$0xf]
        %v12560 = vld [vmem:[%s352 + $0x1ac] sm:$0xf]
        %v12561 = vld [vmem:[%s352 + $0x1b0] sm:$0xf]
        %v12562 = vld [vmem:[%s352 + $0x1b4] sm:$0xf]
        %v12563 = vld [vmem:[%s352 + $0x1b8] sm:$0xf]
        %v12564 = vld [vmem:[%s352 + $0x1bc] sm:$0xf]
        %v12565 = vld [vmem:[%s352 + $0x1c0] sm:$0xf]
        %v12566 = vld [vmem:[%s352 + $0x1c4] sm:$0xf]
        %v12567 = vld [vmem:[%s352 + $0x1c8] sm:$0xf]
        %v12568 = vld [vmem:[%s352 + $0x1cc] sm:$0xf]
        %v12569 = vld [vmem:[%s352 + $0x1d0] sm:$0xf]
        %v12570 = vld [vmem:[%s352 + $0x1d4] sm:$0xf]
        %v12571 = vld [vmem:[%s352 + $0x1d8] sm:$0xf]
        %v12572 = vld [vmem:[%s352 + $0x1dc] sm:$0xf]
        %v12573 = vld [vmem:[%s352 + $0x1e0] sm:$0xf]
        %v12574 = vld [vmem:[%s352 + $0x1e4] sm:$0xf]
        %v12575 = vld [vmem:[%s352 + $0x1e8] sm:$0xf]
        %v12576 = vld [vmem:[%s352 + $0x1ec] sm:$0xf]
        %v12577 = vld [vmem:[%s352 + $0x1f0] sm:$0xf]
        %v12578 = vld [vmem:[%s352 + $0x1f4] sm:$0xf]
        %v12579 = vld [vmem:[%s352 + $0x1f8] sm:$0xf]
        %v12580 = vld [vmem:[%s352 + $0x1fc] sm:$0xf]
        %v12709 = vunpack.c.l.b16 %v12453
        %v12710 = vunpack.c.l.b16 %v12454
        %v12711 = vunpack.c.l.b16 %v12455
        %v12712 = vunpack.c.l.b16 %v12456
        %v12713 = vunpack.c.l.b16 %v12457
        %v12714 = vunpack.c.l.b16 %v12458
        %v12715 = vunpack.c.l.b16 %v12459
        %v12716 = vunpack.c.l.b16 %v12460
        %v12717 = vunpack.c.l.b16 %v12461
        %v12718 = vunpack.c.l.b16 %v12462
        %v12719 = vunpack.c.l.b16 %v12463
        %v12720 = vunpack.c.l.b16 %v12464
        %v12721 = vunpack.c.l.b16 %v12465
        %v12722 = vunpack.c.l.b16 %v12466
        %v12723 = vunpack.c.l.b16 %v12467
        %v12724 = vunpack.c.l.b16 %v12468
        %v12725 = vunpack.c.l.b16 %v12469
        %v12726 = vunpack.c.l.b16 %v12470
        %v12727 = vunpack.c.l.b16 %v12471
        %v12728 = vunpack.c.l.b16 %v12472
        %v12729 = vunpack.c.l.b16 %v12473
        %v12730 = vunpack.c.l.b16 %v12474
        %v12731 = vunpack.c.l.b16 %v12475
        %v12732 = vunpack.c.l.b16 %v12476
        %v12733 = vunpack.c.l.b16 %v12477
        %v12734 = vunpack.c.l.b16 %v12478
        %v12735 = vunpack.c.l.b16 %v12479
        %v12736 = vunpack.c.l.b16 %v12480
        %v12737 = vunpack.c.l.b16 %v12481
        %v12738 = vunpack.c.l.b16 %v12482
        %v12739 = vunpack.c.l.b16 %v12483
        %v12740 = vunpack.c.l.b16 %v12484
        %v12741 = vunpack.c.l.b16 %v12485
        %v12742 = vunpack.c.l.b16 %v12486
        %v12743 = vunpack.c.l.b16 %v12487
        %v12744 = vunpack.c.l.b16 %v12488
        %v12745 = vunpack.c.l.b16 %v12489
        %v12746 = vunpack.c.l.b16 %v12490
        %v12747 = vunpack.c.l.b16 %v12491
        %v12748 = vunpack.c.l.b16 %v12492
        %v12749 = vunpack.c.l.b16 %v12493
        %v12750 = vunpack.c.l.b16 %v12494
        %v12751 = vunpack.c.l.b16 %v12495
        %v12752 = vunpack.c.l.b16 %v12496
        %v12753 = vunpack.c.l.b16 %v12497
        %v12754 = vunpack.c.l.b16 %v12498
        %v12755 = vunpack.c.l.b16 %v12499
        %v12756 = vunpack.c.l.b16 %v12500
        %v12757 = vunpack.c.l.b16 %v12501
        %v12758 = vunpack.c.l.b16 %v12502
        %v12759 = vunpack.c.l.b16 %v12503
        %v12760 = vunpack.c.l.b16 %v12504
        %v12761 = vunpack.c.l.b16 %v12505
        %v12762 = vunpack.c.l.b16 %v12506
        %v12763 = vunpack.c.l.b16 %v12507
        %v12764 = vunpack.c.l.b16 %v12508
        %v12765 = vunpack.c.l.b16 %v12509
        %v12766 = vunpack.c.l.b16 %v12510
        %v12767 = vunpack.c.l.b16 %v12511
        %v12768 = vunpack.c.l.b16 %v12512
        %v12769 = vunpack.c.l.b16 %v12513
        %v12770 = vunpack.c.l.b16 %v12514
        %v12771 = vunpack.c.l.b16 %v12515
        %v12772 = vunpack.c.l.b16 %v12516
        %v12773 = vunpack.c.l.b16 %v12517
        %v12774 = vunpack.c.l.b16 %v12518
        %v12775 = vunpack.c.l.b16 %v12519
        %v12776 = vunpack.c.l.b16 %v12520
        %v12777 = vunpack.c.l.b16 %v12521
        %v12778 = vunpack.c.l.b16 %v12522
        %v12779 = vunpack.c.l.b16 %v12523
        %v12780 = vunpack.c.l.b16 %v12524
        %v12781 = vunpack.c.l.b16 %v12525
        %v12782 = vunpack.c.l.b16 %v12526
        %v12783 = vunpack.c.l.b16 %v12527
        %v12784 = vunpack.c.l.b16 %v12528
        %v12785 = vunpack.c.l.b16 %v12529
        %v12786 = vunpack.c.l.b16 %v12530
        %v12787 = vunpack.c.l.b16 %v12531
        %v12788 = vunpack.c.l.b16 %v12532
        %v12789 = vunpack.c.l.b16 %v12533
        %v12790 = vunpack.c.l.b16 %v12534
        %v12791 = vunpack.c.l.b16 %v12535
        %v12792 = vunpack.c.l.b16 %v12536
        %v12793 = vunpack.c.l.b16 %v12537
        %v12794 = vunpack.c.l.b16 %v12538
        %v12795 = vunpack.c.l.b16 %v12539
        %v12796 = vunpack.c.l.b16 %v12540
        %v12797 = vunpack.c.l.b16 %v12541
        %v12798 = vunpack.c.l.b16 %v12542
        %v12799 = vunpack.c.l.b16 %v12543
        %v12800 = vunpack.c.l.b16 %v12544
        %v12801 = vunpack.c.l.b16 %v12545
        %v12802 = vunpack.c.l.b16 %v12546
        %v12803 = vunpack.c.l.b16 %v12547
        %v12804 = vunpack.c.l.b16 %v12548
        %v12805 = vunpack.c.l.b16 %v12549
        %v12806 = vunpack.c.l.b16 %v12550
        %v12807 = vunpack.c.l.b16 %v12551
        %v12808 = vunpack.c.l.b16 %v12552
        %v12809 = vunpack.c.l.b16 %v12553
        %v12810 = vunpack.c.l.b16 %v12554
        %v12811 = vunpack.c.l.b16 %v12555
        %v12812 = vunpack.c.l.b16 %v12556
        %v12813 = vunpack.c.l.b16 %v12557
        %v12814 = vunpack.c.l.b16 %v12558
        %v12815 = vunpack.c.l.b16 %v12559
        %v12816 = vunpack.c.l.b16 %v12560
        %v12817 = vunpack.c.l.b16 %v12561
        %v12818 = vunpack.c.l.b16 %v12562
        %v12819 = vunpack.c.l.b16 %v12563
        %v12820 = vunpack.c.l.b16 %v12564
        %v12821 = vunpack.c.l.b16 %v12565
        %v12822 = vunpack.c.l.b16 %v12566
        %v12823 = vunpack.c.l.b16 %v12567
        %v12824 = vunpack.c.l.b16 %v12568
        %v12825 = vunpack.c.l.b16 %v12569
        %v12826 = vunpack.c.l.b16 %v12570
        %v12827 = vunpack.c.l.b16 %v12571
        %v12828 = vunpack.c.l.b16 %v12572
        %v12829 = vunpack.c.l.b16 %v12573
        %v12830 = vunpack.c.l.b16 %v12574
        %v12831 = vunpack.c.l.b16 %v12575
        %v12832 = vunpack.c.l.b16 %v12576
        %v12833 = vunpack.c.l.b16 %v12577
        %v12834 = vunpack.c.l.b16 %v12578
        %v12835 = vunpack.c.l.b16 %v12579
        %v12836 = vunpack.c.l.b16 %v12580
        %v12837 = vpack.c.b16 %v12710, %v12709
        %v12838 = vpack.c.b16 %v12712, %v12711
        %v12839 = vpack.c.b16 %v12714, %v12713
        %v12840 = vpack.c.b16 %v12716, %v12715
        %v12841 = vpack.c.b16 %v12718, %v12717
        %v12842 = vpack.c.b16 %v12720, %v12719
        %v12843 = vpack.c.b16 %v12722, %v12721
        %v12844 = vpack.c.b16 %v12724, %v12723
        %v12845 = vpack.c.b16 %v12726, %v12725
        %v12846 = vpack.c.b16 %v12728, %v12727
        %v12847 = vpack.c.b16 %v12730, %v12729
        %v12848 = vpack.c.b16 %v12732, %v12731
        %v12849 = vpack.c.b16 %v12734, %v12733
        %v12850 = vpack.c.b16 %v12736, %v12735
        %v12851 = vpack.c.b16 %v12738, %v12737
        %v12852 = vpack.c.b16 %v12740, %v12739
        %v12853 = vpack.c.b16 %v12742, %v12741
        %v12854 = vpack.c.b16 %v12744, %v12743
        %v12855 = vpack.c.b16 %v12746, %v12745
        %v12856 = vpack.c.b16 %v12748, %v12747
        %v12857 = vpack.c.b16 %v12750, %v12749
        %v12858 = vpack.c.b16 %v12752, %v12751
        %v12859 = vpack.c.b16 %v12754, %v12753
        %v12860 = vpack.c.b16 %v12756, %v12755
        %v12861 = vpack.c.b16 %v12758, %v12757
        %v12862 = vpack.c.b16 %v12760, %v12759
        %v12863 = vpack.c.b16 %v12762, %v12761
        %v12864 = vpack.c.b16 %v12764, %v12763
        %v12865 = vpack.c.b16 %v12766, %v12765
        %v12866 = vpack.c.b16 %v12768, %v12767
        %v12867 = vpack.c.b16 %v12770, %v12769
        %v12868 = vpack.c.b16 %v12772, %v12771
        %v12869 = vpack.c.b16 %v12774, %v12773
        %v12870 = vpack.c.b16 %v12776, %v12775
        %v12871 = vpack.c.b16 %v12778, %v12777
        %v12872 = vpack.c.b16 %v12780, %v12779
        %v12873 = vpack.c.b16 %v12782, %v12781
        %v12874 = vpack.c.b16 %v12784, %v12783
        %v12875 = vpack.c.b16 %v12786, %v12785
        %v12876 = vpack.c.b16 %v12788, %v12787
        %v12877 = vpack.c.b16 %v12790, %v12789
        %v12878 = vpack.c.b16 %v12792, %v12791
        %v12879 = vpack.c.b16 %v12794, %v12793
        %v12880 = vpack.c.b16 %v12796, %v12795
        %v12881 = vpack.c.b16 %v12798, %v12797
        %v12882 = vpack.c.b16 %v12800, %v12799
        %v12883 = vpack.c.b16 %v12802, %v12801
        %v12884 = vpack.c.b16 %v12804, %v12803
        %v12885 = vpack.c.b16 %v12806, %v12805
        %v12886 = vpack.c.b16 %v12808, %v12807
        %v12887 = vpack.c.b16 %v12810, %v12809
        %v12888 = vpack.c.b16 %v12812, %v12811
        %v12889 = vpack.c.b16 %v12814, %v12813
        %v12890 = vpack.c.b16 %v12816, %v12815
        %v12891 = vpack.c.b16 %v12818, %v12817
        %v12892 = vpack.c.b16 %v12820, %v12819
        %v12893 = vpack.c.b16 %v12822, %v12821
        %v12894 = vpack.c.b16 %v12824, %v12823
        %v12895 = vpack.c.b16 %v12826, %v12825
        %v12896 = vpack.c.b16 %v12828, %v12827
        %v12897 = vpack.c.b16 %v12830, %v12829
        %v12898 = vpack.c.b16 %v12832, %v12831
        %v12899 = vpack.c.b16 %v12834, %v12833
        %v12900 = vpack.c.b16 %v12836, %v12835
        %12965 = vmatprep.subr.bf16.mxu0 0
        %12966 = vmatpush1.bf16.msra.mxu0 %v12837
        %12967 = vmatprep.subr.bf16.mxu0 0
        %12968 = vmatpush1.bf16.msra.mxu0 %v12838
        %12969 = vmatprep.subr.bf16.mxu0 0
        %12970 = vmatpush1.bf16.msra.mxu0 %v12839
        %12971 = vmatprep.subr.bf16.mxu0 0
        %12972 = vmatpush1.bf16.msra.mxu0 %v12840
        %12973 = vmatprep.subr.bf16.mxu0 0
        %12974 = vmatpush1.bf16.msra.mxu0 %v12841
        %12975 = vmatprep.subr.bf16.mxu0 0
        %12976 = vmatpush1.bf16.msra.mxu0 %v12842
        %12977 = vmatprep.subr.bf16.mxu0 0
        %12978 = vmatpush1.bf16.msra.mxu0 %v12843
        %12979 = vmatprep.subr.bf16.mxu0 0
        %12980 = vmatpush1.bf16.msra.mxu0 %v12844
        %12981 = vmatprep.subr.bf16.mxu0 0
        %12982 = vmatpush1.bf16.msra.mxu0 %v12845
        %12983 = vmatprep.subr.bf16.mxu0 0
        %12984 = vmatpush1.bf16.msra.mxu0 %v12846
        %12985 = vmatprep.subr.bf16.mxu0 0
        %12986 = vmatpush1.bf16.msra.mxu0 %v12847
        %12987 = vmatprep.subr.bf16.mxu0 0
        %12988 = vmatpush1.bf16.msra.mxu0 %v12848
        %12989 = vmatprep.subr.bf16.mxu0 0
        %12990 = vmatpush1.bf16.msra.mxu0 %v12849
        %12991 = vmatprep.subr.bf16.mxu0 0
        %12992 = vmatpush1.bf16.msra.mxu0 %v12850
        %12993 = vmatprep.subr.bf16.mxu0 0
        %12994 = vmatpush1.bf16.msra.mxu0 %v12851
        %12995 = vmatprep.subr.bf16.mxu0 0
        %12996 = vmatpush1.bf16.msra.mxu0 %v12852
        %12997 = vmatprep.mubr.bf16.mxu0 %v12446
        %12998 = vmatmul.mubr.bf16.gmra.mrb[0].mxu0 %v12445
        %v12999 = vpop.f32.mrb[0].mxu0
        %v13000 = vadd.f32 0.0, %v12999
        %v13001 = vpop.f32.mrb[0].mxu0
        %v13002 = vpop.f32.mrb[0].mxu0
        %v13003 = vpop.f32.mrb[0].mxu0
        %13004 = vdwg.mxu0
        %13005 = vmatprep.subr.bf16.mxu0 0
        %13006 = vmatpush1.bf16.msra.mxu0 %v12853
        %13007 = vmatprep.subr.bf16.mxu0 0
        %13008 = vmatpush1.bf16.msra.mxu0 %v12854
        %13009 = vmatprep.subr.bf16.mxu0 0
        %13010 = vmatpush1.bf16.msra.mxu0 %v12855
        %13011 = vmatprep.subr.bf16.mxu0 0
        %13012 = vmatpush1.bf16.msra.mxu0 %v12856
        %13013 = vmatprep.subr.bf16.mxu0 0
        %13014 = vmatpush1.bf16.msra.mxu0 %v12857
        %13015 = vmatprep.subr.bf16.mxu0 0
        %13016 = vmatpush1.bf16.msra.mxu0 %v12858
        %13017 = vmatprep.subr.bf16.mxu0 0
        %13018 = vmatpush1.bf16.msra.mxu0 %v12859
        %13019 = vmatprep.subr.bf16.mxu0 0
        %13020 = vmatpush1.bf16.msra.mxu0 %v12860
        %13021 = vmatprep.subr.bf16.mxu0 0
        %13022 = vmatpush1.bf16.msra.mxu0 %v12861
        %13023 = vmatprep.subr.bf16.mxu0 0
        %13024 = vmatpush1.bf16.msra.mxu0 %v12862
        %13025 = vmatprep.subr.bf16.mxu0 0
        %13026 = vmatpush1.bf16.msra.mxu0 %v12863
        %13027 = vmatprep.subr.bf16.mxu0 0
        %13028 = vmatpush1.bf16.msra.mxu0 %v12864
        %13029 = vmatprep.subr.bf16.mxu0 0
        %13030 = vmatpush1.bf16.msra.mxu0 %v12865
        %13031 = vmatprep.subr.bf16.mxu0 0
        %13032 = vmatpush1.bf16.msra.mxu0 %v12866
        %13033 = vmatprep.subr.bf16.mxu0 0
        %13034 = vmatpush1.bf16.msra.mxu0 %v12867
        %13035 = vmatprep.subr.bf16.mxu0 0
        %13036 = vmatpush1.bf16.msra.mxu0 %v12868
        %13037 = vmatprep.mubr.bf16.mxu0 %v12448
        %13038 = vmatmul.mubr.bf16.gmra.mrb[0].mxu0 %v12447
        %v13039 = vpop.f32.mrb[0].mxu0
        %v13040 = vadd.f32 %v13000, %v13039
        %v13041 = vpop.f32.mrb[0].mxu0
        %v13042 = vpop.f32.mrb[0].mxu0
        %v13043 = vpop.f32.mrb[0].mxu0
        %13044 = vdwg.mxu0
        %13045 = vmatprep.subr.bf16.mxu0 0
        %13046 = vmatpush1.bf16.msra.mxu0 %v12869
        %13047 = vmatprep.subr.bf16.mxu0 0
        %13048 = vmatpush1.bf16.msra.mxu0 %v12870
        %13049 = vmatprep.subr.bf16.mxu0 0
        %13050 = vmatpush1.bf16.msra.mxu0 %v12871
        %13051 = vmatprep.subr.bf16.mxu0 0
        %13052 = vmatpush1.bf16.msra.mxu0 %v12872
        %13053 = vmatprep.subr.bf16.mxu0 0
        %13054 = vmatpush1.bf16.msra.mxu0 %v12873
        %13055 = vmatprep.subr.bf16.mxu0 0
        %13056 = vmatpush1.bf16.msra.mxu0 %v12874
        %13057 = vmatprep.subr.bf16.mxu0 0
        %13058 = vmatpush1.bf16.msra.mxu0 %v12875
        %13059 = vmatprep.subr.bf16.mxu0 0
        %13060 = vmatpush1.bf16.msra.mxu0 %v12876
        %13061 = vmatprep.subr.bf16.mxu0 0
        %13062 = vmatpush1.bf16.msra.mxu0 %v12877
        %13063 = vmatprep.subr.bf16.mxu0 0
        %13064 = vmatpush1.bf16.msra.mxu0 %v12878
        %13065 = vmatprep.subr.bf16.mxu0 0
        %13066 = vmatpush1.bf16.msra.mxu0 %v12879
        %13067 = vmatprep.subr.bf16.mxu0 0
        %13068 = vmatpush1.bf16.msra.mxu0 %v12880
        %13069 = vmatprep.subr.bf16.mxu0 0
        %13070 = vmatpush1.bf16.msra.mxu0 %v12881
        %13071 = vmatprep.subr.bf16.mxu0 0
        %13072 = vmatpush1.bf16.msra.mxu0 %v12882
        %13073 = vmatprep.subr.bf16.mxu0 0
        %13074 = vmatpush1.bf16.msra.mxu0 %v12883
        %13075 = vmatprep.subr.bf16.mxu0 0
        %13076 = vmatpush1.bf16.msra.mxu0 %v12884
        %13077 = vmatprep.mubr.bf16.mxu0 %v12450
        %13078 = vmatmul.mubr.bf16.gmra.mrb[0].mxu0 %v12449
        %v13079 = vpop.f32.mrb[0].mxu0
        %v13080 = vadd.f32 %v13040, %v13079
        %v13081 = vpop.f32.mrb[0].mxu0
        %v13082 = vpop.f32.mrb[0].mxu0
        %v13083 = vpop.f32.mrb[0].mxu0
        %13084 = vdwg.mxu0
        %13085 = vmatprep.subr.bf16.mxu0 0
        %13086 = vmatpush1.bf16.msra.mxu0 %v12885
        %13087 = vmatprep.subr.bf16.mxu0 0
        %13088 = vmatpush1.bf16.msra.mxu0 %v12886
        %13089 = vmatprep.subr.bf16.mxu0 0
        %13090 = vmatpush1.bf16.msra.mxu0 %v12887
        %13091 = vmatprep.subr.bf16.mxu0 0
        %13092 = vmatpush1.bf16.msra.mxu0 %v12888
        %13093 = vmatprep.subr.bf16.mxu0 0
        %13094 = vmatpush1.bf16.msra.mxu0 %v12889
        %13095 = vmatprep.subr.bf16.mxu0 0
        %13096 = vmatpush1.bf16.msra.mxu0 %v12890
        %13097 = vmatprep.subr.bf16.mxu0 0
        %13098 = vmatpush1.bf16.msra.mxu0 %v12891
        %13099 = vmatprep.subr.bf16.mxu0 0
        %13100 = vmatpush1.bf16.msra.mxu0 %v12892
        %13101 = vmatprep.subr.bf16.mxu0 0
        %13102 = vmatpush1.bf16.msra.mxu0 %v12893
        %13103 = vmatprep.subr.bf16.mxu0 0
        %13104 = vmatpush1.bf16.msra.mxu0 %v12894
        %13105 = vmatprep.subr.bf16.mxu0 0
        %13106 = vmatpush1.bf16.msra.mxu0 %v12895
        %13107 = vmatprep.subr.bf16.mxu0 0
        %13108 = vmatpush1.bf16.msra.mxu0 %v12896
        %13109 = vmatprep.subr.bf16.mxu0 0
        %13110 = vmatpush1.bf16.msra.mxu0 %v12897
        %13111 = vmatprep.subr.bf16.mxu0 0
        %13112 = vmatpush1.bf16.msra.mxu0 %v12898
        %13113 = vmatprep.subr.bf16.mxu0 0
        %13114 = vmatpush1.bf16.msra.mxu0 %v12899
        %13115 = vmatprep.subr.bf16.mxu0 0
        %13116 = vmatpush1.bf16.msra.mxu0 %v12900
        %13117 = vmatprep.mubr.bf16.mxu0 %v12452
        %13118 = vmatmul.mubr.bf16.gmra.mrb[0].mxu0 %v12451
        %v13119 = vpop.f32.mrb[0].mxu0
        %v13120 = vadd.f32 %v13080, %v13119
        %v13121 = vpop.f32.mrb[0].mxu0
        %v13122 = vpop.f32.mrb[0].mxu0
        %v13123 = vpop.f32.mrb[0].mxu0
        %13124 = vdwg.mxu0
        %v13125 = vadd.f32 %v12444, %v13120
        %13126 = vst [vmem:[#allocation2] sm:$0x3] %v13125
        %p13127 = scmp.eq.s32.totalorder %s27, 1
        // Predicated region
        $region77: #{discriminator_forward.1} parent=47 // pred_check
          %p13128 = pneg %p13127
        $region78: #{discriminator_forward.1} parent=47 // pred_check_branch
          %13130 = sbr.rel (%p13128) target = $region80
        $region79: #{discriminator_forward.1} parent=47 // pred_region
          %v13131 = vld [vmem:[#allocation2] sm:$0x3]
          %v13132 = vld [vmem:[#allocation9] sm:$0x1]
          %v13133 = vlaneseq
          %v13134 = vshrl.u32 %v13133, 7
          %v13135 = vsub.s32 0, %v13134
          %v13136 = vrot.slane %v13132, %v13135
          %v13137 = vmul.f32 %v13131, %v13136
          %v13138 = vld [vmem:[#allocation9 + $0x1] sm:$0x1]
          %v13139 = vlaneseq
          %v13140 = vshrl.u32 %v13139, 7
          %v13141 = vsub.s32 0, %v13140
          %v13142 = vrot.slane %v13138, %v13141
          %v13143 = vadd.f32 %v13137, %v13142
          %v13144 = vmax.f32 %v13143, 0.0
          %v13145 = vpack.c.bf16 %v13144, %v13144
          %v13146 = vld [vmem:[#allocation11] sm:$0xf]
          %v13147 = vld [vmem:[#allocation11 + $0x4] sm:$0xf]
          %v13148 = vld [vmem:[#allocation11 + $0x8] sm:$0xf]
          %v13149 = vld [vmem:[#allocation11 + $0xc] sm:$0xf]
          %v13150 = vld [vmem:[#allocation11 + $0x10] sm:$0xf]
          %v13151 = vld [vmem:[#allocation11 + $0x14] sm:$0xf]
          %v13152 = vld [vmem:[#allocation11 + $0x18] sm:$0xf]
          %v13153 = vld [vmem:[#allocation11 + $0x1c] sm:$0xf]
          %v13154 = vld [vmem:[#allocation11 + $0x20] sm:$0xf]
          %v13155 = vld [vmem:[#allocation11 + $0x24] sm:$0xf]
          %v13156 = vld [vmem:[#allocation11 + $0x28] sm:$0xf]
          %v13157 = vld [vmem:[#allocation11 + $0x2c] sm:$0xf]
          %v13158 = vld [vmem:[#allocation11 + $0x30] sm:$0xf]
          %v13159 = vld [vmem:[#allocation11 + $0x34] sm:$0xf]
          %v13160 = vld [vmem:[#allocation11 + $0x38] sm:$0xf]
          %v13161 = vld [vmem:[#allocation11 + $0x3c] sm:$0xf]
          %v13162 = vld [vmem:[#allocation12] sm:$0x1]
          %v13164 = vlaneseq
          %v13165 = vshrl.u32 %v13164, 7
          %v13166 = vsub.s32 0, %v13165
          %v13167 = vrot.slane %v13162, %v13166
          %v13185 = vunpack.c.l.b16 %v13146
          %v13186 = vunpack.c.l.b16 %v13147
          %v13187 = vunpack.c.l.b16 %v13148
          %v13188 = vunpack.c.l.b16 %v13149
          %v13189 = vunpack.c.l.b16 %v13150
          %v13190 = vunpack.c.l.b16 %v13151
          %v13191 = vunpack.c.l.b16 %v13152
          %v13192 = vunpack.c.l.b16 %v13153
          %v13193 = vunpack.c.l.b16 %v13154
          %v13194 = vunpack.c.l.b16 %v13155
          %v13195 = vunpack.c.l.b16 %v13156
          %v13196 = vunpack.c.l.b16 %v13157
          %v13197 = vunpack.c.l.b16 %v13158
          %v13198 = vunpack.c.l.b16 %v13159
          %v13199 = vunpack.c.l.b16 %v13160
          %v13200 = vunpack.c.l.b16 %v13161
          %v13201 = vpack.c.b16 %v13186, %v13185
          %v13202 = vpack.c.b16 %v13188, %v13187
          %v13203 = vpack.c.b16 %v13190, %v13189
          %v13204 = vpack.c.b16 %v13192, %v13191
          %v13205 = vpack.c.b16 %v13194, %v13193
          %v13206 = vpack.c.b16 %v13196, %v13195
          %v13207 = vpack.c.b16 %v13198, %v13197
          %v13208 = vpack.c.b16 %v13200, %v13199
          %13217 = vmatprep.subr.bf16.mxu0 0
          %13218 = vmatpush1.bf16.msra.mxu0 %v13201
          %13219 = vmatprep.subr.bf16.mxu0 0
          %13220 = vmatpush1.bf16.msra.mxu0 %v13202
          %13221 = vmatprep.subr.bf16.mxu0 0
          %13222 = vmatpush1.bf16.msra.mxu0 %v13203
          %13223 = vmatprep.subr.bf16.mxu0 0
          %13224 = vmatpush1.bf16.msra.mxu0 %v13204
          %13225 = vmatprep.subr.bf16.mxu0 0
          %13226 = vmatpush1.bf16.msra.mxu0 %v13205
          %13227 = vmatprep.subr.bf16.mxu0 0
          %13228 = vmatpush1.bf16.msra.mxu0 %v13206
          %13229 = vmatprep.subr.bf16.mxu0 0
          %13230 = vmatpush1.bf16.msra.mxu0 %v13207
          %13231 = vmatprep.subr.bf16.mxu0 0
          %13232 = vmatpush1.bf16.msra.mxu0 %v13208
          %13233 = vmatprep.subr.bf16.mxu0 0
          %13234 = vmatpush1.bf16.msra.mxu0 0
          %13235 = vmatprep.subr.bf16.mxu0 0
          %13236 = vmatpush1.bf16.msra.mxu0 0
          %13237 = vmatprep.subr.bf16.mxu0 0
          %13238 = vmatpush1.bf16.msra.mxu0 0
          %13239 = vmatprep.subr.bf16.mxu0 0
          %13240 = vmatpush1.bf16.msra.mxu0 0
          %13241 = vmatprep.subr.bf16.mxu0 0
          %13242 = vmatpush1.bf16.msra.mxu0 0
          %13243 = vmatprep.subr.bf16.mxu0 0
          %13244 = vmatpush1.bf16.msra.mxu0 0
          %13245 = vmatprep.subr.bf16.mxu0 0
          %13246 = vmatpush1.bf16.msra.mxu0 0
          %13247 = vmatprep.subr.bf16.mxu0 0
          %13248 = vmatpush1.bf16.msra.mxu0 0
          %13249 = vmatprep.mubr.bf16.mxu0 0
          %13250 = vmatmul.mubr.bf16.gmra.mrb[0].mxu0 %v13145
          %v13251 = vpop.f32.mrb[0].mxu0
          %v13252 = vadd.f32 %v13167, %v13251
          %v13253 = vpop.f32.mrb[0].mxu0
          %v13254 = vpop.f32.mrb[0].mxu0
          %v13255 = vpop.f32.mrb[0].mxu0
          %13256 = vdwg.mxu0
          %vm13257 = vcmask 1041408
          %v13258 = vsel %vm13257, %v13252, -inf
          %13259 = vmax.xlane.f32.xlu0 %v13258
          %v13260 = vpop.xlane.xlu0 %13259
          %v13261 = vsub.f32 %v13252, %v13260
          %v13262 = vmul.f32 %v13261, 1.442695
          %v13263 = vpow.pop %v13262
          %v13264 = vsel %vm13257, %v13263, 0.0
          %13265 = vadd.xlane.f32.xlu0 %v13264
          %v13266 = vpop.xlane.xlu0 %13265
          %v13267 = vlog2.pop %v13266
          %v13268 = vmul.f32 %v13267, 0.6931472
          %v13269 = vadd.f32 %v13268, %v13260
          %v13270 = vsub.f32 %v13252, %v13269
          %13271 = vst [vmem:[#allocation14] sm:$0x3] %v13270
        $region80: #{discriminator_forward.1} parent=47 // pred_fallthru
          _
        // Predicated region
        $region81: #{discriminator_forward.1} parent=47 // pred_check
          %p13272 = pneg %p202
        $region82: #{discriminator_forward.1} parent=47 // pred_check_branch
          %13274 = sbr.rel (%p13272) target = $region84
        $region83: #{discriminator_forward.1} parent=47 // pred_region
          %s13276 = ssub.s32 32, 32
          %13277 = vsyncadd [#allocation5], %s13276
          %s13279 = sshll.u32 [#allocation14], 4
          %s13280 = int_to_ptr.vmem [resolvable:$true] %s13279
          %13282 = dma.vmem_to_hbm [thread:$0]  %s13280, 32, %s7, [#allocation5]
        $region84: #{discriminator_forward.1} parent=47 // pred_fallthru
          _
        // Predicated region
        $region85: #{discriminator_forward.1} parent=47 // pred_check
          %p13283 = pneg %p202
        $region86: #{discriminator_forward.1} parent=47 // pred_check_branch
          %13285 = sbr.rel (%p13283) target = $region88
        $region87: #{discriminator_forward.1} parent=47 // pred_region
          %13286 = dma.done [#allocation5], 32
        $region88: #{discriminator_forward.1} parent=47 // pred_fallthru
          _
      $region48: #{discriminator_forward.1} parent=5 // pred_fallthru
        _
      %p13287 = scmp.le.s32.totalorder 2, %s22
      // Predicated region
      $region89: #{discriminator_forward.1} parent=5 // pred_check
        %p13288 = pneg %p13287
      $region90: #{discriminator_forward.1} parent=5 // pred_check_branch
        %13290 = sbr.rel (%p13288) target = $region92
      $region91: #{discriminator_forward.1} parent=5 // pred_region
        %s13291 = ssub.s32 %s22, 2
      $region92: #{discriminator_forward.1} parent=5 // pred_fallthru
        _
    $region6: #{discriminator_forward.1} parent=1 // loop_footer
      %s26 = sadd.s32 1, %s22
    $region7: #{discriminator_forward.1} parent=1 // loop_footer_branch
      %21 = sbr.rel target = $region3
    $region8: #{discriminator_forward.1} parent=1 // loop_exit
      _
    %13292 = vsyncpa [#allocation4], 1
    %s13293 = scalar_lea.sflag [#allocation4], 1
    %13294 = vsyncpa %s13293, 1
    %13295 = vsyncpa [#allocation7], 1
    %s13296 = scalar_lea.sflag [#allocation7], 1
    %13297 = vsyncpa %s13296, 1
    %13298 = vsyncpa [#allocation10], 1
    %13299 = vsyncpa [#allocation13], 1
    %13300 = vsyncpa [#allocation5], 1
    %s13301 = scalar_lea.sflag [#allocation5], 1
    %13302 = vsyncpa %s13301, 1

</llo_original>
